<compile_context>
chip_gen: v7x
topology: tpu7x:2x2x1
jax: 0.10.0
libtpu: 0.0.40
codegen_flags: <defaults>
</compile_context>

<pallas_src>
import functools
import math

import jax
import jax.numpy as jnp
from jax import lax
from jax.experimental import pallas as pl
from jax.experimental.pallas import tpu as pltpu

NHEAD = 4
DFF = 2048
TCN_KSIZE = 21
LN_EPS = 1e-5


# ----------------------------- in-kernel helpers ------------------------------

def _mxu(a, b):
    """MXU matmul: bf16 operands, f32 accumulation."""
    return jnp.dot(a.astype(jnp.bfloat16), b.astype(jnp.bfloat16),
                   preferred_element_type=jnp.float32)


def _mxu_t(a, b):
    """a[M,D] x b[N,D]^T -> [M,N] (contraction on the last dim of both)."""
    return lax.dot_general(a.astype(jnp.bfloat16), b.astype(jnp.bfloat16),
                           (((1,), (1,)), ((), ())),
                           preferred_element_type=jnp.float32)


def _elu(y):
    return jnp.where(y > 0.0, y, jnp.exp(jnp.minimum(y, 0.0)) - 1.0)


def _layer_norm(y, g, b, eps=LN_EPS):
    mu = jnp.mean(y, axis=-1, keepdims=True)
    yc = y - mu
    var = jnp.mean(yc * yc, axis=-1, keepdims=True)
    return (yc * lax.rsqrt(var + eps)) * g + b


# ------------------------------ the fused kernel ------------------------------

def _aimp_kernel(*refs, treedef, nhead):
    n_param = treedef.num_leaves
    pre_ref, feas_ref, feasflat_ref, bias_ref, posenc_ref = refs[:5]
    p = jax.tree_util.tree_unflatten(treedef, refs[5:5 + n_param])
    o_ref = refs[5 + n_param]
    tcn_scr = refs[5 + n_param + 1]

    M, H = posenc_ref.shape
    B, S, Hc = tcn_scr.shape
    attn_bias = bias_ref[...]                       # [M, M] additive group mask

    # --- pre_embedding: Conv1x1 -> BN -> ELU -> Conv1x1  (bn[0] + conv-BN folded) ---
    pp = p["pre_embedding"]
    h = _elu(_mxu(pre_ref[...], pp["w1"][...]) + pp["b1"][...])
    pre_emb = _mxu(h, pp["w2"][...]) + pp["b2"][...]                         # [M, H]

    # --- TCN branch: bn[1] + three dilated convs (as seq-flattened matmuls) ---
    tp = p["tcn"]
    fe2d = feas_ref[...] * tp["s1"][...] + tp["t1"][...]                     # [M, Cf]
    cur = feasflat_ref[...]                                                  # [B, S*Cf]
    for lvl in range(3):                      # bn[1] folded into T[0] / Tb[0]
        cur = jnp.maximum(_mxu(cur, tp["T"][lvl][...]) + tp["Tb"][lvl][...], 0.0)
    # flat [B, S*Hc] -> per-position [B*S, Hc] through a tiny VMEM scratch
    for s in range(S):
        tcn_scr[:, s:s + 1, :] = cur[:, s * Hc:(s + 1) * Hc].reshape(B, 1, Hc)
    h2 = tcn_scr[...].reshape(M, Hc)
    t = _mxu(h2, tp["lin_w"][...]) + tp["lin_b"][...]                        # [M, H]

    rp = p["tcn_res"]      # on concat([tcn_out, feas_normalized], -1)
    hh = _elu(_mxu(t, rp["w1a"][...]) + _mxu(fe2d, rp["w1b"][...]) + rp["b1"][...])
    tcn_out = _mxu(hh, rp["w2"][...]) + rp["b2"][...]                        # [M, H]

    # --- embedding on concat([pre_emb, tcn_out], -1) ---
    ep = p["embedding"]
    hh = _elu(_mxu(pre_emb, ep["w1a"][...]) + _mxu(tcn_out, ep["w1b"][...])
              + ep["b1"][...])
    feas_em = _mxu(hh, ep["w2"][...]) + ep["b2"][...]                        # [M, H]

    # --- transformer (post-norm, eval mode) on the [M, H] position-major layout ---
    def mha(xq, xkv, mp):
        E = xq.shape[-1]
        Dh = E // nhead
        scale = 1.0 / math.sqrt(Dh)
        q = _mxu(xq, mp["wq"][...]) + mp["bq"][...]                          # [M, E]
        kv = _mxu(xkv, mp["wkv"][...]) + mp["bkv"][...]                      # [M, 2E]
        heads = []
        for hd in range(nhead):                       # heads via lane slices
            lo = hd * Dh
            qh = q[:, lo:lo + Dh]
            kh = kv[:, lo:lo + Dh]
            vh = kv[:, E + lo:E + lo + Dh]
            sc = _mxu_t(qh, kh) * scale + attn_bias   # one matmul + group mask
            mx = jnp.max(sc, axis=-1, keepdims=True)
            pr = jnp.exp(sc - mx)
            pr = pr * pl.reciprocal(jnp.sum(pr, axis=-1, keepdims=True), approx=True)
            heads.append(_mxu(pr, vh))                # [M, Dh]
        ao = jnp.concatenate(heads, axis=-1)          # [M, E]
        return _mxu(ao, mp["wo"][...]) + mp["bo"][...]

    def ffn(x, lp):
        hdn = jnp.maximum(_mxu(x, lp["ffn_w1"][...]) + lp["ffn_b1"][...], 0.0)
        return _mxu(hdn, lp["ffn_w2"][...]) + lp["ffn_b2"][...]

    tf = p["transformer"]
    # TransformerModel: src = src + pos_encoder(src) = 2*src + pe ; no PE on tgt.
    src = 2.0 * feas_em + posenc_ref[...]
    mem = src
    for lp in tf["enc"]:
        mem = _layer_norm(mem + mha(mem, mem, lp["sa"]),
                          lp["ln1_g"][...], lp["ln1_b"][...])
        mem = _layer_norm(mem + ffn(mem, lp), lp["ln2_g"][...], lp["ln2_b"][...])
    mem = _layer_norm(mem, tf["enc_norm_g"][...], tf["enc_norm_b"][...])

    out = feas_em
    for lp in tf["dec"]:
        out = _layer_norm(out + mha(out, out, lp["sa"]),
                          lp["ln1_g"][...], lp["ln1_b"][...])
        out = _layer_norm(out + mha(out, mem, lp["ca"]),
                          lp["ln2_g"][...], lp["ln2_b"][...])
        out = _layer_norm(out + ffn(out, lp), lp["ln3_g"][...], lp["ln3_b"][...])
    out = _layer_norm(out, tf["dec_norm_g"][...], tf["dec_norm_b"][...])

    # --- transformer_act -> transformer_res -> seq-mean pool -> clf -> softmax ---
    ta = p["transformer_act"]                 # BN -> ELU -> Conv1x1
    xact = _mxu(_elu(out * ta["s"][...] + ta["t"][...]), ta["w"][...]) + ta["b"][...]
    tr = p["transformer_res"]                 # on concat([xact, feas_em], -1)
    hh = _elu(_mxu(xact, tr["w1a"][...]) + _mxu(feas_em, tr["w1b"][...])
              + tr["b1"][...])
    r = _mxu(hh, tr["w2"][...]) + tr["b2"][...]                              # [M, H]
    pooled = jnp.mean(r.reshape(B, S, H), axis=1)                            # [B, H]
    cf = p["clf"]
    c = _elu(_mxu(pooled, cf["w1"][...]) + cf["b1"][...])
    logits = _mxu(c, cf["w2"][...]) + cf["b2"][...]                          # [B, 2]
    mx = jnp.max(logits, axis=-1, keepdims=True)
    e = jnp.exp(logits - mx)
    o_ref[...] = e / jnp.sum(e, axis=-1, keepdims=True)   # exact softmax


# ------------------------------- JAX glue -------------------------------------

def timing_signal(length, channels):
    assert channels % 2 == 0
    position = jnp.arange(length, dtype=jnp.float32)[:, None]
    div_term = jnp.exp(jnp.arange(0, channels, 2, dtype=jnp.float32)
                       * -(math.log(10000.0) / channels))
    pe = jnp.zeros((length, channels), jnp.float32)
    pe = pe.at[:, 0::2].set(jnp.sin(position * div_term))
    pe = pe.at[:, 1::2].set(jnp.cos(position * div_term))
    return pe


def aimp_forward(params, pre_feas, feas):
    B, S, Cp = pre_feas.shape
    Cf = feas.shape[-1]
    M = B * S
    H = params["transformer_act"]["w"].shape[0]
    Hc = params["tcn"]["lin_w"].shape[0]

    pre2d = pre_feas.reshape(M, Cp)            # position-major rows: b*S + s
    feas2d = feas.reshape(M, Cf)
    feas_flat = feas.reshape(B, S * Cf)        # seq-flattened TCN operand

    # Attention group mask: nn.Transformer (batch_first=False) attends across the
    # B axis independently for each s, i.e. rows with equal (index mod S).
    idx = jnp.arange(M, dtype=jnp.int32)
    same = (idx[:, None] % S) == (idx[None, :] % S)
    attn_bias = jnp.where(same, 0.0, -1e9).astype(jnp.float32)

    # Positional encoding per row (indexed by s, broadcast over b).
    pe_rows = jnp.tile(timing_signal(S, H), (B, 1)).astype(jnp.float32)      # [M, H]

    flat, treedef = jax.tree_util.tree_flatten(params)
    kernel = functools.partial(_aimp_kernel, treedef=treedef, nhead=NHEAD)
    probs = pl.pallas_call(
        kernel,
        out_shape=jax.ShapeDtypeStruct((B, 2), jnp.float32),
        scratch_shapes=[pltpu.VMEM((B, S, Hc), jnp.float32)],
    )(pre2d, feas2d, feas_flat, attn_bias, pe_rows, *flat)
    return probs[:, -1]


# ------------------------------ parameter init --------------------------------

def _conv_seq_matrix(w, b, S, dilation):
    """Dilated 'same' Conv1d over a length-S sequence as one [S*cin, S*cout] matrix.

    w: [ksize, cin, cout], b: [cout].  Zero padding and dilation are baked in.
    """
    ksize, cin, cout = w.shape
    center = (ksize - 1) // 2
    T = jnp.zeros((S * cin, S * cout), jnp.float32)
    for s_out in range(S):
        for s_in in range(S):
            delta = s_in - s_out
            if delta % dilation != 0:
                continue
            k = center + delta // dilation
            if 0 <= k < ksize:
                T = T.at[s_in * cin:(s_in + 1) * cin,
                         s_out * cout:(s_out + 1) * cout].set(w[k])
    bt = jnp.tile(b, S).reshape(1, S * cout)
    return T, bt


def init_params(key, pre_feas_dim, feas_dim, hidden, n_transformer, seq_len):
    keys = iter(jax.random.split(key, 1024))
    H, Hc, S = hidden, hidden // 2, seq_len

    def lin(fan_in, fan_out):
        lim = 1.0 / math.sqrt(fan_in)
        w = jax.random.uniform(next(keys), (fan_in, fan_out), jnp.float32, -lim, lim)
        b = jax.random.uniform(next(keys), (fan_out,), jnp.float32, -lim, lim)
        return w, b

    def bn(c):
        gamma = 1.0 + 0.1 * jax.random.normal(next(keys), (c,), jnp.float32)
        beta = 0.1 * jax.random.normal(next(keys), (c,), jnp.float32)
        mean = 0.1 * jax.random.normal(next(keys), (c,), jnp.float32)
        var = jax.random.uniform(next(keys), (c,), jnp.float32, 0.5, 1.5)
        scale = gamma * lax.rsqrt(var + 1e-5)
        shift = beta - mean * scale
        return scale, shift

    def W(w):                       # MXU operand: store bf16
        return w.astype(jnp.bfloat16)

    def row(v):                     # 1-D parameter -> (1, C) f32
        return jnp.asarray(v, jnp.float32).reshape(1, -1)

    def ln_p(c):
        return row(jnp.ones((c,), jnp.float32)), row(jnp.zeros((c,), jnp.float32))

    def conv_bn_conv(cin, cout, *, cout2=None, in_scale=None, in_shift=None,
                     split=None):
        # Conv1x1 -> BN -> ELU -> Dropout -> Conv1x1 with the BN (and optionally an
        # input BN) folded into the first matmul at prep time.
        w1, b1 = lin(cin, cout)
        s, t = bn(cout)
        if in_scale is not None:
            b1 = b1 + in_shift @ w1
            w1 = in_scale[:, None] * w1
        w1 = w1 * s[None, :]
        b1 = b1 * s + t
        w2, b2 = lin(cout, cout if cout2 is None else cout2)
        d = dict(b1=row(b1), w2=W(w2), b2=row(b2))
        if split is None:
            d["w1"] = W(w1)
        else:
            d["w1a"], d["w1b"] = W(w1[:split]), W(w1[split:])
        return d

    def mha_p(E):
        wq, bq = lin(E, E)
        wk, bk = lin(E, E)
        wv, bv = lin(E, E)
        wo, bo = lin(E, E)
        return dict(wq=W(wq), bq=row(bq),
                    wkv=W(jnp.concatenate([wk, wv], axis=1)),
                    bkv=row(jnp.concatenate([bk, bv])),
                    wo=W(wo), bo=row(bo))

    def enc_layer(E):
        g1, b1 = ln_p(E)
        g2, b2 = ln_p(E)
        w1, bb1 = lin(E, DFF)
        w2, bb2 = lin(DFF, E)
        return dict(sa=mha_p(E), ln1_g=g1, ln1_b=b1, ln2_g=g2, ln2_b=b2,
                    ffn_w1=W(w1), ffn_b1=row(bb1), ffn_w2=W(w2), ffn_b2=row(bb2))

    def dec_layer(E):
        g1, b1 = ln_p(E)
        g2, b2 = ln_p(E)
        g3, b3 = ln_p(E)
        w1, bb1 = lin(E, DFF)
        w2, bb2 = lin(DFF, E)
        return dict(sa=mha_p(E), ca=mha_p(E),
                    ln1_g=g1, ln1_b=b1, ln2_g=g2, ln2_b=b2, ln3_g=g3, ln3_b=b3,
                    ffn_w1=W(w1), ffn_b1=row(bb1), ffn_w2=W(w2), ffn_b2=row(bb2))

    # bn[0] on pre_feas folded into pre_embedding's first conv.
    s0, t0 = bn(pre_feas_dim)
    pre_embedding = conv_bn_conv(pre_feas_dim, H, in_scale=s0, in_shift=t0)

    # TCN: bn[1] + 3 dilated 'same' convs, each baked into one seq-flattened matrix.
    s1, t1 = bn(feas_dim)
    Ts, Tbs = [], []
    cin = feas_dim
    for lvl in range(3):
        dil = 2 ** lvl
        lim = 1.0 / math.sqrt(cin * TCN_KSIZE)
        w = jax.random.uniform(next(keys), (TCN_KSIZE, cin, Hc), jnp.float32,
                               -lim, lim)
        b = jax.random.uniform(next(keys), (Hc,), jnp.float32, -lim, lim)
        T, bt = _conv_seq_matrix(w, b, S, dil)
        if lvl == 0:                # fold bn[1] into the first level's matrix
            s1t = jnp.tile(s1, S)
            t1t = jnp.tile(t1, S)
            bt = bt + (t1t @ T).reshape(1, -1)
            T = s1t[:, None] * T
        Ts.append(W(T))
        Tbs.append(bt.astype(jnp.float32))
        cin = Hc
    lw, lb = lin(Hc, H)
    tcn = dict(s1=row(s1), t1=row(t1), T=Ts, Tb=Tbs, lin_w=W(lw), lin_b=row(lb))

    eg, ebias = ln_p(H)
    dg, dbias = ln_p(H)
    transformer = dict(enc=[enc_layer(H) for _ in range(n_transformer)],
                       dec=[dec_layer(H) for _ in range(n_transformer)],
                       enc_norm_g=eg, enc_norm_b=ebias,
                       dec_norm_g=dg, dec_norm_b=dbias)

    sa_, ta_ = bn(H)
    wa, ba = lin(H, H)
    transformer_act = dict(s=row(sa_), t=row(ta_), w=W(wa), b=row(ba))

    return dict(
        pre_embedding=pre_embedding,
        tcn=tcn,
        tcn_res=conv_bn_conv(H + feas_dim, H, split=H),
        embedding=conv_bn_conv(2 * H, H, split=H),
        transformer=transformer,
        transformer_act=transformer_act,
        transformer_res=conv_bn_conv(2 * H, H, split=H),
        clf=conv_bn_conv(H, H, cout2=2),
    )


# ---------------------------------- main --------------------------------------

if __name__ == "__main__":
    B, S = 2, 8
    pre_feas_dim, feas_dim, hidden, n_transformer, dropout = 6, 5, 32, 1, 0.1
    # TODO(synk): dropout is inference-mode identity; not modeled in the kernel.

    key = jax.random.PRNGKey(0)
    kparams, kpre, kfeas = jax.random.split(key, 3)
    params = init_params(kparams, pre_feas_dim, feas_dim, hidden, n_transformer, S)
    pre_feas = jax.random.normal(kpre, (B, S, pre_feas_dim), jnp.float32)
    feas = jax.random.normal(kfeas, (B, S, feas_dim), jnp.float32)

    out = jax.jit(aimp_forward)(params, pre_feas, feas)
    out = jax.block_until_ready(out)
    assert out.shape == (B,), out.shape
    assert bool(jnp.all(jnp.isfinite(out)))
    print("KERNEL_OK")
</pallas_src>

<mosaic_0001>
module attributes {stable_mosaic.version = 11 : i64} {
  func.func @_aimp_kernel(%arg0: memref<16x6xf32, #tpu.memory_space<vmem>>, %arg1: memref<16x5xf32, #tpu.memory_space<vmem>>, %arg2: memref<2x40xf32, #tpu.memory_space<vmem>>, %arg3: memref<16x16xf32, #tpu.memory_space<vmem>>, %arg4: memref<16x32xf32, #tpu.memory_space<vmem>>, %arg5: memref<1x32xf32, #tpu.memory_space<vmem>>, %arg6: memref<1x2xf32, #tpu.memory_space<vmem>>, %arg7: memref<32x32xbf16, #tpu.memory_space<vmem>>, %arg8: memref<32x2xbf16, #tpu.memory_space<vmem>>, %arg9: memref<1x32xf32, #tpu.memory_space<vmem>>, %arg10: memref<1x32xf32, #tpu.memory_space<vmem>>, %arg11: memref<32x32xbf16, #tpu.memory_space<vmem>>, %arg12: memref<32x32xbf16, #tpu.memory_space<vmem>>, %arg13: memref<32x32xbf16, #tpu.memory_space<vmem>>, %arg14: memref<1x32xf32, #tpu.memory_space<vmem>>, %arg15: memref<1x32xf32, #tpu.memory_space<vmem>>, %arg16: memref<6x32xbf16, #tpu.memory_space<vmem>>, %arg17: memref<32x32xbf16, #tpu.memory_space<vmem>>, %arg18: memref<40x128xbf16, #tpu.memory_space<vmem>>, %arg19: memref<128x128xbf16, #tpu.memory_space<vmem>>, %arg20: memref<128x128xbf16, #tpu.memory_space<vmem>>, %arg21: memref<1x128xf32, #tpu.memory_space<vmem>>, %arg22: memref<1x128xf32, #tpu.memory_space<vmem>>, %arg23: memref<1x128xf32, #tpu.memory_space<vmem>>, %arg24: memref<1x32xf32, #tpu.memory_space<vmem>>, %arg25: memref<16x32xbf16, #tpu.memory_space<vmem>>, %arg26: memref<1x5xf32, #tpu.memory_space<vmem>>, %arg27: memref<1x5xf32, #tpu.memory_space<vmem>>, %arg28: memref<1x32xf32, #tpu.memory_space<vmem>>, %arg29: memref<1x32xf32, #tpu.memory_space<vmem>>, %arg30: memref<32x32xbf16, #tpu.memory_space<vmem>>, %arg31: memref<5x32xbf16, #tpu.memory_space<vmem>>, %arg32: memref<32x32xbf16, #tpu.memory_space<vmem>>, %arg33: memref<1x64xf32, #tpu.memory_space<vmem>>, %arg34: memref<1x32xf32, #tpu.memory_space<vmem>>, %arg35: memref<1x32xf32, #tpu.memory_space<vmem>>, %arg36: memref<32x64xbf16, #tpu.memory_space<vmem>>, %arg37: memref<32x32xbf16, #tpu.memory_space<vmem>>, %arg38: memref<32x32xbf16, #tpu.memory_space<vmem>>, %arg39: memref<1x2048xf32, #tpu.memory_space<vmem>>, %arg40: memref<1x32xf32, #tpu.memory_space<vmem>>, %arg41: memref<32x2048xbf16, #tpu.memory_space<vmem>>, %arg42: memref<2048x32xbf16, #tpu.memory_space<vmem>>, %arg43: memref<1x32xf32, #tpu.memory_space<vmem>>, %arg44: memref<1x32xf32, #tpu.memory_space<vmem>>, %arg45: memref<1x32xf32, #tpu.memory_space<vmem>>, %arg46: memref<1x32xf32, #tpu.memory_space<vmem>>, %arg47: memref<1x32xf32, #tpu.memory_space<vmem>>, %arg48: memref<1x32xf32, #tpu.memory_space<vmem>>, %arg49: memref<1x64xf32, #tpu.memory_space<vmem>>, %arg50: memref<1x32xf32, #tpu.memory_space<vmem>>, %arg51: memref<1x32xf32, #tpu.memory_space<vmem>>, %arg52: memref<32x64xbf16, #tpu.memory_space<vmem>>, %arg53: memref<32x32xbf16, #tpu.memory_space<vmem>>, %arg54: memref<32x32xbf16, #tpu.memory_space<vmem>>, %arg55: memref<1x32xf32, #tpu.memory_space<vmem>>, %arg56: memref<1x32xf32, #tpu.memory_space<vmem>>, %arg57: memref<1x2048xf32, #tpu.memory_space<vmem>>, %arg58: memref<1x32xf32, #tpu.memory_space<vmem>>, %arg59: memref<32x2048xbf16, #tpu.memory_space<vmem>>, %arg60: memref<2048x32xbf16, #tpu.memory_space<vmem>>, %arg61: memref<1x32xf32, #tpu.memory_space<vmem>>, %arg62: memref<1x32xf32, #tpu.memory_space<vmem>>, %arg63: memref<1x32xf32, #tpu.memory_space<vmem>>, %arg64: memref<1x32xf32, #tpu.memory_space<vmem>>, %arg65: memref<1x64xf32, #tpu.memory_space<vmem>>, %arg66: memref<1x32xf32, #tpu.memory_space<vmem>>, %arg67: memref<1x32xf32, #tpu.memory_space<vmem>>, %arg68: memref<32x64xbf16, #tpu.memory_space<vmem>>, %arg69: memref<32x32xbf16, #tpu.memory_space<vmem>>, %arg70: memref<32x32xbf16, #tpu.memory_space<vmem>>, %arg71: memref<1x32xf32, #tpu.memory_space<vmem>>, %arg72: memref<1x32xf32, #tpu.memory_space<vmem>>, %arg73: memref<1x32xf32, #tpu.memory_space<vmem>>, %arg74: memref<1x32xf32, #tpu.memory_space<vmem>>, %arg75: memref<1x32xf32, #tpu.memory_space<vmem>>, %arg76: memref<32x32xbf16, #tpu.memory_space<vmem>>, %arg77: memref<1x32xf32, #tpu.memory_space<vmem>>, %arg78: memref<1x32xf32, #tpu.memory_space<vmem>>, %arg79: memref<32x32xbf16, #tpu.memory_space<vmem>>, %arg80: memref<32x32xbf16, #tpu.memory_space<vmem>>, %arg81: memref<32x32xbf16, #tpu.memory_space<vmem>>, %arg82: memref<2x2xf32, #tpu.memory_space<vmem>>, %arg83: memref<2x8x16xf32, #tpu.memory_space<vmem>>) attributes {dimension_semantics = [], scalar_prefetch = 0 : i64, scratch_operands = 1 : i64, tpu.core_type = #tpu.core_type<tc>} {
    %c0 = arith.constant 0 : index
    %c0_0 = arith.constant 0 : index
    %0 = vector.load %arg3[%c0, %c0_0] : memref<16x16xf32, #tpu.memory_space<vmem>>, vector<16x16xf32>
    %c0_1 = arith.constant 0 : index
    %c0_2 = arith.constant 0 : index
    %1 = vector.load %arg0[%c0_1, %c0_2] : memref<16x6xf32, #tpu.memory_space<vmem>>, vector<16x6xf32>
    %c0_3 = arith.constant 0 : index
    %c0_4 = arith.constant 0 : index
    %2 = vector.load %arg16[%c0_3, %c0_4] : memref<6x32xbf16, #tpu.memory_space<vmem>>, vector<6x32xbf16>
    %3 = arith.truncf %1 : vector<16x6xf32> to vector<16x6xbf16>
    %cst = arith.constant dense<0.000000e+00> : vector<16x32xf32>
    %4 = tpu.matmul %3, %2, %cst {dimension_numbers = #tpu.dot_dimension_numbers<[1], [0], [0], [1], [0, 0, 1, 1], [], []>} : vector<16x6xbf16>, vector<6x32xbf16>, vector<16x32xf32> -> vector<16x32xf32>
    %c0_5 = arith.constant 0 : index
    %c0_6 = arith.constant 0 : index
    %5 = vector.load %arg14[%c0_5, %c0_6] : memref<1x32xf32, #tpu.memory_space<vmem>>, vector<1x32xf32>
    %6 = vector.broadcast %5 : vector<1x32xf32> to vector<16x32xf32>
    %7 = arith.addf %4, %6 : vector<16x32xf32>
    %cst_7 = arith.constant 0.000000e+00 : f32
    %8 = vector.broadcast %cst_7 : f32 to vector<16x32xf32>
    %9 = arith.cmpf ogt, %7, %8 : vector<16x32xf32>
    %cst_8 = arith.constant 0.000000e+00 : f32
    %10 = vector.broadcast %cst_8 : f32 to vector<16x32xf32>
    %11 = arith.minimumf %7, %10 : vector<16x32xf32>
    %12 = math.exp %11 : vector<16x32xf32>
    %cst_9 = arith.constant 1.000000e+00 : f32
    %13 = vector.broadcast %cst_9 : f32 to vector<16x32xf32>
    %14 = arith.subf %12, %13 : vector<16x32xf32>
    %15 = arith.select %9, %7, %14 : vector<16x32xi1>, vector<16x32xf32>
    %c0_10 = arith.constant 0 : index
    %c0_11 = arith.constant 0 : index
    %16 = vector.load %arg17[%c0_10, %c0_11] : memref<32x32xbf16, #tpu.memory_space<vmem>>, vector<32x32xbf16>
    %17 = arith.truncf %15 : vector<16x32xf32> to vector<16x32xbf16>
    %cst_12 = arith.constant dense<0.000000e+00> : vector<16x32xf32>
    %18 = tpu.matmul %17, %16, %cst_12 {dimension_numbers = #tpu.dot_dimension_numbers<[1], [0], [0], [1], [0, 0, 1, 1], [], []>} : vector<16x32xbf16>, vector<32x32xbf16>, vector<16x32xf32> -> vector<16x32xf32>
    %c0_13 = arith.constant 0 : index
    %c0_14 = arith.constant 0 : index
    %19 = vector.load %arg15[%c0_13, %c0_14] : memref<1x32xf32, #tpu.memory_space<vmem>>, vector<1x32xf32>
    %20 = vector.broadcast %19 : vector<1x32xf32> to vector<16x32xf32>
    %21 = arith.addf %18, %20 : vector<16x32xf32>
    %c0_15 = arith.constant 0 : index
    %c0_16 = arith.constant 0 : index
    %22 = vector.load %arg1[%c0_15, %c0_16] : memref<16x5xf32, #tpu.memory_space<vmem>>, vector<16x5xf32>
    %c0_17 = arith.constant 0 : index
    %c0_18 = arith.constant 0 : index
    %23 = vector.load %arg26[%c0_17, %c0_18] : memref<1x5xf32, #tpu.memory_space<vmem>>, vector<1x5xf32>
    %24 = vector.broadcast %23 : vector<1x5xf32> to vector<16x5xf32>
    %25 = arith.mulf %22, %24 : vector<16x5xf32>
    %c0_19 = arith.constant 0 : index
    %c0_20 = arith.constant 0 : index
    %26 = vector.load %arg27[%c0_19, %c0_20] : memref<1x5xf32, #tpu.memory_space<vmem>>, vector<1x5xf32>
    %27 = vector.broadcast %26 : vector<1x5xf32> to vector<16x5xf32>
    %28 = arith.addf %25, %27 : vector<16x5xf32>
    %c0_21 = arith.constant 0 : index
    %c0_22 = arith.constant 0 : index
    %29 = vector.load %arg2[%c0_21, %c0_22] : memref<2x40xf32, #tpu.memory_space<vmem>>, vector<2x40xf32>
    %c0_23 = arith.constant 0 : index
    %c0_24 = arith.constant 0 : index
    %30 = vector.load %arg18[%c0_23, %c0_24] : memref<40x128xbf16, #tpu.memory_space<vmem>>, vector<40x128xbf16>
    %31 = arith.truncf %29 : vector<2x40xf32> to vector<2x40xbf16>
    %cst_25 = arith.constant dense<0.000000e+00> : vector<2x128xf32>
    %32 = tpu.matmul %31, %30, %cst_25 {dimension_numbers = #tpu.dot_dimension_numbers<[1], [0], [0], [1], [0, 0, 1, 1], [], []>} : vector<2x40xbf16>, vector<40x128xbf16>, vector<2x128xf32> -> vector<2x128xf32>
    %c0_26 = arith.constant 0 : index
    %c0_27 = arith.constant 0 : index
    %33 = vector.load %arg21[%c0_26, %c0_27] : memref<1x128xf32, #tpu.memory_space<vmem>>, vector<1x128xf32>
    %34 = vector.broadcast %33 : vector<1x128xf32> to vector<2x128xf32>
    %35 = arith.addf %32, %34 : vector<2x128xf32>
    %cst_28 = arith.constant 0.000000e+00 : f32
    %36 = vector.broadcast %cst_28 : f32 to vector<2x128xf32>
    %37 = arith.maximumf %35, %36 : vector<2x128xf32>
    %c0_29 = arith.constant 0 : index
    %c0_30 = arith.constant 0 : index
    %38 = vector.load %arg19[%c0_29, %c0_30] : memref<128x128xbf16, #tpu.memory_space<vmem>>, vector<128x128xbf16>
    %39 = arith.truncf %37 : vector<2x128xf32> to vector<2x128xbf16>
    %cst_31 = arith.constant dense<0.000000e+00> : vector<2x128xf32>
    %40 = tpu.matmul %39, %38, %cst_31 {dimension_numbers = #tpu.dot_dimension_numbers<[1], [0], [0], [1], [0, 0, 1, 1], [], []>} : vector<2x128xbf16>, vector<128x128xbf16>, vector<2x128xf32> -> vector<2x128xf32>
    %c0_32 = arith.constant 0 : index
    %c0_33 = arith.constant 0 : index
    %41 = vector.load %arg22[%c0_32, %c0_33] : memref<1x128xf32, #tpu.memory_space<vmem>>, vector<1x128xf32>
    %42 = vector.broadcast %41 : vector<1x128xf32> to vector<2x128xf32>
    %43 = arith.addf %40, %42 : vector<2x128xf32>
    %cst_34 = arith.constant 0.000000e+00 : f32
    %44 = vector.broadcast %cst_34 : f32 to vector<2x128xf32>
    %45 = arith.maximumf %43, %44 : vector<2x128xf32>
    %c0_35 = arith.constant 0 : index
    %c0_36 = arith.constant 0 : index
    %46 = vector.load %arg20[%c0_35, %c0_36] : memref<128x128xbf16, #tpu.memory_space<vmem>>, vector<128x128xbf16>
    %47 = arith.truncf %45 : vector<2x128xf32> to vector<2x128xbf16>
    %cst_37 = arith.constant dense<0.000000e+00> : vector<2x128xf32>
    %48 = tpu.matmul %47, %46, %cst_37 {dimension_numbers = #tpu.dot_dimension_numbers<[1], [0], [0], [1], [0, 0, 1, 1], [], []>} : vector<2x128xbf16>, vector<128x128xbf16>, vector<2x128xf32> -> vector<2x128xf32>
    %c0_38 = arith.constant 0 : index
    %c0_39 = arith.constant 0 : index
    %49 = vector.load %arg23[%c0_38, %c0_39] : memref<1x128xf32, #tpu.memory_space<vmem>>, vector<1x128xf32>
    %50 = vector.broadcast %49 : vector<1x128xf32> to vector<2x128xf32>
    %51 = arith.addf %48, %50 : vector<2x128xf32>
    %cst_40 = arith.constant 0.000000e+00 : f32
    %52 = vector.broadcast %cst_40 : f32 to vector<2x128xf32>
    %53 = arith.maximumf %51, %52 : vector<2x128xf32>
    %54 = vector.extract_strided_slice %53 {offsets = [0, 0], sizes = [2, 16], strides = [1, 1]} : vector<2x128xf32> to vector<2x16xf32>
    %55 = vector.shape_cast %54 : vector<2x16xf32> to vector<2x1x16xf32>
    %c0_41 = arith.constant 0 : index
    %c0_42 = arith.constant 0 : index
    %c0_43 = arith.constant 0 : index
    %56 = vector.load %arg83[%c0_41, %c0_42, %c0_43] : memref<2x8x16xf32, #tpu.memory_space<vmem>>, vector<2x1x16xf32>
    tpu.vector_store %arg83[%c0_41, %c0_42, %c0_43], %55 {strides = array<i32>} : memref<2x8x16xf32, #tpu.memory_space<vmem>>, vector<2x1x16xf32>,
    %57 = vector.extract_strided_slice %53 {offsets = [0, 16], sizes = [2, 16], strides = [1, 1]} : vector<2x128xf32> to vector<2x16xf32>
    %58 = vector.shape_cast %57 : vector<2x16xf32> to vector<2x1x16xf32>
    %c0_44 = arith.constant 0 : index
    %c1 = arith.constant 1 : index
    %c0_45 = arith.constant 0 : index
    %59 = vector.load %arg83[%c0_44, %c1, %c0_45] : memref<2x8x16xf32, #tpu.memory_space<vmem>>, vector<2x1x16xf32>
    tpu.vector_store %arg83[%c0_44, %c1, %c0_45], %58 {strides = array<i32>} : memref<2x8x16xf32, #tpu.memory_space<vmem>>, vector<2x1x16xf32>,
    %60 = vector.extract_strided_slice %53 {offsets = [0, 32], sizes = [2, 16], strides = [1, 1]} : vector<2x128xf32> to vector<2x16xf32>
    %61 = vector.shape_cast %60 : vector<2x16xf32> to vector<2x1x16xf32>
    %c0_46 = arith.constant 0 : index
    %c2 = arith.constant 2 : index
    %c0_47 = arith.constant 0 : index
    %62 = vector.load %arg83[%c0_46, %c2, %c0_47] : memref<2x8x16xf32, #tpu.memory_space<vmem>>, vector<2x1x16xf32>
    tpu.vector_store %arg83[%c0_46, %c2, %c0_47], %61 {strides = array<i32>} : memref<2x8x16xf32, #tpu.memory_space<vmem>>, vector<2x1x16xf32>,
    %63 = vector.extract_strided_slice %53 {offsets = [0, 48], sizes = [2, 16], strides = [1, 1]} : vector<2x128xf32> to vector<2x16xf32>
    %64 = vector.shape_cast %63 : vector<2x16xf32> to vector<2x1x16xf32>
    %c0_48 = arith.constant 0 : index
    %c3 = arith.constant 3 : index
    %c0_49 = arith.constant 0 : index
    %65 = vector.load %arg83[%c0_48, %c3, %c0_49] : memref<2x8x16xf32, #tpu.memory_space<vmem>>, vector<2x1x16xf32>
    tpu.vector_store %arg83[%c0_48, %c3, %c0_49], %64 {strides = array<i32>} : memref<2x8x16xf32, #tpu.memory_space<vmem>>, vector<2x1x16xf32>,
    %66 = vector.extract_strided_slice %53 {offsets = [0, 64], sizes = [2, 16], strides = [1, 1]} : vector<2x128xf32> to vector<2x16xf32>
    %67 = vector.shape_cast %66 : vector<2x16xf32> to vector<2x1x16xf32>
    %c0_50 = arith.constant 0 : index
    %c4 = arith.constant 4 : index
    %c0_51 = arith.constant 0 : index
    %68 = vector.load %arg83[%c0_50, %c4, %c0_51] : memref<2x8x16xf32, #tpu.memory_space<vmem>>, vector<2x1x16xf32>
    tpu.vector_store %arg83[%c0_50, %c4, %c0_51], %67 {strides = array<i32>} : memref<2x8x16xf32, #tpu.memory_space<vmem>>, vector<2x1x16xf32>,
    %69 = vector.extract_strided_slice %53 {offsets = [0, 80], sizes = [2, 16], strides = [1, 1]} : vector<2x128xf32> to vector<2x16xf32>
    %70 = vector.shape_cast %69 : vector<2x16xf32> to vector<2x1x16xf32>
    %c0_52 = arith.constant 0 : index
    %c5 = arith.constant 5 : index
    %c0_53 = arith.constant 0 : index
    %71 = vector.load %arg83[%c0_52, %c5, %c0_53] : memref<2x8x16xf32, #tpu.memory_space<vmem>>, vector<2x1x16xf32>
    tpu.vector_store %arg83[%c0_52, %c5, %c0_53], %70 {strides = array<i32>} : memref<2x8x16xf32, #tpu.memory_space<vmem>>, vector<2x1x16xf32>,
    %72 = vector.extract_strided_slice %53 {offsets = [0, 96], sizes = [2, 16], strides = [1, 1]} : vector<2x128xf32> to vector<2x16xf32>
    %73 = vector.shape_cast %72 : vector<2x16xf32> to vector<2x1x16xf32>
    %c0_54 = arith.constant 0 : index
    %c6 = arith.constant 6 : index
    %c0_55 = arith.constant 0 : index
    %74 = vector.load %arg83[%c0_54, %c6, %c0_55] : memref<2x8x16xf32, #tpu.memory_space<vmem>>, vector<2x1x16xf32>
    tpu.vector_store %arg83[%c0_54, %c6, %c0_55], %73 {strides = array<i32>} : memref<2x8x16xf32, #tpu.memory_space<vmem>>, vector<2x1x16xf32>,
    %75 = vector.extract_strided_slice %53 {offsets = [0, 112], sizes = [2, 16], strides = [1, 1]} : vector<2x128xf32> to vector<2x16xf32>
    %76 = vector.shape_cast %75 : vector<2x16xf32> to vector<2x1x16xf32>
    %c0_56 = arith.constant 0 : index
    %c7 = arith.constant 7 : index
    %c0_57 = arith.constant 0 : index
    %77 = vector.load %arg83[%c0_56, %c7, %c0_57] : memref<2x8x16xf32, #tpu.memory_space<vmem>>, vector<2x1x16xf32>
    tpu.vector_store %arg83[%c0_56, %c7, %c0_57], %76 {strides = array<i32>} : memref<2x8x16xf32, #tpu.memory_space<vmem>>, vector<2x1x16xf32>,
    %c0_58 = arith.constant 0 : index
    %c0_59 = arith.constant 0 : index
    %c0_60 = arith.constant 0 : index
    %78 = vector.load %arg83[%c0_58, %c0_59, %c0_60] : memref<2x8x16xf32, #tpu.memory_space<vmem>>, vector<2x8x16xf32>
    %79 = vector.shape_cast %78 : vector<2x8x16xf32> to vector<16x16xf32>
    %c0_61 = arith.constant 0 : index
    %c0_62 = arith.constant 0 : index
    %80 = vector.load %arg25[%c0_61, %c0_62] : memref<16x32xbf16, #tpu.memory_space<vmem>>, vector<16x32xbf16>
    %81 = arith.truncf %79 : vector<16x16xf32> to vector<16x16xbf16>
    %cst_63 = arith.constant dense<0.000000e+00> : vector<16x32xf32>
    %82 = tpu.matmul %81, %80, %cst_63 {dimension_numbers = #tpu.dot_dimension_numbers<[1], [0], [0], [1], [0, 0, 1, 1], [], []>} : vector<16x16xbf16>, vector<16x32xbf16>, vector<16x32xf32> -> vector<16x32xf32>
    %c0_64 = arith.constant 0 : index
    %c0_65 = arith.constant 0 : index
    %83 = vector.load %arg24[%c0_64, %c0_65] : memref<1x32xf32, #tpu.memory_space<vmem>>, vector<1x32xf32>
    %84 = vector.broadcast %83 : vector<1x32xf32> to vector<16x32xf32>
    %85 = arith.addf %82, %84 : vector<16x32xf32>
    %c0_66 = arith.constant 0 : index
    %c0_67 = arith.constant 0 : index
    %86 = vector.load %arg30[%c0_66, %c0_67] : memref<32x32xbf16, #tpu.memory_space<vmem>>, vector<32x32xbf16>
    %87 = arith.truncf %85 : vector<16x32xf32> to vector<16x32xbf16>
    %cst_68 = arith.constant dense<0.000000e+00> : vector<16x32xf32>
    %88 = tpu.matmul %87, %86, %cst_68 {dimension_numbers = #tpu.dot_dimension_numbers<[1], [0], [0], [1], [0, 0, 1, 1], [], []>} : vector<16x32xbf16>, vector<32x32xbf16>, vector<16x32xf32> -> vector<16x32xf32>
    %c0_69 = arith.constant 0 : index
    %c0_70 = arith.constant 0 : index
    %89 = vector.load %arg31[%c0_69, %c0_70] : memref<5x32xbf16, #tpu.memory_space<vmem>>, vector<5x32xbf16>
    %90 = arith.truncf %28 : vector<16x5xf32> to vector<16x5xbf16>
    %cst_71 = arith.constant dense<0.000000e+00> : vector<16x32xf32>
    %91 = tpu.matmul %90, %89, %cst_71 {dimension_numbers = #tpu.dot_dimension_numbers<[1], [0], [0], [1], [0, 0, 1, 1], [], []>} : vector<16x5xbf16>, vector<5x32xbf16>, vector<16x32xf32> -> vector<16x32xf32>
    %92 = arith.addf %88, %91 : vector<16x32xf32>
    %c0_72 = arith.constant 0 : index
    %c0_73 = arith.constant 0 : index
    %93 = vector.load %arg28[%c0_72, %c0_73] : memref<1x32xf32, #tpu.memory_space<vmem>>, vector<1x32xf32>
    %94 = vector.broadcast %93 : vector<1x32xf32> to vector<16x32xf32>
    %95 = arith.addf %92, %94 : vector<16x32xf32>
    %cst_74 = arith.constant 0.000000e+00 : f32
    %96 = vector.broadcast %cst_74 : f32 to vector<16x32xf32>
    %97 = arith.cmpf ogt, %95, %96 : vector<16x32xf32>
    %cst_75 = arith.constant 0.000000e+00 : f32
    %98 = vector.broadcast %cst_75 : f32 to vector<16x32xf32>
    %99 = arith.minimumf %95, %98 : vector<16x32xf32>
    %100 = math.exp %99 : vector<16x32xf32>
    %cst_76 = arith.constant 1.000000e+00 : f32
    %101 = vector.broadcast %cst_76 : f32 to vector<16x32xf32>
    %102 = arith.subf %100, %101 : vector<16x32xf32>
    %103 = arith.select %97, %95, %102 : vector<16x32xi1>, vector<16x32xf32>
    %c0_77 = arith.constant 0 : index
    %c0_78 = arith.constant 0 : index
    %104 = vector.load %arg32[%c0_77, %c0_78] : memref<32x32xbf16, #tpu.memory_space<vmem>>, vector<32x32xbf16>
    %105 = arith.truncf %103 : vector<16x32xf32> to vector<16x32xbf16>
    %cst_79 = arith.constant dense<0.000000e+00> : vector<16x32xf32>
    %106 = tpu.matmul %105, %104, %cst_79 {dimension_numbers = #tpu.dot_dimension_numbers<[1], [0], [0], [1], [0, 0, 1, 1], [], []>} : vector<16x32xbf16>, vector<32x32xbf16>, vector<16x32xf32> -> vector<16x32xf32>
    %c0_80 = arith.constant 0 : index
    %c0_81 = arith.constant 0 : index
    %107 = vector.load %arg29[%c0_80, %c0_81] : memref<1x32xf32, #tpu.memory_space<vmem>>, vector<1x32xf32>
    %108 = vector.broadcast %107 : vector<1x32xf32> to vector<16x32xf32>
    %109 = arith.addf %106, %108 : vector<16x32xf32>
    %c0_82 = arith.constant 0 : index
    %c0_83 = arith.constant 0 : index
    %110 = vector.load %arg11[%c0_82, %c0_83] : memref<32x32xbf16, #tpu.memory_space<vmem>>, vector<32x32xbf16>
    %111 = arith.truncf %21 : vector<16x32xf32> to vector<16x32xbf16>
    %cst_84 = arith.constant dense<0.000000e+00> : vector<16x32xf32>
    %112 = tpu.matmul %111, %110, %cst_84 {dimension_numbers = #tpu.dot_dimension_numbers<[1], [0], [0], [1], [0, 0, 1, 1], [], []>} : vector<16x32xbf16>, vector<32x32xbf16>, vector<16x32xf32> -> vector<16x32xf32>
    %c0_85 = arith.constant 0 : index
    %c0_86 = arith.constant 0 : index
    %113 = vector.load %arg12[%c0_85, %c0_86] : memref<32x32xbf16, #tpu.memory_space<vmem>>, vector<32x32xbf16>
    %114 = arith.truncf %109 : vector<16x32xf32> to vector<16x32xbf16>
    %cst_87 = arith.constant dense<0.000000e+00> : vector<16x32xf32>
    %115 = tpu.matmul %114, %113, %cst_87 {dimension_numbers = #tpu.dot_dimension_numbers<[1], [0], [0], [1], [0, 0, 1, 1], [], []>} : vector<16x32xbf16>, vector<32x32xbf16>, vector<16x32xf32> -> vector<16x32xf32>
    %116 = arith.addf %112, %115 : vector<16x32xf32>
    %c0_88 = arith.constant 0 : index
    %c0_89 = arith.constant 0 : index
    %117 = vector.load %arg9[%c0_88, %c0_89] : memref<1x32xf32, #tpu.memory_space<vmem>>, vector<1x32xf32>
    %118 = vector.broadcast %117 : vector<1x32xf32> to vector<16x32xf32>
    %119 = arith.addf %116, %118 : vector<16x32xf32>
    %cst_90 = arith.constant 0.000000e+00 : f32
    %120 = vector.broadcast %cst_90 : f32 to vector<16x32xf32>
    %121 = arith.cmpf ogt, %119, %120 : vector<16x32xf32>
    %cst_91 = arith.constant 0.000000e+00 : f32
    %122 = vector.broadcast %cst_91 : f32 to vector<16x32xf32>
    %123 = arith.minimumf %119, %122 : vector<16x32xf32>
    %124 = math.exp %123 : vector<16x32xf32>
    %cst_92 = arith.constant 1.000000e+00 : f32
    %125 = vector.broadcast %cst_92 : f32 to vector<16x32xf32>
    %126 = arith.subf %124, %125 : vector<16x32xf32>
    %127 = arith.select %121, %119, %126 : vector<16x32xi1>, vector<16x32xf32>
    %c0_93 = arith.constant 0 : index
    %c0_94 = arith.constant 0 : index
    %128 = vector.load %arg13[%c0_93, %c0_94] : memref<32x32xbf16, #tpu.memory_space<vmem>>, vector<32x32xbf16>
    %129 = arith.truncf %127 : vector<16x32xf32> to vector<16x32xbf16>
    %cst_95 = arith.constant dense<0.000000e+00> : vector<16x32xf32>
    %130 = tpu.matmul %129, %128, %cst_95 {dimension_numbers = #tpu.dot_dimension_numbers<[1], [0], [0], [1], [0, 0, 1, 1], [], []>} : vector<16x32xbf16>, vector<32x32xbf16>, vector<16x32xf32> -> vector<16x32xf32>
    %c0_96 = arith.constant 0 : index
    %c0_97 = arith.constant 0 : index
    %131 = vector.load %arg10[%c0_96, %c0_97] : memref<1x32xf32, #tpu.memory_space<vmem>>, vector<1x32xf32>
    %132 = vector.broadcast %131 : vector<1x32xf32> to vector<16x32xf32>
    %133 = arith.addf %130, %132 : vector<16x32xf32>
    %cst_98 = arith.constant 2.000000e+00 : f32
    %134 = vector.broadcast %cst_98 : f32 to vector<16x32xf32>
    %135 = arith.mulf %134, %133 : vector<16x32xf32>
    %c0_99 = arith.constant 0 : index
    %c0_100 = arith.constant 0 : index
    %136 = vector.load %arg4[%c0_99, %c0_100] : memref<16x32xf32, #tpu.memory_space<vmem>>, vector<16x32xf32>
    %137 = arith.addf %135, %136 : vector<16x32xf32>
    %c0_101 = arith.constant 0 : index
    %c0_102 = arith.constant 0 : index
    %138 = vector.load %arg70[%c0_101, %c0_102] : memref<32x32xbf16, #tpu.memory_space<vmem>>, vector<32x32xbf16>
    %139 = arith.truncf %137 : vector<16x32xf32> to vector<16x32xbf16>
    %cst_103 = arith.constant dense<0.000000e+00> : vector<16x32xf32>
    %140 = tpu.matmul %139, %138, %cst_103 {dimension_numbers = #tpu.dot_dimension_numbers<[1], [0], [0], [1], [0, 0, 1, 1], [], []>} : vector<16x32xbf16>, vector<32x32xbf16>, vector<16x32xf32> -> vector<16x32xf32>
    %c0_104 = arith.constant 0 : index
    %c0_105 = arith.constant 0 : index
    %141 = vector.load %arg67[%c0_104, %c0_105] : memref<1x32xf32, #tpu.memory_space<vmem>>, vector<1x32xf32>
    %142 = vector.broadcast %141 : vector<1x32xf32> to vector<16x32xf32>
    %143 = arith.addf %140, %142 : vector<16x32xf32>
    %c0_106 = arith.constant 0 : index
    %c0_107 = arith.constant 0 : index
    %144 = vector.load %arg68[%c0_106, %c0_107] : memref<32x64xbf16, #tpu.memory_space<vmem>>, vector<32x64xbf16>
    %145 = arith.truncf %137 : vector<16x32xf32> to vector<16x32xbf16>
    %cst_108 = arith.constant dense<0.000000e+00> : vector<16x64xf32>
    %146 = tpu.matmul %145, %144, %cst_108 {dimension_numbers = #tpu.dot_dimension_numbers<[1], [0], [0], [1], [0, 0, 1, 1], [], []>} : vector<16x32xbf16>, vector<32x64xbf16>, vector<16x64xf32> -> vector<16x64xf32>
    %c0_109 = arith.constant 0 : index
    %c0_110 = arith.constant 0 : index
    %147 = vector.load %arg65[%c0_109, %c0_110] : memref<1x64xf32, #tpu.memory_space<vmem>>, vector<1x64xf32>
    %148 = vector.broadcast %147 : vector<1x64xf32> to vector<16x64xf32>
    %149 = arith.addf %146, %148 : vector<16x64xf32>
    %150 = vector.extract_strided_slice %143 {offsets = [0, 0], sizes = [16, 8], strides = [1, 1]} : vector<16x32xf32> to vector<16x8xf32>
    %151 = vector.extract_strided_slice %149 {offsets = [0, 0], sizes = [16, 8], strides = [1, 1]} : vector<16x64xf32> to vector<16x8xf32>
    %152 = vector.extract_strided_slice %149 {offsets = [0, 32], sizes = [16, 8], strides = [1, 1]} : vector<16x64xf32> to vector<16x8xf32>
    %153 = arith.truncf %150 : vector<16x8xf32> to vector<16x8xbf16>
    %154 = arith.truncf %151 : vector<16x8xf32> to vector<16x8xbf16>
    %cst_111 = arith.constant dense<0.000000e+00> : vector<16x16xf32>
    %155 = tpu.matmul %153, %154, %cst_111 {dimension_numbers = #tpu.dot_dimension_numbers<[1], [1], [0], [0], [0, 0, 1, 0], [], []>} : vector<16x8xbf16>, vector<16x8xbf16>, vector<16x16xf32> -> vector<16x16xf32>
    %cst_112 = arith.constant 0.353553385 : f32
    %156 = vector.broadcast %cst_112 : f32 to vector<16x16xf32>
    %157 = arith.mulf %155, %156 : vector<16x16xf32>
    %158 = arith.addf %157, %0 : vector<16x16xf32>
    %cst_113 = arith.constant dense<0xFF800000> : vector<16xf32>
    %159 = vector.multi_reduction <maximumf>, %158, %cst_113 [1] : vector<16x16xf32> to vector<16xf32>
    %160 = vector.shape_cast %159 : vector<16xf32> to vector<16x1xf32>
    %161 = vector.broadcast %160 : vector<16x1xf32> to vector<16x16xf32>
    %162 = arith.subf %158, %161 : vector<16x16xf32>
    %163 = math.exp %162 : vector<16x16xf32>
    %cst_114 = arith.constant dense<0.000000e+00> : vector<16xf32>
    %164 = vector.multi_reduction <add>, %163, %cst_114 [1] : vector<16x16xf32> to vector<16xf32>
    %165 = vector.shape_cast %164 : vector<16xf32> to vector<16x1xf32>
    %166 = tpu.reciprocal %165 {approx = true} : vector<16x1xf32> -> vector<16x1xf32>
    %167 = vector.broadcast %166 : vector<16x1xf32> to vector<16x16xf32>
    %168 = arith.mulf %163, %167 : vector<16x16xf32>
    %169 = arith.truncf %168 : vector<16x16xf32> to vector<16x16xbf16>
    %170 = arith.truncf %152 : vector<16x8xf32> to vector<16x8xbf16>
    %cst_115 = arith.constant dense<0.000000e+00> : vector<16x8xf32>
    %171 = tpu.matmul %169, %170, %cst_115 {dimension_numbers = #tpu.dot_dimension_numbers<[1], [0], [0], [1], [0, 0, 1, 1], [], []>} : vector<16x16xbf16>, vector<16x8xbf16>, vector<16x8xf32> -> vector<16x8xf32>
    %172 = vector.extract_strided_slice %143 {offsets = [0, 8], sizes = [16, 8], strides = [1, 1]} : vector<16x32xf32> to vector<16x8xf32>
    %173 = vector.extract_strided_slice %149 {offsets = [0, 8], sizes = [16, 8], strides = [1, 1]} : vector<16x64xf32> to vector<16x8xf32>
    %174 = vector.extract_strided_slice %149 {offsets = [0, 40], sizes = [16, 8], strides = [1, 1]} : vector<16x64xf32> to vector<16x8xf32>
    %175 = arith.truncf %172 : vector<16x8xf32> to vector<16x8xbf16>
    %176 = arith.truncf %173 : vector<16x8xf32> to vector<16x8xbf16>
    %cst_116 = arith.constant dense<0.000000e+00> : vector<16x16xf32>
    %177 = tpu.matmul %175, %176, %cst_116 {dimension_numbers = #tpu.dot_dimension_numbers<[1], [1], [0], [0], [0, 0, 1, 0], [], []>} : vector<16x8xbf16>, vector<16x8xbf16>, vector<16x16xf32> -> vector<16x16xf32>
    %cst_117 = arith.constant 0.353553385 : f32
    %178 = vector.broadcast %cst_117 : f32 to vector<16x16xf32>
    %179 = arith.mulf %177, %178 : vector<16x16xf32>
    %180 = arith.addf %179, %0 : vector<16x16xf32>
    %cst_118 = arith.constant dense<0xFF800000> : vector<16xf32>
    %181 = vector.multi_reduction <maximumf>, %180, %cst_118 [1] : vector<16x16xf32> to vector<16xf32>
    %182 = vector.shape_cast %181 : vector<16xf32> to vector<16x1xf32>
    %183 = vector.broadcast %182 : vector<16x1xf32> to vector<16x16xf32>
    %184 = arith.subf %180, %183 : vector<16x16xf32>
    %185 = math.exp %184 : vector<16x16xf32>
    %cst_119 = arith.constant dense<0.000000e+00> : vector<16xf32>
    %186 = vector.multi_reduction <add>, %185, %cst_119 [1] : vector<16x16xf32> to vector<16xf32>
    %187 = vector.shape_cast %186 : vector<16xf32> to vector<16x1xf32>
    %188 = tpu.reciprocal %187 {approx = true} : vector<16x1xf32> -> vector<16x1xf32>
    %189 = vector.broadcast %188 : vector<16x1xf32> to vector<16x16xf32>
    %190 = arith.mulf %185, %189 : vector<16x16xf32>
    %191 = arith.truncf %190 : vector<16x16xf32> to vector<16x16xbf16>
    %192 = arith.truncf %174 : vector<16x8xf32> to vector<16x8xbf16>
    %cst_120 = arith.constant dense<0.000000e+00> : vector<16x8xf32>
    %193 = tpu.matmul %191, %192, %cst_120 {dimension_numbers = #tpu.dot_dimension_numbers<[1], [0], [0], [1], [0, 0, 1, 1], [], []>} : vector<16x16xbf16>, vector<16x8xbf16>, vector<16x8xf32> -> vector<16x8xf32>
    %194 = vector.extract_strided_slice %143 {offsets = [0, 16], sizes = [16, 8], strides = [1, 1]} : vector<16x32xf32> to vector<16x8xf32>
    %195 = vector.extract_strided_slice %149 {offsets = [0, 16], sizes = [16, 8], strides = [1, 1]} : vector<16x64xf32> to vector<16x8xf32>
    %196 = vector.extract_strided_slice %149 {offsets = [0, 48], sizes = [16, 8], strides = [1, 1]} : vector<16x64xf32> to vector<16x8xf32>
    %197 = arith.truncf %194 : vector<16x8xf32> to vector<16x8xbf16>
    %198 = arith.truncf %195 : vector<16x8xf32> to vector<16x8xbf16>
    %cst_121 = arith.constant dense<0.000000e+00> : vector<16x16xf32>
    %199 = tpu.matmul %197, %198, %cst_121 {dimension_numbers = #tpu.dot_dimension_numbers<[1], [1], [0], [0], [0, 0, 1, 0], [], []>} : vector<16x8xbf16>, vector<16x8xbf16>, vector<16x16xf32> -> vector<16x16xf32>
    %cst_122 = arith.constant 0.353553385 : f32
    %200 = vector.broadcast %cst_122 : f32 to vector<16x16xf32>
    %201 = arith.mulf %199, %200 : vector<16x16xf32>
    %202 = arith.addf %201, %0 : vector<16x16xf32>
    %cst_123 = arith.constant dense<0xFF800000> : vector<16xf32>
    %203 = vector.multi_reduction <maximumf>, %202, %cst_123 [1] : vector<16x16xf32> to vector<16xf32>
    %204 = vector.shape_cast %203 : vector<16xf32> to vector<16x1xf32>
    %205 = vector.broadcast %204 : vector<16x1xf32> to vector<16x16xf32>
    %206 = arith.subf %202, %205 : vector<16x16xf32>
    %207 = math.exp %206 : vector<16x16xf32>
    %cst_124 = arith.constant dense<0.000000e+00> : vector<16xf32>
    %208 = vector.multi_reduction <add>, %207, %cst_124 [1] : vector<16x16xf32> to vector<16xf32>
    %209 = vector.shape_cast %208 : vector<16xf32> to vector<16x1xf32>
    %210 = tpu.reciprocal %209 {approx = true} : vector<16x1xf32> -> vector<16x1xf32>
    %211 = vector.broadcast %210 : vector<16x1xf32> to vector<16x16xf32>
    %212 = arith.mulf %207, %211 : vector<16x16xf32>
    %213 = arith.truncf %212 : vector<16x16xf32> to vector<16x16xbf16>
    %214 = arith.truncf %196 : vector<16x8xf32> to vector<16x8xbf16>
    %cst_125 = arith.constant dense<0.000000e+00> : vector<16x8xf32>
    %215 = tpu.matmul %213, %214, %cst_125 {dimension_numbers = #tpu.dot_dimension_numbers<[1], [0], [0], [1], [0, 0, 1, 1], [], []>} : vector<16x16xbf16>, vector<16x8xbf16>, vector<16x8xf32> -> vector<16x8xf32>
    %216 = vector.extract_strided_slice %143 {offsets = [0, 24], sizes = [16, 8], strides = [1, 1]} : vector<16x32xf32> to vector<16x8xf32>
    %217 = vector.extract_strided_slice %149 {offsets = [0, 24], sizes = [16, 8], strides = [1, 1]} : vector<16x64xf32> to vector<16x8xf32>
    %218 = vector.extract_strided_slice %149 {offsets = [0, 56], sizes = [16, 8], strides = [1, 1]} : vector<16x64xf32> to vector<16x8xf32>
    %219 = arith.truncf %216 : vector<16x8xf32> to vector<16x8xbf16>
    %220 = arith.truncf %217 : vector<16x8xf32> to vector<16x8xbf16>
    %cst_126 = arith.constant dense<0.000000e+00> : vector<16x16xf32>
    %221 = tpu.matmul %219, %220, %cst_126 {dimension_numbers = #tpu.dot_dimension_numbers<[1], [1], [0], [0], [0, 0, 1, 0], [], []>} : vector<16x8xbf16>, vector<16x8xbf16>, vector<16x16xf32> -> vector<16x16xf32>
    %cst_127 = arith.constant 0.353553385 : f32
    %222 = vector.broadcast %cst_127 : f32 to vector<16x16xf32>
    %223 = arith.mulf %221, %222 : vector<16x16xf32>
    %224 = arith.addf %223, %0 : vector<16x16xf32>
    %cst_128 = arith.constant dense<0xFF800000> : vector<16xf32>
    %225 = vector.multi_reduction <maximumf>, %224, %cst_128 [1] : vector<16x16xf32> to vector<16xf32>
    %226 = vector.shape_cast %225 : vector<16xf32> to vector<16x1xf32>
    %227 = vector.broadcast %226 : vector<16x1xf32> to vector<16x16xf32>
    %228 = arith.subf %224, %227 : vector<16x16xf32>
    %229 = math.exp %228 : vector<16x16xf32>
    %cst_129 = arith.constant dense<0.000000e+00> : vector<16xf32>
    %230 = vector.multi_reduction <add>, %229, %cst_129 [1] : vector<16x16xf32> to vector<16xf32>
    %231 = vector.shape_cast %230 : vector<16xf32> to vector<16x1xf32>
    %232 = tpu.reciprocal %231 {approx = true} : vector<16x1xf32> -> vector<16x1xf32>
    %233 = vector.broadcast %232 : vector<16x1xf32> to vector<16x16xf32>
    %234 = arith.mulf %229, %233 : vector<16x16xf32>
    %235 = arith.truncf %234 : vector<16x16xf32> to vector<16x16xbf16>
    %236 = arith.truncf %218 : vector<16x8xf32> to vector<16x8xbf16>
    %cst_130 = arith.constant dense<0.000000e+00> : vector<16x8xf32>
    %237 = tpu.matmul %235, %236, %cst_130 {dimension_numbers = #tpu.dot_dimension_numbers<[1], [0], [0], [1], [0, 0, 1, 1], [], []>} : vector<16x16xbf16>, vector<16x8xbf16>, vector<16x8xf32> -> vector<16x8xf32>
    %238 = tpu.concatenate %171, %193, %215, %237 in 1 : vector<16x8xf32>, vector<16x8xf32>, vector<16x8xf32>, vector<16x8xf32> -> vector<16x32xf32>
    %c0_131 = arith.constant 0 : index
    %c0_132 = arith.constant 0 : index
    %239 = vector.load %arg69[%c0_131, %c0_132] : memref<32x32xbf16, #tpu.memory_space<vmem>>, vector<32x32xbf16>
    %240 = arith.truncf %238 : vector<16x32xf32> to vector<16x32xbf16>
    %cst_133 = arith.constant dense<0.000000e+00> : vector<16x32xf32>
    %241 = tpu.matmul %240, %239, %cst_133 {dimension_numbers = #tpu.dot_dimension_numbers<[1], [0], [0], [1], [0, 0, 1, 1], [], []>} : vector<16x32xbf16>, vector<32x32xbf16>, vector<16x32xf32> -> vector<16x32xf32>
    %c0_134 = arith.constant 0 : index
    %c0_135 = arith.constant 0 : index
    %242 = vector.load %arg66[%c0_134, %c0_135] : memref<1x32xf32, #tpu.memory_space<vmem>>, vector<1x32xf32>
    %243 = vector.broadcast %242 : vector<1x32xf32> to vector<16x32xf32>
    %244 = arith.addf %241, %243 : vector<16x32xf32>
    %245 = arith.addf %137, %244 : vector<16x32xf32>
    %c0_136 = arith.constant 0 : index
    %c0_137 = arith.constant 0 : index
    %246 = vector.load %arg62[%c0_136, %c0_137] : memref<1x32xf32, #tpu.memory_space<vmem>>, vector<1x32xf32>
    %c0_138 = arith.constant 0 : index
    %c0_139 = arith.constant 0 : index
    %247 = vector.load %arg61[%c0_138, %c0_139] : memref<1x32xf32, #tpu.memory_space<vmem>>, vector<1x32xf32>
    %cst_140 = arith.constant dense<0.000000e+00> : vector<16xf32>
    %248 = vector.multi_reduction <add>, %245, %cst_140 [1] : vector<16x32xf32> to vector<16xf32>
    %249 = vector.shape_cast %248 : vector<16xf32> to vector<16x1xf32>
    %cst_141 = arith.constant 3.200000e+01 : f32
    %250 = vector.broadcast %cst_141 : f32 to vector<16x1xf32>
    %251 = arith.divf %249, %250 : vector<16x1xf32>
    %252 = vector.broadcast %251 : vector<16x1xf32> to vector<16x32xf32>
    %253 = arith.subf %245, %252 : vector<16x32xf32>
    %254 = arith.mulf %253, %253 : vector<16x32xf32>
    %cst_142 = arith.constant dense<0.000000e+00> : vector<16xf32>
    %255 = vector.multi_reduction <add>, %254, %cst_142 [1] : vector<16x32xf32> to vector<16xf32>
    %256 = vector.shape_cast %255 : vector<16xf32> to vector<16x1xf32>
    %cst_143 = arith.constant 3.200000e+01 : f32
    %257 = vector.broadcast %cst_143 : f32 to vector<16x1xf32>
    %258 = arith.divf %256, %257 : vector<16x1xf32>
    %cst_144 = arith.constant 9.99999974E-6 : f32
    %259 = vector.broadcast %cst_144 : f32 to vector<16x1xf32>
    %260 = arith.addf %258, %259 : vector<16x1xf32>
    %261 = math.rsqrt %260 : vector<16x1xf32>
    %262 = vector.broadcast %261 : vector<16x1xf32> to vector<16x32xf32>
    %263 = arith.mulf %253, %262 : vector<16x32xf32>
    %264 = vector.broadcast %246 : vector<1x32xf32> to vector<16x32xf32>
    %265 = arith.mulf %263, %264 : vector<16x32xf32>
    %266 = vector.broadcast %247 : vector<1x32xf32> to vector<16x32xf32>
    %267 = arith.addf %265, %266 : vector<16x32xf32>
    %c0_145 = arith.constant 0 : index
    %c0_146 = arith.constant 0 : index
    %268 = vector.load %arg59[%c0_145, %c0_146] : memref<32x2048xbf16, #tpu.memory_space<vmem>>, vector<32x2048xbf16>
    %269 = arith.truncf %267 : vector<16x32xf32> to vector<16x32xbf16>
    %cst_147 = arith.constant dense<0.000000e+00> : vector<16x2048xf32>
    %270 = tpu.matmul %269, %268, %cst_147 {dimension_numbers = #tpu.dot_dimension_numbers<[1], [0], [0], [1], [0, 0, 1, 1], [], []>} : vector<16x32xbf16>, vector<32x2048xbf16>, vector<16x2048xf32> -> vector<16x2048xf32>
    %c0_148 = arith.constant 0 : index
    %c0_149 = arith.constant 0 : index
    %271 = vector.load %arg57[%c0_148, %c0_149] : memref<1x2048xf32, #tpu.memory_space<vmem>>, vector<1x2048xf32>
    %272 = vector.broadcast %271 : vector<1x2048xf32> to vector<16x2048xf32>
    %273 = arith.addf %270, %272 : vector<16x2048xf32>
    %cst_150 = arith.constant 0.000000e+00 : f32
    %274 = vector.broadcast %cst_150 : f32 to vector<16x2048xf32>
    %275 = arith.maximumf %273, %274 : vector<16x2048xf32>
    %c0_151 = arith.constant 0 : index
    %c0_152 = arith.constant 0 : index
    %276 = vector.load %arg60[%c0_151, %c0_152] : memref<2048x32xbf16, #tpu.memory_space<vmem>>, vector<2048x32xbf16>
    %277 = arith.truncf %275 : vector<16x2048xf32> to vector<16x2048xbf16>
    %cst_153 = arith.constant dense<0.000000e+00> : vector<16x32xf32>
    %278 = tpu.matmul %277, %276, %cst_153 {dimension_numbers = #tpu.dot_dimension_numbers<[1], [0], [0], [1], [0, 0, 1, 1], [], []>} : vector<16x2048xbf16>, vector<2048x32xbf16>, vector<16x32xf32> -> vector<16x32xf32>
    %c0_154 = arith.constant 0 : index
    %c0_155 = arith.constant 0 : index
    %279 = vector.load %arg58[%c0_154, %c0_155] : memref<1x32xf32, #tpu.memory_space<vmem>>, vector<1x32xf32>
    %280 = vector.broadcast %279 : vector<1x32xf32> to vector<16x32xf32>
    %281 = arith.addf %278, %280 : vector<16x32xf32>
    %282 = arith.addf %267, %281 : vector<16x32xf32>
    %c0_156 = arith.constant 0 : index
    %c0_157 = arith.constant 0 : index
    %283 = vector.load %arg64[%c0_156, %c0_157] : memref<1x32xf32, #tpu.memory_space<vmem>>, vector<1x32xf32>
    %c0_158 = arith.constant 0 : index
    %c0_159 = arith.constant 0 : index
    %284 = vector.load %arg63[%c0_158, %c0_159] : memref<1x32xf32, #tpu.memory_space<vmem>>, vector<1x32xf32>
    %cst_160 = arith.constant dense<0.000000e+00> : vector<16xf32>
    %285 = vector.multi_reduction <add>, %282, %cst_160 [1] : vector<16x32xf32> to vector<16xf32>
    %286 = vector.shape_cast %285 : vector<16xf32> to vector<16x1xf32>
    %cst_161 = arith.constant 3.200000e+01 : f32
    %287 = vector.broadcast %cst_161 : f32 to vector<16x1xf32>
    %288 = arith.divf %286, %287 : vector<16x1xf32>
    %289 = vector.broadcast %288 : vector<16x1xf32> to vector<16x32xf32>
    %290 = arith.subf %282, %289 : vector<16x32xf32>
    %291 = arith.mulf %290, %290 : vector<16x32xf32>
    %cst_162 = arith.constant dense<0.000000e+00> : vector<16xf32>
    %292 = vector.multi_reduction <add>, %291, %cst_162 [1] : vector<16x32xf32> to vector<16xf32>
    %293 = vector.shape_cast %292 : vector<16xf32> to vector<16x1xf32>
    %cst_163 = arith.constant 3.200000e+01 : f32
    %294 = vector.broadcast %cst_163 : f32 to vector<16x1xf32>
    %295 = arith.divf %293, %294 : vector<16x1xf32>
    %cst_164 = arith.constant 9.99999974E-6 : f32
    %296 = vector.broadcast %cst_164 : f32 to vector<16x1xf32>
    %297 = arith.addf %295, %296 : vector<16x1xf32>
    %298 = math.rsqrt %297 : vector<16x1xf32>
    %299 = vector.broadcast %298 : vector<16x1xf32> to vector<16x32xf32>
    %300 = arith.mulf %290, %299 : vector<16x32xf32>
    %301 = vector.broadcast %283 : vector<1x32xf32> to vector<16x32xf32>
    %302 = arith.mulf %300, %301 : vector<16x32xf32>
    %303 = vector.broadcast %284 : vector<1x32xf32> to vector<16x32xf32>
    %304 = arith.addf %302, %303 : vector<16x32xf32>
    %c0_165 = arith.constant 0 : index
    %c0_166 = arith.constant 0 : index
    %305 = vector.load %arg72[%c0_165, %c0_166] : memref<1x32xf32, #tpu.memory_space<vmem>>, vector<1x32xf32>
    %c0_167 = arith.constant 0 : index
    %c0_168 = arith.constant 0 : index
    %306 = vector.load %arg71[%c0_167, %c0_168] : memref<1x32xf32, #tpu.memory_space<vmem>>, vector<1x32xf32>
    %cst_169 = arith.constant dense<0.000000e+00> : vector<16xf32>
    %307 = vector.multi_reduction <add>, %304, %cst_169 [1] : vector<16x32xf32> to vector<16xf32>
    %308 = vector.shape_cast %307 : vector<16xf32> to vector<16x1xf32>
    %cst_170 = arith.constant 3.200000e+01 : f32
    %309 = vector.broadcast %cst_170 : f32 to vector<16x1xf32>
    %310 = arith.divf %308, %309 : vector<16x1xf32>
    %311 = vector.broadcast %310 : vector<16x1xf32> to vector<16x32xf32>
    %312 = arith.subf %304, %311 : vector<16x32xf32>
    %313 = arith.mulf %312, %312 : vector<16x32xf32>
    %cst_171 = arith.constant dense<0.000000e+00> : vector<16xf32>
    %314 = vector.multi_reduction <add>, %313, %cst_171 [1] : vector<16x32xf32> to vector<16xf32>
    %315 = vector.shape_cast %314 : vector<16xf32> to vector<16x1xf32>
    %cst_172 = arith.constant 3.200000e+01 : f32
    %316 = vector.broadcast %cst_172 : f32 to vector<16x1xf32>
    %317 = arith.divf %315, %316 : vector<16x1xf32>
    %cst_173 = arith.constant 9.99999974E-6 : f32
    %318 = vector.broadcast %cst_173 : f32 to vector<16x1xf32>
    %319 = arith.addf %317, %318 : vector<16x1xf32>
    %320 = math.rsqrt %319 : vector<16x1xf32>
    %321 = vector.broadcast %320 : vector<16x1xf32> to vector<16x32xf32>
    %322 = arith.mulf %312, %321 : vector<16x32xf32>
    %323 = vector.broadcast %305 : vector<1x32xf32> to vector<16x32xf32>
    %324 = arith.mulf %322, %323 : vector<16x32xf32>
    %325 = vector.broadcast %306 : vector<1x32xf32> to vector<16x32xf32>
    %326 = arith.addf %324, %325 : vector<16x32xf32>
    %c0_174 = arith.constant 0 : index
    %c0_175 = arith.constant 0 : index
    %327 = vector.load %arg54[%c0_174, %c0_175] : memref<32x32xbf16, #tpu.memory_space<vmem>>, vector<32x32xbf16>
    %328 = arith.truncf %133 : vector<16x32xf32> to vector<16x32xbf16>
    %cst_176 = arith.constant dense<0.000000e+00> : vector<16x32xf32>
    %329 = tpu.matmul %328, %327, %cst_176 {dimension_numbers = #tpu.dot_dimension_numbers<[1], [0], [0], [1], [0, 0, 1, 1], [], []>} : vector<16x32xbf16>, vector<32x32xbf16>, vector<16x32xf32> -> vector<16x32xf32>
    %c0_177 = arith.constant 0 : index
    %c0_178 = arith.constant 0 : index
    %330 = vector.load %arg51[%c0_177, %c0_178] : memref<1x32xf32, #tpu.memory_space<vmem>>, vector<1x32xf32>
    %331 = vector.broadcast %330 : vector<1x32xf32> to vector<16x32xf32>
    %332 = arith.addf %329, %331 : vector<16x32xf32>
    %c0_179 = arith.constant 0 : index
    %c0_180 = arith.constant 0 : index
    %333 = vector.load %arg52[%c0_179, %c0_180] : memref<32x64xbf16, #tpu.memory_space<vmem>>, vector<32x64xbf16>
    %334 = arith.truncf %133 : vector<16x32xf32> to vector<16x32xbf16>
    %cst_181 = arith.constant dense<0.000000e+00> : vector<16x64xf32>
    %335 = tpu.matmul %334, %333, %cst_181 {dimension_numbers = #tpu.dot_dimension_numbers<[1], [0], [0], [1], [0, 0, 1, 1], [], []>} : vector<16x32xbf16>, vector<32x64xbf16>, vector<16x64xf32> -> vector<16x64xf32>
    %c0_182 = arith.constant 0 : index
    %c0_183 = arith.constant 0 : index
    %336 = vector.load %arg49[%c0_182, %c0_183] : memref<1x64xf32, #tpu.memory_space<vmem>>, vector<1x64xf32>
    %337 = vector.broadcast %336 : vector<1x64xf32> to vector<16x64xf32>
    %338 = arith.addf %335, %337 : vector<16x64xf32>
    %339 = vector.extract_strided_slice %332 {offsets = [0, 0], sizes = [16, 8], strides = [1, 1]} : vector<16x32xf32> to vector<16x8xf32>
    %340 = vector.extract_strided_slice %338 {offsets = [0, 0], sizes = [16, 8], strides = [1, 1]} : vector<16x64xf32> to vector<16x8xf32>
    %341 = vector.extract_strided_slice %338 {offsets = [0, 32], sizes = [16, 8], strides = [1, 1]} : vector<16x64xf32> to vector<16x8xf32>
    %342 = arith.truncf %339 : vector<16x8xf32> to vector<16x8xbf16>
    %343 = arith.truncf %340 : vector<16x8xf32> to vector<16x8xbf16>
    %cst_184 = arith.constant dense<0.000000e+00> : vector<16x16xf32>
    %344 = tpu.matmul %342, %343, %cst_184 {dimension_numbers = #tpu.dot_dimension_numbers<[1], [1], [0], [0], [0, 0, 1, 0], [], []>} : vector<16x8xbf16>, vector<16x8xbf16>, vector<16x16xf32> -> vector<16x16xf32>
    %cst_185 = arith.constant 0.353553385 : f32
    %345 = vector.broadcast %cst_185 : f32 to vector<16x16xf32>
    %346 = arith.mulf %344, %345 : vector<16x16xf32>
    %347 = arith.addf %346, %0 : vector<16x16xf32>
    %cst_186 = arith.constant dense<0xFF800000> : vector<16xf32>
    %348 = vector.multi_reduction <maximumf>, %347, %cst_186 [1] : vector<16x16xf32> to vector<16xf32>
    %349 = vector.shape_cast %348 : vector<16xf32> to vector<16x1xf32>
    %350 = vector.broadcast %349 : vector<16x1xf32> to vector<16x16xf32>
    %351 = arith.subf %347, %350 : vector<16x16xf32>
    %352 = math.exp %351 : vector<16x16xf32>
    %cst_187 = arith.constant dense<0.000000e+00> : vector<16xf32>
    %353 = vector.multi_reduction <add>, %352, %cst_187 [1] : vector<16x16xf32> to vector<16xf32>
    %354 = vector.shape_cast %353 : vector<16xf32> to vector<16x1xf32>
    %355 = tpu.reciprocal %354 {approx = true} : vector<16x1xf32> -> vector<16x1xf32>
    %356 = vector.broadcast %355 : vector<16x1xf32> to vector<16x16xf32>
    %357 = arith.mulf %352, %356 : vector<16x16xf32>
    %358 = arith.truncf %357 : vector<16x16xf32> to vector<16x16xbf16>
    %359 = arith.truncf %341 : vector<16x8xf32> to vector<16x8xbf16>
    %cst_188 = arith.constant dense<0.000000e+00> : vector<16x8xf32>
    %360 = tpu.matmul %358, %359, %cst_188 {dimension_numbers = #tpu.dot_dimension_numbers<[1], [0], [0], [1], [0, 0, 1, 1], [], []>} : vector<16x16xbf16>, vector<16x8xbf16>, vector<16x8xf32> -> vector<16x8xf32>
    %361 = vector.extract_strided_slice %332 {offsets = [0, 8], sizes = [16, 8], strides = [1, 1]} : vector<16x32xf32> to vector<16x8xf32>
    %362 = vector.extract_strided_slice %338 {offsets = [0, 8], sizes = [16, 8], strides = [1, 1]} : vector<16x64xf32> to vector<16x8xf32>
    %363 = vector.extract_strided_slice %338 {offsets = [0, 40], sizes = [16, 8], strides = [1, 1]} : vector<16x64xf32> to vector<16x8xf32>
    %364 = arith.truncf %361 : vector<16x8xf32> to vector<16x8xbf16>
    %365 = arith.truncf %362 : vector<16x8xf32> to vector<16x8xbf16>
    %cst_189 = arith.constant dense<0.000000e+00> : vector<16x16xf32>
    %366 = tpu.matmul %364, %365, %cst_189 {dimension_numbers = #tpu.dot_dimension_numbers<[1], [1], [0], [0], [0, 0, 1, 0], [], []>} : vector<16x8xbf16>, vector<16x8xbf16>, vector<16x16xf32> -> vector<16x16xf32>
    %cst_190 = arith.constant 0.353553385 : f32
    %367 = vector.broadcast %cst_190 : f32 to vector<16x16xf32>
    %368 = arith.mulf %366, %367 : vector<16x16xf32>
    %369 = arith.addf %368, %0 : vector<16x16xf32>
    %cst_191 = arith.constant dense<0xFF800000> : vector<16xf32>
    %370 = vector.multi_reduction <maximumf>, %369, %cst_191 [1] : vector<16x16xf32> to vector<16xf32>
    %371 = vector.shape_cast %370 : vector<16xf32> to vector<16x1xf32>
    %372 = vector.broadcast %371 : vector<16x1xf32> to vector<16x16xf32>
    %373 = arith.subf %369, %372 : vector<16x16xf32>
    %374 = math.exp %373 : vector<16x16xf32>
    %cst_192 = arith.constant dense<0.000000e+00> : vector<16xf32>
    %375 = vector.multi_reduction <add>, %374, %cst_192 [1] : vector<16x16xf32> to vector<16xf32>
    %376 = vector.shape_cast %375 : vector<16xf32> to vector<16x1xf32>
    %377 = tpu.reciprocal %376 {approx = true} : vector<16x1xf32> -> vector<16x1xf32>
    %378 = vector.broadcast %377 : vector<16x1xf32> to vector<16x16xf32>
    %379 = arith.mulf %374, %378 : vector<16x16xf32>
    %380 = arith.truncf %379 : vector<16x16xf32> to vector<16x16xbf16>
    %381 = arith.truncf %363 : vector<16x8xf32> to vector<16x8xbf16>
    %cst_193 = arith.constant dense<0.000000e+00> : vector<16x8xf32>
    %382 = tpu.matmul %380, %381, %cst_193 {dimension_numbers = #tpu.dot_dimension_numbers<[1], [0], [0], [1], [0, 0, 1, 1], [], []>} : vector<16x16xbf16>, vector<16x8xbf16>, vector<16x8xf32> -> vector<16x8xf32>
    %383 = vector.extract_strided_slice %332 {offsets = [0, 16], sizes = [16, 8], strides = [1, 1]} : vector<16x32xf32> to vector<16x8xf32>
    %384 = vector.extract_strided_slice %338 {offsets = [0, 16], sizes = [16, 8], strides = [1, 1]} : vector<16x64xf32> to vector<16x8xf32>
    %385 = vector.extract_strided_slice %338 {offsets = [0, 48], sizes = [16, 8], strides = [1, 1]} : vector<16x64xf32> to vector<16x8xf32>
    %386 = arith.truncf %383 : vector<16x8xf32> to vector<16x8xbf16>
    %387 = arith.truncf %384 : vector<16x8xf32> to vector<16x8xbf16>
    %cst_194 = arith.constant dense<0.000000e+00> : vector<16x16xf32>
    %388 = tpu.matmul %386, %387, %cst_194 {dimension_numbers = #tpu.dot_dimension_numbers<[1], [1], [0], [0], [0, 0, 1, 0], [], []>} : vector<16x8xbf16>, vector<16x8xbf16>, vector<16x16xf32> -> vector<16x16xf32>
    %cst_195 = arith.constant 0.353553385 : f32
    %389 = vector.broadcast %cst_195 : f32 to vector<16x16xf32>
    %390 = arith.mulf %388, %389 : vector<16x16xf32>
    %391 = arith.addf %390, %0 : vector<16x16xf32>
    %cst_196 = arith.constant dense<0xFF800000> : vector<16xf32>
    %392 = vector.multi_reduction <maximumf>, %391, %cst_196 [1] : vector<16x16xf32> to vector<16xf32>
    %393 = vector.shape_cast %392 : vector<16xf32> to vector<16x1xf32>
    %394 = vector.broadcast %393 : vector<16x1xf32> to vector<16x16xf32>
    %395 = arith.subf %391, %394 : vector<16x16xf32>
    %396 = math.exp %395 : vector<16x16xf32>
    %cst_197 = arith.constant dense<0.000000e+00> : vector<16xf32>
    %397 = vector.multi_reduction <add>, %396, %cst_197 [1] : vector<16x16xf32> to vector<16xf32>
    %398 = vector.shape_cast %397 : vector<16xf32> to vector<16x1xf32>
    %399 = tpu.reciprocal %398 {approx = true} : vector<16x1xf32> -> vector<16x1xf32>
    %400 = vector.broadcast %399 : vector<16x1xf32> to vector<16x16xf32>
    %401 = arith.mulf %396, %400 : vector<16x16xf32>
    %402 = arith.truncf %401 : vector<16x16xf32> to vector<16x16xbf16>
    %403 = arith.truncf %385 : vector<16x8xf32> to vector<16x8xbf16>
    %cst_198 = arith.constant dense<0.000000e+00> : vector<16x8xf32>
    %404 = tpu.matmul %402, %403, %cst_198 {dimension_numbers = #tpu.dot_dimension_numbers<[1], [0], [0], [1], [0, 0, 1, 1], [], []>} : vector<16x16xbf16>, vector<16x8xbf16>, vector<16x8xf32> -> vector<16x8xf32>
    %405 = vector.extract_strided_slice %332 {offsets = [0, 24], sizes = [16, 8], strides = [1, 1]} : vector<16x32xf32> to vector<16x8xf32>
    %406 = vector.extract_strided_slice %338 {offsets = [0, 24], sizes = [16, 8], strides = [1, 1]} : vector<16x64xf32> to vector<16x8xf32>
    %407 = vector.extract_strided_slice %338 {offsets = [0, 56], sizes = [16, 8], strides = [1, 1]} : vector<16x64xf32> to vector<16x8xf32>
    %408 = arith.truncf %405 : vector<16x8xf32> to vector<16x8xbf16>
    %409 = arith.truncf %406 : vector<16x8xf32> to vector<16x8xbf16>
    %cst_199 = arith.constant dense<0.000000e+00> : vector<16x16xf32>
    %410 = tpu.matmul %408, %409, %cst_199 {dimension_numbers = #tpu.dot_dimension_numbers<[1], [1], [0], [0], [0, 0, 1, 0], [], []>} : vector<16x8xbf16>, vector<16x8xbf16>, vector<16x16xf32> -> vector<16x16xf32>
    %cst_200 = arith.constant 0.353553385 : f32
    %411 = vector.broadcast %cst_200 : f32 to vector<16x16xf32>
    %412 = arith.mulf %410, %411 : vector<16x16xf32>
    %413 = arith.addf %412, %0 : vector<16x16xf32>
    %cst_201 = arith.constant dense<0xFF800000> : vector<16xf32>
    %414 = vector.multi_reduction <maximumf>, %413, %cst_201 [1] : vector<16x16xf32> to vector<16xf32>
    %415 = vector.shape_cast %414 : vector<16xf32> to vector<16x1xf32>
    %416 = vector.broadcast %415 : vector<16x1xf32> to vector<16x16xf32>
    %417 = arith.subf %413, %416 : vector<16x16xf32>
    %418 = math.exp %417 : vector<16x16xf32>
    %cst_202 = arith.constant dense<0.000000e+00> : vector<16xf32>
    %419 = vector.multi_reduction <add>, %418, %cst_202 [1] : vector<16x16xf32> to vector<16xf32>
    %420 = vector.shape_cast %419 : vector<16xf32> to vector<16x1xf32>
    %421 = tpu.reciprocal %420 {approx = true} : vector<16x1xf32> -> vector<16x1xf32>
    %422 = vector.broadcast %421 : vector<16x1xf32> to vector<16x16xf32>
    %423 = arith.mulf %418, %422 : vector<16x16xf32>
    %424 = arith.truncf %423 : vector<16x16xf32> to vector<16x16xbf16>
    %425 = arith.truncf %407 : vector<16x8xf32> to vector<16x8xbf16>
    %cst_203 = arith.constant dense<0.000000e+00> : vector<16x8xf32>
    %426 = tpu.matmul %424, %425, %cst_203 {dimension_numbers = #tpu.dot_dimension_numbers<[1], [0], [0], [1], [0, 0, 1, 1], [], []>} : vector<16x16xbf16>, vector<16x8xbf16>, vector<16x8xf32> -> vector<16x8xf32>
    %427 = tpu.concatenate %360, %382, %404, %426 in 1 : vector<16x8xf32>, vector<16x8xf32>, vector<16x8xf32>, vector<16x8xf32> -> vector<16x32xf32>
    %c0_204 = arith.constant 0 : index
    %c0_205 = arith.constant 0 : index
    %428 = vector.load %arg53[%c0_204, %c0_205] : memref<32x32xbf16, #tpu.memory_space<vmem>>, vector<32x32xbf16>
    %429 = arith.truncf %427 : vector<16x32xf32> to vector<16x32xbf16>
    %cst_206 = arith.constant dense<0.000000e+00> : vector<16x32xf32>
    %430 = tpu.matmul %429, %428, %cst_206 {dimension_numbers = #tpu.dot_dimension_numbers<[1], [0], [0], [1], [0, 0, 1, 1], [], []>} : vector<16x32xbf16>, vector<32x32xbf16>, vector<16x32xf32> -> vector<16x32xf32>
    %c0_207 = arith.constant 0 : index
    %c0_208 = arith.constant 0 : index
    %431 = vector.load %arg50[%c0_207, %c0_208] : memref<1x32xf32, #tpu.memory_space<vmem>>, vector<1x32xf32>
    %432 = vector.broadcast %431 : vector<1x32xf32> to vector<16x32xf32>
    %433 = arith.addf %430, %432 : vector<16x32xf32>
    %434 = arith.addf %133, %433 : vector<16x32xf32>
    %c0_209 = arith.constant 0 : index
    %c0_210 = arith.constant 0 : index
    %435 = vector.load %arg44[%c0_209, %c0_210] : memref<1x32xf32, #tpu.memory_space<vmem>>, vector<1x32xf32>
    %c0_211 = arith.constant 0 : index
    %c0_212 = arith.constant 0 : index
    %436 = vector.load %arg43[%c0_211, %c0_212] : memref<1x32xf32, #tpu.memory_space<vmem>>, vector<1x32xf32>
    %cst_213 = arith.constant dense<0.000000e+00> : vector<16xf32>
    %437 = vector.multi_reduction <add>, %434, %cst_213 [1] : vector<16x32xf32> to vector<16xf32>
    %438 = vector.shape_cast %437 : vector<16xf32> to vector<16x1xf32>
    %cst_214 = arith.constant 3.200000e+01 : f32
    %439 = vector.broadcast %cst_214 : f32 to vector<16x1xf32>
    %440 = arith.divf %438, %439 : vector<16x1xf32>
    %441 = vector.broadcast %440 : vector<16x1xf32> to vector<16x32xf32>
    %442 = arith.subf %434, %441 : vector<16x32xf32>
    %443 = arith.mulf %442, %442 : vector<16x32xf32>
    %cst_215 = arith.constant dense<0.000000e+00> : vector<16xf32>
    %444 = vector.multi_reduction <add>, %443, %cst_215 [1] : vector<16x32xf32> to vector<16xf32>
    %445 = vector.shape_cast %444 : vector<16xf32> to vector<16x1xf32>
    %cst_216 = arith.constant 3.200000e+01 : f32
    %446 = vector.broadcast %cst_216 : f32 to vector<16x1xf32>
    %447 = arith.divf %445, %446 : vector<16x1xf32>
    %cst_217 = arith.constant 9.99999974E-6 : f32
    %448 = vector.broadcast %cst_217 : f32 to vector<16x1xf32>
    %449 = arith.addf %447, %448 : vector<16x1xf32>
    %450 = math.rsqrt %449 : vector<16x1xf32>
    %451 = vector.broadcast %450 : vector<16x1xf32> to vector<16x32xf32>
    %452 = arith.mulf %442, %451 : vector<16x32xf32>
    %453 = vector.broadcast %435 : vector<1x32xf32> to vector<16x32xf32>
    %454 = arith.mulf %452, %453 : vector<16x32xf32>
    %455 = vector.broadcast %436 : vector<1x32xf32> to vector<16x32xf32>
    %456 = arith.addf %454, %455 : vector<16x32xf32>
    %c0_218 = arith.constant 0 : index
    %c0_219 = arith.constant 0 : index
    %457 = vector.load %arg38[%c0_218, %c0_219] : memref<32x32xbf16, #tpu.memory_space<vmem>>, vector<32x32xbf16>
    %458 = arith.truncf %456 : vector<16x32xf32> to vector<16x32xbf16>
    %cst_220 = arith.constant dense<0.000000e+00> : vector<16x32xf32>
    %459 = tpu.matmul %458, %457, %cst_220 {dimension_numbers = #tpu.dot_dimension_numbers<[1], [0], [0], [1], [0, 0, 1, 1], [], []>} : vector<16x32xbf16>, vector<32x32xbf16>, vector<16x32xf32> -> vector<16x32xf32>
    %c0_221 = arith.constant 0 : index
    %c0_222 = arith.constant 0 : index
    %460 = vector.load %arg35[%c0_221, %c0_222] : memref<1x32xf32, #tpu.memory_space<vmem>>, vector<1x32xf32>
    %461 = vector.broadcast %460 : vector<1x32xf32> to vector<16x32xf32>
    %462 = arith.addf %459, %461 : vector<16x32xf32>
    %c0_223 = arith.constant 0 : index
    %c0_224 = arith.constant 0 : index
    %463 = vector.load %arg36[%c0_223, %c0_224] : memref<32x64xbf16, #tpu.memory_space<vmem>>, vector<32x64xbf16>
    %464 = arith.truncf %326 : vector<16x32xf32> to vector<16x32xbf16>
    %cst_225 = arith.constant dense<0.000000e+00> : vector<16x64xf32>
    %465 = tpu.matmul %464, %463, %cst_225 {dimension_numbers = #tpu.dot_dimension_numbers<[1], [0], [0], [1], [0, 0, 1, 1], [], []>} : vector<16x32xbf16>, vector<32x64xbf16>, vector<16x64xf32> -> vector<16x64xf32>
    %c0_226 = arith.constant 0 : index
    %c0_227 = arith.constant 0 : index
    %466 = vector.load %arg33[%c0_226, %c0_227] : memref<1x64xf32, #tpu.memory_space<vmem>>, vector<1x64xf32>
    %467 = vector.broadcast %466 : vector<1x64xf32> to vector<16x64xf32>
    %468 = arith.addf %465, %467 : vector<16x64xf32>
    %469 = vector.extract_strided_slice %462 {offsets = [0, 0], sizes = [16, 8], strides = [1, 1]} : vector<16x32xf32> to vector<16x8xf32>
    %470 = vector.extract_strided_slice %468 {offsets = [0, 0], sizes = [16, 8], strides = [1, 1]} : vector<16x64xf32> to vector<16x8xf32>
    %471 = vector.extract_strided_slice %468 {offsets = [0, 32], sizes = [16, 8], strides = [1, 1]} : vector<16x64xf32> to vector<16x8xf32>
    %472 = arith.truncf %469 : vector<16x8xf32> to vector<16x8xbf16>
    %473 = arith.truncf %470 : vector<16x8xf32> to vector<16x8xbf16>
    %cst_228 = arith.constant dense<0.000000e+00> : vector<16x16xf32>
    %474 = tpu.matmul %472, %473, %cst_228 {dimension_numbers = #tpu.dot_dimension_numbers<[1], [1], [0], [0], [0, 0, 1, 0], [], []>} : vector<16x8xbf16>, vector<16x8xbf16>, vector<16x16xf32> -> vector<16x16xf32>
    %cst_229 = arith.constant 0.353553385 : f32
    %475 = vector.broadcast %cst_229 : f32 to vector<16x16xf32>
    %476 = arith.mulf %474, %475 : vector<16x16xf32>
    %477 = arith.addf %476, %0 : vector<16x16xf32>
    %cst_230 = arith.constant dense<0xFF800000> : vector<16xf32>
    %478 = vector.multi_reduction <maximumf>, %477, %cst_230 [1] : vector<16x16xf32> to vector<16xf32>
    %479 = vector.shape_cast %478 : vector<16xf32> to vector<16x1xf32>
    %480 = vector.broadcast %479 : vector<16x1xf32> to vector<16x16xf32>
    %481 = arith.subf %477, %480 : vector<16x16xf32>
    %482 = math.exp %481 : vector<16x16xf32>
    %cst_231 = arith.constant dense<0.000000e+00> : vector<16xf32>
    %483 = vector.multi_reduction <add>, %482, %cst_231 [1] : vector<16x16xf32> to vector<16xf32>
    %484 = vector.shape_cast %483 : vector<16xf32> to vector<16x1xf32>
    %485 = tpu.reciprocal %484 {approx = true} : vector<16x1xf32> -> vector<16x1xf32>
    %486 = vector.broadcast %485 : vector<16x1xf32> to vector<16x16xf32>
    %487 = arith.mulf %482, %486 : vector<16x16xf32>
    %488 = arith.truncf %487 : vector<16x16xf32> to vector<16x16xbf16>
    %489 = arith.truncf %471 : vector<16x8xf32> to vector<16x8xbf16>
    %cst_232 = arith.constant dense<0.000000e+00> : vector<16x8xf32>
    %490 = tpu.matmul %488, %489, %cst_232 {dimension_numbers = #tpu.dot_dimension_numbers<[1], [0], [0], [1], [0, 0, 1, 1], [], []>} : vector<16x16xbf16>, vector<16x8xbf16>, vector<16x8xf32> -> vector<16x8xf32>
    %491 = vector.extract_strided_slice %462 {offsets = [0, 8], sizes = [16, 8], strides = [1, 1]} : vector<16x32xf32> to vector<16x8xf32>
    %492 = vector.extract_strided_slice %468 {offsets = [0, 8], sizes = [16, 8], strides = [1, 1]} : vector<16x64xf32> to vector<16x8xf32>
    %493 = vector.extract_strided_slice %468 {offsets = [0, 40], sizes = [16, 8], strides = [1, 1]} : vector<16x64xf32> to vector<16x8xf32>
    %494 = arith.truncf %491 : vector<16x8xf32> to vector<16x8xbf16>
    %495 = arith.truncf %492 : vector<16x8xf32> to vector<16x8xbf16>
    %cst_233 = arith.constant dense<0.000000e+00> : vector<16x16xf32>
    %496 = tpu.matmul %494, %495, %cst_233 {dimension_numbers = #tpu.dot_dimension_numbers<[1], [1], [0], [0], [0, 0, 1, 0], [], []>} : vector<16x8xbf16>, vector<16x8xbf16>, vector<16x16xf32> -> vector<16x16xf32>
    %cst_234 = arith.constant 0.353553385 : f32
    %497 = vector.broadcast %cst_234 : f32 to vector<16x16xf32>
    %498 = arith.mulf %496, %497 : vector<16x16xf32>
    %499 = arith.addf %498, %0 : vector<16x16xf32>
    %cst_235 = arith.constant dense<0xFF800000> : vector<16xf32>
    %500 = vector.multi_reduction <maximumf>, %499, %cst_235 [1] : vector<16x16xf32> to vector<16xf32>
    %501 = vector.shape_cast %500 : vector<16xf32> to vector<16x1xf32>
    %502 = vector.broadcast %501 : vector<16x1xf32> to vector<16x16xf32>
    %503 = arith.subf %499, %502 : vector<16x16xf32>
    %504 = math.exp %503 : vector<16x16xf32>
    %cst_236 = arith.constant dense<0.000000e+00> : vector<16xf32>
    %505 = vector.multi_reduction <add>, %504, %cst_236 [1] : vector<16x16xf32> to vector<16xf32>
    %506 = vector.shape_cast %505 : vector<16xf32> to vector<16x1xf32>
    %507 = tpu.reciprocal %506 {approx = true} : vector<16x1xf32> -> vector<16x1xf32>
    %508 = vector.broadcast %507 : vector<16x1xf32> to vector<16x16xf32>
    %509 = arith.mulf %504, %508 : vector<16x16xf32>
    %510 = arith.truncf %509 : vector<16x16xf32> to vector<16x16xbf16>
    %511 = arith.truncf %493 : vector<16x8xf32> to vector<16x8xbf16>
    %cst_237 = arith.constant dense<0.000000e+00> : vector<16x8xf32>
    %512 = tpu.matmul %510, %511, %cst_237 {dimension_numbers = #tpu.dot_dimension_numbers<[1], [0], [0], [1], [0, 0, 1, 1], [], []>} : vector<16x16xbf16>, vector<16x8xbf16>, vector<16x8xf32> -> vector<16x8xf32>
    %513 = vector.extract_strided_slice %462 {offsets = [0, 16], sizes = [16, 8], strides = [1, 1]} : vector<16x32xf32> to vector<16x8xf32>
    %514 = vector.extract_strided_slice %468 {offsets = [0, 16], sizes = [16, 8], strides = [1, 1]} : vector<16x64xf32> to vector<16x8xf32>
    %515 = vector.extract_strided_slice %468 {offsets = [0, 48], sizes = [16, 8], strides = [1, 1]} : vector<16x64xf32> to vector<16x8xf32>
    %516 = arith.truncf %513 : vector<16x8xf32> to vector<16x8xbf16>
    %517 = arith.truncf %514 : vector<16x8xf32> to vector<16x8xbf16>
    %cst_238 = arith.constant dense<0.000000e+00> : vector<16x16xf32>
    %518 = tpu.matmul %516, %517, %cst_238 {dimension_numbers = #tpu.dot_dimension_numbers<[1], [1], [0], [0], [0, 0, 1, 0], [], []>} : vector<16x8xbf16>, vector<16x8xbf16>, vector<16x16xf32> -> vector<16x16xf32>
    %cst_239 = arith.constant 0.353553385 : f32
    %519 = vector.broadcast %cst_239 : f32 to vector<16x16xf32>
    %520 = arith.mulf %518, %519 : vector<16x16xf32>
    %521 = arith.addf %520, %0 : vector<16x16xf32>
    %cst_240 = arith.constant dense<0xFF800000> : vector<16xf32>
    %522 = vector.multi_reduction <maximumf>, %521, %cst_240 [1] : vector<16x16xf32> to vector<16xf32>
    %523 = vector.shape_cast %522 : vector<16xf32> to vector<16x1xf32>
    %524 = vector.broadcast %523 : vector<16x1xf32> to vector<16x16xf32>
    %525 = arith.subf %521, %524 : vector<16x16xf32>
    %526 = math.exp %525 : vector<16x16xf32>
    %cst_241 = arith.constant dense<0.000000e+00> : vector<16xf32>
    %527 = vector.multi_reduction <add>, %526, %cst_241 [1] : vector<16x16xf32> to vector<16xf32>
    %528 = vector.shape_cast %527 : vector<16xf32> to vector<16x1xf32>
    %529 = tpu.reciprocal %528 {approx = true} : vector<16x1xf32> -> vector<16x1xf32>
    %530 = vector.broadcast %529 : vector<16x1xf32> to vector<16x16xf32>
    %531 = arith.mulf %526, %530 : vector<16x16xf32>
    %532 = arith.truncf %531 : vector<16x16xf32> to vector<16x16xbf16>
    %533 = arith.truncf %515 : vector<16x8xf32> to vector<16x8xbf16>
    %cst_242 = arith.constant dense<0.000000e+00> : vector<16x8xf32>
    %534 = tpu.matmul %532, %533, %cst_242 {dimension_numbers = #tpu.dot_dimension_numbers<[1], [0], [0], [1], [0, 0, 1, 1], [], []>} : vector<16x16xbf16>, vector<16x8xbf16>, vector<16x8xf32> -> vector<16x8xf32>
    %535 = vector.extract_strided_slice %462 {offsets = [0, 24], sizes = [16, 8], strides = [1, 1]} : vector<16x32xf32> to vector<16x8xf32>
    %536 = vector.extract_strided_slice %468 {offsets = [0, 24], sizes = [16, 8], strides = [1, 1]} : vector<16x64xf32> to vector<16x8xf32>
    %537 = vector.extract_strided_slice %468 {offsets = [0, 56], sizes = [16, 8], strides = [1, 1]} : vector<16x64xf32> to vector<16x8xf32>
    %538 = arith.truncf %535 : vector<16x8xf32> to vector<16x8xbf16>
    %539 = arith.truncf %536 : vector<16x8xf32> to vector<16x8xbf16>
    %cst_243 = arith.constant dense<0.000000e+00> : vector<16x16xf32>
    %540 = tpu.matmul %538, %539, %cst_243 {dimension_numbers = #tpu.dot_dimension_numbers<[1], [1], [0], [0], [0, 0, 1, 0], [], []>} : vector<16x8xbf16>, vector<16x8xbf16>, vector<16x16xf32> -> vector<16x16xf32>
    %cst_244 = arith.constant 0.353553385 : f32
    %541 = vector.broadcast %cst_244 : f32 to vector<16x16xf32>
    %542 = arith.mulf %540, %541 : vector<16x16xf32>
    %543 = arith.addf %542, %0 : vector<16x16xf32>
    %cst_245 = arith.constant dense<0xFF800000> : vector<16xf32>
    %544 = vector.multi_reduction <maximumf>, %543, %cst_245 [1] : vector<16x16xf32> to vector<16xf32>
    %545 = vector.shape_cast %544 : vector<16xf32> to vector<16x1xf32>
    %546 = vector.broadcast %545 : vector<16x1xf32> to vector<16x16xf32>
    %547 = arith.subf %543, %546 : vector<16x16xf32>
    %548 = math.exp %547 : vector<16x16xf32>
    %cst_246 = arith.constant dense<0.000000e+00> : vector<16xf32>
    %549 = vector.multi_reduction <add>, %548, %cst_246 [1] : vector<16x16xf32> to vector<16xf32>
    %550 = vector.shape_cast %549 : vector<16xf32> to vector<16x1xf32>
    %551 = tpu.reciprocal %550 {approx = true} : vector<16x1xf32> -> vector<16x1xf32>
    %552 = vector.broadcast %551 : vector<16x1xf32> to vector<16x16xf32>
    %553 = arith.mulf %548, %552 : vector<16x16xf32>
    %554 = arith.truncf %553 : vector<16x16xf32> to vector<16x16xbf16>
    %555 = arith.truncf %537 : vector<16x8xf32> to vector<16x8xbf16>
    %cst_247 = arith.constant dense<0.000000e+00> : vector<16x8xf32>
    %556 = tpu.matmul %554, %555, %cst_247 {dimension_numbers = #tpu.dot_dimension_numbers<[1], [0], [0], [1], [0, 0, 1, 1], [], []>} : vector<16x16xbf16>, vector<16x8xbf16>, vector<16x8xf32> -> vector<16x8xf32>
    %557 = tpu.concatenate %490, %512, %534, %556 in 1 : vector<16x8xf32>, vector<16x8xf32>, vector<16x8xf32>, vector<16x8xf32> -> vector<16x32xf32>
    %c0_248 = arith.constant 0 : index
    %c0_249 = arith.constant 0 : index
    %558 = vector.load %arg37[%c0_248, %c0_249] : memref<32x32xbf16, #tpu.memory_space<vmem>>, vector<32x32xbf16>
    %559 = arith.truncf %557 : vector<16x32xf32> to vector<16x32xbf16>
    %cst_250 = arith.constant dense<0.000000e+00> : vector<16x32xf32>
    %560 = tpu.matmul %559, %558, %cst_250 {dimension_numbers = #tpu.dot_dimension_numbers<[1], [0], [0], [1], [0, 0, 1, 1], [], []>} : vector<16x32xbf16>, vector<32x32xbf16>, vector<16x32xf32> -> vector<16x32xf32>
    %c0_251 = arith.constant 0 : index
    %c0_252 = arith.constant 0 : index
    %561 = vector.load %arg34[%c0_251, %c0_252] : memref<1x32xf32, #tpu.memory_space<vmem>>, vector<1x32xf32>
    %562 = vector.broadcast %561 : vector<1x32xf32> to vector<16x32xf32>
    %563 = arith.addf %560, %562 : vector<16x32xf32>
    %564 = arith.addf %456, %563 : vector<16x32xf32>
    %c0_253 = arith.constant 0 : index
    %c0_254 = arith.constant 0 : index
    %565 = vector.load %arg46[%c0_253, %c0_254] : memref<1x32xf32, #tpu.memory_space<vmem>>, vector<1x32xf32>
    %c0_255 = arith.constant 0 : index
    %c0_256 = arith.constant 0 : index
    %566 = vector.load %arg45[%c0_255, %c0_256] : memref<1x32xf32, #tpu.memory_space<vmem>>, vector<1x32xf32>
    %cst_257 = arith.constant dense<0.000000e+00> : vector<16xf32>
    %567 = vector.multi_reduction <add>, %564, %cst_257 [1] : vector<16x32xf32> to vector<16xf32>
    %568 = vector.shape_cast %567 : vector<16xf32> to vector<16x1xf32>
    %cst_258 = arith.constant 3.200000e+01 : f32
    %569 = vector.broadcast %cst_258 : f32 to vector<16x1xf32>
    %570 = arith.divf %568, %569 : vector<16x1xf32>
    %571 = vector.broadcast %570 : vector<16x1xf32> to vector<16x32xf32>
    %572 = arith.subf %564, %571 : vector<16x32xf32>
    %573 = arith.mulf %572, %572 : vector<16x32xf32>
    %cst_259 = arith.constant dense<0.000000e+00> : vector<16xf32>
    %574 = vector.multi_reduction <add>, %573, %cst_259 [1] : vector<16x32xf32> to vector<16xf32>
    %575 = vector.shape_cast %574 : vector<16xf32> to vector<16x1xf32>
    %cst_260 = arith.constant 3.200000e+01 : f32
    %576 = vector.broadcast %cst_260 : f32 to vector<16x1xf32>
    %577 = arith.divf %575, %576 : vector<16x1xf32>
    %cst_261 = arith.constant 9.99999974E-6 : f32
    %578 = vector.broadcast %cst_261 : f32 to vector<16x1xf32>
    %579 = arith.addf %577, %578 : vector<16x1xf32>
    %580 = math.rsqrt %579 : vector<16x1xf32>
    %581 = vector.broadcast %580 : vector<16x1xf32> to vector<16x32xf32>
    %582 = arith.mulf %572, %581 : vector<16x32xf32>
    %583 = vector.broadcast %565 : vector<1x32xf32> to vector<16x32xf32>
    %584 = arith.mulf %582, %583 : vector<16x32xf32>
    %585 = vector.broadcast %566 : vector<1x32xf32> to vector<16x32xf32>
    %586 = arith.addf %584, %585 : vector<16x32xf32>
    %c0_262 = arith.constant 0 : index
    %c0_263 = arith.constant 0 : index
    %587 = vector.load %arg41[%c0_262, %c0_263] : memref<32x2048xbf16, #tpu.memory_space<vmem>>, vector<32x2048xbf16>
    %588 = arith.truncf %586 : vector<16x32xf32> to vector<16x32xbf16>
    %cst_264 = arith.constant dense<0.000000e+00> : vector<16x2048xf32>
    %589 = tpu.matmul %588, %587, %cst_264 {dimension_numbers = #tpu.dot_dimension_numbers<[1], [0], [0], [1], [0, 0, 1, 1], [], []>} : vector<16x32xbf16>, vector<32x2048xbf16>, vector<16x2048xf32> -> vector<16x2048xf32>
    %c0_265 = arith.constant 0 : index
    %c0_266 = arith.constant 0 : index
    %590 = vector.load %arg39[%c0_265, %c0_266] : memref<1x2048xf32, #tpu.memory_space<vmem>>, vector<1x2048xf32>
    %591 = vector.broadcast %590 : vector<1x2048xf32> to vector<16x2048xf32>
    %592 = arith.addf %589, %591 : vector<16x2048xf32>
    %cst_267 = arith.constant 0.000000e+00 : f32
    %593 = vector.broadcast %cst_267 : f32 to vector<16x2048xf32>
    %594 = arith.maximumf %592, %593 : vector<16x2048xf32>
    %c0_268 = arith.constant 0 : index
    %c0_269 = arith.constant 0 : index
    %595 = vector.load %arg42[%c0_268, %c0_269] : memref<2048x32xbf16, #tpu.memory_space<vmem>>, vector<2048x32xbf16>
    %596 = arith.truncf %594 : vector<16x2048xf32> to vector<16x2048xbf16>
    %cst_270 = arith.constant dense<0.000000e+00> : vector<16x32xf32>
    %597 = tpu.matmul %596, %595, %cst_270 {dimension_numbers = #tpu.dot_dimension_numbers<[1], [0], [0], [1], [0, 0, 1, 1], [], []>} : vector<16x2048xbf16>, vector<2048x32xbf16>, vector<16x32xf32> -> vector<16x32xf32>
    %c0_271 = arith.constant 0 : index
    %c0_272 = arith.constant 0 : index
    %598 = vector.load %arg40[%c0_271, %c0_272] : memref<1x32xf32, #tpu.memory_space<vmem>>, vector<1x32xf32>
    %599 = vector.broadcast %598 : vector<1x32xf32> to vector<16x32xf32>
    %600 = arith.addf %597, %599 : vector<16x32xf32>
    %601 = arith.addf %586, %600 : vector<16x32xf32>
    %c0_273 = arith.constant 0 : index
    %c0_274 = arith.constant 0 : index
    %602 = vector.load %arg48[%c0_273, %c0_274] : memref<1x32xf32, #tpu.memory_space<vmem>>, vector<1x32xf32>
    %c0_275 = arith.constant 0 : index
    %c0_276 = arith.constant 0 : index
    %603 = vector.load %arg47[%c0_275, %c0_276] : memref<1x32xf32, #tpu.memory_space<vmem>>, vector<1x32xf32>
    %cst_277 = arith.constant dense<0.000000e+00> : vector<16xf32>
    %604 = vector.multi_reduction <add>, %601, %cst_277 [1] : vector<16x32xf32> to vector<16xf32>
    %605 = vector.shape_cast %604 : vector<16xf32> to vector<16x1xf32>
    %cst_278 = arith.constant 3.200000e+01 : f32
    %606 = vector.broadcast %cst_278 : f32 to vector<16x1xf32>
    %607 = arith.divf %605, %606 : vector<16x1xf32>
    %608 = vector.broadcast %607 : vector<16x1xf32> to vector<16x32xf32>
    %609 = arith.subf %601, %608 : vector<16x32xf32>
    %610 = arith.mulf %609, %609 : vector<16x32xf32>
    %cst_279 = arith.constant dense<0.000000e+00> : vector<16xf32>
    %611 = vector.multi_reduction <add>, %610, %cst_279 [1] : vector<16x32xf32> to vector<16xf32>
    %612 = vector.shape_cast %611 : vector<16xf32> to vector<16x1xf32>
    %cst_280 = arith.constant 3.200000e+01 : f32
    %613 = vector.broadcast %cst_280 : f32 to vector<16x1xf32>
    %614 = arith.divf %612, %613 : vector<16x1xf32>
    %cst_281 = arith.constant 9.99999974E-6 : f32
    %615 = vector.broadcast %cst_281 : f32 to vector<16x1xf32>
    %616 = arith.addf %614, %615 : vector<16x1xf32>
    %617 = math.rsqrt %616 : vector<16x1xf32>
    %618 = vector.broadcast %617 : vector<16x1xf32> to vector<16x32xf32>
    %619 = arith.mulf %609, %618 : vector<16x32xf32>
    %620 = vector.broadcast %602 : vector<1x32xf32> to vector<16x32xf32>
    %621 = arith.mulf %619, %620 : vector<16x32xf32>
    %622 = vector.broadcast %603 : vector<1x32xf32> to vector<16x32xf32>
    %623 = arith.addf %621, %622 : vector<16x32xf32>
    %c0_282 = arith.constant 0 : index
    %c0_283 = arith.constant 0 : index
    %624 = vector.load %arg56[%c0_282, %c0_283] : memref<1x32xf32, #tpu.memory_space<vmem>>, vector<1x32xf32>
    %c0_284 = arith.constant 0 : index
    %c0_285 = arith.constant 0 : index
    %625 = vector.load %arg55[%c0_284, %c0_285] : memref<1x32xf32, #tpu.memory_space<vmem>>, vector<1x32xf32>
    %cst_286 = arith.constant dense<0.000000e+00> : vector<16xf32>
    %626 = vector.multi_reduction <add>, %623, %cst_286 [1] : vector<16x32xf32> to vector<16xf32>
    %627 = vector.shape_cast %626 : vector<16xf32> to vector<16x1xf32>
    %cst_287 = arith.constant 3.200000e+01 : f32
    %628 = vector.broadcast %cst_287 : f32 to vector<16x1xf32>
    %629 = arith.divf %627, %628 : vector<16x1xf32>
    %630 = vector.broadcast %629 : vector<16x1xf32> to vector<16x32xf32>
    %631 = arith.subf %623, %630 : vector<16x32xf32>
    %632 = arith.mulf %631, %631 : vector<16x32xf32>
    %cst_288 = arith.constant dense<0.000000e+00> : vector<16xf32>
    %633 = vector.multi_reduction <add>, %632, %cst_288 [1] : vector<16x32xf32> to vector<16xf32>
    %634 = vector.shape_cast %633 : vector<16xf32> to vector<16x1xf32>
    %cst_289 = arith.constant 3.200000e+01 : f32
    %635 = vector.broadcast %cst_289 : f32 to vector<16x1xf32>
    %636 = arith.divf %634, %635 : vector<16x1xf32>
    %cst_290 = arith.constant 9.99999974E-6 : f32
    %637 = vector.broadcast %cst_290 : f32 to vector<16x1xf32>
    %638 = arith.addf %636, %637 : vector<16x1xf32>
    %639 = math.rsqrt %638 : vector<16x1xf32>
    %640 = vector.broadcast %639 : vector<16x1xf32> to vector<16x32xf32>
    %641 = arith.mulf %631, %640 : vector<16x32xf32>
    %642 = vector.broadcast %624 : vector<1x32xf32> to vector<16x32xf32>
    %643 = arith.mulf %641, %642 : vector<16x32xf32>
    %644 = vector.broadcast %625 : vector<1x32xf32> to vector<16x32xf32>
    %645 = arith.addf %643, %644 : vector<16x32xf32>
    %c0_291 = arith.constant 0 : index
    %c0_292 = arith.constant 0 : index
    %646 = vector.load %arg74[%c0_291, %c0_292] : memref<1x32xf32, #tpu.memory_space<vmem>>, vector<1x32xf32>
    %647 = vector.broadcast %646 : vector<1x32xf32> to vector<16x32xf32>
    %648 = arith.mulf %645, %647 : vector<16x32xf32>
    %c0_293 = arith.constant 0 : index
    %c0_294 = arith.constant 0 : index
    %649 = vector.load %arg75[%c0_293, %c0_294] : memref<1x32xf32, #tpu.memory_space<vmem>>, vector<1x32xf32>
    %650 = vector.broadcast %649 : vector<1x32xf32> to vector<16x32xf32>
    %651 = arith.addf %648, %650 : vector<16x32xf32>
    %cst_295 = arith.constant 0.000000e+00 : f32
    %652 = vector.broadcast %cst_295 : f32 to vector<16x32xf32>
    %653 = arith.cmpf ogt, %651, %652 : vector<16x32xf32>
    %cst_296 = arith.constant 0.000000e+00 : f32
    %654 = vector.broadcast %cst_296 : f32 to vector<16x32xf32>
    %655 = arith.minimumf %651, %654 : vector<16x32xf32>
    %656 = math.exp %655 : vector<16x32xf32>
    %cst_297 = arith.constant 1.000000e+00 : f32
    %657 = vector.broadcast %cst_297 : f32 to vector<16x32xf32>
    %658 = arith.subf %656, %657 : vector<16x32xf32>
    %659 = arith.select %653, %651, %658 : vector<16x32xi1>, vector<16x32xf32>
    %c0_298 = arith.constant 0 : index
    %c0_299 = arith.constant 0 : index
    %660 = vector.load %arg76[%c0_298, %c0_299] : memref<32x32xbf16, #tpu.memory_space<vmem>>, vector<32x32xbf16>
    %661 = arith.truncf %659 : vector<16x32xf32> to vector<16x32xbf16>
    %cst_300 = arith.constant dense<0.000000e+00> : vector<16x32xf32>
    %662 = tpu.matmul %661, %660, %cst_300 {dimension_numbers = #tpu.dot_dimension_numbers<[1], [0], [0], [1], [0, 0, 1, 1], [], []>} : vector<16x32xbf16>, vector<32x32xbf16>, vector<16x32xf32> -> vector<16x32xf32>
    %c0_301 = arith.constant 0 : index
    %c0_302 = arith.constant 0 : index
    %663 = vector.load %arg73[%c0_301, %c0_302] : memref<1x32xf32, #tpu.memory_space<vmem>>, vector<1x32xf32>
    %664 = vector.broadcast %663 : vector<1x32xf32> to vector<16x32xf32>
    %665 = arith.addf %662, %664 : vector<16x32xf32>
    %c0_303 = arith.constant 0 : index
    %c0_304 = arith.constant 0 : index
    %666 = vector.load %arg79[%c0_303, %c0_304] : memref<32x32xbf16, #tpu.memory_space<vmem>>, vector<32x32xbf16>
    %667 = arith.truncf %665 : vector<16x32xf32> to vector<16x32xbf16>
    %cst_305 = arith.constant dense<0.000000e+00> : vector<16x32xf32>
    %668 = tpu.matmul %667, %666, %cst_305 {dimension_numbers = #tpu.dot_dimension_numbers<[1], [0], [0], [1], [0, 0, 1, 1], [], []>} : vector<16x32xbf16>, vector<32x32xbf16>, vector<16x32xf32> -> vector<16x32xf32>
    %c0_306 = arith.constant 0 : index
    %c0_307 = arith.constant 0 : index
    %669 = vector.load %arg80[%c0_306, %c0_307] : memref<32x32xbf16, #tpu.memory_space<vmem>>, vector<32x32xbf16>
    %670 = arith.truncf %133 : vector<16x32xf32> to vector<16x32xbf16>
    %cst_308 = arith.constant dense<0.000000e+00> : vector<16x32xf32>
    %671 = tpu.matmul %670, %669, %cst_308 {dimension_numbers = #tpu.dot_dimension_numbers<[1], [0], [0], [1], [0, 0, 1, 1], [], []>} : vector<16x32xbf16>, vector<32x32xbf16>, vector<16x32xf32> -> vector<16x32xf32>
    %672 = arith.addf %668, %671 : vector<16x32xf32>
    %c0_309 = arith.constant 0 : index
    %c0_310 = arith.constant 0 : index
    %673 = vector.load %arg77[%c0_309, %c0_310] : memref<1x32xf32, #tpu.memory_space<vmem>>, vector<1x32xf32>
    %674 = vector.broadcast %673 : vector<1x32xf32> to vector<16x32xf32>
    %675 = arith.addf %672, %674 : vector<16x32xf32>
    %cst_311 = arith.constant 0.000000e+00 : f32
    %676 = vector.broadcast %cst_311 : f32 to vector<16x32xf32>
    %677 = arith.cmpf ogt, %675, %676 : vector<16x32xf32>
    %cst_312 = arith.constant 0.000000e+00 : f32
    %678 = vector.broadcast %cst_312 : f32 to vector<16x32xf32>
    %679 = arith.minimumf %675, %678 : vector<16x32xf32>
    %680 = math.exp %679 : vector<16x32xf32>
    %cst_313 = arith.constant 1.000000e+00 : f32
    %681 = vector.broadcast %cst_313 : f32 to vector<16x32xf32>
    %682 = arith.subf %680, %681 : vector<16x32xf32>
    %683 = arith.select %677, %675, %682 : vector<16x32xi1>, vector<16x32xf32>
    %c0_314 = arith.constant 0 : index
    %c0_315 = arith.constant 0 : index
    %684 = vector.load %arg81[%c0_314, %c0_315] : memref<32x32xbf16, #tpu.memory_space<vmem>>, vector<32x32xbf16>
    %685 = arith.truncf %683 : vector<16x32xf32> to vector<16x32xbf16>
    %cst_316 = arith.constant dense<0.000000e+00> : vector<16x32xf32>
    %686 = tpu.matmul %685, %684, %cst_316 {dimension_numbers = #tpu.dot_dimension_numbers<[1], [0], [0], [1], [0, 0, 1, 1], [], []>} : vector<16x32xbf16>, vector<32x32xbf16>, vector<16x32xf32> -> vector<16x32xf32>
    %c0_317 = arith.constant 0 : index
    %c0_318 = arith.constant 0 : index
    %687 = vector.load %arg78[%c0_317, %c0_318] : memref<1x32xf32, #tpu.memory_space<vmem>>, vector<1x32xf32>
    %688 = vector.broadcast %687 : vector<1x32xf32> to vector<16x32xf32>
    %689 = arith.addf %686, %688 : vector<16x32xf32>
    %690 = vector.shape_cast %689 : vector<16x32xf32> to vector<2x8x32xf32>
    %cst_319 = arith.constant dense<0.000000e+00> : vector<2x32xf32>
    %691 = vector.multi_reduction <add>, %690, %cst_319 [1] : vector<2x8x32xf32> to vector<2x32xf32>
    %cst_320 = arith.constant 8.000000e+00 : f32
    %692 = vector.broadcast %cst_320 : f32 to vector<2x32xf32>
    %693 = arith.divf %691, %692 : vector<2x32xf32>
    %c0_321 = arith.constant 0 : index
    %c0_322 = arith.constant 0 : index
    %694 = vector.load %arg7[%c0_321, %c0_322] : memref<32x32xbf16, #tpu.memory_space<vmem>>, vector<32x32xbf16>
    %695 = arith.truncf %693 : vector<2x32xf32> to vector<2x32xbf16>
    %cst_323 = arith.constant dense<0.000000e+00> : vector<2x32xf32>
    %696 = tpu.matmul %695, %694, %cst_323 {dimension_numbers = #tpu.dot_dimension_numbers<[1], [0], [0], [1], [0, 0, 1, 1], [], []>} : vector<2x32xbf16>, vector<32x32xbf16>, vector<2x32xf32> -> vector<2x32xf32>
    %c0_324 = arith.constant 0 : index
    %c0_325 = arith.constant 0 : index
    %697 = vector.load %arg5[%c0_324, %c0_325] : memref<1x32xf32, #tpu.memory_space<vmem>>, vector<1x32xf32>
    %698 = vector.broadcast %697 : vector<1x32xf32> to vector<2x32xf32>
    %699 = arith.addf %696, %698 : vector<2x32xf32>
    %cst_326 = arith.constant 0.000000e+00 : f32
    %700 = vector.broadcast %cst_326 : f32 to vector<2x32xf32>
    %701 = arith.cmpf ogt, %699, %700 : vector<2x32xf32>
    %cst_327 = arith.constant 0.000000e+00 : f32
    %702 = vector.broadcast %cst_327 : f32 to vector<2x32xf32>
    %703 = arith.minimumf %699, %702 : vector<2x32xf32>
    %704 = math.exp %703 : vector<2x32xf32>
    %cst_328 = arith.constant 1.000000e+00 : f32
    %705 = vector.broadcast %cst_328 : f32 to vector<2x32xf32>
    %706 = arith.subf %704, %705 : vector<2x32xf32>
    %707 = arith.select %701, %699, %706 : vector<2x32xi1>, vector<2x32xf32>
    %c0_329 = arith.constant 0 : index
    %c0_330 = arith.constant 0 : index
    %708 = vector.load %arg8[%c0_329, %c0_330] : memref<32x2xbf16, #tpu.memory_space<vmem>>, vector<32x2xbf16>
    %709 = arith.truncf %707 : vector<2x32xf32> to vector<2x32xbf16>
    %cst_331 = arith.constant dense<0.000000e+00> : vector<2x2xf32>
    %710 = tpu.matmul %709, %708, %cst_331 {dimension_numbers = #tpu.dot_dimension_numbers<[1], [0], [0], [1], [0, 0, 1, 1], [], []>} : vector<2x32xbf16>, vector<32x2xbf16>, vector<2x2xf32> -> vector<2x2xf32>
    %c0_332 = arith.constant 0 : index
    %c0_333 = arith.constant 0 : index
    %711 = vector.load %arg6[%c0_332, %c0_333] : memref<1x2xf32, #tpu.memory_space<vmem>>, vector<1x2xf32>
    %712 = vector.broadcast %711 : vector<1x2xf32> to vector<2x2xf32>
    %713 = arith.addf %710, %712 : vector<2x2xf32>
    %cst_334 = arith.constant dense<0xFF800000> : vector<2xf32>
    %714 = vector.multi_reduction <maximumf>, %713, %cst_334 [1] : vector<2x2xf32> to vector<2xf32>
    %715 = vector.shape_cast %714 : vector<2xf32> to vector<2x1xf32>
    %716 = vector.broadcast %715 : vector<2x1xf32> to vector<2x2xf32>
    %717 = arith.subf %713, %716 : vector<2x2xf32>
    %718 = math.exp %717 : vector<2x2xf32>
    %cst_335 = arith.constant dense<0.000000e+00> : vector<2xf32>
    %719 = vector.multi_reduction <add>, %718, %cst_335 [1] : vector<2x2xf32> to vector<2xf32>
    %720 = vector.shape_cast %719 : vector<2xf32> to vector<2x1xf32>
    %721 = vector.broadcast %720 : vector<2x1xf32> to vector<2x2xf32>
    %722 = arith.divf %718, %721 : vector<2x2xf32>
    %c0_336 = arith.constant 0 : index
    %c0_337 = arith.constant 0 : index
    %723 = vector.load %arg82[%c0_336, %c0_337] : memref<2x2xf32, #tpu.memory_space<vmem>>, vector<2x2xf32>
    tpu.vector_store %arg82[%c0_336, %c0_337], %722 {strides = array<i32>} : memref<2x2xf32, #tpu.memory_space<vmem>>, vector<2x2xf32>,
    return
  }
}

</mosaic_0001>

<llo_original>
// kernel: aimp_forward.1
$region0: #{aimp_forward.1}
  #allocation0 [shape = 'u32[]', space=smem, size = 0x4, offset = 0x4, fixed_abs, tag = 'smem constant byte address 0x4 - core index']
  #allocation1 [shape = 'u32[144,128]{1,0:T(1,128)}', space=vmem, size = 0x12000, scoped, tag = 'internal scratch']
  #allocation2 [shape = 'f32[2,8,16]{2,1,0:T(8,128)}', space=vmem, size = 0x2000, scoped, tag = 'scratch operand']
  %s0 = inlined_call_operand.smem [shape: u32[83], index: -1, kind: input, shape index: {}]
  %s1 = sld [smem:[%s0]]
  %s2 = scalar_lea.smem %s0, 1
  %s3 = sld [smem:[%s2]]
  %s4 = scalar_lea.smem %s0, 2
  %s5 = sld [smem:[%s4]]
  %s6 = scalar_lea.smem %s0, 3
  %s7 = sld [smem:[%s6]]
  %s8 = scalar_lea.smem %s0, 4
  %s9 = sld [smem:[%s8]]
  %s10 = scalar_lea.smem %s0, 5
  %s11 = sld [smem:[%s10]]
  %s12 = scalar_lea.smem %s0, 6
  %s13 = sld [smem:[%s12]]
  %s14 = scalar_lea.smem %s0, 7
  %s15 = sld [smem:[%s14]]
  %s16 = scalar_lea.smem %s0, 8
  %s17 = sld [smem:[%s16]]
  %s18 = scalar_lea.smem %s0, 9
  %s19 = sld [smem:[%s18]]
  %s20 = scalar_lea.smem %s0, 10
  %s21 = sld [smem:[%s20]]
  %s22 = scalar_lea.smem %s0, 11
  %s23 = sld [smem:[%s22]]
  %s24 = scalar_lea.smem %s0, 12
  %s25 = sld [smem:[%s24]]
  %s26 = scalar_lea.smem %s0, 13
  %s27 = sld [smem:[%s26]]
  %s28 = scalar_lea.smem %s0, 14
  %s29 = sld [smem:[%s28]]
  %s30 = scalar_lea.smem %s0, 15
  %s31 = sld [smem:[%s30]]
  %s32 = scalar_lea.smem %s0, 16
  %s33 = sld [smem:[%s32]]
  %s34 = scalar_lea.smem %s0, 17
  %s35 = sld [smem:[%s34]]
  %s36 = scalar_lea.smem %s0, 18
  %s37 = sld [smem:[%s36]]
  %s38 = scalar_lea.smem %s0, 19
  %s39 = sld [smem:[%s38]]
  %s40 = scalar_lea.smem %s0, 20
  %s41 = sld [smem:[%s40]]
  %s42 = scalar_lea.smem %s0, 21
  %s43 = sld [smem:[%s42]]
  %s44 = scalar_lea.smem %s0, 22
  %s45 = sld [smem:[%s44]]
  %s46 = scalar_lea.smem %s0, 23
  %s47 = sld [smem:[%s46]]
  %s48 = scalar_lea.smem %s0, 24
  %s49 = sld [smem:[%s48]]
  %s50 = scalar_lea.smem %s0, 25
  %s51 = sld [smem:[%s50]]
  %s52 = scalar_lea.smem %s0, 26
  %s53 = sld [smem:[%s52]]
  %s54 = scalar_lea.smem %s0, 27
  %s55 = sld [smem:[%s54]]
  %s56 = scalar_lea.smem %s0, 28
  %s57 = sld [smem:[%s56]]
  %s58 = scalar_lea.smem %s0, 29
  %s59 = sld [smem:[%s58]]
  %s60 = scalar_lea.smem %s0, 30
  %s61 = sld [smem:[%s60]]
  %s62 = scalar_lea.smem %s0, 31
  %s63 = sld [smem:[%s62]]
  %s64 = scalar_lea.smem %s0, 32
  %s65 = sld [smem:[%s64]]
  %s66 = scalar_lea.smem %s0, 33
  %s67 = sld [smem:[%s66]]
  %s68 = scalar_lea.smem %s0, 34
  %s69 = sld [smem:[%s68]]
  %s70 = scalar_lea.smem %s0, 35
  %s71 = sld [smem:[%s70]]
  %s72 = scalar_lea.smem %s0, 36
  %s73 = sld [smem:[%s72]]
  %s74 = scalar_lea.smem %s0, 37
  %s75 = sld [smem:[%s74]]
  %s76 = scalar_lea.smem %s0, 38
  %s77 = sld [smem:[%s76]]
  %s78 = scalar_lea.smem %s0, 39
  %s79 = sld [smem:[%s78]]
  %s80 = scalar_lea.smem %s0, 40
  %s81 = sld [smem:[%s80]]
  %s82 = scalar_lea.smem %s0, 41
  %s83 = sld [smem:[%s82]]
  %s84 = scalar_lea.smem %s0, 42
  %s85 = sld [smem:[%s84]]
  %s86 = scalar_lea.smem %s0, 43
  %s87 = sld [smem:[%s86]]
  %s88 = scalar_lea.smem %s0, 44
  %s89 = sld [smem:[%s88]]
  %s90 = scalar_lea.smem %s0, 45
  %s91 = sld [smem:[%s90]]
  %s92 = scalar_lea.smem %s0, 46
  %s93 = sld [smem:[%s92]]
  %s94 = scalar_lea.smem %s0, 47
  %s95 = sld [smem:[%s94]]
  %s96 = scalar_lea.smem %s0, 48
  %s97 = sld [smem:[%s96]]
  %s98 = scalar_lea.smem %s0, 49
  %s99 = sld [smem:[%s98]]
  %s100 = scalar_lea.smem %s0, 50
  %s101 = sld [smem:[%s100]]
  %s102 = scalar_lea.smem %s0, 51
  %s103 = sld [smem:[%s102]]
  %s104 = scalar_lea.smem %s0, 52
  %s105 = sld [smem:[%s104]]
  %s106 = scalar_lea.smem %s0, 53
  %s107 = sld [smem:[%s106]]
  %s108 = scalar_lea.smem %s0, 54
  %s109 = sld [smem:[%s108]]
  %s110 = scalar_lea.smem %s0, 55
  %s111 = sld [smem:[%s110]]
  %s112 = scalar_lea.smem %s0, 56
  %s113 = sld [smem:[%s112]]
  %s114 = scalar_lea.smem %s0, 57
  %s115 = sld [smem:[%s114]]
  %s116 = scalar_lea.smem %s0, 58
  %s117 = sld [smem:[%s116]]
  %s118 = scalar_lea.smem %s0, 59
  %s119 = sld [smem:[%s118]]
  %s120 = scalar_lea.smem %s0, 60
  %s121 = sld [smem:[%s120]]
  %s122 = scalar_lea.smem %s0, 61
  %s123 = sld [smem:[%s122]]
  %s124 = scalar_lea.smem %s0, 62
  %s125 = sld [smem:[%s124]]
  %s126 = scalar_lea.smem %s0, 63
  %s127 = sld [smem:[%s126]]
  %s128 = scalar_lea.smem %s0, 64
  %s129 = sld [smem:[%s128]]
  %s130 = scalar_lea.smem %s0, 65
  %s131 = sld [smem:[%s130]]
  %s132 = scalar_lea.smem %s0, 66
  %s133 = sld [smem:[%s132]]
  %s134 = scalar_lea.smem %s0, 67
  %s135 = sld [smem:[%s134]]
  %s136 = scalar_lea.smem %s0, 68
  %s137 = sld [smem:[%s136]]
  %s138 = scalar_lea.smem %s0, 69
  %s139 = sld [smem:[%s138]]
  %s140 = scalar_lea.smem %s0, 70
  %s141 = sld [smem:[%s140]]
  %s142 = scalar_lea.smem %s0, 71
  %s143 = sld [smem:[%s142]]
  %s144 = scalar_lea.smem %s0, 72
  %s145 = sld [smem:[%s144]]
  %s146 = scalar_lea.smem %s0, 73
  %s147 = sld [smem:[%s146]]
  %s148 = scalar_lea.smem %s0, 74
  %s149 = sld [smem:[%s148]]
  %s150 = scalar_lea.smem %s0, 75
  %s151 = sld [smem:[%s150]]
  %s152 = scalar_lea.smem %s0, 76
  %s153 = sld [smem:[%s152]]
  %s154 = scalar_lea.smem %s0, 77
  %s155 = sld [smem:[%s154]]
  %s156 = scalar_lea.smem %s0, 78
  %s157 = sld [smem:[%s156]]
  %s158 = scalar_lea.smem %s0, 79
  %s159 = sld [smem:[%s158]]
  %s160 = scalar_lea.smem %s0, 80
  %s161 = sld [smem:[%s160]]
  %s162 = scalar_lea.smem %s0, 81
  %s163 = sld [smem:[%s162]]
  %s164 = scalar_lea.smem %s0, 82
  %s165 = sld [smem:[%s164]]
  %s166 = sld [smem:[#allocation0]]
  $region482: #{aimp_forward.1} parent=0
    _
  %s168 = ssub.s32 1, %s166
  %s169 = scalar_select 0, %s168, %s166
  $region1: #{aimp_forward.1} parent=0
    #allocation3 [shape = 'u8[512]{0}', space=vmem, size = 0x400, scoped, tag = 'input window, operand 23, single buffered']
    #allocation4 [shape = 's32[1]{0}', space=sflag, size = 0x4, scoped, tag = 'scoped memory for aimp_forward.1']
    #allocation5 [shape = 'u8[512]{0}', space=vmem, size = 0x400, scoped, tag = 'input window, operand 24, single buffered']
    #allocation6 [shape = 's32[1]{0}', space=sflag, size = 0x4, scoped, tag = 'scoped memory for aimp_forward.1']
    #allocation7 [shape = 'u8[512]{0}', space=vmem, size = 0x400, scoped, tag = 'input window, operand 26, single buffered']
    #allocation8 [shape = 'u8[512]{0}', space=vmem, size = 0x400, scoped, tag = 'input window, operand 27, single buffered']
    #allocation9 [shape = 's32[1]{0}', space=sflag, size = 0x4, scoped, tag = 'scoped memory for aimp_forward.1']
    #allocation10 [shape = 'u8[512]{0}', space=vmem, size = 0x400, scoped, tag = 'input window, operand 28, single buffered']
    #allocation11 [shape = 'u8[512]{0}', space=vmem, size = 0x400, scoped, tag = 'input window, operand 29, single buffered']
    #allocation12 [shape = 's32[1]{0}', space=sflag, size = 0x4, scoped, tag = 'scoped memory for aimp_forward.1']
    #allocation13 [shape = 'u8[512]{0}', space=vmem, size = 0x400, scoped, tag = 'input window, operand 33, single buffered']
    #allocation14 [shape = 'u8[512]{0}', space=vmem, size = 0x400, scoped, tag = 'input window, operand 34, single buffered']
    #allocation15 [shape = 's32[1]{0}', space=sflag, size = 0x4, scoped, tag = 'scoped memory for aimp_forward.1']
    #allocation16 [shape = 'u8[512]{0}', space=vmem, size = 0x400, scoped, tag = 'input window, operand 35, single buffered']
    #allocation17 [shape = 'u8[512]{0}', space=vmem, size = 0x400, scoped, tag = 'input window, operand 40, single buffered']
    #allocation18 [shape = 's32[1]{0}', space=sflag, size = 0x4, scoped, tag = 'scoped memory for aimp_forward.1']
    #allocation19 [shape = 'u8[512]{0}', space=vmem, size = 0x400, scoped, tag = 'input window, operand 43, single buffered']
    #allocation20 [shape = 'u8[512]{0}', space=vmem, size = 0x400, scoped, tag = 'input window, operand 44, single buffered']
    #allocation21 [shape = 's32[1]{0}', space=sflag, size = 0x4, scoped, tag = 'scoped memory for aimp_forward.1']
    #allocation22 [shape = 'u8[512]{0}', space=vmem, size = 0x400, scoped, tag = 'input window, operand 45, single buffered']
    #allocation23 [shape = 'u8[512]{0}', space=vmem, size = 0x400, scoped, tag = 'input window, operand 46, single buffered']
    #allocation24 [shape = 's32[1]{0}', space=sflag, size = 0x4, scoped, tag = 'scoped memory for aimp_forward.1']
    #allocation25 [shape = 'u8[512]{0}', space=vmem, size = 0x400, scoped, tag = 'input window, operand 47, single buffered']
    #allocation26 [shape = 'u8[512]{0}', space=vmem, size = 0x400, scoped, tag = 'input window, operand 48, single buffered']
    #allocation27 [shape = 's32[1]{0}', space=sflag, size = 0x4, scoped, tag = 'scoped memory for aimp_forward.1']
    #allocation28 [shape = 'u8[512]{0}', space=vmem, size = 0x400, scoped, tag = 'input window, operand 49, single buffered']
    #allocation29 [shape = 'u8[512]{0}', space=vmem, size = 0x400, scoped, tag = 'input window, operand 50, single buffered']
    #allocation30 [shape = 's32[1]{0}', space=sflag, size = 0x4, scoped, tag = 'scoped memory for aimp_forward.1']
    #allocation31 [shape = 'u8[512]{0}', space=vmem, size = 0x400, scoped, tag = 'input window, operand 51, single buffered']
    #allocation32 [shape = 'u8[512]{0}', space=vmem, size = 0x400, scoped, tag = 'input window, operand 55, single buffered']
    #allocation33 [shape = 's32[1]{0}', space=sflag, size = 0x4, scoped, tag = 'scoped memory for aimp_forward.1']
    #allocation34 [shape = 'u8[512]{0}', space=vmem, size = 0x400, scoped, tag = 'input window, operand 56, single buffered']
    #allocation35 [shape = 'u8[512]{0}', space=vmem, size = 0x400, scoped, tag = 'input window, operand 58, single buffered']
    #allocation36 [shape = 's32[1]{0}', space=sflag, size = 0x4, scoped, tag = 'scoped memory for aimp_forward.1']
    #allocation37 [shape = 'u8[512]{0}', space=vmem, size = 0x400, scoped, tag = 'input window, operand 61, single buffered']
    #allocation38 [shape = 'u8[512]{0}', space=vmem, size = 0x400, scoped, tag = 'input window, operand 62, single buffered']
    #allocation39 [shape = 's32[1]{0}', space=sflag, size = 0x4, scoped, tag = 'scoped memory for aimp_forward.1']
    #allocation40 [shape = 'u8[512]{0}', space=vmem, size = 0x400, scoped, tag = 'input window, operand 63, single buffered']
    #allocation41 [shape = 'u8[512]{0}', space=vmem, size = 0x400, scoped, tag = 'input window, operand 64, single buffered']
    #allocation42 [shape = 's32[1]{0}', space=sflag, size = 0x4, scoped, tag = 'scoped memory for aimp_forward.1']
    #allocation43 [shape = 'u8[512]{0}', space=vmem, size = 0x400, scoped, tag = 'input window, operand 65, single buffered']
    #allocation44 [shape = 'u8[512]{0}', space=vmem, size = 0x400, scoped, tag = 'input window, operand 66, single buffered']
    #allocation45 [shape = 's32[1]{0}', space=sflag, size = 0x4, scoped, tag = 'scoped memory for aimp_forward.1']
    #allocation46 [shape = 'u8[512]{0}', space=vmem, size = 0x400, scoped, tag = 'input window, operand 67, single buffered']
    #allocation47 [shape = 'u8[512]{0}', space=vmem, size = 0x400, scoped, tag = 'input window, operand 71, single buffered']
    #allocation48 [shape = 's32[1]{0}', space=sflag, size = 0x4, scoped, tag = 'scoped memory for aimp_forward.1']
    #allocation49 [shape = 'u8[512]{0}', space=vmem, size = 0x400, scoped, tag = 'input window, operand 72, single buffered']
    #allocation50 [shape = 'u8[512]{0}', space=vmem, size = 0x400, scoped, tag = 'input window, operand 73, single buffered']
    #allocation51 [shape = 's32[1]{0}', space=sflag, size = 0x4, scoped, tag = 'scoped memory for aimp_forward.1']
    #allocation52 [shape = 'u8[512]{0}', space=vmem, size = 0x400, scoped, tag = 'input window, operand 74, single buffered']
    #allocation53 [shape = 'u8[512]{0}', space=vmem, size = 0x400, scoped, tag = 'input window, operand 75, single buffered']
    #allocation54 [shape = 's32[1]{0}', space=sflag, size = 0x4, scoped, tag = 'scoped memory for aimp_forward.1']
    #allocation55 [shape = 'u8[512]{0}', space=vmem, size = 0x400, scoped, tag = 'input window, operand 77, single buffered']
    #allocation56 [shape = 'u8[512]{0}', space=vmem, size = 0x400, scoped, tag = 'input window, operand 78, single buffered']
    #allocation57 [shape = 's32[1]{0}', space=sflag, size = 0x4, scoped, tag = 'scoped memory for aimp_forward.1']
    %170 = vsyncpa [#allocation4], 0
    %171 = vsyncpa [#allocation6], 0
    %172 = vsyncpa [#allocation9], 0
    %173 = vsyncpa [#allocation12], 0
    %174 = vsyncpa [#allocation15], 0
    %175 = vsyncpa [#allocation18], 0
    %176 = vsyncpa [#allocation21], 0
    %177 = vsyncpa [#allocation24], 0
    %178 = vsyncpa [#allocation27], 0
    %179 = vsyncpa [#allocation30], 0
    %180 = vsyncpa [#allocation33], 0
    %181 = vsyncpa [#allocation36], 0
    %182 = vsyncpa [#allocation39], 0
    %183 = vsyncpa [#allocation42], 0
    %184 = vsyncpa [#allocation45], 0
    %185 = vsyncpa [#allocation48], 0
    %186 = vsyncpa [#allocation51], 0
    %187 = vsyncpa [#allocation54], 0
    %188 = vsyncpa [#allocation57], 0
    // Predicated region
    $region2: #{aimp_forward.1} parent=1 // pred_check
      _
    $region3: #{aimp_forward.1} parent=1 // pred_check_branch
      %190 = sbr.rel (0) target = $region5
    $region4: #{aimp_forward.1} parent=1 // pred_region
      _
    $region5: #{aimp_forward.1} parent=1 // pred_fallthru
      _
    // Predicated region
    $region6: #{aimp_forward.1} parent=1 // pred_check
      _
    $region7: #{aimp_forward.1} parent=1 // pred_check_branch
      %192 = sbr.rel (0) target = $region9
    $region8: #{aimp_forward.1} parent=1 // pred_region
      _
    $region9: #{aimp_forward.1} parent=1 // pred_fallthru
      _
    // Predicated region
    $region10: #{aimp_forward.1} parent=1 // pred_check
      _
    $region11: #{aimp_forward.1} parent=1 // pred_check_branch
      %194 = sbr.rel (0) target = $region13
    $region12: #{aimp_forward.1} parent=1 // pred_region
      _
    $region13: #{aimp_forward.1} parent=1 // pred_fallthru
      _
    // Predicated region
    $region14: #{aimp_forward.1} parent=1 // pred_check
      _
    $region15: #{aimp_forward.1} parent=1 // pred_check_branch
      %196 = sbr.rel (0) target = $region17
    $region16: #{aimp_forward.1} parent=1 // pred_region
      _
    $region17: #{aimp_forward.1} parent=1 // pred_fallthru
      _
    // Predicated region
    $region18: #{aimp_forward.1} parent=1 // pred_check
      _
    $region19: #{aimp_forward.1} parent=1 // pred_check_branch
      %198 = sbr.rel (0) target = $region21
    $region20: #{aimp_forward.1} parent=1 // pred_region
      _
    $region21: #{aimp_forward.1} parent=1 // pred_fallthru
      _
    // Predicated region
    $region22: #{aimp_forward.1} parent=1 // pred_check
      _
    $region23: #{aimp_forward.1} parent=1 // pred_check_branch
      %200 = sbr.rel (0) target = $region25
    $region24: #{aimp_forward.1} parent=1 // pred_region
      _
    $region25: #{aimp_forward.1} parent=1 // pred_fallthru
      _
    // Predicated region
    $region26: #{aimp_forward.1} parent=1 // pred_check
      _
    $region27: #{aimp_forward.1} parent=1 // pred_check_branch
      %202 = sbr.rel (0) target = $region29
    $region28: #{aimp_forward.1} parent=1 // pred_region
      _
    $region29: #{aimp_forward.1} parent=1 // pred_fallthru
      _
    // Predicated region
    $region30: #{aimp_forward.1} parent=1 // pred_check
      _
    $region31: #{aimp_forward.1} parent=1 // pred_check_branch
      %204 = sbr.rel (0) target = $region33
    $region32: #{aimp_forward.1} parent=1 // pred_region
      _
    $region33: #{aimp_forward.1} parent=1 // pred_fallthru
      _
    // Predicated region
    $region34: #{aimp_forward.1} parent=1 // pred_check
      _
    $region35: #{aimp_forward.1} parent=1 // pred_check_branch
      %206 = sbr.rel (0) target = $region37
    $region36: #{aimp_forward.1} parent=1 // pred_region
      _
    $region37: #{aimp_forward.1} parent=1 // pred_fallthru
      _
    // Predicated region
    $region38: #{aimp_forward.1} parent=1 // pred_check
      _
    $region39: #{aimp_forward.1} parent=1 // pred_check_branch
      %208 = sbr.rel (0) target = $region41
    $region40: #{aimp_forward.1} parent=1 // pred_region
      _
    $region41: #{aimp_forward.1} parent=1 // pred_fallthru
      _
    // Predicated region
    $region42: #{aimp_forward.1} parent=1 // pred_check
      _
    $region43: #{aimp_forward.1} parent=1 // pred_check_branch
      %210 = sbr.rel (0) target = $region45
    $region44: #{aimp_forward.1} parent=1 // pred_region
      _
    $region45: #{aimp_forward.1} parent=1 // pred_fallthru
      _
    // Predicated region
    $region46: #{aimp_forward.1} parent=1 // pred_check
      _
    $region47: #{aimp_forward.1} parent=1 // pred_check_branch
      %212 = sbr.rel (0) target = $region49
    $region48: #{aimp_forward.1} parent=1 // pred_region
      _
    $region49: #{aimp_forward.1} parent=1 // pred_fallthru
      _
    // Predicated region
    $region50: #{aimp_forward.1} parent=1 // pred_check
      _
    $region51: #{aimp_forward.1} parent=1 // pred_check_branch
      %214 = sbr.rel (0) target = $region53
    $region52: #{aimp_forward.1} parent=1 // pred_region
      _
    $region53: #{aimp_forward.1} parent=1 // pred_fallthru
      _
    // Predicated region
    $region54: #{aimp_forward.1} parent=1 // pred_check
      _
    $region55: #{aimp_forward.1} parent=1 // pred_check_branch
      %216 = sbr.rel (0) target = $region57
    $region56: #{aimp_forward.1} parent=1 // pred_region
      _
    $region57: #{aimp_forward.1} parent=1 // pred_fallthru
      _
    // Predicated region
    $region58: #{aimp_forward.1} parent=1 // pred_check
      _
    $region59: #{aimp_forward.1} parent=1 // pred_check_branch
      %218 = sbr.rel (0) target = $region61
    $region60: #{aimp_forward.1} parent=1 // pred_region
      _
    $region61: #{aimp_forward.1} parent=1 // pred_fallthru
      _
    // Predicated region
    $region62: #{aimp_forward.1} parent=1 // pred_check
      _
    $region63: #{aimp_forward.1} parent=1 // pred_check_branch
      %220 = sbr.rel (0) target = $region65
    $region64: #{aimp_forward.1} parent=1 // pred_region
      _
    $region65: #{aimp_forward.1} parent=1 // pred_fallthru
      _
    // Predicated region
    $region66: #{aimp_forward.1} parent=1 // pred_check
      _
    $region67: #{aimp_forward.1} parent=1 // pred_check_branch
      %222 = sbr.rel (0) target = $region69
    $region68: #{aimp_forward.1} parent=1 // pred_region
      _
    $region69: #{aimp_forward.1} parent=1 // pred_fallthru
      _
    // Predicated region
    $region70: #{aimp_forward.1} parent=1 // pred_check
      _
    $region71: #{aimp_forward.1} parent=1 // pred_check_branch
      %224 = sbr.rel (0) target = $region73
    $region72: #{aimp_forward.1} parent=1 // pred_region
      _
    $region73: #{aimp_forward.1} parent=1 // pred_fallthru
      _
    // Predicated region
    $region74: #{aimp_forward.1} parent=1 // pred_check
      _
    $region75: #{aimp_forward.1} parent=1 // pred_check_branch
      %226 = sbr.rel (0) target = $region77
    $region76: #{aimp_forward.1} parent=1 // pred_region
      _
    $region77: #{aimp_forward.1} parent=1 // pred_fallthru
      _
    // Predicated region
    $region78: #{aimp_forward.1} parent=1 // pred_check
      _
    $region79: #{aimp_forward.1} parent=1 // pred_check_branch
      %228 = sbr.rel (0) target = $region81
    $region80: #{aimp_forward.1} parent=1 // pred_region
      _
    $region81: #{aimp_forward.1} parent=1 // pred_fallthru
      _
    // Predicated region
    $region82: #{aimp_forward.1} parent=1 // pred_check
      _
    $region83: #{aimp_forward.1} parent=1 // pred_check_branch
      %230 = sbr.rel (0) target = $region85
    $region84: #{aimp_forward.1} parent=1 // pred_region
      _
    $region85: #{aimp_forward.1} parent=1 // pred_fallthru
      _
    // Predicated region
    $region86: #{aimp_forward.1} parent=1 // pred_check
      _
    $region87: #{aimp_forward.1} parent=1 // pred_check_branch
      %232 = sbr.rel (0) target = $region89
    $region88: #{aimp_forward.1} parent=1 // pred_region
      _
    $region89: #{aimp_forward.1} parent=1 // pred_fallthru
      _
    // Predicated region
    $region90: #{aimp_forward.1} parent=1 // pred_check
      _
    $region91: #{aimp_forward.1} parent=1 // pred_check_branch
      %234 = sbr.rel (0) target = $region93
    $region92: #{aimp_forward.1} parent=1 // pred_region
      _
    $region93: #{aimp_forward.1} parent=1 // pred_fallthru
      _
    // Predicated region
    $region94: #{aimp_forward.1} parent=1 // pred_check
      _
    $region95: #{aimp_forward.1} parent=1 // pred_check_branch
      %236 = sbr.rel (0) target = $region97
    $region96: #{aimp_forward.1} parent=1 // pred_region
      %s238 = ssub.s32 16, 16
      %239 = vsyncadd [#allocation4], %s238
      %s241 = sshll.u32 [#allocation3], 4
      %s242 = int_to_ptr.vmem [resolvable:$true] %s241
      %244 = dma.hbm_to_vmem [thread:$0]  %s47, 16, %s242, [#allocation4]
    $region97: #{aimp_forward.1} parent=1 // pred_fallthru
      _
    // Predicated region
    $region98: #{aimp_forward.1} parent=1 // pred_check
      _
    $region99: #{aimp_forward.1} parent=1 // pred_check_branch
      %246 = sbr.rel (0) target = $region101
    $region100: #{aimp_forward.1} parent=1 // pred_region
      %s248 = ssub.s32 16, 16
      %249 = vsyncadd [#allocation6], %s248
      %s251 = sshll.u32 [#allocation5], 4
      %s252 = int_to_ptr.vmem [resolvable:$true] %s251
      %254 = dma.hbm_to_vmem [thread:$0]  %s49, 16, %s252, [#allocation6]
    $region101: #{aimp_forward.1} parent=1 // pred_fallthru
      _
    // Predicated region
    $region102: #{aimp_forward.1} parent=1 // pred_check
      _
    $region103: #{aimp_forward.1} parent=1 // pred_check_branch
      %256 = sbr.rel (0) target = $region105
    $region104: #{aimp_forward.1} parent=1 // pred_region
      _
    $region105: #{aimp_forward.1} parent=1 // pred_fallthru
      _
    // Predicated region
    $region106: #{aimp_forward.1} parent=1 // pred_check
      _
    $region107: #{aimp_forward.1} parent=1 // pred_check_branch
      %258 = sbr.rel (0) target = $region109
    $region108: #{aimp_forward.1} parent=1 // pred_region
      %s260 = ssub.s32 16, 16
      %261 = vsyncadd [#allocation6], %s260
      %s263 = sshll.u32 [#allocation7], 4
      %s264 = int_to_ptr.vmem [resolvable:$true] %s263
      %266 = dma.hbm_to_vmem [thread:$0]  %s53, 16, %s264, [#allocation6]
    $region109: #{aimp_forward.1} parent=1 // pred_fallthru
      _
    // Predicated region
    $region110: #{aimp_forward.1} parent=1 // pred_check
      _
    $region111: #{aimp_forward.1} parent=1 // pred_check_branch
      %268 = sbr.rel (0) target = $region113
    $region112: #{aimp_forward.1} parent=1 // pred_region
      %s270 = ssub.s32 16, 16
      %271 = vsyncadd [#allocation9], %s270
      %s273 = sshll.u32 [#allocation8], 4
      %s274 = int_to_ptr.vmem [resolvable:$true] %s273
      %276 = dma.hbm_to_vmem [thread:$0]  %s55, 16, %s274, [#allocation9]
    $region113: #{aimp_forward.1} parent=1 // pred_fallthru
      _
    // Predicated region
    $region114: #{aimp_forward.1} parent=1 // pred_check
      _
    $region115: #{aimp_forward.1} parent=1 // pred_check_branch
      %278 = sbr.rel (0) target = $region117
    $region116: #{aimp_forward.1} parent=1 // pred_region
      %s280 = ssub.s32 16, 16
      %281 = vsyncadd [#allocation9], %s280
      %s283 = sshll.u32 [#allocation10], 4
      %s284 = int_to_ptr.vmem [resolvable:$true] %s283
      %286 = dma.hbm_to_vmem [thread:$0]  %s57, 16, %s284, [#allocation9]
    $region117: #{aimp_forward.1} parent=1 // pred_fallthru
      _
    // Predicated region
    $region118: #{aimp_forward.1} parent=1 // pred_check
      _
    $region119: #{aimp_forward.1} parent=1 // pred_check_branch
      %288 = sbr.rel (0) target = $region121
    $region120: #{aimp_forward.1} parent=1 // pred_region
      %s290 = ssub.s32 16, 16
      %291 = vsyncadd [#allocation12], %s290
      %s293 = sshll.u32 [#allocation11], 4
      %s294 = int_to_ptr.vmem [resolvable:$true] %s293
      %296 = dma.hbm_to_vmem [thread:$0]  %s59, 16, %s294, [#allocation12]
    $region121: #{aimp_forward.1} parent=1 // pred_fallthru
      _
    // Predicated region
    $region122: #{aimp_forward.1} parent=1 // pred_check
      _
    $region123: #{aimp_forward.1} parent=1 // pred_check_branch
      %298 = sbr.rel (0) target = $region125
    $region124: #{aimp_forward.1} parent=1 // pred_region
      _
    $region125: #{aimp_forward.1} parent=1 // pred_fallthru
      _
    // Predicated region
    $region126: #{aimp_forward.1} parent=1 // pred_check
      _
    $region127: #{aimp_forward.1} parent=1 // pred_check_branch
      %300 = sbr.rel (0) target = $region129
    $region128: #{aimp_forward.1} parent=1 // pred_region
      _
    $region129: #{aimp_forward.1} parent=1 // pred_fallthru
      _
    // Predicated region
    $region130: #{aimp_forward.1} parent=1 // pred_check
      _
    $region131: #{aimp_forward.1} parent=1 // pred_check_branch
      %302 = sbr.rel (0) target = $region133
    $region132: #{aimp_forward.1} parent=1 // pred_region
      _
    $region133: #{aimp_forward.1} parent=1 // pred_fallthru
      _
    // Predicated region
    $region134: #{aimp_forward.1} parent=1 // pred_check
      _
    $region135: #{aimp_forward.1} parent=1 // pred_check_branch
      %304 = sbr.rel (0) target = $region137
    $region136: #{aimp_forward.1} parent=1 // pred_region
      %s306 = ssub.s32 16, 16
      %307 = vsyncadd [#allocation12], %s306
      %s309 = sshll.u32 [#allocation13], 4
      %s310 = int_to_ptr.vmem [resolvable:$true] %s309
      %312 = dma.hbm_to_vmem [thread:$0]  %s67, 16, %s310, [#allocation12]
    $region137: #{aimp_forward.1} parent=1 // pred_fallthru
      _
    // Predicated region
    $region138: #{aimp_forward.1} parent=1 // pred_check
      _
    $region139: #{aimp_forward.1} parent=1 // pred_check_branch
      %314 = sbr.rel (0) target = $region141
    $region140: #{aimp_forward.1} parent=1 // pred_region
      %s316 = ssub.s32 16, 16
      %317 = vsyncadd [#allocation15], %s316
      %s319 = sshll.u32 [#allocation14], 4
      %s320 = int_to_ptr.vmem [resolvable:$true] %s319
      %322 = dma.hbm_to_vmem [thread:$0]  %s69, 16, %s320, [#allocation15]
    $region141: #{aimp_forward.1} parent=1 // pred_fallthru
      _
    // Predicated region
    $region142: #{aimp_forward.1} parent=1 // pred_check
      _
    $region143: #{aimp_forward.1} parent=1 // pred_check_branch
      %324 = sbr.rel (0) target = $region145
    $region144: #{aimp_forward.1} parent=1 // pred_region
      %s326 = ssub.s32 16, 16
      %327 = vsyncadd [#allocation15], %s326
      %s329 = sshll.u32 [#allocation16], 4
      %s330 = int_to_ptr.vmem [resolvable:$true] %s329
      %332 = dma.hbm_to_vmem [thread:$0]  %s71, 16, %s330, [#allocation15]
    $region145: #{aimp_forward.1} parent=1 // pred_fallthru
      _
    // Predicated region
    $region146: #{aimp_forward.1} parent=1 // pred_check
      _
    $region147: #{aimp_forward.1} parent=1 // pred_check_branch
      %334 = sbr.rel (0) target = $region149
    $region148: #{aimp_forward.1} parent=1 // pred_region
      _
    $region149: #{aimp_forward.1} parent=1 // pred_fallthru
      _
    // Predicated region
    $region150: #{aimp_forward.1} parent=1 // pred_check
      _
    $region151: #{aimp_forward.1} parent=1 // pred_check_branch
      %336 = sbr.rel (0) target = $region153
    $region152: #{aimp_forward.1} parent=1 // pred_region
      _
    $region153: #{aimp_forward.1} parent=1 // pred_fallthru
      _
    // Predicated region
    $region154: #{aimp_forward.1} parent=1 // pred_check
      _
    $region155: #{aimp_forward.1} parent=1 // pred_check_branch
      %338 = sbr.rel (0) target = $region157
    $region156: #{aimp_forward.1} parent=1 // pred_region
      _
    $region157: #{aimp_forward.1} parent=1 // pred_fallthru
      _
    // Predicated region
    $region158: #{aimp_forward.1} parent=1 // pred_check
      _
    $region159: #{aimp_forward.1} parent=1 // pred_check_branch
      %340 = sbr.rel (0) target = $region161
    $region160: #{aimp_forward.1} parent=1 // pred_region
      _
    $region161: #{aimp_forward.1} parent=1 // pred_fallthru
      _
    // Predicated region
    $region162: #{aimp_forward.1} parent=1 // pred_check
      _
    $region163: #{aimp_forward.1} parent=1 // pred_check_branch
      %342 = sbr.rel (0) target = $region165
    $region164: #{aimp_forward.1} parent=1 // pred_region
      %s344 = ssub.s32 16, 16
      %345 = vsyncadd [#allocation18], %s344
      %s347 = sshll.u32 [#allocation17], 4
      %s348 = int_to_ptr.vmem [resolvable:$true] %s347
      %350 = dma.hbm_to_vmem [thread:$0]  %s81, 16, %s348, [#allocation18]
    $region165: #{aimp_forward.1} parent=1 // pred_fallthru
      _
    // Predicated region
    $region166: #{aimp_forward.1} parent=1 // pred_check
      _
    $region167: #{aimp_forward.1} parent=1 // pred_check_branch
      %352 = sbr.rel (0) target = $region169
    $region168: #{aimp_forward.1} parent=1 // pred_region
      _
    $region169: #{aimp_forward.1} parent=1 // pred_fallthru
      _
    // Predicated region
    $region170: #{aimp_forward.1} parent=1 // pred_check
      _
    $region171: #{aimp_forward.1} parent=1 // pred_check_branch
      %354 = sbr.rel (0) target = $region173
    $region172: #{aimp_forward.1} parent=1 // pred_region
      _
    $region173: #{aimp_forward.1} parent=1 // pred_fallthru
      _
    // Predicated region
    $region174: #{aimp_forward.1} parent=1 // pred_check
      _
    $region175: #{aimp_forward.1} parent=1 // pred_check_branch
      %356 = sbr.rel (0) target = $region177
    $region176: #{aimp_forward.1} parent=1 // pred_region
      %s358 = ssub.s32 16, 16
      %359 = vsyncadd [#allocation18], %s358
      %s361 = sshll.u32 [#allocation19], 4
      %s362 = int_to_ptr.vmem [resolvable:$true] %s361
      %364 = dma.hbm_to_vmem [thread:$0]  %s87, 16, %s362, [#allocation18]
    $region177: #{aimp_forward.1} parent=1 // pred_fallthru
      _
    // Predicated region
    $region178: #{aimp_forward.1} parent=1 // pred_check
      _
    $region179: #{aimp_forward.1} parent=1 // pred_check_branch
      %366 = sbr.rel (0) target = $region181
    $region180: #{aimp_forward.1} parent=1 // pred_region
      %s368 = ssub.s32 16, 16
      %369 = vsyncadd [#allocation21], %s368
      %s371 = sshll.u32 [#allocation20], 4
      %s372 = int_to_ptr.vmem [resolvable:$true] %s371
      %374 = dma.hbm_to_vmem [thread:$0]  %s89, 16, %s372, [#allocation21]
    $region181: #{aimp_forward.1} parent=1 // pred_fallthru
      _
    // Predicated region
    $region182: #{aimp_forward.1} parent=1 // pred_check
      _
    $region183: #{aimp_forward.1} parent=1 // pred_check_branch
      %376 = sbr.rel (0) target = $region185
    $region184: #{aimp_forward.1} parent=1 // pred_region
      %s378 = ssub.s32 16, 16
      %379 = vsyncadd [#allocation21], %s378
      %s381 = sshll.u32 [#allocation22], 4
      %s382 = int_to_ptr.vmem [resolvable:$true] %s381
      %384 = dma.hbm_to_vmem [thread:$0]  %s91, 16, %s382, [#allocation21]
    $region185: #{aimp_forward.1} parent=1 // pred_fallthru
      _
    // Predicated region
    $region186: #{aimp_forward.1} parent=1 // pred_check
      _
    $region187: #{aimp_forward.1} parent=1 // pred_check_branch
      %386 = sbr.rel (0) target = $region189
    $region188: #{aimp_forward.1} parent=1 // pred_region
      %s388 = ssub.s32 16, 16
      %389 = vsyncadd [#allocation24], %s388
      %s391 = sshll.u32 [#allocation23], 4
      %s392 = int_to_ptr.vmem [resolvable:$true] %s391
      %394 = dma.hbm_to_vmem [thread:$0]  %s93, 16, %s392, [#allocation24]
    $region189: #{aimp_forward.1} parent=1 // pred_fallthru
      _
    // Predicated region
    $region190: #{aimp_forward.1} parent=1 // pred_check
      _
    $region191: #{aimp_forward.1} parent=1 // pred_check_branch
      %396 = sbr.rel (0) target = $region193
    $region192: #{aimp_forward.1} parent=1 // pred_region
      %s398 = ssub.s32 16, 16
      %399 = vsyncadd [#allocation24], %s398
      %s401 = sshll.u32 [#allocation25], 4
      %s402 = int_to_ptr.vmem [resolvable:$true] %s401
      %404 = dma.hbm_to_vmem [thread:$0]  %s95, 16, %s402, [#allocation24]
    $region193: #{aimp_forward.1} parent=1 // pred_fallthru
      _
    // Predicated region
    $region194: #{aimp_forward.1} parent=1 // pred_check
      _
    $region195: #{aimp_forward.1} parent=1 // pred_check_branch
      %406 = sbr.rel (0) target = $region197
    $region196: #{aimp_forward.1} parent=1 // pred_region
      %s408 = ssub.s32 16, 16
      %409 = vsyncadd [#allocation27], %s408
      %s411 = sshll.u32 [#allocation26], 4
      %s412 = int_to_ptr.vmem [resolvable:$true] %s411
      %414 = dma.hbm_to_vmem [thread:$0]  %s97, 16, %s412, [#allocation27]
    $region197: #{aimp_forward.1} parent=1 // pred_fallthru
      _
    // Predicated region
    $region198: #{aimp_forward.1} parent=1 // pred_check
      _
    $region199: #{aimp_forward.1} parent=1 // pred_check_branch
      %416 = sbr.rel (0) target = $region201
    $region200: #{aimp_forward.1} parent=1 // pred_region
      %s418 = ssub.s32 16, 16
      %419 = vsyncadd [#allocation27], %s418
      %s421 = sshll.u32 [#allocation28], 4
      %s422 = int_to_ptr.vmem [resolvable:$true] %s421
      %424 = dma.hbm_to_vmem [thread:$0]  %s99, 16, %s422, [#allocation27]
    $region201: #{aimp_forward.1} parent=1 // pred_fallthru
      _
    // Predicated region
    $region202: #{aimp_forward.1} parent=1 // pred_check
      _
    $region203: #{aimp_forward.1} parent=1 // pred_check_branch
      %426 = sbr.rel (0) target = $region205
    $region204: #{aimp_forward.1} parent=1 // pred_region
      %s428 = ssub.s32 16, 16
      %429 = vsyncadd [#allocation30], %s428
      %s431 = sshll.u32 [#allocation29], 4
      %s432 = int_to_ptr.vmem [resolvable:$true] %s431
      %434 = dma.hbm_to_vmem [thread:$0]  %s101, 16, %s432, [#allocation30]
    $region205: #{aimp_forward.1} parent=1 // pred_fallthru
      _
    // Predicated region
    $region206: #{aimp_forward.1} parent=1 // pred_check
      _
    $region207: #{aimp_forward.1} parent=1 // pred_check_branch
      %436 = sbr.rel (0) target = $region209
    $region208: #{aimp_forward.1} parent=1 // pred_region
      %s438 = ssub.s32 16, 16
      %439 = vsyncadd [#allocation30], %s438
      %s441 = sshll.u32 [#allocation31], 4
      %s442 = int_to_ptr.vmem [resolvable:$true] %s441
      %444 = dma.hbm_to_vmem [thread:$0]  %s103, 16, %s442, [#allocation30]
    $region209: #{aimp_forward.1} parent=1 // pred_fallthru
      _
    // Predicated region
    $region210: #{aimp_forward.1} parent=1 // pred_check
      _
    $region211: #{aimp_forward.1} parent=1 // pred_check_branch
      %446 = sbr.rel (0) target = $region213
    $region212: #{aimp_forward.1} parent=1 // pred_region
      _
    $region213: #{aimp_forward.1} parent=1 // pred_fallthru
      _
    // Predicated region
    $region214: #{aimp_forward.1} parent=1 // pred_check
      _
    $region215: #{aimp_forward.1} parent=1 // pred_check_branch
      %448 = sbr.rel (0) target = $region217
    $region216: #{aimp_forward.1} parent=1 // pred_region
      _
    $region217: #{aimp_forward.1} parent=1 // pred_fallthru
      _
    // Predicated region
    $region218: #{aimp_forward.1} parent=1 // pred_check
      _
    $region219: #{aimp_forward.1} parent=1 // pred_check_branch
      %450 = sbr.rel (0) target = $region221
    $region220: #{aimp_forward.1} parent=1 // pred_region
      _
    $region221: #{aimp_forward.1} parent=1 // pred_fallthru
      _
    // Predicated region
    $region222: #{aimp_forward.1} parent=1 // pred_check
      _
    $region223: #{aimp_forward.1} parent=1 // pred_check_branch
      %452 = sbr.rel (0) target = $region225
    $region224: #{aimp_forward.1} parent=1 // pred_region
      %s454 = ssub.s32 16, 16
      %455 = vsyncadd [#allocation33], %s454
      %s457 = sshll.u32 [#allocation32], 4
      %s458 = int_to_ptr.vmem [resolvable:$true] %s457
      %460 = dma.hbm_to_vmem [thread:$0]  %s111, 16, %s458, [#allocation33]
    $region225: #{aimp_forward.1} parent=1 // pred_fallthru
      _
    // Predicated region
    $region226: #{aimp_forward.1} parent=1 // pred_check
      _
    $region227: #{aimp_forward.1} parent=1 // pred_check_branch
      %462 = sbr.rel (0) target = $region229
    $region228: #{aimp_forward.1} parent=1 // pred_region
      %s464 = ssub.s32 16, 16
      %465 = vsyncadd [#allocation33], %s464
      %s467 = sshll.u32 [#allocation34], 4
      %s468 = int_to_ptr.vmem [resolvable:$true] %s467
      %470 = dma.hbm_to_vmem [thread:$0]  %s113, 16, %s468, [#allocation33]
    $region229: #{aimp_forward.1} parent=1 // pred_fallthru
      _
    // Predicated region
    $region230: #{aimp_forward.1} parent=1 // pred_check
      _
    $region231: #{aimp_forward.1} parent=1 // pred_check_branch
      %472 = sbr.rel (0) target = $region233
    $region232: #{aimp_forward.1} parent=1 // pred_region
      _
    $region233: #{aimp_forward.1} parent=1 // pred_fallthru
      _
    // Predicated region
    $region234: #{aimp_forward.1} parent=1 // pred_check
      _
    $region235: #{aimp_forward.1} parent=1 // pred_check_branch
      %474 = sbr.rel (0) target = $region237
    $region236: #{aimp_forward.1} parent=1 // pred_region
      %s476 = ssub.s32 16, 16
      %477 = vsyncadd [#allocation36], %s476
      %s479 = sshll.u32 [#allocation35], 4
      %s480 = int_to_ptr.vmem [resolvable:$true] %s479
      %482 = dma.hbm_to_vmem [thread:$0]  %s117, 16, %s480, [#allocation36]
    $region237: #{aimp_forward.1} parent=1 // pred_fallthru
      _
    // Predicated region
    $region238: #{aimp_forward.1} parent=1 // pred_check
      _
    $region239: #{aimp_forward.1} parent=1 // pred_check_branch
      %484 = sbr.rel (0) target = $region241
    $region240: #{aimp_forward.1} parent=1 // pred_region
      _
    $region241: #{aimp_forward.1} parent=1 // pred_fallthru
      _
    // Predicated region
    $region242: #{aimp_forward.1} parent=1 // pred_check
      _
    $region243: #{aimp_forward.1} parent=1 // pred_check_branch
      %486 = sbr.rel (0) target = $region245
    $region244: #{aimp_forward.1} parent=1 // pred_region
      _
    $region245: #{aimp_forward.1} parent=1 // pred_fallthru
      _
    // Predicated region
    $region246: #{aimp_forward.1} parent=1 // pred_check
      _
    $region247: #{aimp_forward.1} parent=1 // pred_check_branch
      %488 = sbr.rel (0) target = $region249
    $region248: #{aimp_forward.1} parent=1 // pred_region
      %s490 = ssub.s32 16, 16
      %491 = vsyncadd [#allocation36], %s490
      %s493 = sshll.u32 [#allocation37], 4
      %s494 = int_to_ptr.vmem [resolvable:$true] %s493
      %496 = dma.hbm_to_vmem [thread:$0]  %s123, 16, %s494, [#allocation36]
    $region249: #{aimp_forward.1} parent=1 // pred_fallthru
      _
    // Predicated region
    $region250: #{aimp_forward.1} parent=1 // pred_check
      _
    $region251: #{aimp_forward.1} parent=1 // pred_check_branch
      %498 = sbr.rel (0) target = $region253
    $region252: #{aimp_forward.1} parent=1 // pred_region
      %s500 = ssub.s32 16, 16
      %501 = vsyncadd [#allocation39], %s500
      %s503 = sshll.u32 [#allocation38], 4
      %s504 = int_to_ptr.vmem [resolvable:$true] %s503
      %506 = dma.hbm_to_vmem [thread:$0]  %s125, 16, %s504, [#allocation39]
    $region253: #{aimp_forward.1} parent=1 // pred_fallthru
      _
    // Predicated region
    $region254: #{aimp_forward.1} parent=1 // pred_check
      _
    $region255: #{aimp_forward.1} parent=1 // pred_check_branch
      %508 = sbr.rel (0) target = $region257
    $region256: #{aimp_forward.1} parent=1 // pred_region
      %s510 = ssub.s32 16, 16
      %511 = vsyncadd [#allocation39], %s510
      %s513 = sshll.u32 [#allocation40], 4
      %s514 = int_to_ptr.vmem [resolvable:$true] %s513
      %516 = dma.hbm_to_vmem [thread:$0]  %s127, 16, %s514, [#allocation39]
    $region257: #{aimp_forward.1} parent=1 // pred_fallthru
      _
    // Predicated region
    $region258: #{aimp_forward.1} parent=1 // pred_check
      _
    $region259: #{aimp_forward.1} parent=1 // pred_check_branch
      %518 = sbr.rel (0) target = $region261
    $region260: #{aimp_forward.1} parent=1 // pred_region
      %s520 = ssub.s32 16, 16
      %521 = vsyncadd [#allocation42], %s520
      %s523 = sshll.u32 [#allocation41], 4
      %s524 = int_to_ptr.vmem [resolvable:$true] %s523
      %526 = dma.hbm_to_vmem [thread:$0]  %s129, 16, %s524, [#allocation42]
    $region261: #{aimp_forward.1} parent=1 // pred_fallthru
      _
    // Predicated region
    $region262: #{aimp_forward.1} parent=1 // pred_check
      _
    $region263: #{aimp_forward.1} parent=1 // pred_check_branch
      %528 = sbr.rel (0) target = $region265
    $region264: #{aimp_forward.1} parent=1 // pred_region
      %s530 = ssub.s32 16, 16
      %531 = vsyncadd [#allocation42], %s530
      %s533 = sshll.u32 [#allocation43], 4
      %s534 = int_to_ptr.vmem [resolvable:$true] %s533
      %536 = dma.hbm_to_vmem [thread:$0]  %s131, 16, %s534, [#allocation42]
    $region265: #{aimp_forward.1} parent=1 // pred_fallthru
      _
    // Predicated region
    $region266: #{aimp_forward.1} parent=1 // pred_check
      _
    $region267: #{aimp_forward.1} parent=1 // pred_check_branch
      %538 = sbr.rel (0) target = $region269
    $region268: #{aimp_forward.1} parent=1 // pred_region
      %s540 = ssub.s32 16, 16
      %541 = vsyncadd [#allocation45], %s540
      %s543 = sshll.u32 [#allocation44], 4
      %s544 = int_to_ptr.vmem [resolvable:$true] %s543
      %546 = dma.hbm_to_vmem [thread:$0]  %s133, 16, %s544, [#allocation45]
    $region269: #{aimp_forward.1} parent=1 // pred_fallthru
      _
    // Predicated region
    $region270: #{aimp_forward.1} parent=1 // pred_check
      _
    $region271: #{aimp_forward.1} parent=1 // pred_check_branch
      %548 = sbr.rel (0) target = $region273
    $region272: #{aimp_forward.1} parent=1 // pred_region
      %s550 = ssub.s32 16, 16
      %551 = vsyncadd [#allocation45], %s550
      %s553 = sshll.u32 [#allocation46], 4
      %s554 = int_to_ptr.vmem [resolvable:$true] %s553
      %556 = dma.hbm_to_vmem [thread:$0]  %s135, 16, %s554, [#allocation45]
    $region273: #{aimp_forward.1} parent=1 // pred_fallthru
      _
    // Predicated region
    $region274: #{aimp_forward.1} parent=1 // pred_check
      _
    $region275: #{aimp_forward.1} parent=1 // pred_check_branch
      %558 = sbr.rel (0) target = $region277
    $region276: #{aimp_forward.1} parent=1 // pred_region
      _
    $region277: #{aimp_forward.1} parent=1 // pred_fallthru
      _
    // Predicated region
    $region278: #{aimp_forward.1} parent=1 // pred_check
      _
    $region279: #{aimp_forward.1} parent=1 // pred_check_branch
      %560 = sbr.rel (0) target = $region281
    $region280: #{aimp_forward.1} parent=1 // pred_region
      _
    $region281: #{aimp_forward.1} parent=1 // pred_fallthru
      _
    // Predicated region
    $region282: #{aimp_forward.1} parent=1 // pred_check
      _
    $region283: #{aimp_forward.1} parent=1 // pred_check_branch
      %562 = sbr.rel (0) target = $region285
    $region284: #{aimp_forward.1} parent=1 // pred_region
      _
    $region285: #{aimp_forward.1} parent=1 // pred_fallthru
      _
    // Predicated region
    $region286: #{aimp_forward.1} parent=1 // pred_check
      _
    $region287: #{aimp_forward.1} parent=1 // pred_check_branch
      %564 = sbr.rel (0) target = $region289
    $region288: #{aimp_forward.1} parent=1 // pred_region
      %s566 = ssub.s32 16, 16
      %567 = vsyncadd [#allocation48], %s566
      %s569 = sshll.u32 [#allocation47], 4
      %s570 = int_to_ptr.vmem [resolvable:$true] %s569
      %572 = dma.hbm_to_vmem [thread:$0]  %s143, 16, %s570, [#allocation48]
    $region289: #{aimp_forward.1} parent=1 // pred_fallthru
      _
    // Predicated region
    $region290: #{aimp_forward.1} parent=1 // pred_check
      _
    $region291: #{aimp_forward.1} parent=1 // pred_check_branch
      %574 = sbr.rel (0) target = $region293
    $region292: #{aimp_forward.1} parent=1 // pred_region
      %s576 = ssub.s32 16, 16
      %577 = vsyncadd [#allocation48], %s576
      %s579 = sshll.u32 [#allocation49], 4
      %s580 = int_to_ptr.vmem [resolvable:$true] %s579
      %582 = dma.hbm_to_vmem [thread:$0]  %s145, 16, %s580, [#allocation48]
    $region293: #{aimp_forward.1} parent=1 // pred_fallthru
      _
    // Predicated region
    $region294: #{aimp_forward.1} parent=1 // pred_check
      _
    $region295: #{aimp_forward.1} parent=1 // pred_check_branch
      %584 = sbr.rel (0) target = $region297
    $region296: #{aimp_forward.1} parent=1 // pred_region
      %s586 = ssub.s32 16, 16
      %587 = vsyncadd [#allocation51], %s586
      %s589 = sshll.u32 [#allocation50], 4
      %s590 = int_to_ptr.vmem [resolvable:$true] %s589
      %592 = dma.hbm_to_vmem [thread:$0]  %s147, 16, %s590, [#allocation51]
    $region297: #{aimp_forward.1} parent=1 // pred_fallthru
      _
    // Predicated region
    $region298: #{aimp_forward.1} parent=1 // pred_check
      _
    $region299: #{aimp_forward.1} parent=1 // pred_check_branch
      %594 = sbr.rel (0) target = $region301
    $region300: #{aimp_forward.1} parent=1 // pred_region
      %s596 = ssub.s32 16, 16
      %597 = vsyncadd [#allocation51], %s596
      %s599 = sshll.u32 [#allocation52], 4
      %s600 = int_to_ptr.vmem [resolvable:$true] %s599
      %602 = dma.hbm_to_vmem [thread:$0]  %s149, 16, %s600, [#allocation51]
    $region301: #{aimp_forward.1} parent=1 // pred_fallthru
      _
    // Predicated region
    $region302: #{aimp_forward.1} parent=1 // pred_check
      _
    $region303: #{aimp_forward.1} parent=1 // pred_check_branch
      %604 = sbr.rel (0) target = $region305
    $region304: #{aimp_forward.1} parent=1 // pred_region
      %s606 = ssub.s32 16, 16
      %607 = vsyncadd [#allocation54], %s606
      %s609 = sshll.u32 [#allocation53], 4
      %s610 = int_to_ptr.vmem [resolvable:$true] %s609
      %612 = dma.hbm_to_vmem [thread:$0]  %s151, 16, %s610, [#allocation54]
    $region305: #{aimp_forward.1} parent=1 // pred_fallthru
      _
    // Predicated region
    $region306: #{aimp_forward.1} parent=1 // pred_check
      _
    $region307: #{aimp_forward.1} parent=1 // pred_check_branch
      %614 = sbr.rel (0) target = $region309
    $region308: #{aimp_forward.1} parent=1 // pred_region
      _
    $region309: #{aimp_forward.1} parent=1 // pred_fallthru
      _
    // Predicated region
    $region310: #{aimp_forward.1} parent=1 // pred_check
      _
    $region311: #{aimp_forward.1} parent=1 // pred_check_branch
      %616 = sbr.rel (0) target = $region313
    $region312: #{aimp_forward.1} parent=1 // pred_region
      %s618 = ssub.s32 16, 16
      %619 = vsyncadd [#allocation54], %s618
      %s621 = sshll.u32 [#allocation55], 4
      %s622 = int_to_ptr.vmem [resolvable:$true] %s621
      %624 = dma.hbm_to_vmem [thread:$0]  %s155, 16, %s622, [#allocation54]
    $region313: #{aimp_forward.1} parent=1 // pred_fallthru
      _
    // Predicated region
    $region314: #{aimp_forward.1} parent=1 // pred_check
      _
    $region315: #{aimp_forward.1} parent=1 // pred_check_branch
      %626 = sbr.rel (0) target = $region317
    $region316: #{aimp_forward.1} parent=1 // pred_region
      %s628 = ssub.s32 16, 16
      %629 = vsyncadd [#allocation57], %s628
      %s631 = sshll.u32 [#allocation56], 4
      %s632 = int_to_ptr.vmem [resolvable:$true] %s631
      %634 = dma.hbm_to_vmem [thread:$0]  %s157, 16, %s632, [#allocation57]
    $region317: #{aimp_forward.1} parent=1 // pred_fallthru
      _
    // Predicated region
    $region318: #{aimp_forward.1} parent=1 // pred_check
      _
    $region319: #{aimp_forward.1} parent=1 // pred_check_branch
      %636 = sbr.rel (0) target = $region321
    $region320: #{aimp_forward.1} parent=1 // pred_region
      _
    $region321: #{aimp_forward.1} parent=1 // pred_fallthru
      _
    // Predicated region
    $region322: #{aimp_forward.1} parent=1 // pred_check
      _
    $region323: #{aimp_forward.1} parent=1 // pred_check_branch
      %638 = sbr.rel (0) target = $region325
    $region324: #{aimp_forward.1} parent=1 // pred_region
      _
    $region325: #{aimp_forward.1} parent=1 // pred_fallthru
      _
    // Predicated region
    $region326: #{aimp_forward.1} parent=1 // pred_check
      _
    $region327: #{aimp_forward.1} parent=1 // pred_check_branch
      %640 = sbr.rel (0) target = $region329
    $region328: #{aimp_forward.1} parent=1 // pred_region
      _
    $region329: #{aimp_forward.1} parent=1 // pred_fallthru
      _
    // Predicated region
    $region330: #{aimp_forward.1} parent=1 // pred_check
      _
    $region331: #{aimp_forward.1} parent=1 // pred_check_branch
      %642 = sbr.rel (0) target = $region333
    $region332: #{aimp_forward.1} parent=1 // pred_region
      %643 = dma.done [#allocation4], 16
    $region333: #{aimp_forward.1} parent=1 // pred_fallthru
      _
    // Predicated region
    $region334: #{aimp_forward.1} parent=1 // pred_check
      _
    $region335: #{aimp_forward.1} parent=1 // pred_check_branch
      %645 = sbr.rel (0) target = $region337
    $region336: #{aimp_forward.1} parent=1 // pred_region
      %646 = dma.done [#allocation6], 16
    $region337: #{aimp_forward.1} parent=1 // pred_fallthru
      _
    // Predicated region
    $region338: #{aimp_forward.1} parent=1 // pred_check
      _
    $region339: #{aimp_forward.1} parent=1 // pred_check_branch
      %648 = sbr.rel (0) target = $region341
    $region340: #{aimp_forward.1} parent=1 // pred_region
      %649 = dma.done [#allocation6], 16
    $region341: #{aimp_forward.1} parent=1 // pred_fallthru
      _
    // Predicated region
    $region342: #{aimp_forward.1} parent=1 // pred_check
      _
    $region343: #{aimp_forward.1} parent=1 // pred_check_branch
      %651 = sbr.rel (0) target = $region345
    $region344: #{aimp_forward.1} parent=1 // pred_region
      %652 = dma.done [#allocation9], 16
    $region345: #{aimp_forward.1} parent=1 // pred_fallthru
      _
    // Predicated region
    $region346: #{aimp_forward.1} parent=1 // pred_check
      _
    $region347: #{aimp_forward.1} parent=1 // pred_check_branch
      %654 = sbr.rel (0) target = $region349
    $region348: #{aimp_forward.1} parent=1 // pred_region
      %655 = dma.done [#allocation9], 16
    $region349: #{aimp_forward.1} parent=1 // pred_fallthru
      _
    // Predicated region
    $region350: #{aimp_forward.1} parent=1 // pred_check
      _
    $region351: #{aimp_forward.1} parent=1 // pred_check_branch
      %657 = sbr.rel (0) target = $region353
    $region352: #{aimp_forward.1} parent=1 // pred_region
      %658 = dma.done [#allocation12], 16
    $region353: #{aimp_forward.1} parent=1 // pred_fallthru
      _
    // Predicated region
    $region354: #{aimp_forward.1} parent=1 // pred_check
      _
    $region355: #{aimp_forward.1} parent=1 // pred_check_branch
      %660 = sbr.rel (0) target = $region357
    $region356: #{aimp_forward.1} parent=1 // pred_region
      %661 = dma.done [#allocation12], 16
    $region357: #{aimp_forward.1} parent=1 // pred_fallthru
      _
    // Predicated region
    $region358: #{aimp_forward.1} parent=1 // pred_check
      _
    $region359: #{aimp_forward.1} parent=1 // pred_check_branch
      %663 = sbr.rel (0) target = $region361
    $region360: #{aimp_forward.1} parent=1 // pred_region
      %664 = dma.done [#allocation15], 16
    $region361: #{aimp_forward.1} parent=1 // pred_fallthru
      _
    // Predicated region
    $region362: #{aimp_forward.1} parent=1 // pred_check
      _
    $region363: #{aimp_forward.1} parent=1 // pred_check_branch
      %666 = sbr.rel (0) target = $region365
    $region364: #{aimp_forward.1} parent=1 // pred_region
      %667 = dma.done [#allocation15], 16
    $region365: #{aimp_forward.1} parent=1 // pred_fallthru
      _
    // Predicated region
    $region366: #{aimp_forward.1} parent=1 // pred_check
      _
    $region367: #{aimp_forward.1} parent=1 // pred_check_branch
      %669 = sbr.rel (0) target = $region369
    $region368: #{aimp_forward.1} parent=1 // pred_region
      %670 = dma.done [#allocation18], 16
    $region369: #{aimp_forward.1} parent=1 // pred_fallthru
      _
    // Predicated region
    $region370: #{aimp_forward.1} parent=1 // pred_check
      _
    $region371: #{aimp_forward.1} parent=1 // pred_check_branch
      %672 = sbr.rel (0) target = $region373
    $region372: #{aimp_forward.1} parent=1 // pred_region
      %673 = dma.done [#allocation18], 16
    $region373: #{aimp_forward.1} parent=1 // pred_fallthru
      _
    // Predicated region
    $region374: #{aimp_forward.1} parent=1 // pred_check
      _
    $region375: #{aimp_forward.1} parent=1 // pred_check_branch
      %675 = sbr.rel (0) target = $region377
    $region376: #{aimp_forward.1} parent=1 // pred_region
      %676 = dma.done [#allocation21], 16
    $region377: #{aimp_forward.1} parent=1 // pred_fallthru
      _
    // Predicated region
    $region378: #{aimp_forward.1} parent=1 // pred_check
      _
    $region379: #{aimp_forward.1} parent=1 // pred_check_branch
      %678 = sbr.rel (0) target = $region381
    $region380: #{aimp_forward.1} parent=1 // pred_region
      %679 = dma.done [#allocation21], 16
    $region381: #{aimp_forward.1} parent=1 // pred_fallthru
      _
    // Predicated region
    $region382: #{aimp_forward.1} parent=1 // pred_check
      _
    $region383: #{aimp_forward.1} parent=1 // pred_check_branch
      %681 = sbr.rel (0) target = $region385
    $region384: #{aimp_forward.1} parent=1 // pred_region
      %682 = dma.done [#allocation24], 16
    $region385: #{aimp_forward.1} parent=1 // pred_fallthru
      _
    // Predicated region
    $region386: #{aimp_forward.1} parent=1 // pred_check
      _
    $region387: #{aimp_forward.1} parent=1 // pred_check_branch
      %684 = sbr.rel (0) target = $region389
    $region388: #{aimp_forward.1} parent=1 // pred_region
      %685 = dma.done [#allocation24], 16
    $region389: #{aimp_forward.1} parent=1 // pred_fallthru
      _
    // Predicated region
    $region390: #{aimp_forward.1} parent=1 // pred_check
      _
    $region391: #{aimp_forward.1} parent=1 // pred_check_branch
      %687 = sbr.rel (0) target = $region393
    $region392: #{aimp_forward.1} parent=1 // pred_region
      %688 = dma.done [#allocation27], 16
    $region393: #{aimp_forward.1} parent=1 // pred_fallthru
      _
    // Predicated region
    $region394: #{aimp_forward.1} parent=1 // pred_check
      _
    $region395: #{aimp_forward.1} parent=1 // pred_check_branch
      %690 = sbr.rel (0) target = $region397
    $region396: #{aimp_forward.1} parent=1 // pred_region
      %691 = dma.done [#allocation27], 16
    $region397: #{aimp_forward.1} parent=1 // pred_fallthru
      _
    // Predicated region
    $region398: #{aimp_forward.1} parent=1 // pred_check
      _
    $region399: #{aimp_forward.1} parent=1 // pred_check_branch
      %693 = sbr.rel (0) target = $region401
    $region400: #{aimp_forward.1} parent=1 // pred_region
      %694 = dma.done [#allocation30], 16
    $region401: #{aimp_forward.1} parent=1 // pred_fallthru
      _
    // Predicated region
    $region402: #{aimp_forward.1} parent=1 // pred_check
      _
    $region403: #{aimp_forward.1} parent=1 // pred_check_branch
      %696 = sbr.rel (0) target = $region405
    $region404: #{aimp_forward.1} parent=1 // pred_region
      %697 = dma.done [#allocation30], 16
    $region405: #{aimp_forward.1} parent=1 // pred_fallthru
      _
    // Predicated region
    $region406: #{aimp_forward.1} parent=1 // pred_check
      _
    $region407: #{aimp_forward.1} parent=1 // pred_check_branch
      %699 = sbr.rel (0) target = $region409
    $region408: #{aimp_forward.1} parent=1 // pred_region
      %700 = dma.done [#allocation33], 16
    $region409: #{aimp_forward.1} parent=1 // pred_fallthru
      _
    // Predicated region
    $region410: #{aimp_forward.1} parent=1 // pred_check
      _
    $region411: #{aimp_forward.1} parent=1 // pred_check_branch
      %702 = sbr.rel (0) target = $region413
    $region412: #{aimp_forward.1} parent=1 // pred_region
      %703 = dma.done [#allocation33], 16
    $region413: #{aimp_forward.1} parent=1 // pred_fallthru
      _
    // Predicated region
    $region414: #{aimp_forward.1} parent=1 // pred_check
      _
    $region415: #{aimp_forward.1} parent=1 // pred_check_branch
      %705 = sbr.rel (0) target = $region417
    $region416: #{aimp_forward.1} parent=1 // pred_region
      %706 = dma.done [#allocation36], 16
    $region417: #{aimp_forward.1} parent=1 // pred_fallthru
      _
    // Predicated region
    $region418: #{aimp_forward.1} parent=1 // pred_check
      _
    $region419: #{aimp_forward.1} parent=1 // pred_check_branch
      %708 = sbr.rel (0) target = $region421
    $region420: #{aimp_forward.1} parent=1 // pred_region
      %709 = dma.done [#allocation36], 16
    $region421: #{aimp_forward.1} parent=1 // pred_fallthru
      _
    // Predicated region
    $region422: #{aimp_forward.1} parent=1 // pred_check
      _
    $region423: #{aimp_forward.1} parent=1 // pred_check_branch
      %711 = sbr.rel (0) target = $region425
    $region424: #{aimp_forward.1} parent=1 // pred_region
      %712 = dma.done [#allocation39], 16
    $region425: #{aimp_forward.1} parent=1 // pred_fallthru
      _
    // Predicated region
    $region426: #{aimp_forward.1} parent=1 // pred_check
      _
    $region427: #{aimp_forward.1} parent=1 // pred_check_branch
      %714 = sbr.rel (0) target = $region429
    $region428: #{aimp_forward.1} parent=1 // pred_region
      %715 = dma.done [#allocation39], 16
    $region429: #{aimp_forward.1} parent=1 // pred_fallthru
      _
    // Predicated region
    $region430: #{aimp_forward.1} parent=1 // pred_check
      _
    $region431: #{aimp_forward.1} parent=1 // pred_check_branch
      %717 = sbr.rel (0) target = $region433
    $region432: #{aimp_forward.1} parent=1 // pred_region
      %718 = dma.done [#allocation42], 16
    $region433: #{aimp_forward.1} parent=1 // pred_fallthru
      _
    // Predicated region
    $region434: #{aimp_forward.1} parent=1 // pred_check
      _
    $region435: #{aimp_forward.1} parent=1 // pred_check_branch
      %720 = sbr.rel (0) target = $region437
    $region436: #{aimp_forward.1} parent=1 // pred_region
      %721 = dma.done [#allocation42], 16
    $region437: #{aimp_forward.1} parent=1 // pred_fallthru
      _
    // Predicated region
    $region438: #{aimp_forward.1} parent=1 // pred_check
      _
    $region439: #{aimp_forward.1} parent=1 // pred_check_branch
      %723 = sbr.rel (0) target = $region441
    $region440: #{aimp_forward.1} parent=1 // pred_region
      %724 = dma.done [#allocation45], 16
    $region441: #{aimp_forward.1} parent=1 // pred_fallthru
      _
    // Predicated region
    $region442: #{aimp_forward.1} parent=1 // pred_check
      _
    $region443: #{aimp_forward.1} parent=1 // pred_check_branch
      %726 = sbr.rel (0) target = $region445
    $region444: #{aimp_forward.1} parent=1 // pred_region
      %727 = dma.done [#allocation45], 16
    $region445: #{aimp_forward.1} parent=1 // pred_fallthru
      _
    // Predicated region
    $region446: #{aimp_forward.1} parent=1 // pred_check
      _
    $region447: #{aimp_forward.1} parent=1 // pred_check_branch
      %729 = sbr.rel (0) target = $region449
    $region448: #{aimp_forward.1} parent=1 // pred_region
      %730 = dma.done [#allocation48], 16
    $region449: #{aimp_forward.1} parent=1 // pred_fallthru
      _
    // Predicated region
    $region450: #{aimp_forward.1} parent=1 // pred_check
      _
    $region451: #{aimp_forward.1} parent=1 // pred_check_branch
      %732 = sbr.rel (0) target = $region453
    $region452: #{aimp_forward.1} parent=1 // pred_region
      %733 = dma.done [#allocation48], 16
    $region453: #{aimp_forward.1} parent=1 // pred_fallthru
      _
    // Predicated region
    $region454: #{aimp_forward.1} parent=1 // pred_check
      _
    $region455: #{aimp_forward.1} parent=1 // pred_check_branch
      %735 = sbr.rel (0) target = $region457
    $region456: #{aimp_forward.1} parent=1 // pred_region
      %736 = dma.done [#allocation51], 16
    $region457: #{aimp_forward.1} parent=1 // pred_fallthru
      _
    // Predicated region
    $region458: #{aimp_forward.1} parent=1 // pred_check
      _
    $region459: #{aimp_forward.1} parent=1 // pred_check_branch
      %738 = sbr.rel (0) target = $region461
    $region460: #{aimp_forward.1} parent=1 // pred_region
      %739 = dma.done [#allocation51], 16
    $region461: #{aimp_forward.1} parent=1 // pred_fallthru
      _
    // Predicated region
    $region462: #{aimp_forward.1} parent=1 // pred_check
      _
    $region463: #{aimp_forward.1} parent=1 // pred_check_branch
      %741 = sbr.rel (0) target = $region465
    $region464: #{aimp_forward.1} parent=1 // pred_region
      %742 = dma.done [#allocation54], 16
    $region465: #{aimp_forward.1} parent=1 // pred_fallthru
      _
    // Predicated region
    $region466: #{aimp_forward.1} parent=1 // pred_check
      _
    $region467: #{aimp_forward.1} parent=1 // pred_check_branch
      %744 = sbr.rel (0) target = $region469
    $region468: #{aimp_forward.1} parent=1 // pred_region
      %745 = dma.done [#allocation54], 16
    $region469: #{aimp_forward.1} parent=1 // pred_fallthru
      _
    // Predicated region
    $region470: #{aimp_forward.1} parent=1 // pred_check
      _
    $region471: #{aimp_forward.1} parent=1 // pred_check_branch
      %747 = sbr.rel (0) target = $region473
    $region472: #{aimp_forward.1} parent=1 // pred_region
      %748 = dma.done [#allocation57], 16
    $region473: #{aimp_forward.1} parent=1 // pred_fallthru
      _
    %v750 = vld [vmem:[%s7] sm:$0xff]
    %v751 = vld [vmem:[%s7 + $0x8] sm:$0xff]
    %v752 = vld [vmem:[%s1] sm:$0xff]
    %v753 = vld [vmem:[%s1 + $0x8] sm:$0xff]
    %v754 = vld [vmem:[%s33] sm:$0x7]
    %v755 = vpack.c.bf16 %v753, %v752
    %v756 = vld [vmem:[%s29] sm:$0x1]
    %v758 = vlaneseq
    %v759 = vshrl.u32 %v758, 7
    %v760 = vsub.s32 0, %v759
    %v761 = vrot.slane %v756, %v760
    %vm763 = vcmask 48128
    %v765 = vsel %vm763, %v755, 0
    %vm767 = vcmask 1042432
    %v769 = vsel %vm767, %v754, 0
    %771 = vmatprep.subr.bf16.mxu0 0
    %772 = vmatpush1.bf16.msra.mxu0 %v769
    %773 = vmatprep.subr.bf16.mxu0 0
    %774 = vmatpush1.bf16.msra.mxu0 0
    %775 = vmatprep.subr.bf16.mxu0 0
    %776 = vmatpush1.bf16.msra.mxu0 0
    %777 = vmatprep.subr.bf16.mxu0 0
    %778 = vmatpush1.bf16.msra.mxu0 0
    %779 = vmatprep.subr.bf16.mxu0 0
    %780 = vmatpush1.bf16.msra.mxu0 0
    %781 = vmatprep.subr.bf16.mxu0 0
    %782 = vmatpush1.bf16.msra.mxu0 0
    %783 = vmatprep.subr.bf16.mxu0 0
    %784 = vmatpush1.bf16.msra.mxu0 0
    %785 = vmatprep.subr.bf16.mxu0 0
    %786 = vmatpush1.bf16.msra.mxu0 0
    %787 = vmatprep.subr.bf16.mxu0 0
    %788 = vmatpush1.bf16.msra.mxu0 0
    %789 = vmatprep.subr.bf16.mxu0 0
    %790 = vmatpush1.bf16.msra.mxu0 0
    %791 = vmatprep.subr.bf16.mxu0 0
    %792 = vmatpush1.bf16.msra.mxu0 0
    %793 = vmatprep.subr.bf16.mxu0 0
    %794 = vmatpush1.bf16.msra.mxu0 0
    %795 = vmatprep.subr.bf16.mxu0 0
    %796 = vmatpush1.bf16.msra.mxu0 0
    %797 = vmatprep.subr.bf16.mxu0 0
    %798 = vmatpush1.bf16.msra.mxu0 0
    %799 = vmatprep.subr.bf16.mxu0 0
    %800 = vmatpush1.bf16.msra.mxu0 0
    %801 = vmatprep.subr.bf16.mxu0 0
    %802 = vmatpush1.bf16.msra.mxu0 0
    %803 = vmatprep.mubr.bf16.mxu0 0
    %804 = vmatmul.mubr.bf16.gmra.mrb[0].mxu0 %v765
    %v805 = vpop.f32.mrb[0].mxu0
    %v806 = vadd.f32 %v761, %v805
    %v807 = vpop.f32.mrb[0].mxu0
    %v808 = vpop.f32.mrb[0].mxu0
    %v809 = vadd.f32 %v761, %v808
    %v810 = vpop.f32.mrb[0].mxu0
    %811 = vdwg.mxu0
    %vm812 = vcmp.gt.f32.partialorder %v806, 0.0
    %vm813 = vcmp.gt.f32.partialorder %v809, 0.0
    %v814 = vmin.f32 %v806, 0.0
    %v815 = vmin.f32 %v809, 0.0
    %v816 = vmul.f32 %v814, 1.442695
    %v817 = vpow.pop %v816
    %v818 = vmul.f32 %v815, 1.442695
    %v819 = vpow.pop %v818
    %v820 = vsub.f32 %v817, 1.0
    %v821 = vsub.f32 %v819, 1.0
    %v822 = vsel %vm812, %v806, %v820
    %v823 = vsel %vm813, %v809, %v821
    %v824 = vld [vmem:[%s35] sm:$0xf]
    %v825 = vld [vmem:[%s35 + $0x4] sm:$0xf]
    %v826 = vld [vmem:[%s35 + $0x8] sm:$0xf]
    %v827 = vld [vmem:[%s35 + $0xc] sm:$0xf]
    %v828 = vpack.c.bf16 %v823, %v822
    %v829 = vld [vmem:[%s31] sm:$0x1]
    %v831 = vlaneseq
    %v832 = vshrl.u32 %v831, 7
    %v833 = vsub.s32 0, %v832
    %v834 = vrot.slane %v829, %v833
    %v840 = vunpack.c.l.b16 %v824
    %v841 = vunpack.c.l.b16 %v825
    %v842 = vunpack.c.l.b16 %v826
    %v843 = vunpack.c.l.b16 %v827
    %v844 = vpack.c.b16 %v841, %v840
    %v845 = vpack.c.b16 %v843, %v842
    %vm848 = vcmask 261120
    %v850 = vsel %vm848, %v828, 0
    %852 = vmatprep.subr.bf16.mxu0 0
    %853 = vmatpush1.bf16.msra.mxu0 %v844
    %854 = vmatprep.subr.bf16.mxu0 0
    %855 = vmatpush1.bf16.msra.mxu0 %v845
    %856 = vmatprep.subr.bf16.mxu0 0
    %857 = vmatpush1.bf16.msra.mxu0 0
    %858 = vmatprep.subr.bf16.mxu0 0
    %859 = vmatpush1.bf16.msra.mxu0 0
    %860 = vmatprep.subr.bf16.mxu0 0
    %861 = vmatpush1.bf16.msra.mxu0 0
    %862 = vmatprep.subr.bf16.mxu0 0
    %863 = vmatpush1.bf16.msra.mxu0 0
    %864 = vmatprep.subr.bf16.mxu0 0
    %865 = vmatpush1.bf16.msra.mxu0 0
    %866 = vmatprep.subr.bf16.mxu0 0
    %867 = vmatpush1.bf16.msra.mxu0 0
    %868 = vmatprep.subr.bf16.mxu0 0
    %869 = vmatpush1.bf16.msra.mxu0 0
    %870 = vmatprep.subr.bf16.mxu0 0
    %871 = vmatpush1.bf16.msra.mxu0 0
    %872 = vmatprep.subr.bf16.mxu0 0
    %873 = vmatpush1.bf16.msra.mxu0 0
    %874 = vmatprep.subr.bf16.mxu0 0
    %875 = vmatpush1.bf16.msra.mxu0 0
    %876 = vmatprep.subr.bf16.mxu0 0
    %877 = vmatpush1.bf16.msra.mxu0 0
    %878 = vmatprep.subr.bf16.mxu0 0
    %879 = vmatpush1.bf16.msra.mxu0 0
    %880 = vmatprep.subr.bf16.mxu0 0
    %881 = vmatpush1.bf16.msra.mxu0 0
    %882 = vmatprep.subr.bf16.mxu0 0
    %883 = vmatpush1.bf16.msra.mxu0 0
    %884 = vmatprep.mubr.bf16.mxu0 0
    %885 = vmatmul.mubr.bf16.gmra.mrb[0].mxu0 %v850
    %v886 = vpop.f32.mrb[0].mxu0
    %v887 = vadd.f32 %v834, %v886
    %v888 = vpop.f32.mrb[0].mxu0
    %v889 = vpop.f32.mrb[0].mxu0
    %v890 = vadd.f32 %v834, %v889
    %v891 = vpop.f32.mrb[0].mxu0
    %892 = vdwg.mxu0
    %v893 = vld [vmem:[%s3] sm:$0xff]
    %v894 = vld [vmem:[%s3 + $0x8] sm:$0xff]
    %v895 = vld [vmem:[#allocation7] sm:$0x1]
    %v897 = vlaneseq
    %v898 = vshrl.u32 %v897, 7
    %v899 = vsub.s32 0, %v898
    %v900 = vrot.slane %v895, %v899
    %v902 = vmul.f32 %v893, %v900
    %v903 = vmul.f32 %v894, %v900
    %v904 = vld [vmem:[#allocation8] sm:$0x1]
    %v906 = vlaneseq
    %v907 = vshrl.u32 %v906, 7
    %v908 = vsub.s32 0, %v907
    %v909 = vrot.slane %v904, %v908
    %v911 = vadd.f32 %v902, %v909
    %v912 = vadd.f32 %v903, %v909
    %v913 = vld [vmem:[%s5] sm:$0x3]
    %v914 = vld [vmem:[%s37] sm:$0xf]
    %v915 = vld [vmem:[%s37 + $0x4] sm:$0xf]
    %v916 = vld [vmem:[%s37 + $0x8] sm:$0xf]
    %v917 = vld [vmem:[%s37 + $0xc] sm:$0xf]
    %v918 = vld [vmem:[%s37 + $0x10] sm:$0xf]
    %v919 = vpack.c.bf16 %v913, %v913
    %v920 = vld [vmem:[%s43] sm:$0x1]
    %v922 = vlaneseq
    %v923 = vshrl.u32 %v922, 7
    %v924 = vsub.s32 0, %v923
    %v925 = vrot.slane %v920, %v924
    %v932 = vunpack.c.l.b16 %v914
    %v933 = vunpack.c.l.b16 %v915
    %v934 = vunpack.c.l.b16 %v916
    %v935 = vunpack.c.l.b16 %v917
    %v936 = vunpack.c.l.b16 %v918
    %v937 = vpack.c.b16 %v933, %v932
    %v938 = vpack.c.b16 %v935, %v934
    %v939 = vpack.c.b16 %v936, %v936
    %vm942 = vcmask 326656
    %v944 = vsel %vm942, %v919, 0
    %vm946 = vcmask 1043456
    %v948 = vsel %vm946, %v939, 0
    %950 = vmatprep.subr.bf16.mxu0 0
    %951 = vmatpush1.bf16.msra.mxu0 %v937
    %952 = vmatprep.subr.bf16.mxu0 0
    %953 = vmatpush1.bf16.msra.mxu0 %v938
    %954 = vmatprep.subr.bf16.mxu0 0
    %955 = vmatpush1.bf16.msra.mxu0 %v948
    %956 = vmatprep.subr.bf16.mxu0 0
    %957 = vmatpush1.bf16.msra.mxu0 0
    %958 = vmatprep.subr.bf16.mxu0 0
    %959 = vmatpush1.bf16.msra.mxu0 0
    %960 = vmatprep.subr.bf16.mxu0 0
    %961 = vmatpush1.bf16.msra.mxu0 0
    %962 = vmatprep.subr.bf16.mxu0 0
    %963 = vmatpush1.bf16.msra.mxu0 0
    %964 = vmatprep.subr.bf16.mxu0 0
    %965 = vmatpush1.bf16.msra.mxu0 0
    %966 = vmatprep.subr.bf16.mxu0 0
    %967 = vmatpush1.bf16.msra.mxu0 0
    %968 = vmatprep.subr.bf16.mxu0 0
    %969 = vmatpush1.bf16.msra.mxu0 0
    %970 = vmatprep.subr.bf16.mxu0 0
    %971 = vmatpush1.bf16.msra.mxu0 0
    %972 = vmatprep.subr.bf16.mxu0 0
    %973 = vmatpush1.bf16.msra.mxu0 0
    %974 = vmatprep.subr.bf16.mxu0 0
    %975 = vmatpush1.bf16.msra.mxu0 0
    %976 = vmatprep.subr.bf16.mxu0 0
    %977 = vmatpush1.bf16.msra.mxu0 0
    %978 = vmatprep.subr.bf16.mxu0 0
    %979 = vmatpush1.bf16.msra.mxu0 0
    %980 = vmatprep.subr.bf16.mxu0 0
    %981 = vmatpush1.bf16.msra.mxu0 0
    %982 = vmatprep.mubr.bf16.mxu0 0
    %983 = vmatmul.mubr.bf16.gmra.mrb[0].mxu0 %v944
    %v984 = vpop.f32.mrb[0].mxu0
    %v985 = vadd.f32 %v925, %v984
    %v986 = vpop.f32.mrb[0].mxu0
    %v987 = vpop.f32.mrb[0].mxu0
    %v988 = vpop.f32.mrb[0].mxu0
    %989 = vdwg.mxu0
    %v990 = vmax.f32 %v985, 0.0
    %v991 = vld [vmem:[%s39] sm:$0xf]
    %v992 = vld [vmem:[%s39 + $0x4] sm:$0xf]
    %v993 = vld [vmem:[%s39 + $0x8] sm:$0xf]
    %v994 = vld [vmem:[%s39 + $0xc] sm:$0xf]
    %v995 = vld [vmem:[%s39 + $0x10] sm:$0xf]
    %v996 = vld [vmem:[%s39 + $0x14] sm:$0xf]
    %v997 = vld [vmem:[%s39 + $0x18] sm:$0xf]
    %v998 = vld [vmem:[%s39 + $0x1c] sm:$0xf]
    %v999 = vld [vmem:[%s39 + $0x20] sm:$0xf]
    %v1000 = vld [vmem:[%s39 + $0x24] sm:$0xf]
    %v1001 = vld [vmem:[%s39 + $0x28] sm:$0xf]
    %v1002 = vld [vmem:[%s39 + $0x2c] sm:$0xf]
    %v1003 = vld [vmem:[%s39 + $0x30] sm:$0xf]
    %v1004 = vld [vmem:[%s39 + $0x34] sm:$0xf]
    %v1005 = vld [vmem:[%s39 + $0x38] sm:$0xf]
    %v1006 = vld [vmem:[%s39 + $0x3c] sm:$0xf]
    %v1007 = vpack.c.bf16 %v990, %v990
    %v1008 = vld [vmem:[%s45] sm:$0x1]
    %v1010 = vlaneseq
    %v1011 = vshrl.u32 %v1010, 7
    %v1012 = vsub.s32 0, %v1011
    %v1013 = vrot.slane %v1008, %v1012
    %v1031 = vunpack.c.l.b16 %v991
    %v1032 = vunpack.c.l.b16 %v992
    %v1033 = vunpack.c.l.b16 %v993
    %v1034 = vunpack.c.l.b16 %v994
    %v1035 = vunpack.c.l.b16 %v995
    %v1036 = vunpack.c.l.b16 %v996
    %v1037 = vunpack.c.l.b16 %v997
    %v1038 = vunpack.c.l.b16 %v998
    %v1039 = vunpack.c.l.b16 %v999
    %v1040 = vunpack.c.l.b16 %v1000
    %v1041 = vunpack.c.l.b16 %v1001
    %v1042 = vunpack.c.l.b16 %v1002
    %v1043 = vunpack.c.l.b16 %v1003
    %v1044 = vunpack.c.l.b16 %v1004
    %v1045 = vunpack.c.l.b16 %v1005
    %v1046 = vunpack.c.l.b16 %v1006
    %v1047 = vpack.c.b16 %v1032, %v1031
    %v1048 = vpack.c.b16 %v1034, %v1033
    %v1049 = vpack.c.b16 %v1036, %v1035
    %v1050 = vpack.c.b16 %v1038, %v1037
    %v1051 = vpack.c.b16 %v1040, %v1039
    %v1052 = vpack.c.b16 %v1042, %v1041
    %v1053 = vpack.c.b16 %v1044, %v1043
    %v1054 = vpack.c.b16 %v1046, %v1045
    %1063 = vmatprep.subr.bf16.mxu0 0
    %1064 = vmatpush1.bf16.msra.mxu0 %v1047
    %1065 = vmatprep.subr.bf16.mxu0 0
    %1066 = vmatpush1.bf16.msra.mxu0 %v1048
    %1067 = vmatprep.subr.bf16.mxu0 0
    %1068 = vmatpush1.bf16.msra.mxu0 %v1049
    %1069 = vmatprep.subr.bf16.mxu0 0
    %1070 = vmatpush1.bf16.msra.mxu0 %v1050
    %1071 = vmatprep.subr.bf16.mxu0 0
    %1072 = vmatpush1.bf16.msra.mxu0 %v1051
    %1073 = vmatprep.subr.bf16.mxu0 0
    %1074 = vmatpush1.bf16.msra.mxu0 %v1052
    %1075 = vmatprep.subr.bf16.mxu0 0
    %1076 = vmatpush1.bf16.msra.mxu0 %v1053
    %1077 = vmatprep.subr.bf16.mxu0 0
    %1078 = vmatpush1.bf16.msra.mxu0 %v1054
    %1079 = vmatprep.subr.bf16.mxu0 0
    %1080 = vmatpush1.bf16.msra.mxu0 0
    %1081 = vmatprep.subr.bf16.mxu0 0
    %1082 = vmatpush1.bf16.msra.mxu0 0
    %1083 = vmatprep.subr.bf16.mxu0 0
    %1084 = vmatpush1.bf16.msra.mxu0 0
    %1085 = vmatprep.subr.bf16.mxu0 0
    %1086 = vmatpush1.bf16.msra.mxu0 0
    %1087 = vmatprep.subr.bf16.mxu0 0
    %1088 = vmatpush1.bf16.msra.mxu0 0
    %1089 = vmatprep.subr.bf16.mxu0 0
    %1090 = vmatpush1.bf16.msra.mxu0 0
    %1091 = vmatprep.subr.bf16.mxu0 0
    %1092 = vmatpush1.bf16.msra.mxu0 0
    %1093 = vmatprep.subr.bf16.mxu0 0
    %1094 = vmatpush1.bf16.msra.mxu0 0
    %1095 = vmatprep.mubr.bf16.mxu0 0
    %1096 = vmatmul.mubr.bf16.gmra.mrb[0].mxu0 %v1007
    %v1097 = vpop.f32.mrb[0].mxu0
    %v1098 = vadd.f32 %v1013, %v1097
    %v1099 = vpop.f32.mrb[0].mxu0
    %v1100 = vpop.f32.mrb[0].mxu0
    %v1101 = vpop.f32.mrb[0].mxu0
    %1102 = vdwg.mxu0
    %v1103 = vmax.f32 %v1098, 0.0
    %v1104 = vld [vmem:[%s41] sm:$0xf]
    %v1105 = vld [vmem:[%s41 + $0x4] sm:$0xf]
    %v1106 = vld [vmem:[%s41 + $0x8] sm:$0xf]
    %v1107 = vld [vmem:[%s41 + $0xc] sm:$0xf]
    %v1108 = vld [vmem:[%s41 + $0x10] sm:$0xf]
    %v1109 = vld [vmem:[%s41 + $0x14] sm:$0xf]
    %v1110 = vld [vmem:[%s41 + $0x18] sm:$0xf]
    %v1111 = vld [vmem:[%s41 + $0x1c] sm:$0xf]
    %v1112 = vld [vmem:[%s41 + $0x20] sm:$0xf]
    %v1113 = vld [vmem:[%s41 + $0x24] sm:$0xf]
    %v1114 = vld [vmem:[%s41 + $0x28] sm:$0xf]
    %v1115 = vld [vmem:[%s41 + $0x2c] sm:$0xf]
    %v1116 = vld [vmem:[%s41 + $0x30] sm:$0xf]
    %v1117 = vld [vmem:[%s41 + $0x34] sm:$0xf]
    %v1118 = vld [vmem:[%s41 + $0x38] sm:$0xf]
    %v1119 = vld [vmem:[%s41 + $0x3c] sm:$0xf]
    %v1120 = vpack.c.bf16 %v1103, %v1103
    %v1121 = vld [vmem:[#allocation3] sm:$0x1]
    %v1123 = vlaneseq
    %v1124 = vshrl.u32 %v1123, 7
    %v1125 = vsub.s32 0, %v1124
    %v1126 = vrot.slane %v1121, %v1125
    %v1144 = vunpack.c.l.b16 %v1104
    %v1145 = vunpack.c.l.b16 %v1105
    %v1146 = vunpack.c.l.b16 %v1106
    %v1147 = vunpack.c.l.b16 %v1107
    %v1148 = vunpack.c.l.b16 %v1108
    %v1149 = vunpack.c.l.b16 %v1109
    %v1150 = vunpack.c.l.b16 %v1110
    %v1151 = vunpack.c.l.b16 %v1111
    %v1152 = vunpack.c.l.b16 %v1112
    %v1153 = vunpack.c.l.b16 %v1113
    %v1154 = vunpack.c.l.b16 %v1114
    %v1155 = vunpack.c.l.b16 %v1115
    %v1156 = vunpack.c.l.b16 %v1116
    %v1157 = vunpack.c.l.b16 %v1117
    %v1158 = vunpack.c.l.b16 %v1118
    %v1159 = vunpack.c.l.b16 %v1119
    %v1160 = vpack.c.b16 %v1145, %v1144
    %v1161 = vpack.c.b16 %v1147, %v1146
    %v1162 = vpack.c.b16 %v1149, %v1148
    %v1163 = vpack.c.b16 %v1151, %v1150
    %v1164 = vpack.c.b16 %v1153, %v1152
    %v1165 = vpack.c.b16 %v1155, %v1154
    %v1166 = vpack.c.b16 %v1157, %v1156
    %v1167 = vpack.c.b16 %v1159, %v1158
    %1176 = vmatprep.subr.bf16.mxu0 0
    %1177 = vmatpush1.bf16.msra.mxu0 %v1160
    %1178 = vmatprep.subr.bf16.mxu0 0
    %1179 = vmatpush1.bf16.msra.mxu0 %v1161
    %1180 = vmatprep.subr.bf16.mxu0 0
    %1181 = vmatpush1.bf16.msra.mxu0 %v1162
    %1182 = vmatprep.subr.bf16.mxu0 0
    %1183 = vmatpush1.bf16.msra.mxu0 %v1163
    %1184 = vmatprep.subr.bf16.mxu0 0
    %1185 = vmatpush1.bf16.msra.mxu0 %v1164
    %1186 = vmatprep.subr.bf16.mxu0 0
    %1187 = vmatpush1.bf16.msra.mxu0 %v1165
    %1188 = vmatprep.subr.bf16.mxu0 0
    %1189 = vmatpush1.bf16.msra.mxu0 %v1166
    %1190 = vmatprep.subr.bf16.mxu0 0
    %1191 = vmatpush1.bf16.msra.mxu0 %v1167
    %1192 = vmatprep.subr.bf16.mxu0 0
    %1193 = vmatpush1.bf16.msra.mxu0 0
    %1194 = vmatprep.subr.bf16.mxu0 0
    %1195 = vmatpush1.bf16.msra.mxu0 0
    %1196 = vmatprep.subr.bf16.mxu0 0
    %1197 = vmatpush1.bf16.msra.mxu0 0
    %1198 = vmatprep.subr.bf16.mxu0 0
    %1199 = vmatpush1.bf16.msra.mxu0 0
    %1200 = vmatprep.subr.bf16.mxu0 0
    %1201 = vmatpush1.bf16.msra.mxu0 0
    %1202 = vmatprep.subr.bf16.mxu0 0
    %1203 = vmatpush1.bf16.msra.mxu0 0
    %1204 = vmatprep.subr.bf16.mxu0 0
    %1205 = vmatpush1.bf16.msra.mxu0 0
    %1206 = vmatprep.subr.bf16.mxu0 0
    %1207 = vmatpush1.bf16.msra.mxu0 0
    %1208 = vmatprep.mubr.bf16.mxu0 0
    %1209 = vmatmul.mubr.bf16.gmra.mrb[0].mxu0 %v1120
    %v1210 = vpop.f32.mrb[0].mxu0
    %v1211 = vadd.f32 %v1126, %v1210
    %v1212 = vpop.f32.mrb[0].mxu0
    %v1213 = vpop.f32.mrb[0].mxu0
    %v1214 = vpop.f32.mrb[0].mxu0
    %1215 = vdwg.mxu0
    %v1216 = vmax.f32 %v1211, 0.0
    %v1219 = vunpack.c.l.s4 1966171168
    %v1220 = vunpack.c.0.s8 %v1219
    %v1221 = vlaneseq
    %v1222 = vshrl.u32 %v1221, 7
    %v1223 = vsub.s32 %v1220, %v1222
    %v1224 = vrot.slane %v1216, %v1223
    %v1225 = vcombine.high %v1224, %v1224
    %v1227 = vunpack.c.l.s4 1966171168
    %v1228 = vunpack.c.0.s8 %v1227
    %v1229 = vlaneseq
    %v1230 = vshrl.u32 %v1229, 7
    %v1231 = vsub.s32 %v1228, %v1230
    %v1232 = vrot.slane %v1224, %v1231
    %v1234 = vunpack.c.l.s4 1966171168
    %v1235 = vunpack.c.0.s8 %v1234
    %v1236 = vlaneseq
    %v1237 = vshrl.u32 %v1236, 7
    %v1238 = vsub.s32 %v1235, %v1237
    %v1239 = vrot.slane %v1225, %v1238
    %vm1242 = vcmask 122880
    %1243 = vst.msk [vmem:[#allocation2] sm:$0x1] %vm1242, %v1232
    %1244 = vst.msk [vmem:[#allocation2 + $0x8] sm:$0x1] %vm1242, %v1239
    %v1245 = vlaneseq
    %v1246 = vshrl.u32 %v1245, 7
    %v1247 = vsub.s32 0, %v1246
    %v1248 = vrot.slane %v1232, %v1247
    %v1249 = vlaneseq
    %v1250 = vshrl.u32 %v1249, 7
    %v1251 = vsub.s32 0, %v1250
    %v1252 = vrot.slane %v1239, %v1251
    %1253 = vrot.lane.b32.xlu0 %v1248, 112
    %v1254 = vpop.permute.xlu0 %1253
    %1255 = vrot.lane.b32.xlu0 %v1252, 112
    %v1256 = vpop.permute.xlu0 %1255
    %1259 = vst.msk [vmem:[#allocation2 + $0x1] sm:$0x1] %vm1242, %v1254
    %1260 = vst.msk [vmem:[#allocation2 + $0x9] sm:$0x1] %vm1242, %v1256
    %1261 = vrot.lane.b32.xlu0 %v1248, 96
    %v1262 = vpop.permute.xlu0 %1261
    %1263 = vrot.lane.b32.xlu0 %v1252, 96
    %v1264 = vpop.permute.xlu0 %1263
    %1267 = vst.msk [vmem:[#allocation2 + $0x2] sm:$0x1] %vm1242, %v1262
    %1268 = vst.msk [vmem:[#allocation2 + $0xa] sm:$0x1] %vm1242, %v1264
    %1269 = vrot.lane.b32.xlu0 %v1248, 80
    %v1270 = vpop.permute.xlu0 %1269
    %1271 = vrot.lane.b32.xlu0 %v1252, 80
    %v1272 = vpop.permute.xlu0 %1271
    %1275 = vst.msk [vmem:[#allocation2 + $0x3] sm:$0x1] %vm1242, %v1270
    %1276 = vst.msk [vmem:[#allocation2 + $0xb] sm:$0x1] %vm1242, %v1272
    %1277 = vrot.lane.b32.xlu0 %v1248, 64
    %v1278 = vpop.permute.xlu0 %1277
    %1279 = vrot.lane.b32.xlu0 %v1252, 64
    %v1280 = vpop.permute.xlu0 %1279
    %1283 = vst.msk [vmem:[#allocation2 + $0x4] sm:$0x1] %vm1242, %v1278
    %1284 = vst.msk [vmem:[#allocation2 + $0xc] sm:$0x1] %vm1242, %v1280
    %1285 = vrot.lane.b32.xlu0 %v1248, 48
    %v1286 = vpop.permute.xlu0 %1285
    %1287 = vrot.lane.b32.xlu0 %v1252, 48
    %v1288 = vpop.permute.xlu0 %1287
    %1291 = vst.msk [vmem:[#allocation2 + $0x5] sm:$0x1] %vm1242, %v1286
    %1292 = vst.msk [vmem:[#allocation2 + $0xd] sm:$0x1] %vm1242, %v1288
    %1293 = vrot.lane.b32.xlu0 %v1248, 32
    %v1294 = vpop.permute.xlu0 %1293
    %1295 = vrot.lane.b32.xlu0 %v1252, 32
    %v1296 = vpop.permute.xlu0 %1295
    %1299 = vst.msk [vmem:[#allocation2 + $0x6] sm:$0x1] %vm1242, %v1294
    %1300 = vst.msk [vmem:[#allocation2 + $0xe] sm:$0x1] %vm1242, %v1296
    %1301 = vrot.lane.b32.xlu0 %v1248, 16
    %v1302 = vpop.permute.xlu0 %1301
    %1303 = vrot.lane.b32.xlu0 %v1252, 16
    %v1304 = vpop.permute.xlu0 %1303
    %1307 = vst.msk [vmem:[#allocation2 + $0x7] sm:$0x1] %vm1242, %v1302
    %1308 = vst.msk [vmem:[#allocation2 + $0xf] sm:$0x1] %vm1242, %v1304
    %v1309 = vld [vmem:[#allocation2] sm:$0xff]
    %v1310 = vld [vmem:[#allocation2 + $0x8] sm:$0xff]
    %v1311 = vld [vmem:[%s51] sm:$0xf]
    %v1312 = vld [vmem:[%s51 + $0x4] sm:$0xf]
    %v1313 = vpack.c.bf16 %v1310, %v1309
    %v1314 = vld [vmem:[#allocation5] sm:$0x1]
    %v1316 = vlaneseq
    %v1317 = vshrl.u32 %v1316, 7
    %v1318 = vsub.s32 0, %v1317
    %v1319 = vrot.slane %v1314, %v1318
    %v1323 = vunpack.c.l.b16 %v1311
    %v1324 = vunpack.c.l.b16 %v1312
    %v1325 = vpack.c.b16 %v1324, %v1323
    %vm1327 = vcmask 130048
    %v1329 = vsel %vm1327, %v1313, 0
    %1331 = vmatprep.subr.bf16.mxu0 0
    %1332 = vmatpush1.bf16.msra.mxu0 %v1325
    %1333 = vmatprep.subr.bf16.mxu0 0
    %1334 = vmatpush1.bf16.msra.mxu0 0
    %1335 = vmatprep.subr.bf16.mxu0 0
    %1336 = vmatpush1.bf16.msra.mxu0 0
    %1337 = vmatprep.subr.bf16.mxu0 0
    %1338 = vmatpush1.bf16.msra.mxu0 0
    %1339 = vmatprep.subr.bf16.mxu0 0
    %1340 = vmatpush1.bf16.msra.mxu0 0
    %1341 = vmatprep.subr.bf16.mxu0 0
    %1342 = vmatpush1.bf16.msra.mxu0 0
    %1343 = vmatprep.subr.bf16.mxu0 0
    %1344 = vmatpush1.bf16.msra.mxu0 0
    %1345 = vmatprep.subr.bf16.mxu0 0
    %1346 = vmatpush1.bf16.msra.mxu0 0
    %1347 = vmatprep.subr.bf16.mxu0 0
    %1348 = vmatpush1.bf16.msra.mxu0 0
    %1349 = vmatprep.subr.bf16.mxu0 0
    %1350 = vmatpush1.bf16.msra.mxu0 0
    %1351 = vmatprep.subr.bf16.mxu0 0
    %1352 = vmatpush1.bf16.msra.mxu0 0
    %1353 = vmatprep.subr.bf16.mxu0 0
    %1354 = vmatpush1.bf16.msra.mxu0 0
    %1355 = vmatprep.subr.bf16.mxu0 0
    %1356 = vmatpush1.bf16.msra.mxu0 0
    %1357 = vmatprep.subr.bf16.mxu0 0
    %1358 = vmatpush1.bf16.msra.mxu0 0
    %1359 = vmatprep.subr.bf16.mxu0 0
    %1360 = vmatpush1.bf16.msra.mxu0 0
    %1361 = vmatprep.subr.bf16.mxu0 0
    %1362 = vmatpush1.bf16.msra.mxu0 0
    %1363 = vmatprep.mubr.bf16.mxu0 0
    %1364 = vmatmul.mubr.bf16.gmra.mrb[0].mxu0 %v1329
    %v1365 = vpop.f32.mrb[0].mxu0
    %v1366 = vadd.f32 %v1319, %v1365
    %v1367 = vpop.f32.mrb[0].mxu0
    %v1368 = vpop.f32.mrb[0].mxu0
    %v1369 = vadd.f32 %v1319, %v1368
    %v1370 = vpop.f32.mrb[0].mxu0
    %1371 = vdwg.mxu0
    %v1372 = vld [vmem:[%s61] sm:$0xf]
    %v1373 = vld [vmem:[%s61 + $0x4] sm:$0xf]
    %v1374 = vld [vmem:[%s61 + $0x8] sm:$0xf]
    %v1375 = vld [vmem:[%s61 + $0xc] sm:$0xf]
    %v1376 = vpack.c.bf16 %v1369, %v1366
    %v1377 = vld [vmem:[%s63] sm:$0x7]
    %v1378 = vpack.c.bf16 %v912, %v911
    %vm1379 = vcmask 39936
    %v1381 = vsel %vm1379, %v1378, 0
    %vm1383 = vcmask 1041408
    %v1384 = vsel %vm1383, 4294967295, 65535
    %v1385 = vsel %vm767, %v1384, 0
    %v1387 = vand.u32 %v1377, %v1385
    %1389 = vmatprep.subr.bf16.mxu0 0
    %1390 = vmatpush1.bf16.msra.mxu0 %v1387
    %1391 = vmatprep.subr.bf16.mxu0 0
    %1392 = vmatpush1.bf16.msra.mxu0 0
    %1393 = vmatprep.subr.bf16.mxu0 0
    %1394 = vmatpush1.bf16.msra.mxu0 0
    %1395 = vmatprep.subr.bf16.mxu0 0
    %1396 = vmatpush1.bf16.msra.mxu0 0
    %1397 = vmatprep.subr.bf16.mxu0 0
    %1398 = vmatpush1.bf16.msra.mxu0 0
    %1399 = vmatprep.subr.bf16.mxu0 0
    %1400 = vmatpush1.bf16.msra.mxu0 0
    %1401 = vmatprep.subr.bf16.mxu0 0
    %1402 = vmatpush1.bf16.msra.mxu0 0
    %1403 = vmatprep.subr.bf16.mxu0 0
    %1404 = vmatpush1.bf16.msra.mxu0 0
    %1405 = vmatprep.subr.bf16.mxu0 0
    %1406 = vmatpush1.bf16.msra.mxu0 0
    %1407 = vmatprep.subr.bf16.mxu0 0
    %1408 = vmatpush1.bf16.msra.mxu0 0
    %1409 = vmatprep.subr.bf16.mxu0 0
    %1410 = vmatpush1.bf16.msra.mxu0 0
    %1411 = vmatprep.subr.bf16.mxu0 0
    %1412 = vmatpush1.bf16.msra.mxu0 0
    %1413 = vmatprep.subr.bf16.mxu0 0
    %1414 = vmatpush1.bf16.msra.mxu0 0
    %1415 = vmatprep.subr.bf16.mxu0 0
    %1416 = vmatpush1.bf16.msra.mxu0 0
    %1417 = vmatprep.subr.bf16.mxu0 0
    %1418 = vmatpush1.bf16.msra.mxu0 0
    %1419 = vmatprep.subr.bf16.mxu0 0
    %1420 = vmatpush1.bf16.msra.mxu0 0
    %1421 = vmatprep.mubr.bf16.mxu0 0
    %1422 = vmatmul.mubr.bf16.gmra.mrb[0].mxu0 %v1381
    %v1423 = vpop.f32.mrb[0].mxu0
    %v1424 = vadd.f32 0.0, %v1423
    %v1425 = vpop.f32.mrb[0].mxu0
    %v1426 = vpop.f32.mrb[0].mxu0
    %v1427 = vadd.f32 0.0, %v1426
    %v1428 = vpop.f32.mrb[0].mxu0
    %1429 = vdwg.mxu0
    %v1434 = vunpack.c.l.b16 %v1372
    %v1435 = vunpack.c.l.b16 %v1373
    %v1436 = vunpack.c.l.b16 %v1374
    %v1437 = vunpack.c.l.b16 %v1375
    %v1438 = vpack.c.b16 %v1435, %v1434
    %v1439 = vpack.c.b16 %v1437, %v1436
    %v1443 = vsel %vm848, %v1376, 0
    %1445 = vmatprep.subr.bf16.mxu0 0
    %1446 = vmatpush1.bf16.msra.mxu0 %v1438
    %1447 = vmatprep.subr.bf16.mxu0 0
    %1448 = vmatpush1.bf16.msra.mxu0 %v1439
    %1449 = vmatprep.subr.bf16.mxu0 0
    %1450 = vmatpush1.bf16.msra.mxu0 0
    %1451 = vmatprep.subr.bf16.mxu0 0
    %1452 = vmatpush1.bf16.msra.mxu0 0
    %1453 = vmatprep.subr.bf16.mxu0 0
    %1454 = vmatpush1.bf16.msra.mxu0 0
    %1455 = vmatprep.subr.bf16.mxu0 0
    %1456 = vmatpush1.bf16.msra.mxu0 0
    %1457 = vmatprep.subr.bf16.mxu0 0
    %1458 = vmatpush1.bf16.msra.mxu0 0
    %1459 = vmatprep.subr.bf16.mxu0 0
    %1460 = vmatpush1.bf16.msra.mxu0 0
    %1461 = vmatprep.subr.bf16.mxu0 0
    %1462 = vmatpush1.bf16.msra.mxu0 0
    %1463 = vmatprep.subr.bf16.mxu0 0
    %1464 = vmatpush1.bf16.msra.mxu0 0
    %1465 = vmatprep.subr.bf16.mxu0 0
    %1466 = vmatpush1.bf16.msra.mxu0 0
    %1467 = vmatprep.subr.bf16.mxu0 0
    %1468 = vmatpush1.bf16.msra.mxu0 0
    %1469 = vmatprep.subr.bf16.mxu0 0
    %1470 = vmatpush1.bf16.msra.mxu0 0
    %1471 = vmatprep.subr.bf16.mxu0 0
    %1472 = vmatpush1.bf16.msra.mxu0 0
    %1473 = vmatprep.subr.bf16.mxu0 0
    %1474 = vmatpush1.bf16.msra.mxu0 0
    %1475 = vmatprep.subr.bf16.mxu0 0
    %1476 = vmatpush1.bf16.msra.mxu0 0
    %1477 = vmatprep.mubr.bf16.mxu0 0
    %1478 = vmatmul.mubr.bf16.gmra.mrb[0].mxu0 %v1443
    %v1479 = vpop.f32.mrb[0].mxu0
    %v1480 = vadd.f32 %v1424, %v1479
    %v1481 = vpop.f32.mrb[0].mxu0
    %v1482 = vpop.f32.mrb[0].mxu0
    %v1483 = vadd.f32 %v1427, %v1482
    %v1484 = vpop.f32.mrb[0].mxu0
    %1485 = vdwg.mxu0
    %v1486 = vld [vmem:[#allocation10] sm:$0x1]
    %v1488 = vlaneseq
    %v1489 = vshrl.u32 %v1488, 7
    %v1490 = vsub.s32 0, %v1489
    %v1491 = vrot.slane %v1486, %v1490
    %v1493 = vadd.f32 %v1480, %v1491
    %v1494 = vadd.f32 %v1483, %v1491
    %vm1495 = vcmp.gt.f32.partialorder %v1493, 0.0
    %vm1496 = vcmp.gt.f32.partialorder %v1494, 0.0
    %v1497 = vmin.f32 %v1493, 0.0
    %v1498 = vmin.f32 %v1494, 0.0
    %v1499 = vmul.f32 %v1497, 1.442695
    %v1500 = vpow.pop %v1499
    %v1501 = vmul.f32 %v1498, 1.442695
    %v1502 = vpow.pop %v1501
    %v1503 = vsub.f32 %v1500, 1.0
    %v1504 = vsub.f32 %v1502, 1.0
    %v1505 = vsel %vm1495, %v1493, %v1503
    %v1506 = vsel %vm1496, %v1494, %v1504
    %v1507 = vld [vmem:[%s65] sm:$0xf]
    %v1508 = vld [vmem:[%s65 + $0x4] sm:$0xf]
    %v1509 = vld [vmem:[%s65 + $0x8] sm:$0xf]
    %v1510 = vld [vmem:[%s65 + $0xc] sm:$0xf]
    %v1511 = vpack.c.bf16 %v1506, %v1505
    %v1512 = vld [vmem:[#allocation11] sm:$0x1]
    %v1514 = vlaneseq
    %v1515 = vshrl.u32 %v1514, 7
    %v1516 = vsub.s32 0, %v1515
    %v1517 = vrot.slane %v1512, %v1516
    %v1523 = vunpack.c.l.b16 %v1507
    %v1524 = vunpack.c.l.b16 %v1508
    %v1525 = vunpack.c.l.b16 %v1509
    %v1526 = vunpack.c.l.b16 %v1510
    %v1527 = vpack.c.b16 %v1524, %v1523
    %v1528 = vpack.c.b16 %v1526, %v1525
    %v1532 = vsel %vm848, %v1511, 0
    %1534 = vmatprep.subr.bf16.mxu0 0
    %1535 = vmatpush1.bf16.msra.mxu0 %v1527
    %1536 = vmatprep.subr.bf16.mxu0 0
    %1537 = vmatpush1.bf16.msra.mxu0 %v1528
    %1538 = vmatprep.subr.bf16.mxu0 0
    %1539 = vmatpush1.bf16.msra.mxu0 0
    %1540 = vmatprep.subr.bf16.mxu0 0
    %1541 = vmatpush1.bf16.msra.mxu0 0
    %1542 = vmatprep.subr.bf16.mxu0 0
    %1543 = vmatpush1.bf16.msra.mxu0 0
    %1544 = vmatprep.subr.bf16.mxu0 0
    %1545 = vmatpush1.bf16.msra.mxu0 0
    %1546 = vmatprep.subr.bf16.mxu0 0
    %1547 = vmatpush1.bf16.msra.mxu0 0
    %1548 = vmatprep.subr.bf16.mxu0 0
    %1549 = vmatpush1.bf16.msra.mxu0 0
    %1550 = vmatprep.subr.bf16.mxu0 0
    %1551 = vmatpush1.bf16.msra.mxu0 0
    %1552 = vmatprep.subr.bf16.mxu0 0
    %1553 = vmatpush1.bf16.msra.mxu0 0
    %1554 = vmatprep.subr.bf16.mxu0 0
    %1555 = vmatpush1.bf16.msra.mxu0 0
    %1556 = vmatprep.subr.bf16.mxu0 0
    %1557 = vmatpush1.bf16.msra.mxu0 0
    %1558 = vmatprep.subr.bf16.mxu0 0
    %1559 = vmatpush1.bf16.msra.mxu0 0
    %1560 = vmatprep.subr.bf16.mxu0 0
    %1561 = vmatpush1.bf16.msra.mxu0 0
    %1562 = vmatprep.subr.bf16.mxu0 0
    %1563 = vmatpush1.bf16.msra.mxu0 0
    %1564 = vmatprep.subr.bf16.mxu0 0
    %1565 = vmatpush1.bf16.msra.mxu0 0
    %1566 = vmatprep.mubr.bf16.mxu0 0
    %1567 = vmatmul.mubr.bf16.gmra.mrb[0].mxu0 %v1532
    %v1568 = vpop.f32.mrb[0].mxu0
    %v1569 = vadd.f32 %v1517, %v1568
    %v1570 = vpop.f32.mrb[0].mxu0
    %v1571 = vpop.f32.mrb[0].mxu0
    %v1572 = vadd.f32 %v1517, %v1571
    %v1573 = vpop.f32.mrb[0].mxu0
    %1574 = vdwg.mxu0
    %v1575 = vld [vmem:[%s23] sm:$0xf]
    %v1576 = vld [vmem:[%s23 + $0x4] sm:$0xf]
    %v1577 = vld [vmem:[%s23 + $0x8] sm:$0xf]
    %v1578 = vld [vmem:[%s23 + $0xc] sm:$0xf]
    %v1579 = vpack.c.bf16 %v890, %v887
    %v1580 = vld [vmem:[%s25] sm:$0xf]
    %v1581 = vld [vmem:[%s25 + $0x4] sm:$0xf]
    %v1582 = vld [vmem:[%s25 + $0x8] sm:$0xf]
    %v1583 = vld [vmem:[%s25 + $0xc] sm:$0xf]
    %v1584 = vpack.c.bf16 %v1572, %v1569
    %v1589 = vunpack.c.l.b16 %v1580
    %v1590 = vunpack.c.l.b16 %v1581
    %v1591 = vunpack.c.l.b16 %v1582
    %v1592 = vunpack.c.l.b16 %v1583
    %v1593 = vpack.c.b16 %v1590, %v1589
    %v1594 = vpack.c.b16 %v1592, %v1591
    %v1598 = vsel %vm848, %v1584, 0
    %1600 = vmatprep.subr.bf16.mxu0 0
    %1601 = vmatpush1.bf16.msra.mxu0 %v1593
    %1602 = vmatprep.subr.bf16.mxu0 0
    %1603 = vmatpush1.bf16.msra.mxu0 %v1594
    %1604 = vmatprep.subr.bf16.mxu0 0
    %1605 = vmatpush1.bf16.msra.mxu0 0
    %1606 = vmatprep.subr.bf16.mxu0 0
    %1607 = vmatpush1.bf16.msra.mxu0 0
    %1608 = vmatprep.subr.bf16.mxu0 0
    %1609 = vmatpush1.bf16.msra.mxu0 0
    %1610 = vmatprep.subr.bf16.mxu0 0
    %1611 = vmatpush1.bf16.msra.mxu0 0
    %1612 = vmatprep.subr.bf16.mxu0 0
    %1613 = vmatpush1.bf16.msra.mxu0 0
    %1614 = vmatprep.subr.bf16.mxu0 0
    %1615 = vmatpush1.bf16.msra.mxu0 0
    %1616 = vmatprep.subr.bf16.mxu0 0
    %1617 = vmatpush1.bf16.msra.mxu0 0
    %1618 = vmatprep.subr.bf16.mxu0 0
    %1619 = vmatpush1.bf16.msra.mxu0 0
    %1620 = vmatprep.subr.bf16.mxu0 0
    %1621 = vmatpush1.bf16.msra.mxu0 0
    %1622 = vmatprep.subr.bf16.mxu0 0
    %1623 = vmatpush1.bf16.msra.mxu0 0
    %1624 = vmatprep.subr.bf16.mxu0 0
    %1625 = vmatpush1.bf16.msra.mxu0 0
    %1626 = vmatprep.subr.bf16.mxu0 0
    %1627 = vmatpush1.bf16.msra.mxu0 0
    %1628 = vmatprep.subr.bf16.mxu0 0
    %1629 = vmatpush1.bf16.msra.mxu0 0
    %1630 = vmatprep.subr.bf16.mxu0 0
    %1631 = vmatpush1.bf16.msra.mxu0 0
    %1632 = vmatprep.mubr.bf16.mxu0 0
    %1633 = vmatmul.mubr.bf16.gmra.mrb[0].mxu0 %v1598
    %v1634 = vpop.f32.mrb[0].mxu0
    %v1635 = vadd.f32 0.0, %v1634
    %v1636 = vpop.f32.mrb[0].mxu0
    %v1637 = vpop.f32.mrb[0].mxu0
    %v1638 = vadd.f32 0.0, %v1637
    %v1639 = vpop.f32.mrb[0].mxu0
    %1640 = vdwg.mxu0
    %v1645 = vunpack.c.l.b16 %v1575
    %v1646 = vunpack.c.l.b16 %v1576
    %v1647 = vunpack.c.l.b16 %v1577
    %v1648 = vunpack.c.l.b16 %v1578
    %v1649 = vpack.c.b16 %v1646, %v1645
    %v1650 = vpack.c.b16 %v1648, %v1647
    %v1654 = vsel %vm848, %v1579, 0
    %1656 = vmatprep.subr.bf16.mxu0 0
    %1657 = vmatpush1.bf16.msra.mxu0 %v1649
    %1658 = vmatprep.subr.bf16.mxu0 0
    %1659 = vmatpush1.bf16.msra.mxu0 %v1650
    %1660 = vmatprep.subr.bf16.mxu0 0
    %1661 = vmatpush1.bf16.msra.mxu0 0
    %1662 = vmatprep.subr.bf16.mxu0 0
    %1663 = vmatpush1.bf16.msra.mxu0 0
    %1664 = vmatprep.subr.bf16.mxu0 0
    %1665 = vmatpush1.bf16.msra.mxu0 0
    %1666 = vmatprep.subr.bf16.mxu0 0
    %1667 = vmatpush1.bf16.msra.mxu0 0
    %1668 = vmatprep.subr.bf16.mxu0 0
    %1669 = vmatpush1.bf16.msra.mxu0 0
    %1670 = vmatprep.subr.bf16.mxu0 0
    %1671 = vmatpush1.bf16.msra.mxu0 0
    %1672 = vmatprep.subr.bf16.mxu0 0
    %1673 = vmatpush1.bf16.msra.mxu0 0
    %1674 = vmatprep.subr.bf16.mxu0 0
    %1675 = vmatpush1.bf16.msra.mxu0 0
    %1676 = vmatprep.subr.bf16.mxu0 0
    %1677 = vmatpush1.bf16.msra.mxu0 0
    %1678 = vmatprep.subr.bf16.mxu0 0
    %1679 = vmatpush1.bf16.msra.mxu0 0
    %1680 = vmatprep.subr.bf16.mxu0 0
    %1681 = vmatpush1.bf16.msra.mxu0 0
    %1682 = vmatprep.subr.bf16.mxu0 0
    %1683 = vmatpush1.bf16.msra.mxu0 0
    %1684 = vmatprep.subr.bf16.mxu0 0
    %1685 = vmatpush1.bf16.msra.mxu0 0
    %1686 = vmatprep.subr.bf16.mxu0 0
    %1687 = vmatpush1.bf16.msra.mxu0 0
    %1688 = vmatprep.mubr.bf16.mxu0 0
    %1689 = vmatmul.mubr.bf16.gmra.mrb[0].mxu0 %v1654
    %v1690 = vpop.f32.mrb[0].mxu0
    %v1691 = vadd.f32 %v1635, %v1690
    %v1692 = vpop.f32.mrb[0].mxu0
    %v1693 = vpop.f32.mrb[0].mxu0
    %v1694 = vadd.f32 %v1638, %v1693
    %v1695 = vpop.f32.mrb[0].mxu0
    %1696 = vdwg.mxu0
    %v1697 = vld [vmem:[%s19] sm:$0x1]
    %v1699 = vlaneseq
    %v1700 = vshrl.u32 %v1699, 7
    %v1701 = vsub.s32 0, %v1700
    %v1702 = vrot.slane %v1697, %v1701
    %v1704 = vadd.f32 %v1691, %v1702
    %v1705 = vadd.f32 %v1694, %v1702
    %vm1706 = vcmp.gt.f32.partialorder %v1704, 0.0
    %vm1707 = vcmp.gt.f32.partialorder %v1705, 0.0
    %v1708 = vmin.f32 %v1704, 0.0
    %v1709 = vmin.f32 %v1705, 0.0
    %v1710 = vmul.f32 %v1708, 1.442695
    %v1711 = vpow.pop %v1710
    %v1712 = vmul.f32 %v1709, 1.442695
    %v1713 = vpow.pop %v1712
    %v1714 = vsub.f32 %v1711, 1.0
    %v1715 = vsub.f32 %v1713, 1.0
    %v1716 = vsel %vm1706, %v1704, %v1714
    %v1717 = vsel %vm1707, %v1705, %v1715
    %v1718 = vld [vmem:[%s27] sm:$0xf]
    %v1719 = vld [vmem:[%s27 + $0x4] sm:$0xf]
    %v1720 = vld [vmem:[%s27 + $0x8] sm:$0xf]
    %v1721 = vld [vmem:[%s27 + $0xc] sm:$0xf]
    %v1722 = vpack.c.bf16 %v1717, %v1716
    %v1723 = vld [vmem:[%s21] sm:$0x1]
    %v1725 = vlaneseq
    %v1726 = vshrl.u32 %v1725, 7
    %v1727 = vsub.s32 0, %v1726
    %v1728 = vrot.slane %v1723, %v1727
    %v1734 = vunpack.c.l.b16 %v1718
    %v1735 = vunpack.c.l.b16 %v1719
    %v1736 = vunpack.c.l.b16 %v1720
    %v1737 = vunpack.c.l.b16 %v1721
    %v1738 = vpack.c.b16 %v1735, %v1734
    %v1739 = vpack.c.b16 %v1737, %v1736
    %v1743 = vsel %vm848, %v1722, 0
    %1745 = vmatprep.subr.bf16.mxu0 0
    %1746 = vmatpush1.bf16.msra.mxu0 %v1738
    %1747 = vmatprep.subr.bf16.mxu0 0
    %1748 = vmatpush1.bf16.msra.mxu0 %v1739
    %1749 = vmatprep.subr.bf16.mxu0 0
    %1750 = vmatpush1.bf16.msra.mxu0 0
    %1751 = vmatprep.subr.bf16.mxu0 0
    %1752 = vmatpush1.bf16.msra.mxu0 0
    %1753 = vmatprep.subr.bf16.mxu0 0
    %1754 = vmatpush1.bf16.msra.mxu0 0
    %1755 = vmatprep.subr.bf16.mxu0 0
    %1756 = vmatpush1.bf16.msra.mxu0 0
    %1757 = vmatprep.subr.bf16.mxu0 0
    %1758 = vmatpush1.bf16.msra.mxu0 0
    %1759 = vmatprep.subr.bf16.mxu0 0
    %1760 = vmatpush1.bf16.msra.mxu0 0
    %1761 = vmatprep.subr.bf16.mxu0 0
    %1762 = vmatpush1.bf16.msra.mxu0 0
    %1763 = vmatprep.subr.bf16.mxu0 0
    %1764 = vmatpush1.bf16.msra.mxu0 0
    %1765 = vmatprep.subr.bf16.mxu0 0
    %1766 = vmatpush1.bf16.msra.mxu0 0
    %1767 = vmatprep.subr.bf16.mxu0 0
    %1768 = vmatpush1.bf16.msra.mxu0 0
    %1769 = vmatprep.subr.bf16.mxu0 0
    %1770 = vmatpush1.bf16.msra.mxu0 0
    %1771 = vmatprep.subr.bf16.mxu0 0
    %1772 = vmatpush1.bf16.msra.mxu0 0
    %1773 = vmatprep.subr.bf16.mxu0 0
    %1774 = vmatpush1.bf16.msra.mxu0 0
    %1775 = vmatprep.subr.bf16.mxu0 0
    %1776 = vmatpush1.bf16.msra.mxu0 0
    %1777 = vmatprep.mubr.bf16.mxu0 0
    %1778 = vmatmul.mubr.bf16.gmra.mrb[0].mxu0 %v1743
    %v1779 = vpop.f32.mrb[0].mxu0
    %v1780 = vadd.f32 %v1728, %v1779
    %v1781 = vpop.f32.mrb[0].mxu0
    %v1782 = vpop.f32.mrb[0].mxu0
    %v1783 = vadd.f32 %v1728, %v1782
    %v1784 = vpop.f32.mrb[0].mxu0
    %1785 = vdwg.mxu0
    %v1786 = vmul.f32 %v1780, 2.0
    %v1787 = vmul.f32 %v1783, 2.0
    %v1788 = vld [vmem:[%s9] sm:$0xff]
    %v1789 = vld [vmem:[%s9 + $0x8] sm:$0xff]
    %v1790 = vadd.f32 %v1786, %v1788
    %v1791 = vadd.f32 %v1787, %v1789
    %v1792 = vld [vmem:[%s141] sm:$0xf]
    %v1793 = vld [vmem:[%s141 + $0x4] sm:$0xf]
    %v1794 = vld [vmem:[%s141 + $0x8] sm:$0xf]
    %v1795 = vld [vmem:[%s141 + $0xc] sm:$0xf]
    %v1796 = vpack.c.bf16 %v1791, %v1790
    %v1797 = vld [vmem:[#allocation46] sm:$0x1]
    %v1799 = vlaneseq
    %v1800 = vshrl.u32 %v1799, 7
    %v1801 = vsub.s32 0, %v1800
    %v1802 = vrot.slane %v1797, %v1801
    %v1808 = vunpack.c.l.b16 %v1792
    %v1809 = vunpack.c.l.b16 %v1793
    %v1810 = vunpack.c.l.b16 %v1794
    %v1811 = vunpack.c.l.b16 %v1795
    %v1812 = vpack.c.b16 %v1809, %v1808
    %v1813 = vpack.c.b16 %v1811, %v1810
    %v1817 = vsel %vm848, %v1796, 0
    %1819 = vmatprep.subr.bf16.mxu0 0
    %1820 = vmatpush1.bf16.msra.mxu0 %v1812
    %1821 = vmatprep.subr.bf16.mxu0 0
    %1822 = vmatpush1.bf16.msra.mxu0 %v1813
    %1823 = vmatprep.subr.bf16.mxu0 0
    %1824 = vmatpush1.bf16.msra.mxu0 0
    %1825 = vmatprep.subr.bf16.mxu0 0
    %1826 = vmatpush1.bf16.msra.mxu0 0
    %1827 = vmatprep.subr.bf16.mxu0 0
    %1828 = vmatpush1.bf16.msra.mxu0 0
    %1829 = vmatprep.subr.bf16.mxu0 0
    %1830 = vmatpush1.bf16.msra.mxu0 0
    %1831 = vmatprep.subr.bf16.mxu0 0
    %1832 = vmatpush1.bf16.msra.mxu0 0
    %1833 = vmatprep.subr.bf16.mxu0 0
    %1834 = vmatpush1.bf16.msra.mxu0 0
    %1835 = vmatprep.subr.bf16.mxu0 0
    %1836 = vmatpush1.bf16.msra.mxu0 0
    %1837 = vmatprep.subr.bf16.mxu0 0
    %1838 = vmatpush1.bf16.msra.mxu0 0
    %1839 = vmatprep.subr.bf16.mxu0 0
    %1840 = vmatpush1.bf16.msra.mxu0 0
    %1841 = vmatprep.subr.bf16.mxu0 0
    %1842 = vmatpush1.bf16.msra.mxu0 0
    %1843 = vmatprep.subr.bf16.mxu0 0
    %1844 = vmatpush1.bf16.msra.mxu0 0
    %1845 = vmatprep.subr.bf16.mxu0 0
    %1846 = vmatpush1.bf16.msra.mxu0 0
    %1847 = vmatprep.subr.bf16.mxu0 0
    %1848 = vmatpush1.bf16.msra.mxu0 0
    %1849 = vmatprep.subr.bf16.mxu0 0
    %1850 = vmatpush1.bf16.msra.mxu0 0
    %1851 = vmatprep.mubr.bf16.mxu0 0
    %1852 = vmatmul.mubr.bf16.gmra.mrb[0].mxu0 %v1817
    %v1853 = vpop.f32.mrb[0].mxu0
    %v1854 = vadd.f32 %v1802, %v1853
    %v1855 = vpop.f32.mrb[0].mxu0
    %v1856 = vpop.f32.mrb[0].mxu0
    %v1857 = vadd.f32 %v1802, %v1856
    %v1858 = vpop.f32.mrb[0].mxu0
    %1859 = vdwg.mxu0
    %v1860 = vld [vmem:[%s137] sm:$0xf]
    %v1861 = vld [vmem:[%s137 + $0x4] sm:$0xf]
    %v1862 = vld [vmem:[%s137 + $0x8] sm:$0xf]
    %v1863 = vld [vmem:[%s137 + $0xc] sm:$0xf]
    %v1864 = vld [vmem:[#allocation43] sm:$0x1]
    %v1866 = vlaneseq
    %v1867 = vshrl.u32 %v1866, 7
    %v1868 = vsub.s32 0, %v1867
    %v1869 = vrot.slane %v1864, %v1868
    %v1875 = vunpack.c.l.b16 %v1860
    %v1876 = vunpack.c.l.b16 %v1861
    %v1877 = vunpack.c.l.b16 %v1862
    %v1878 = vunpack.c.l.b16 %v1863
    %v1879 = vpack.c.b16 %v1876, %v1875
    %v1880 = vpack.c.b16 %v1878, %v1877
    %1883 = vmatprep.subr.bf16.mxu0 0
    %1884 = vmatpush1.bf16.msra.mxu0 %v1879
    %1885 = vmatprep.subr.bf16.mxu0 0
    %1886 = vmatpush1.bf16.msra.mxu0 %v1880
    %1887 = vmatprep.subr.bf16.mxu0 0
    %1888 = vmatpush1.bf16.msra.mxu0 0
    %1889 = vmatprep.subr.bf16.mxu0 0
    %1890 = vmatpush1.bf16.msra.mxu0 0
    %1891 = vmatprep.subr.bf16.mxu0 0
    %1892 = vmatpush1.bf16.msra.mxu0 0
    %1893 = vmatprep.subr.bf16.mxu0 0
    %1894 = vmatpush1.bf16.msra.mxu0 0
    %1895 = vmatprep.subr.bf16.mxu0 0
    %1896 = vmatpush1.bf16.msra.mxu0 0
    %1897 = vmatprep.subr.bf16.mxu0 0
    %1898 = vmatpush1.bf16.msra.mxu0 0
    %1899 = vmatprep.subr.bf16.mxu0 0
    %1900 = vmatpush1.bf16.msra.mxu0 0
    %1901 = vmatprep.subr.bf16.mxu0 0
    %1902 = vmatpush1.bf16.msra.mxu0 0
    %1903 = vmatprep.subr.bf16.mxu0 0
    %1904 = vmatpush1.bf16.msra.mxu0 0
    %1905 = vmatprep.subr.bf16.mxu0 0
    %1906 = vmatpush1.bf16.msra.mxu0 0
    %1907 = vmatprep.subr.bf16.mxu0 0
    %1908 = vmatpush1.bf16.msra.mxu0 0
    %1909 = vmatprep.subr.bf16.mxu0 0
    %1910 = vmatpush1.bf16.msra.mxu0 0
    %1911 = vmatprep.subr.bf16.mxu0 0
    %1912 = vmatpush1.bf16.msra.mxu0 0
    %1913 = vmatprep.subr.bf16.mxu0 0
    %1914 = vmatpush1.bf16.msra.mxu0 0
    %1915 = vmatprep.mubr.bf16.mxu0 0
    %1916 = vmatmul.mubr.bf16.gmra.mrb[0].mxu0 %v1817
    %v1917 = vpop.f32.mrb[0].mxu0
    %v1918 = vadd.f32 %v1869, %v1917
    %v1919 = vpop.f32.mrb[0].mxu0
    %v1920 = vpop.f32.mrb[0].mxu0
    %v1921 = vadd.f32 %v1869, %v1920
    %v1922 = vpop.f32.mrb[0].mxu0
    %1923 = vdwg.mxu0
    %v1924 = vpack.c.bf16 %v1857, %v1854
    %v1925 = vpack.c.bf16 %v1921, %v1918
    %vm1926 = vcmask 64512
    %v1928 = vsel %vm1926, %v1924, 0
    %v1931 = vsel %vm1926, %v1925, 0
    %1933 = vmatprep.subr.bf16.mxu0 0
    %1934 = vmatpush1.bf16.xpose.msra.mxu0 %v1931
    %1935 = vmatprep.subr.bf16.mxu0 0
    %1936 = vmatpush1.bf16.xpose.msra.mxu0 0
    %1937 = vmatprep.subr.bf16.mxu0 0
    %1938 = vmatpush1.bf16.xpose.msra.mxu0 0
    %1939 = vmatprep.subr.bf16.mxu0 0
    %1940 = vmatpush1.bf16.xpose.msra.mxu0 0
    %1941 = vmatprep.subr.bf16.mxu0 0
    %1942 = vmatpush1.bf16.xpose.msra.mxu0 0
    %1943 = vmatprep.subr.bf16.mxu0 0
    %1944 = vmatpush1.bf16.xpose.msra.mxu0 0
    %1945 = vmatprep.subr.bf16.mxu0 0
    %1946 = vmatpush1.bf16.xpose.msra.mxu0 0
    %1947 = vmatprep.subr.bf16.mxu0 0
    %1948 = vmatpush1.bf16.xpose.msra.mxu0 0
    %1949 = vmatprep.subr.bf16.mxu0 0
    %1950 = vmatpush1.bf16.xpose.msra.mxu0 0
    %1951 = vmatprep.subr.bf16.mxu0 0
    %1952 = vmatpush1.bf16.xpose.msra.mxu0 0
    %1953 = vmatprep.subr.bf16.mxu0 0
    %1954 = vmatpush1.bf16.xpose.msra.mxu0 0
    %1955 = vmatprep.subr.bf16.mxu0 0
    %1956 = vmatpush1.bf16.xpose.msra.mxu0 0
    %1957 = vmatprep.subr.bf16.mxu0 0
    %1958 = vmatpush1.bf16.xpose.msra.mxu0 0
    %1959 = vmatprep.subr.bf16.mxu0 0
    %1960 = vmatpush1.bf16.xpose.msra.mxu0 0
    %1961 = vmatprep.subr.bf16.mxu0 0
    %1962 = vmatpush1.bf16.xpose.msra.mxu0 0
    %1963 = vmatprep.subr.bf16.mxu0 0
    %1964 = vmatpush1.bf16.xpose.msra.mxu0 0
    %1965 = vmatprep.mubr.bf16.mxu0 0
    %1966 = vmatmul.mubr.bf16.gmra.mrb[0].mxu0 %v1928
    %v1967 = vpop.f32.mrb[0].mxu0
    %v1968 = vadd.f32 0.0, %v1967
    %v1969 = vpop.f32.mrb[0].mxu0
    %v1970 = vpop.f32.mrb[0].mxu0
    %v1971 = vadd.f32 0.0, %v1970
    %v1972 = vpop.f32.mrb[0].mxu0
    %1973 = vdwg.mxu0
    %v1974 = vmul.f32 %v1968, 0.35355338
    %v1975 = vmul.f32 %v1971, 0.35355338
    %v1976 = vadd.f32 %v1974, %v750
    %v1977 = vadd.f32 %v1975, %v751
    %v1978 = vsel %vm1327, %v1976, -inf
    %1979 = vmax.xlane.f32.xlu0 %v1978
    %v1980 = vpop.xlane.xlu0 %1979
    %v1981 = vsel %vm1327, %v1977, -inf
    %1982 = vmax.xlane.f32.xlu0 %v1981
    %v1983 = vpop.xlane.xlu0 %1982
    %v1984 = vsub.f32 %v1976, %v1980
    %v1985 = vsub.f32 %v1977, %v1983
    %v1986 = vmul.f32 %v1984, 1.442695
    %v1987 = vpow.pop %v1986
    %v1988 = vmul.f32 %v1985, 1.442695
    %v1989 = vpow.pop %v1988
    %v1990 = vsel %vm1327, %v1987, 0.0
    %1991 = vadd.xlane.f32.xlu0 %v1990
    %v1992 = vpop.xlane.xlu0 %1991
    %v1993 = vsel %vm1327, %v1989, 0.0
    %1994 = vadd.xlane.f32.xlu0 %v1993
    %v1995 = vpop.xlane.xlu0 %1994
    %v1996 = vrcp.pop %v1992
    %v1997 = vrcp.pop %v1995
    %v1998 = vmul.f32 %v1987, %v1996
    %v1999 = vmul.f32 %v1989, %v1997
    %v2000 = vpack.c.bf16 %v1999, %v1998
    %2002 = vrot.lane.b32.xlu0 %v1925, 96
    %v2003 = vpop.permute.xlu0 %2002
    %v2006 = vsel %vm1327, %v2000, 0
    %2008 = vmatprep.subr.bf16.mxu0 0
    %2009 = vmatpush1.bf16.msra.mxu0 %v2003
    %2010 = vmatprep.subr.bf16.mxu0 0
    %2011 = vmatpush1.bf16.msra.mxu0 0
    %2012 = vmatprep.subr.bf16.mxu0 0
    %2013 = vmatpush1.bf16.msra.mxu0 0
    %2014 = vmatprep.subr.bf16.mxu0 0
    %2015 = vmatpush1.bf16.msra.mxu0 0
    %2016 = vmatprep.subr.bf16.mxu0 0
    %2017 = vmatpush1.bf16.msra.mxu0 0
    %2018 = vmatprep.subr.bf16.mxu0 0
    %2019 = vmatpush1.bf16.msra.mxu0 0
    %2020 = vmatprep.subr.bf16.mxu0 0
    %2021 = vmatpush1.bf16.msra.mxu0 0
    %2022 = vmatprep.subr.bf16.mxu0 0
    %2023 = vmatpush1.bf16.msra.mxu0 0
    %2024 = vmatprep.subr.bf16.mxu0 0
    %2025 = vmatpush1.bf16.msra.mxu0 0
    %2026 = vmatprep.subr.bf16.mxu0 0
    %2027 = vmatpush1.bf16.msra.mxu0 0
    %2028 = vmatprep.subr.bf16.mxu0 0
    %2029 = vmatpush1.bf16.msra.mxu0 0
    %2030 = vmatprep.subr.bf16.mxu0 0
    %2031 = vmatpush1.bf16.msra.mxu0 0
    %2032 = vmatprep.subr.bf16.mxu0 0
    %2033 = vmatpush1.bf16.msra.mxu0 0
    %2034 = vmatprep.subr.bf16.mxu0 0
    %2035 = vmatpush1.bf16.msra.mxu0 0
    %2036 = vmatprep.subr.bf16.mxu0 0
    %2037 = vmatpush1.bf16.msra.mxu0 0
    %2038 = vmatprep.subr.bf16.mxu0 0
    %2039 = vmatpush1.bf16.msra.mxu0 0
    %2040 = vmatprep.mubr.bf16.mxu0 0
    %2041 = vmatmul.mubr.bf16.gmra.mrb[0].mxu0 %v2006
    %v2042 = vpop.f32.mrb[0].mxu0
    %v2043 = vadd.f32 0.0, %v2042
    %v2044 = vpop.f32.mrb[0].mxu0
    %v2045 = vpop.f32.mrb[0].mxu0
    %v2046 = vadd.f32 0.0, %v2045
    %v2047 = vpop.f32.mrb[0].mxu0
    %2048 = vdwg.mxu0
    %2050 = vrot.lane.b32.xlu0 %v1924, 120
    %v2051 = vpop.permute.xlu0 %2050
    %2052 = vrot.lane.b32.xlu0 %v1925, 120
    %v2053 = vpop.permute.xlu0 %2052
    %v2055 = vsel %vm1926, %v2051, 0
    %v2058 = vsel %vm1926, %v2053, 0
    %2060 = vmatprep.subr.bf16.mxu0 0
    %2061 = vmatpush1.bf16.xpose.msra.mxu0 %v2058
    %2062 = vmatprep.subr.bf16.mxu0 0
    %2063 = vmatpush1.bf16.xpose.msra.mxu0 0
    %2064 = vmatprep.subr.bf16.mxu0 0
    %2065 = vmatpush1.bf16.xpose.msra.mxu0 0
    %2066 = vmatprep.subr.bf16.mxu0 0
    %2067 = vmatpush1.bf16.xpose.msra.mxu0 0
    %2068 = vmatprep.subr.bf16.mxu0 0
    %2069 = vmatpush1.bf16.xpose.msra.mxu0 0
    %2070 = vmatprep.subr.bf16.mxu0 0
    %2071 = vmatpush1.bf16.xpose.msra.mxu0 0
    %2072 = vmatprep.subr.bf16.mxu0 0
    %2073 = vmatpush1.bf16.xpose.msra.mxu0 0
    %2074 = vmatprep.subr.bf16.mxu0 0
    %2075 = vmatpush1.bf16.xpose.msra.mxu0 0
    %2076 = vmatprep.subr.bf16.mxu0 0
    %2077 = vmatpush1.bf16.xpose.msra.mxu0 0
    %2078 = vmatprep.subr.bf16.mxu0 0
    %2079 = vmatpush1.bf16.xpose.msra.mxu0 0
    %2080 = vmatprep.subr.bf16.mxu0 0
    %2081 = vmatpush1.bf16.xpose.msra.mxu0 0
    %2082 = vmatprep.subr.bf16.mxu0 0
    %2083 = vmatpush1.bf16.xpose.msra.mxu0 0
    %2084 = vmatprep.subr.bf16.mxu0 0
    %2085 = vmatpush1.bf16.xpose.msra.mxu0 0
    %2086 = vmatprep.subr.bf16.mxu0 0
    %2087 = vmatpush1.bf16.xpose.msra.mxu0 0
    %2088 = vmatprep.subr.bf16.mxu0 0
    %2089 = vmatpush1.bf16.xpose.msra.mxu0 0
    %2090 = vmatprep.subr.bf16.mxu0 0
    %2091 = vmatpush1.bf16.xpose.msra.mxu0 0
    %2092 = vmatprep.mubr.bf16.mxu0 0
    %2093 = vmatmul.mubr.bf16.gmra.mrb[0].mxu0 %v2055
    %v2094 = vpop.f32.mrb[0].mxu0
    %v2095 = vadd.f32 0.0, %v2094
    %v2096 = vpop.f32.mrb[0].mxu0
    %v2097 = vpop.f32.mrb[0].mxu0
    %v2098 = vadd.f32 0.0, %v2097
    %v2099 = vpop.f32.mrb[0].mxu0
    %2100 = vdwg.mxu0
    %v2101 = vmul.f32 %v2095, 0.35355338
    %v2102 = vmul.f32 %v2098, 0.35355338
    %v2103 = vadd.f32 %v2101, %v750
    %v2104 = vadd.f32 %v2102, %v751
    %v2105 = vsel %vm1327, %v2103, -inf
    %2106 = vmax.xlane.f32.xlu0 %v2105
    %v2107 = vpop.xlane.xlu0 %2106
    %v2108 = vsel %vm1327, %v2104, -inf
    %2109 = vmax.xlane.f32.xlu0 %v2108
    %v2110 = vpop.xlane.xlu0 %2109
    %v2111 = vsub.f32 %v2103, %v2107
    %v2112 = vsub.f32 %v2104, %v2110
    %v2113 = vmul.f32 %v2111, 1.442695
    %v2114 = vpow.pop %v2113
    %v2115 = vmul.f32 %v2112, 1.442695
    %v2116 = vpow.pop %v2115
    %v2117 = vsel %vm1327, %v2114, 0.0
    %2118 = vadd.xlane.f32.xlu0 %v2117
    %v2119 = vpop.xlane.xlu0 %2118
    %v2120 = vsel %vm1327, %v2116, 0.0
    %2121 = vadd.xlane.f32.xlu0 %v2120
    %v2122 = vpop.xlane.xlu0 %2121
    %v2123 = vrcp.pop %v2119
    %v2124 = vrcp.pop %v2122
    %v2125 = vmul.f32 %v2114, %v2123
    %v2126 = vmul.f32 %v2116, %v2124
    %v2127 = vpack.c.bf16 %v2126, %v2125
    %2128 = vrot.lane.b32.xlu0 %v1925, 88
    %v2129 = vpop.permute.xlu0 %2128
    %v2132 = vsel %vm1327, %v2127, 0
    %2134 = vmatprep.subr.bf16.mxu0 0
    %2135 = vmatpush1.bf16.msra.mxu0 %v2129
    %2136 = vmatprep.subr.bf16.mxu0 0
    %2137 = vmatpush1.bf16.msra.mxu0 0
    %2138 = vmatprep.subr.bf16.mxu0 0
    %2139 = vmatpush1.bf16.msra.mxu0 0
    %2140 = vmatprep.subr.bf16.mxu0 0
    %2141 = vmatpush1.bf16.msra.mxu0 0
    %2142 = vmatprep.subr.bf16.mxu0 0
    %2143 = vmatpush1.bf16.msra.mxu0 0
    %2144 = vmatprep.subr.bf16.mxu0 0
    %2145 = vmatpush1.bf16.msra.mxu0 0
    %2146 = vmatprep.subr.bf16.mxu0 0
    %2147 = vmatpush1.bf16.msra.mxu0 0
    %2148 = vmatprep.subr.bf16.mxu0 0
    %2149 = vmatpush1.bf16.msra.mxu0 0
    %2150 = vmatprep.subr.bf16.mxu0 0
    %2151 = vmatpush1.bf16.msra.mxu0 0
    %2152 = vmatprep.subr.bf16.mxu0 0
    %2153 = vmatpush1.bf16.msra.mxu0 0
    %2154 = vmatprep.subr.bf16.mxu0 0
    %2155 = vmatpush1.bf16.msra.mxu0 0
    %2156 = vmatprep.subr.bf16.mxu0 0
    %2157 = vmatpush1.bf16.msra.mxu0 0
    %2158 = vmatprep.subr.bf16.mxu0 0
    %2159 = vmatpush1.bf16.msra.mxu0 0
    %2160 = vmatprep.subr.bf16.mxu0 0
    %2161 = vmatpush1.bf16.msra.mxu0 0
    %2162 = vmatprep.subr.bf16.mxu0 0
    %2163 = vmatpush1.bf16.msra.mxu0 0
    %2164 = vmatprep.subr.bf16.mxu0 0
    %2165 = vmatpush1.bf16.msra.mxu0 0
    %2166 = vmatprep.mubr.bf16.mxu0 0
    %2167 = vmatmul.mubr.bf16.gmra.mrb[0].mxu0 %v2132
    %v2168 = vpop.f32.mrb[0].mxu0
    %v2169 = vadd.f32 0.0, %v2168
    %v2170 = vpop.f32.mrb[0].mxu0
    %v2171 = vpop.f32.mrb[0].mxu0
    %v2172 = vadd.f32 0.0, %v2171
    %v2173 = vpop.f32.mrb[0].mxu0
    %2174 = vdwg.mxu0
    %2175 = vrot.lane.b32.xlu0 %v1924, 112
    %v2176 = vpop.permute.xlu0 %2175
    %2177 = vrot.lane.b32.xlu0 %v1925, 112
    %v2178 = vpop.permute.xlu0 %2177
    %v2180 = vsel %vm1926, %v2176, 0
    %v2183 = vsel %vm1926, %v2178, 0
    %2185 = vmatprep.subr.bf16.mxu0 0
    %2186 = vmatpush1.bf16.xpose.msra.mxu0 %v2183
    %2187 = vmatprep.subr.bf16.mxu0 0
    %2188 = vmatpush1.bf16.xpose.msra.mxu0 0
    %2189 = vmatprep.subr.bf16.mxu0 0
    %2190 = vmatpush1.bf16.xpose.msra.mxu0 0
    %2191 = vmatprep.subr.bf16.mxu0 0
    %2192 = vmatpush1.bf16.xpose.msra.mxu0 0
    %2193 = vmatprep.subr.bf16.mxu0 0
    %2194 = vmatpush1.bf16.xpose.msra.mxu0 0
    %2195 = vmatprep.subr.bf16.mxu0 0
    %2196 = vmatpush1.bf16.xpose.msra.mxu0 0
    %2197 = vmatprep.subr.bf16.mxu0 0
    %2198 = vmatpush1.bf16.xpose.msra.mxu0 0
    %2199 = vmatprep.subr.bf16.mxu0 0
    %2200 = vmatpush1.bf16.xpose.msra.mxu0 0
    %2201 = vmatprep.subr.bf16.mxu0 0
    %2202 = vmatpush1.bf16.xpose.msra.mxu0 0
    %2203 = vmatprep.subr.bf16.mxu0 0
    %2204 = vmatpush1.bf16.xpose.msra.mxu0 0
    %2205 = vmatprep.subr.bf16.mxu0 0
    %2206 = vmatpush1.bf16.xpose.msra.mxu0 0
    %2207 = vmatprep.subr.bf16.mxu0 0
    %2208 = vmatpush1.bf16.xpose.msra.mxu0 0
    %2209 = vmatprep.subr.bf16.mxu0 0
    %2210 = vmatpush1.bf16.xpose.msra.mxu0 0
    %2211 = vmatprep.subr.bf16.mxu0 0
    %2212 = vmatpush1.bf16.xpose.msra.mxu0 0
    %2213 = vmatprep.subr.bf16.mxu0 0
    %2214 = vmatpush1.bf16.xpose.msra.mxu0 0
    %2215 = vmatprep.subr.bf16.mxu0 0
    %2216 = vmatpush1.bf16.xpose.msra.mxu0 0
    %2217 = vmatprep.mubr.bf16.mxu0 0
    %2218 = vmatmul.mubr.bf16.gmra.mrb[0].mxu0 %v2180
    %v2219 = vpop.f32.mrb[0].mxu0
    %v2220 = vadd.f32 0.0, %v2219
    %v2221 = vpop.f32.mrb[0].mxu0
    %v2222 = vpop.f32.mrb[0].mxu0
    %v2223 = vadd.f32 0.0, %v2222
    %v2224 = vpop.f32.mrb[0].mxu0
    %2225 = vdwg.mxu0
    %v2226 = vmul.f32 %v2220, 0.35355338
    %v2227 = vmul.f32 %v2223, 0.35355338
    %v2228 = vadd.f32 %v2226, %v750
    %v2229 = vadd.f32 %v2227, %v751
    %v2230 = vsel %vm1327, %v2228, -inf
    %2231 = vmax.xlane.f32.xlu0 %v2230
    %v2232 = vpop.xlane.xlu0 %2231
    %v2233 = vsel %vm1327, %v2229, -inf
    %2234 = vmax.xlane.f32.xlu0 %v2233
    %v2235 = vpop.xlane.xlu0 %2234
    %v2236 = vsub.f32 %v2228, %v2232
    %v2237 = vsub.f32 %v2229, %v2235
    %v2238 = vmul.f32 %v2236, 1.442695
    %v2239 = vpow.pop %v2238
    %v2240 = vmul.f32 %v2237, 1.442695
    %v2241 = vpow.pop %v2240
    %v2242 = vsel %vm1327, %v2239, 0.0
    %2243 = vadd.xlane.f32.xlu0 %v2242
    %v2244 = vpop.xlane.xlu0 %2243
    %v2245 = vsel %vm1327, %v2241, 0.0
    %2246 = vadd.xlane.f32.xlu0 %v2245
    %v2247 = vpop.xlane.xlu0 %2246
    %v2248 = vrcp.pop %v2244
    %v2249 = vrcp.pop %v2247
    %v2250 = vmul.f32 %v2239, %v2248
    %v2251 = vmul.f32 %v2241, %v2249
    %v2252 = vpack.c.bf16 %v2251, %v2250
    %2253 = vrot.lane.b32.xlu0 %v1925, 80
    %v2254 = vpop.permute.xlu0 %2253
    %v2257 = vsel %vm1327, %v2252, 0
    %2259 = vmatprep.subr.bf16.mxu0 0
    %2260 = vmatpush1.bf16.msra.mxu0 %v2254
    %2261 = vmatprep.subr.bf16.mxu0 0
    %2262 = vmatpush1.bf16.msra.mxu0 0
    %2263 = vmatprep.subr.bf16.mxu0 0
    %2264 = vmatpush1.bf16.msra.mxu0 0
    %2265 = vmatprep.subr.bf16.mxu0 0
    %2266 = vmatpush1.bf16.msra.mxu0 0
    %2267 = vmatprep.subr.bf16.mxu0 0
    %2268 = vmatpush1.bf16.msra.mxu0 0
    %2269 = vmatprep.subr.bf16.mxu0 0
    %2270 = vmatpush1.bf16.msra.mxu0 0
    %2271 = vmatprep.subr.bf16.mxu0 0
    %2272 = vmatpush1.bf16.msra.mxu0 0
    %2273 = vmatprep.subr.bf16.mxu0 0
    %2274 = vmatpush1.bf16.msra.mxu0 0
    %2275 = vmatprep.subr.bf16.mxu0 0
    %2276 = vmatpush1.bf16.msra.mxu0 0
    %2277 = vmatprep.subr.bf16.mxu0 0
    %2278 = vmatpush1.bf16.msra.mxu0 0
    %2279 = vmatprep.subr.bf16.mxu0 0
    %2280 = vmatpush1.bf16.msra.mxu0 0
    %2281 = vmatprep.subr.bf16.mxu0 0
    %2282 = vmatpush1.bf16.msra.mxu0 0
    %2283 = vmatprep.subr.bf16.mxu0 0
    %2284 = vmatpush1.bf16.msra.mxu0 0
    %2285 = vmatprep.subr.bf16.mxu0 0
    %2286 = vmatpush1.bf16.msra.mxu0 0
    %2287 = vmatprep.subr.bf16.mxu0 0
    %2288 = vmatpush1.bf16.msra.mxu0 0
    %2289 = vmatprep.subr.bf16.mxu0 0
    %2290 = vmatpush1.bf16.msra.mxu0 0
    %2291 = vmatprep.mubr.bf16.mxu0 0
    %2292 = vmatmul.mubr.bf16.gmra.mrb[0].mxu0 %v2257
    %v2293 = vpop.f32.mrb[0].mxu0
    %v2294 = vadd.f32 0.0, %v2293
    %v2295 = vpop.f32.mrb[0].mxu0
    %v2296 = vpop.f32.mrb[0].mxu0
    %v2297 = vadd.f32 0.0, %v2296
    %v2298 = vpop.f32.mrb[0].mxu0
    %2299 = vdwg.mxu0
    %2300 = vrot.lane.b32.xlu0 %v1924, 104
    %v2301 = vpop.permute.xlu0 %2300
    %2302 = vrot.lane.b32.xlu0 %v1925, 104
    %v2303 = vpop.permute.xlu0 %2302
    %v2305 = vsel %vm1926, %v2301, 0
    %v2308 = vsel %vm1926, %v2303, 0
    %2310 = vmatprep.subr.bf16.mxu0 0
    %2311 = vmatpush1.bf16.xpose.msra.mxu0 %v2308
    %2312 = vmatprep.subr.bf16.mxu0 0
    %2313 = vmatpush1.bf16.xpose.msra.mxu0 0
    %2314 = vmatprep.subr.bf16.mxu0 0
    %2315 = vmatpush1.bf16.xpose.msra.mxu0 0
    %2316 = vmatprep.subr.bf16.mxu0 0
    %2317 = vmatpush1.bf16.xpose.msra.mxu0 0
    %2318 = vmatprep.subr.bf16.mxu0 0
    %2319 = vmatpush1.bf16.xpose.msra.mxu0 0
    %2320 = vmatprep.subr.bf16.mxu0 0
    %2321 = vmatpush1.bf16.xpose.msra.mxu0 0
    %2322 = vmatprep.subr.bf16.mxu0 0
    %2323 = vmatpush1.bf16.xpose.msra.mxu0 0
    %2324 = vmatprep.subr.bf16.mxu0 0
    %2325 = vmatpush1.bf16.xpose.msra.mxu0 0
    %2326 = vmatprep.subr.bf16.mxu0 0
    %2327 = vmatpush1.bf16.xpose.msra.mxu0 0
    %2328 = vmatprep.subr.bf16.mxu0 0
    %2329 = vmatpush1.bf16.xpose.msra.mxu0 0
    %2330 = vmatprep.subr.bf16.mxu0 0
    %2331 = vmatpush1.bf16.xpose.msra.mxu0 0
    %2332 = vmatprep.subr.bf16.mxu0 0
    %2333 = vmatpush1.bf16.xpose.msra.mxu0 0
    %2334 = vmatprep.subr.bf16.mxu0 0
    %2335 = vmatpush1.bf16.xpose.msra.mxu0 0
    %2336 = vmatprep.subr.bf16.mxu0 0
    %2337 = vmatpush1.bf16.xpose.msra.mxu0 0
    %2338 = vmatprep.subr.bf16.mxu0 0
    %2339 = vmatpush1.bf16.xpose.msra.mxu0 0
    %2340 = vmatprep.subr.bf16.mxu0 0
    %2341 = vmatpush1.bf16.xpose.msra.mxu0 0
    %2342 = vmatprep.mubr.bf16.mxu0 0
    %2343 = vmatmul.mubr.bf16.gmra.mrb[0].mxu0 %v2305
    %v2344 = vpop.f32.mrb[0].mxu0
    %v2345 = vadd.f32 0.0, %v2344
    %v2346 = vpop.f32.mrb[0].mxu0
    %v2347 = vpop.f32.mrb[0].mxu0
    %v2348 = vadd.f32 0.0, %v2347
    %v2349 = vpop.f32.mrb[0].mxu0
    %2350 = vdwg.mxu0
    %v2351 = vmul.f32 %v2345, 0.35355338
    %v2352 = vmul.f32 %v2348, 0.35355338
    %v2353 = vadd.f32 %v2351, %v750
    %v2354 = vadd.f32 %v2352, %v751
    %v2355 = vsel %vm1327, %v2353, -inf
    %2356 = vmax.xlane.f32.xlu0 %v2355
    %v2357 = vpop.xlane.xlu0 %2356
    %v2358 = vsel %vm1327, %v2354, -inf
    %2359 = vmax.xlane.f32.xlu0 %v2358
    %v2360 = vpop.xlane.xlu0 %2359
    %v2361 = vsub.f32 %v2353, %v2357
    %v2362 = vsub.f32 %v2354, %v2360
    %v2363 = vmul.f32 %v2361, 1.442695
    %v2364 = vpow.pop %v2363
    %v2365 = vmul.f32 %v2362, 1.442695
    %v2366 = vpow.pop %v2365
    %v2367 = vsel %vm1327, %v2364, 0.0
    %2368 = vadd.xlane.f32.xlu0 %v2367
    %v2369 = vpop.xlane.xlu0 %2368
    %v2370 = vsel %vm1327, %v2366, 0.0
    %2371 = vadd.xlane.f32.xlu0 %v2370
    %v2372 = vpop.xlane.xlu0 %2371
    %v2373 = vrcp.pop %v2369
    %v2374 = vrcp.pop %v2372
    %v2375 = vmul.f32 %v2364, %v2373
    %v2376 = vmul.f32 %v2366, %v2374
    %v2377 = vpack.c.bf16 %v2376, %v2375
    %2378 = vrot.lane.b32.xlu0 %v1925, 72
    %v2379 = vpop.permute.xlu0 %2378
    %v2382 = vsel %vm1327, %v2377, 0
    %2384 = vmatprep.subr.bf16.mxu0 0
    %2385 = vmatpush1.bf16.msra.mxu0 %v2379
    %2386 = vmatprep.subr.bf16.mxu0 0
    %2387 = vmatpush1.bf16.msra.mxu0 0
    %2388 = vmatprep.subr.bf16.mxu0 0
    %2389 = vmatpush1.bf16.msra.mxu0 0
    %2390 = vmatprep.subr.bf16.mxu0 0
    %2391 = vmatpush1.bf16.msra.mxu0 0
    %2392 = vmatprep.subr.bf16.mxu0 0
    %2393 = vmatpush1.bf16.msra.mxu0 0
    %2394 = vmatprep.subr.bf16.mxu0 0
    %2395 = vmatpush1.bf16.msra.mxu0 0
    %2396 = vmatprep.subr.bf16.mxu0 0
    %2397 = vmatpush1.bf16.msra.mxu0 0
    %2398 = vmatprep.subr.bf16.mxu0 0
    %2399 = vmatpush1.bf16.msra.mxu0 0
    %2400 = vmatprep.subr.bf16.mxu0 0
    %2401 = vmatpush1.bf16.msra.mxu0 0
    %2402 = vmatprep.subr.bf16.mxu0 0
    %2403 = vmatpush1.bf16.msra.mxu0 0
    %2404 = vmatprep.subr.bf16.mxu0 0
    %2405 = vmatpush1.bf16.msra.mxu0 0
    %2406 = vmatprep.subr.bf16.mxu0 0
    %2407 = vmatpush1.bf16.msra.mxu0 0
    %2408 = vmatprep.subr.bf16.mxu0 0
    %2409 = vmatpush1.bf16.msra.mxu0 0
    %2410 = vmatprep.subr.bf16.mxu0 0
    %2411 = vmatpush1.bf16.msra.mxu0 0
    %2412 = vmatprep.subr.bf16.mxu0 0
    %2413 = vmatpush1.bf16.msra.mxu0 0
    %2414 = vmatprep.subr.bf16.mxu0 0
    %2415 = vmatpush1.bf16.msra.mxu0 0
    %2416 = vmatprep.mubr.bf16.mxu0 0
    %2417 = vmatmul.mubr.bf16.gmra.mrb[0].mxu0 %v2382
    %v2418 = vpop.f32.mrb[0].mxu0
    %v2419 = vadd.f32 0.0, %v2418
    %v2420 = vpop.f32.mrb[0].mxu0
    %v2421 = vpop.f32.mrb[0].mxu0
    %v2422 = vadd.f32 0.0, %v2421
    %v2423 = vpop.f32.mrb[0].mxu0
    %2424 = vdwg.mxu0
    %2427 = vrot.lane.b32.xlu0 %v2169, 8
    %v2428 = vpop.permute.xlu0 %2427
    %2429 = vrot.lane.b32.xlu0 %v2172, 8
    %v2430 = vpop.permute.xlu0 %2429
    %2435 = vrot.lane.b32.xlu0 %v2294, 16
    %v2436 = vpop.permute.xlu0 %2435
    %2437 = vrot.lane.b32.xlu0 %v2297, 16
    %v2438 = vpop.permute.xlu0 %2437
    %2443 = vrot.lane.b32.xlu0 %v2419, 24
    %v2444 = vpop.permute.xlu0 %2443
    %2445 = vrot.lane.b32.xlu0 %v2422, 24
    %v2446 = vpop.permute.xlu0 %2445
    %v2449 = vsel %vm1926, %v2043, %v2428
    %v2450 = vsel %vm1926, %v2046, %v2430
    %v2451 = vsel %vm1327, %v2449, %v2436
    %v2452 = vsel %vm1327, %v2450, %v2438
    %vm2453 = vcmask 195584
    %v2454 = vsel %vm2453, %v2451, %v2444
    %v2455 = vsel %vm2453, %v2452, %v2446
    %v2456 = vld [vmem:[%s139] sm:$0xf]
    %v2457 = vld [vmem:[%s139 + $0x4] sm:$0xf]
    %v2458 = vld [vmem:[%s139 + $0x8] sm:$0xf]
    %v2459 = vld [vmem:[%s139 + $0xc] sm:$0xf]
    %v2460 = vpack.c.bf16 %v2455, %v2454
    %v2461 = vld [vmem:[#allocation44] sm:$0x1]
    %v2463 = vlaneseq
    %v2464 = vshrl.u32 %v2463, 7
    %v2465 = vsub.s32 0, %v2464
    %v2466 = vrot.slane %v2461, %v2465
    %v2472 = vunpack.c.l.b16 %v2456
    %v2473 = vunpack.c.l.b16 %v2457
    %v2474 = vunpack.c.l.b16 %v2458
    %v2475 = vunpack.c.l.b16 %v2459
    %v2476 = vpack.c.b16 %v2473, %v2472
    %v2477 = vpack.c.b16 %v2475, %v2474
    %v2481 = vsel %vm848, %v2460, 0
    %2483 = vmatprep.subr.bf16.mxu0 0
    %2484 = vmatpush1.bf16.msra.mxu0 %v2476
    %2485 = vmatprep.subr.bf16.mxu0 0
    %2486 = vmatpush1.bf16.msra.mxu0 %v2477
    %2487 = vmatprep.subr.bf16.mxu0 0
    %2488 = vmatpush1.bf16.msra.mxu0 0
    %2489 = vmatprep.subr.bf16.mxu0 0
    %2490 = vmatpush1.bf16.msra.mxu0 0
    %2491 = vmatprep.subr.bf16.mxu0 0
    %2492 = vmatpush1.bf16.msra.mxu0 0
    %2493 = vmatprep.subr.bf16.mxu0 0
    %2494 = vmatpush1.bf16.msra.mxu0 0
    %2495 = vmatprep.subr.bf16.mxu0 0
    %2496 = vmatpush1.bf16.msra.mxu0 0
    %2497 = vmatprep.subr.bf16.mxu0 0
    %2498 = vmatpush1.bf16.msra.mxu0 0
    %2499 = vmatprep.subr.bf16.mxu0 0
    %2500 = vmatpush1.bf16.msra.mxu0 0
    %2501 = vmatprep.subr.bf16.mxu0 0
    %2502 = vmatpush1.bf16.msra.mxu0 0
    %2503 = vmatprep.subr.bf16.mxu0 0
    %2504 = vmatpush1.bf16.msra.mxu0 0
    %2505 = vmatprep.subr.bf16.mxu0 0
    %2506 = vmatpush1.bf16.msra.mxu0 0
    %2507 = vmatprep.subr.bf16.mxu0 0
    %2508 = vmatpush1.bf16.msra.mxu0 0
    %2509 = vmatprep.subr.bf16.mxu0 0
    %2510 = vmatpush1.bf16.msra.mxu0 0
    %2511 = vmatprep.subr.bf16.mxu0 0
    %2512 = vmatpush1.bf16.msra.mxu0 0
    %2513 = vmatprep.subr.bf16.mxu0 0
    %2514 = vmatpush1.bf16.msra.mxu0 0
    %2515 = vmatprep.mubr.bf16.mxu0 0
    %2516 = vmatmul.mubr.bf16.gmra.mrb[0].mxu0 %v2481
    %v2517 = vpop.f32.mrb[0].mxu0
    %v2518 = vadd.f32 %v2466, %v2517
    %v2519 = vpop.f32.mrb[0].mxu0
    %v2520 = vpop.f32.mrb[0].mxu0
    %v2521 = vadd.f32 %v2466, %v2520
    %v2522 = vpop.f32.mrb[0].mxu0
    %2523 = vdwg.mxu0
    %v2524 = vadd.f32 %v1790, %v2518
    %v2525 = vadd.f32 %v1791, %v2521
    %v2526 = vld [vmem:[#allocation38] sm:$0x1]
    %v2527 = vld [vmem:[#allocation37] sm:$0x1]
    %v2528 = vsel %vm848, %v2524, 0.0
    %2529 = vadd.xlane.f32.xlu0 %v2528
    %v2530 = vpop.xlane.xlu0 %2529
    %v2531 = vsel %vm848, %v2525, 0.0
    %2532 = vadd.xlane.f32.xlu0 %v2531
    %v2533 = vpop.xlane.xlu0 %2532
    %v2534 = vrcp.pop 32.0
    %v2535 = vmul.f32 %v2530, %v2534
    %v2536 = vmul.f32 %v2533, %v2534
    %v2537 = vsub.f32 %v2524, %v2535
    %v2538 = vsub.f32 %v2525, %v2536
    %v2539 = vmul.f32 %v2537, %v2537
    %v2540 = vmul.f32 %v2538, %v2538
    %v2541 = vsel %vm848, %v2539, 0.0
    %2542 = vadd.xlane.f32.xlu0 %v2541
    %v2543 = vpop.xlane.xlu0 %2542
    %v2544 = vsel %vm848, %v2540, 0.0
    %2545 = vadd.xlane.f32.xlu0 %v2544
    %v2546 = vpop.xlane.xlu0 %2545
    %v2547 = vmul.f32 %v2543, %v2534
    %v2548 = vmul.f32 %v2546, %v2534
    %v2549 = vadd.f32 %v2547, 1e-05
    %v2550 = vadd.f32 %v2548, 1e-05
    %v2551 = vrsqrt.pop %v2549
    %v2552 = vrsqrt.pop %v2550
    %v2553 = vmul.f32 %v2537, %v2551
    %v2554 = vmul.f32 %v2538, %v2552
    %v2556 = vlaneseq
    %v2557 = vshrl.u32 %v2556, 7
    %v2558 = vsub.s32 0, %v2557
    %v2559 = vrot.slane %v2526, %v2558
    %v2561 = vmul.f32 %v2553, %v2559
    %v2562 = vmul.f32 %v2554, %v2559
    %v2564 = vlaneseq
    %v2565 = vshrl.u32 %v2564, 7
    %v2566 = vsub.s32 0, %v2565
    %v2567 = vrot.slane %v2527, %v2566
    %v2569 = vadd.f32 %v2561, %v2567
    %v2570 = vadd.f32 %v2562, %v2567
    %v2571 = vld [vmem:[%s119] sm:$0xff]
    %v2572 = vld [vmem:[%s119 + $0x8] sm:$0xff]
    %v2573 = vld [vmem:[%s119 + $0x10] sm:$0xff]
    %v2574 = vld [vmem:[%s119 + $0x18] sm:$0xff]
    %v2575 = vld [vmem:[%s119 + $0x20] sm:$0xff]
    %v2576 = vld [vmem:[%s119 + $0x28] sm:$0xff]
    %v2577 = vld [vmem:[%s119 + $0x30] sm:$0xff]
    %v2578 = vld [vmem:[%s119 + $0x38] sm:$0xff]
    %v2579 = vld [vmem:[%s119 + $0x40] sm:$0xff]
    %v2580 = vld [vmem:[%s119 + $0x48] sm:$0xff]
    %v2581 = vld [vmem:[%s119 + $0x50] sm:$0xff]
    %v2582 = vld [vmem:[%s119 + $0x58] sm:$0xff]
    %v2583 = vld [vmem:[%s119 + $0x60] sm:$0xff]
    %v2584 = vld [vmem:[%s119 + $0x68] sm:$0xff]
    %v2585 = vld [vmem:[%s119 + $0x70] sm:$0xff]
    %v2586 = vld [vmem:[%s119 + $0x78] sm:$0xff]
    %v2587 = vld [vmem:[%s119 + $0x80] sm:$0xff]
    %v2588 = vld [vmem:[%s119 + $0x88] sm:$0xff]
    %v2589 = vld [vmem:[%s119 + $0x90] sm:$0xff]
    %v2590 = vld [vmem:[%s119 + $0x98] sm:$0xff]
    %v2591 = vld [vmem:[%s119 + $0xa0] sm:$0xff]
    %v2592 = vld [vmem:[%s119 + $0xa8] sm:$0xff]
    %v2593 = vld [vmem:[%s119 + $0xb0] sm:$0xff]
    %v2594 = vld [vmem:[%s119 + $0xb8] sm:$0xff]
    %v2595 = vld [vmem:[%s119 + $0xc0] sm:$0xff]
    %v2596 = vld [vmem:[%s119 + $0xc8] sm:$0xff]
    %v2597 = vld [vmem:[%s119 + $0xd0] sm:$0xff]
    %v2598 = vld [vmem:[%s119 + $0xd8] sm:$0xff]
    %v2599 = vld [vmem:[%s119 + $0xe0] sm:$0xff]
    %v2600 = vld [vmem:[%s119 + $0xe8] sm:$0xff]
    %v2601 = vld [vmem:[%s119 + $0xf0] sm:$0xff]
    %v2602 = vld [vmem:[%s119 + $0xf8] sm:$0xff]
    %v2603 = vpack.c.bf16 %v2570, %v2569
    %v2604 = vld [vmem:[%s115] sm:$0xff]
    %v2605 = vld [vmem:[%s115 + $0x8] sm:$0xff]
    %v2608 = vlaneseq
    %v2609 = vshrl.u32 %v2608, 7
    %v2610 = vsub.s32 0, %v2609
    %v2611 = vrot.slane %v2604, %v2610
    %v2612 = vlaneseq
    %v2613 = vshrl.u32 %v2612, 7
    %v2614 = vsub.s32 1, %v2613
    %v2615 = vrot.slane %v2604, %v2614
    %v2616 = vlaneseq
    %v2617 = vshrl.u32 %v2616, 7
    %v2618 = vsub.s32 2, %v2617
    %v2619 = vrot.slane %v2604, %v2618
    %v2620 = vlaneseq
    %v2621 = vshrl.u32 %v2620, 7
    %v2622 = vsub.s32 3, %v2621
    %v2623 = vrot.slane %v2604, %v2622
    %v2624 = vlaneseq
    %v2625 = vshrl.u32 %v2624, 7
    %v2626 = vsub.s32 4, %v2625
    %v2627 = vrot.slane %v2604, %v2626
    %v2628 = vlaneseq
    %v2629 = vshrl.u32 %v2628, 7
    %v2630 = vsub.s32 5, %v2629
    %v2631 = vrot.slane %v2604, %v2630
    %v2632 = vlaneseq
    %v2633 = vshrl.u32 %v2632, 7
    %v2634 = vsub.s32 6, %v2633
    %v2635 = vrot.slane %v2604, %v2634
    %v2636 = vlaneseq
    %v2637 = vshrl.u32 %v2636, 7
    %v2638 = vsub.s32 7, %v2637
    %v2639 = vrot.slane %v2604, %v2638
    %v2640 = vlaneseq
    %v2641 = vshrl.u32 %v2640, 7
    %v2642 = vsub.s32 0, %v2641
    %v2643 = vrot.slane %v2605, %v2642
    %v2644 = vlaneseq
    %v2645 = vshrl.u32 %v2644, 7
    %v2646 = vsub.s32 1, %v2645
    %v2647 = vrot.slane %v2605, %v2646
    %v2648 = vlaneseq
    %v2649 = vshrl.u32 %v2648, 7
    %v2650 = vsub.s32 2, %v2649
    %v2651 = vrot.slane %v2605, %v2650
    %v2652 = vlaneseq
    %v2653 = vshrl.u32 %v2652, 7
    %v2654 = vsub.s32 3, %v2653
    %v2655 = vrot.slane %v2605, %v2654
    %v2656 = vlaneseq
    %v2657 = vshrl.u32 %v2656, 7
    %v2658 = vsub.s32 4, %v2657
    %v2659 = vrot.slane %v2605, %v2658
    %v2660 = vlaneseq
    %v2661 = vshrl.u32 %v2660, 7
    %v2662 = vsub.s32 5, %v2661
    %v2663 = vrot.slane %v2605, %v2662
    %v2664 = vlaneseq
    %v2665 = vshrl.u32 %v2664, 7
    %v2666 = vsub.s32 6, %v2665
    %v2667 = vrot.slane %v2605, %v2666
    %v2668 = vlaneseq
    %v2669 = vshrl.u32 %v2668, 7
    %v2670 = vsub.s32 7, %v2669
    %v2671 = vrot.slane %v2605, %v2670
    %v2720 = vunpack.c.l.b16 %v2571
    %v2721 = vunpack.c.h.b16 %v2571
    %v2722 = vunpack.c.l.b16 %v2572
    %v2723 = vunpack.c.h.b16 %v2572
    %v2724 = vunpack.c.l.b16 %v2573
    %v2725 = vunpack.c.h.b16 %v2573
    %v2726 = vunpack.c.l.b16 %v2574
    %v2727 = vunpack.c.h.b16 %v2574
    %v2728 = vunpack.c.l.b16 %v2575
    %v2729 = vunpack.c.h.b16 %v2575
    %v2730 = vunpack.c.l.b16 %v2576
    %v2731 = vunpack.c.h.b16 %v2576
    %v2732 = vunpack.c.l.b16 %v2577
    %v2733 = vunpack.c.h.b16 %v2577
    %v2734 = vunpack.c.l.b16 %v2578
    %v2735 = vunpack.c.h.b16 %v2578
    %v2736 = vunpack.c.l.b16 %v2579
    %v2737 = vunpack.c.h.b16 %v2579
    %v2738 = vunpack.c.l.b16 %v2580
    %v2739 = vunpack.c.h.b16 %v2580
    %v2740 = vunpack.c.l.b16 %v2581
    %v2741 = vunpack.c.h.b16 %v2581
    %v2742 = vunpack.c.l.b16 %v2582
    %v2743 = vunpack.c.h.b16 %v2582
    %v2744 = vunpack.c.l.b16 %v2583
    %v2745 = vunpack.c.h.b16 %v2583
    %v2746 = vunpack.c.l.b16 %v2584
    %v2747 = vunpack.c.h.b16 %v2584
    %v2748 = vunpack.c.l.b16 %v2585
    %v2749 = vunpack.c.h.b16 %v2585
    %v2750 = vunpack.c.l.b16 %v2586
    %v2751 = vunpack.c.h.b16 %v2586
    %v2752 = vunpack.c.l.b16 %v2587
    %v2753 = vunpack.c.h.b16 %v2587
    %v2754 = vunpack.c.l.b16 %v2588
    %v2755 = vunpack.c.h.b16 %v2588
    %v2756 = vunpack.c.l.b16 %v2589
    %v2757 = vunpack.c.h.b16 %v2589
    %v2758 = vunpack.c.l.b16 %v2590
    %v2759 = vunpack.c.h.b16 %v2590
    %v2760 = vunpack.c.l.b16 %v2591
    %v2761 = vunpack.c.h.b16 %v2591
    %v2762 = vunpack.c.l.b16 %v2592
    %v2763 = vunpack.c.h.b16 %v2592
    %v2764 = vunpack.c.l.b16 %v2593
    %v2765 = vunpack.c.h.b16 %v2593
    %v2766 = vunpack.c.l.b16 %v2594
    %v2767 = vunpack.c.h.b16 %v2594
    %v2768 = vunpack.c.l.b16 %v2595
    %v2769 = vunpack.c.h.b16 %v2595
    %v2770 = vunpack.c.l.b16 %v2596
    %v2771 = vunpack.c.h.b16 %v2596
    %v2772 = vunpack.c.l.b16 %v2597
    %v2773 = vunpack.c.h.b16 %v2597
    %v2774 = vunpack.c.l.b16 %v2598
    %v2775 = vunpack.c.h.b16 %v2598
    %v2776 = vunpack.c.l.b16 %v2599
    %v2777 = vunpack.c.h.b16 %v2599
    %v2778 = vunpack.c.l.b16 %v2600
    %v2779 = vunpack.c.h.b16 %v2600
    %v2780 = vunpack.c.l.b16 %v2601
    %v2781 = vunpack.c.h.b16 %v2601
    %v2782 = vunpack.c.l.b16 %v2602
    %v2783 = vunpack.c.h.b16 %v2602
    %v2784 = vpack.c.b16 %v2736, %v2720
    %v2785 = vpack.c.b16 %v2737, %v2721
    %v2786 = vpack.c.b16 %v2738, %v2722
    %v2787 = vpack.c.b16 %v2739, %v2723
    %v2788 = vpack.c.b16 %v2740, %v2724
    %v2789 = vpack.c.b16 %v2741, %v2725
    %v2790 = vpack.c.b16 %v2742, %v2726
    %v2791 = vpack.c.b16 %v2743, %v2727
    %v2792 = vpack.c.b16 %v2744, %v2728
    %v2793 = vpack.c.b16 %v2745, %v2729
    %v2794 = vpack.c.b16 %v2746, %v2730
    %v2795 = vpack.c.b16 %v2747, %v2731
    %v2796 = vpack.c.b16 %v2748, %v2732
    %v2797 = vpack.c.b16 %v2749, %v2733
    %v2798 = vpack.c.b16 %v2750, %v2734
    %v2799 = vpack.c.b16 %v2751, %v2735
    %v2800 = vpack.c.b16 %v2768, %v2752
    %v2801 = vpack.c.b16 %v2769, %v2753
    %v2802 = vpack.c.b16 %v2770, %v2754
    %v2803 = vpack.c.b16 %v2771, %v2755
    %v2804 = vpack.c.b16 %v2772, %v2756
    %v2805 = vpack.c.b16 %v2773, %v2757
    %v2806 = vpack.c.b16 %v2774, %v2758
    %v2807 = vpack.c.b16 %v2775, %v2759
    %v2808 = vpack.c.b16 %v2776, %v2760
    %v2809 = vpack.c.b16 %v2777, %v2761
    %v2810 = vpack.c.b16 %v2778, %v2762
    %v2811 = vpack.c.b16 %v2779, %v2763
    %v2812 = vpack.c.b16 %v2780, %v2764
    %v2813 = vpack.c.b16 %v2781, %v2765
    %v2814 = vpack.c.b16 %v2782, %v2766
    %v2815 = vpack.c.b16 %v2783, %v2767
    %v2849 = vsel %vm848, %v2603, 0
    %2851 = vmatprep.subr.bf16.mxu0 %v2785
    %2852 = vmatpush1.bf16.msra.mxu0 %v2784
    %2853 = vmatprep.subr.bf16.mxu0 %v2801
    %2854 = vmatpush1.bf16.msra.mxu0 %v2800
    %2855 = vmatprep.subr.bf16.mxu0 0
    %2856 = vmatpush1.bf16.msra.mxu0 0
    %2857 = vmatprep.subr.bf16.mxu0 0
    %2858 = vmatpush1.bf16.msra.mxu0 0
    %2859 = vmatprep.subr.bf16.mxu0 0
    %2860 = vmatpush1.bf16.msra.mxu0 0
    %2861 = vmatprep.subr.bf16.mxu0 0
    %2862 = vmatpush1.bf16.msra.mxu0 0
    %2863 = vmatprep.subr.bf16.mxu0 0
    %2864 = vmatpush1.bf16.msra.mxu0 0
    %2865 = vmatprep.subr.bf16.mxu0 0
    %2866 = vmatpush1.bf16.msra.mxu0 0
    %2867 = vmatprep.subr.bf16.mxu0 0
    %2868 = vmatpush1.bf16.msra.mxu0 0
    %2869 = vmatprep.subr.bf16.mxu0 0
    %2870 = vmatpush1.bf16.msra.mxu0 0
    %2871 = vmatprep.subr.bf16.mxu0 0
    %2872 = vmatpush1.bf16.msra.mxu0 0
    %2873 = vmatprep.subr.bf16.mxu0 0
    %2874 = vmatpush1.bf16.msra.mxu0 0
    %2875 = vmatprep.subr.bf16.mxu0 0
    %2876 = vmatpush1.bf16.msra.mxu0 0
    %2877 = vmatprep.subr.bf16.mxu0 0
    %2878 = vmatpush1.bf16.msra.mxu0 0
    %2879 = vmatprep.subr.bf16.mxu0 0
    %2880 = vmatpush1.bf16.msra.mxu0 0
    %2881 = vmatprep.subr.bf16.mxu0 0
    %2882 = vmatpush1.bf16.msra.mxu0 0
    %2883 = vmatprep.mubr.bf16.mxu0 0
    %2884 = vmatmul.mubr.bf16.gmra.mrb[0].mxu0 %v2849
    %v2885 = vpop.f32.mrb[0].mxu0
    %v2886 = vadd.f32 %v2611, %v2885
    %v2887 = vpop.f32.mrb[0].mxu0
    %v2888 = vadd.f32 %v2615, %v2887
    %v2889 = vpop.f32.mrb[0].mxu0
    %v2890 = vadd.f32 %v2611, %v2889
    %v2891 = vpop.f32.mrb[0].mxu0
    %v2892 = vadd.f32 %v2615, %v2891
    %2893 = vdwg.mxu0
    %2894 = vmatprep.subr.bf16.mxu0 %v2787
    %2895 = vmatpush1.bf16.msra.mxu0 %v2786
    %2896 = vmatprep.subr.bf16.mxu0 %v2803
    %2897 = vmatpush1.bf16.msra.mxu0 %v2802
    %2898 = vmatprep.subr.bf16.mxu0 0
    %2899 = vmatpush1.bf16.msra.mxu0 0
    %2900 = vmatprep.subr.bf16.mxu0 0
    %2901 = vmatpush1.bf16.msra.mxu0 0
    %2902 = vmatprep.subr.bf16.mxu0 0
    %2903 = vmatpush1.bf16.msra.mxu0 0
    %2904 = vmatprep.subr.bf16.mxu0 0
    %2905 = vmatpush1.bf16.msra.mxu0 0
    %2906 = vmatprep.subr.bf16.mxu0 0
    %2907 = vmatpush1.bf16.msra.mxu0 0
    %2908 = vmatprep.subr.bf16.mxu0 0
    %2909 = vmatpush1.bf16.msra.mxu0 0
    %2910 = vmatprep.subr.bf16.mxu0 0
    %2911 = vmatpush1.bf16.msra.mxu0 0
    %2912 = vmatprep.subr.bf16.mxu0 0
    %2913 = vmatpush1.bf16.msra.mxu0 0
    %2914 = vmatprep.subr.bf16.mxu0 0
    %2915 = vmatpush1.bf16.msra.mxu0 0
    %2916 = vmatprep.subr.bf16.mxu0 0
    %2917 = vmatpush1.bf16.msra.mxu0 0
    %2918 = vmatprep.subr.bf16.mxu0 0
    %2919 = vmatpush1.bf16.msra.mxu0 0
    %2920 = vmatprep.subr.bf16.mxu0 0
    %2921 = vmatpush1.bf16.msra.mxu0 0
    %2922 = vmatprep.subr.bf16.mxu0 0
    %2923 = vmatpush1.bf16.msra.mxu0 0
    %2924 = vmatprep.subr.bf16.mxu0 0
    %2925 = vmatpush1.bf16.msra.mxu0 0
    %2926 = vmatprep.mubr.bf16.mxu0 0
    %2927 = vmatmul.mubr.bf16.gmra.mrb[0].mxu0 %v2849
    %v2928 = vpop.f32.mrb[0].mxu0
    %v2929 = vadd.f32 %v2619, %v2928
    %v2930 = vpop.f32.mrb[0].mxu0
    %v2931 = vadd.f32 %v2623, %v2930
    %v2932 = vpop.f32.mrb[0].mxu0
    %v2933 = vadd.f32 %v2619, %v2932
    %v2934 = vpop.f32.mrb[0].mxu0
    %v2935 = vadd.f32 %v2623, %v2934
    %2936 = vdwg.mxu0
    %2937 = vmatprep.subr.bf16.mxu0 %v2789
    %2938 = vmatpush1.bf16.msra.mxu0 %v2788
    %2939 = vmatprep.subr.bf16.mxu0 %v2805
    %2940 = vmatpush1.bf16.msra.mxu0 %v2804
    %2941 = vmatprep.subr.bf16.mxu0 0
    %2942 = vmatpush1.bf16.msra.mxu0 0
    %2943 = vmatprep.subr.bf16.mxu0 0
    %2944 = vmatpush1.bf16.msra.mxu0 0
    %2945 = vmatprep.subr.bf16.mxu0 0
    %2946 = vmatpush1.bf16.msra.mxu0 0
    %2947 = vmatprep.subr.bf16.mxu0 0
    %2948 = vmatpush1.bf16.msra.mxu0 0
    %2949 = vmatprep.subr.bf16.mxu0 0
    %2950 = vmatpush1.bf16.msra.mxu0 0
    %2951 = vmatprep.subr.bf16.mxu0 0
    %2952 = vmatpush1.bf16.msra.mxu0 0
    %2953 = vmatprep.subr.bf16.mxu0 0
    %2954 = vmatpush1.bf16.msra.mxu0 0
    %2955 = vmatprep.subr.bf16.mxu0 0
    %2956 = vmatpush1.bf16.msra.mxu0 0
    %2957 = vmatprep.subr.bf16.mxu0 0
    %2958 = vmatpush1.bf16.msra.mxu0 0
    %2959 = vmatprep.subr.bf16.mxu0 0
    %2960 = vmatpush1.bf16.msra.mxu0 0
    %2961 = vmatprep.subr.bf16.mxu0 0
    %2962 = vmatpush1.bf16.msra.mxu0 0
    %2963 = vmatprep.subr.bf16.mxu0 0
    %2964 = vmatpush1.bf16.msra.mxu0 0
    %2965 = vmatprep.subr.bf16.mxu0 0
    %2966 = vmatpush1.bf16.msra.mxu0 0
    %2967 = vmatprep.subr.bf16.mxu0 0
    %2968 = vmatpush1.bf16.msra.mxu0 0
    %2969 = vmatprep.mubr.bf16.mxu0 0
    %2970 = vmatmul.mubr.bf16.gmra.mrb[0].mxu0 %v2849
    %v2971 = vpop.f32.mrb[0].mxu0
    %v2972 = vadd.f32 %v2627, %v2971
    %v2973 = vpop.f32.mrb[0].mxu0
    %v2974 = vadd.f32 %v2631, %v2973
    %v2975 = vpop.f32.mrb[0].mxu0
    %v2976 = vadd.f32 %v2627, %v2975
    %v2977 = vpop.f32.mrb[0].mxu0
    %v2978 = vadd.f32 %v2631, %v2977
    %2979 = vdwg.mxu0
    %2980 = vmatprep.subr.bf16.mxu0 %v2791
    %2981 = vmatpush1.bf16.msra.mxu0 %v2790
    %2982 = vmatprep.subr.bf16.mxu0 %v2807
    %2983 = vmatpush1.bf16.msra.mxu0 %v2806
    %2984 = vmatprep.subr.bf16.mxu0 0
    %2985 = vmatpush1.bf16.msra.mxu0 0
    %2986 = vmatprep.subr.bf16.mxu0 0
    %2987 = vmatpush1.bf16.msra.mxu0 0
    %2988 = vmatprep.subr.bf16.mxu0 0
    %2989 = vmatpush1.bf16.msra.mxu0 0
    %2990 = vmatprep.subr.bf16.mxu0 0
    %2991 = vmatpush1.bf16.msra.mxu0 0
    %2992 = vmatprep.subr.bf16.mxu0 0
    %2993 = vmatpush1.bf16.msra.mxu0 0
    %2994 = vmatprep.subr.bf16.mxu0 0
    %2995 = vmatpush1.bf16.msra.mxu0 0
    %2996 = vmatprep.subr.bf16.mxu0 0
    %2997 = vmatpush1.bf16.msra.mxu0 0
    %2998 = vmatprep.subr.bf16.mxu0 0
    %2999 = vmatpush1.bf16.msra.mxu0 0
    %3000 = vmatprep.subr.bf16.mxu0 0
    %3001 = vmatpush1.bf16.msra.mxu0 0
    %3002 = vmatprep.subr.bf16.mxu0 0
    %3003 = vmatpush1.bf16.msra.mxu0 0
    %3004 = vmatprep.subr.bf16.mxu0 0
    %3005 = vmatpush1.bf16.msra.mxu0 0
    %3006 = vmatprep.subr.bf16.mxu0 0
    %3007 = vmatpush1.bf16.msra.mxu0 0
    %3008 = vmatprep.subr.bf16.mxu0 0
    %3009 = vmatpush1.bf16.msra.mxu0 0
    %3010 = vmatprep.subr.bf16.mxu0 0
    %3011 = vmatpush1.bf16.msra.mxu0 0
    %3012 = vmatprep.mubr.bf16.mxu0 0
    %3013 = vmatmul.mubr.bf16.gmra.mrb[0].mxu0 %v2849
    %v3014 = vpop.f32.mrb[0].mxu0
    %v3015 = vadd.f32 %v2635, %v3014
    %v3016 = vpop.f32.mrb[0].mxu0
    %v3017 = vadd.f32 %v2639, %v3016
    %v3018 = vpop.f32.mrb[0].mxu0
    %v3019 = vadd.f32 %v2635, %v3018
    %v3020 = vpop.f32.mrb[0].mxu0
    %v3021 = vadd.f32 %v2639, %v3020
    %3022 = vdwg.mxu0
    %3023 = vmatprep.subr.bf16.mxu0 %v2793
    %3024 = vmatpush1.bf16.msra.mxu0 %v2792
    %3025 = vmatprep.subr.bf16.mxu0 %v2809
    %3026 = vmatpush1.bf16.msra.mxu0 %v2808
    %3027 = vmatprep.subr.bf16.mxu0 0
    %3028 = vmatpush1.bf16.msra.mxu0 0
    %3029 = vmatprep.subr.bf16.mxu0 0
    %3030 = vmatpush1.bf16.msra.mxu0 0
    %3031 = vmatprep.subr.bf16.mxu0 0
    %3032 = vmatpush1.bf16.msra.mxu0 0
    %3033 = vmatprep.subr.bf16.mxu0 0
    %3034 = vmatpush1.bf16.msra.mxu0 0
    %3035 = vmatprep.subr.bf16.mxu0 0
    %3036 = vmatpush1.bf16.msra.mxu0 0
    %3037 = vmatprep.subr.bf16.mxu0 0
    %3038 = vmatpush1.bf16.msra.mxu0 0
    %3039 = vmatprep.subr.bf16.mxu0 0
    %3040 = vmatpush1.bf16.msra.mxu0 0
    %3041 = vmatprep.subr.bf16.mxu0 0
    %3042 = vmatpush1.bf16.msra.mxu0 0
    %3043 = vmatprep.subr.bf16.mxu0 0
    %3044 = vmatpush1.bf16.msra.mxu0 0
    %3045 = vmatprep.subr.bf16.mxu0 0
    %3046 = vmatpush1.bf16.msra.mxu0 0
    %3047 = vmatprep.subr.bf16.mxu0 0
    %3048 = vmatpush1.bf16.msra.mxu0 0
    %3049 = vmatprep.subr.bf16.mxu0 0
    %3050 = vmatpush1.bf16.msra.mxu0 0
    %3051 = vmatprep.subr.bf16.mxu0 0
    %3052 = vmatpush1.bf16.msra.mxu0 0
    %3053 = vmatprep.subr.bf16.mxu0 0
    %3054 = vmatpush1.bf16.msra.mxu0 0
    %3055 = vmatprep.mubr.bf16.mxu0 0
    %3056 = vmatmul.mubr.bf16.gmra.mrb[0].mxu0 %v2849
    %v3057 = vpop.f32.mrb[0].mxu0
    %v3058 = vadd.f32 %v2643, %v3057
    %v3059 = vpop.f32.mrb[0].mxu0
    %v3060 = vadd.f32 %v2647, %v3059
    %v3061 = vpop.f32.mrb[0].mxu0
    %v3062 = vadd.f32 %v2643, %v3061
    %v3063 = vpop.f32.mrb[0].mxu0
    %v3064 = vadd.f32 %v2647, %v3063
    %3065 = vdwg.mxu0
    %3066 = vmatprep.subr.bf16.mxu0 %v2795
    %3067 = vmatpush1.bf16.msra.mxu0 %v2794
    %3068 = vmatprep.subr.bf16.mxu0 %v2811
    %3069 = vmatpush1.bf16.msra.mxu0 %v2810
    %3070 = vmatprep.subr.bf16.mxu0 0
    %3071 = vmatpush1.bf16.msra.mxu0 0
    %3072 = vmatprep.subr.bf16.mxu0 0
    %3073 = vmatpush1.bf16.msra.mxu0 0
    %3074 = vmatprep.subr.bf16.mxu0 0
    %3075 = vmatpush1.bf16.msra.mxu0 0
    %3076 = vmatprep.subr.bf16.mxu0 0
    %3077 = vmatpush1.bf16.msra.mxu0 0
    %3078 = vmatprep.subr.bf16.mxu0 0
    %3079 = vmatpush1.bf16.msra.mxu0 0
    %3080 = vmatprep.subr.bf16.mxu0 0
    %3081 = vmatpush1.bf16.msra.mxu0 0
    %3082 = vmatprep.subr.bf16.mxu0 0
    %3083 = vmatpush1.bf16.msra.mxu0 0
    %3084 = vmatprep.subr.bf16.mxu0 0
    %3085 = vmatpush1.bf16.msra.mxu0 0
    %3086 = vmatprep.subr.bf16.mxu0 0
    %3087 = vmatpush1.bf16.msra.mxu0 0
    %3088 = vmatprep.subr.bf16.mxu0 0
    %3089 = vmatpush1.bf16.msra.mxu0 0
    %3090 = vmatprep.subr.bf16.mxu0 0
    %3091 = vmatpush1.bf16.msra.mxu0 0
    %3092 = vmatprep.subr.bf16.mxu0 0
    %3093 = vmatpush1.bf16.msra.mxu0 0
    %3094 = vmatprep.subr.bf16.mxu0 0
    %3095 = vmatpush1.bf16.msra.mxu0 0
    %3096 = vmatprep.subr.bf16.mxu0 0
    %3097 = vmatpush1.bf16.msra.mxu0 0
    %3098 = vmatprep.mubr.bf16.mxu0 0
    %3099 = vmatmul.mubr.bf16.gmra.mrb[0].mxu0 %v2849
    %v3100 = vpop.f32.mrb[0].mxu0
    %v3101 = vadd.f32 %v2651, %v3100
    %v3102 = vpop.f32.mrb[0].mxu0
    %v3103 = vadd.f32 %v2655, %v3102
    %v3104 = vpop.f32.mrb[0].mxu0
    %v3105 = vadd.f32 %v2651, %v3104
    %v3106 = vpop.f32.mrb[0].mxu0
    %v3107 = vadd.f32 %v2655, %v3106
    %3108 = vdwg.mxu0
    %3109 = vmatprep.subr.bf16.mxu0 %v2797
    %3110 = vmatpush1.bf16.msra.mxu0 %v2796
    %3111 = vmatprep.subr.bf16.mxu0 %v2813
    %3112 = vmatpush1.bf16.msra.mxu0 %v2812
    %3113 = vmatprep.subr.bf16.mxu0 0
    %3114 = vmatpush1.bf16.msra.mxu0 0
    %3115 = vmatprep.subr.bf16.mxu0 0
    %3116 = vmatpush1.bf16.msra.mxu0 0
    %3117 = vmatprep.subr.bf16.mxu0 0
    %3118 = vmatpush1.bf16.msra.mxu0 0
    %3119 = vmatprep.subr.bf16.mxu0 0
    %3120 = vmatpush1.bf16.msra.mxu0 0
    %3121 = vmatprep.subr.bf16.mxu0 0
    %3122 = vmatpush1.bf16.msra.mxu0 0
    %3123 = vmatprep.subr.bf16.mxu0 0
    %3124 = vmatpush1.bf16.msra.mxu0 0
    %3125 = vmatprep.subr.bf16.mxu0 0
    %3126 = vmatpush1.bf16.msra.mxu0 0
    %3127 = vmatprep.subr.bf16.mxu0 0
    %3128 = vmatpush1.bf16.msra.mxu0 0
    %3129 = vmatprep.subr.bf16.mxu0 0
    %3130 = vmatpush1.bf16.msra.mxu0 0
    %3131 = vmatprep.subr.bf16.mxu0 0
    %3132 = vmatpush1.bf16.msra.mxu0 0
    %3133 = vmatprep.subr.bf16.mxu0 0
    %3134 = vmatpush1.bf16.msra.mxu0 0
    %3135 = vmatprep.subr.bf16.mxu0 0
    %3136 = vmatpush1.bf16.msra.mxu0 0
    %3137 = vmatprep.subr.bf16.mxu0 0
    %3138 = vmatpush1.bf16.msra.mxu0 0
    %3139 = vmatprep.subr.bf16.mxu0 0
    %3140 = vmatpush1.bf16.msra.mxu0 0
    %3141 = vmatprep.mubr.bf16.mxu0 0
    %3142 = vmatmul.mubr.bf16.gmra.mrb[0].mxu0 %v2849
    %v3143 = vpop.f32.mrb[0].mxu0
    %v3144 = vadd.f32 %v2659, %v3143
    %v3145 = vpop.f32.mrb[0].mxu0
    %v3146 = vadd.f32 %v2663, %v3145
    %v3147 = vpop.f32.mrb[0].mxu0
    %v3148 = vadd.f32 %v2659, %v3147
    %v3149 = vpop.f32.mrb[0].mxu0
    %v3150 = vadd.f32 %v2663, %v3149
    %3151 = vdwg.mxu0
    %3152 = vmatprep.subr.bf16.mxu0 %v2799
    %3153 = vmatpush1.bf16.msra.mxu0 %v2798
    %3154 = vmatprep.subr.bf16.mxu0 %v2815
    %3155 = vmatpush1.bf16.msra.mxu0 %v2814
    %3156 = vmatprep.subr.bf16.mxu0 0
    %3157 = vmatpush1.bf16.msra.mxu0 0
    %3158 = vmatprep.subr.bf16.mxu0 0
    %3159 = vmatpush1.bf16.msra.mxu0 0
    %3160 = vmatprep.subr.bf16.mxu0 0
    %3161 = vmatpush1.bf16.msra.mxu0 0
    %3162 = vmatprep.subr.bf16.mxu0 0
    %3163 = vmatpush1.bf16.msra.mxu0 0
    %3164 = vmatprep.subr.bf16.mxu0 0
    %3165 = vmatpush1.bf16.msra.mxu0 0
    %3166 = vmatprep.subr.bf16.mxu0 0
    %3167 = vmatpush1.bf16.msra.mxu0 0
    %3168 = vmatprep.subr.bf16.mxu0 0
    %3169 = vmatpush1.bf16.msra.mxu0 0
    %3170 = vmatprep.subr.bf16.mxu0 0
    %3171 = vmatpush1.bf16.msra.mxu0 0
    %3172 = vmatprep.subr.bf16.mxu0 0
    %3173 = vmatpush1.bf16.msra.mxu0 0
    %3174 = vmatprep.subr.bf16.mxu0 0
    %3175 = vmatpush1.bf16.msra.mxu0 0
    %3176 = vmatprep.subr.bf16.mxu0 0
    %3177 = vmatpush1.bf16.msra.mxu0 0
    %3178 = vmatprep.subr.bf16.mxu0 0
    %3179 = vmatpush1.bf16.msra.mxu0 0
    %3180 = vmatprep.subr.bf16.mxu0 0
    %3181 = vmatpush1.bf16.msra.mxu0 0
    %3182 = vmatprep.subr.bf16.mxu0 0
    %3183 = vmatpush1.bf16.msra.mxu0 0
    %3184 = vmatprep.mubr.bf16.mxu0 0
    %3185 = vmatmul.mubr.bf16.gmra.mrb[0].mxu0 %v2849
    %v3186 = vpop.f32.mrb[0].mxu0
    %v3187 = vadd.f32 %v2667, %v3186
    %v3188 = vpop.f32.mrb[0].mxu0
    %v3189 = vadd.f32 %v2671, %v3188
    %v3190 = vpop.f32.mrb[0].mxu0
    %v3191 = vadd.f32 %v2667, %v3190
    %v3192 = vpop.f32.mrb[0].mxu0
    %v3193 = vadd.f32 %v2671, %v3192
    %3194 = vdwg.mxu0
    %v3195 = vmax.f32 %v2886, 0.0
    %v3196 = vmax.f32 %v2888, 0.0
    %v3197 = vmax.f32 %v2929, 0.0
    %v3198 = vmax.f32 %v2931, 0.0
    %v3199 = vmax.f32 %v2972, 0.0
    %v3200 = vmax.f32 %v2974, 0.0
    %v3201 = vmax.f32 %v3015, 0.0
    %v3202 = vmax.f32 %v3017, 0.0
    %v3203 = vmax.f32 %v3058, 0.0
    %v3204 = vmax.f32 %v3060, 0.0
    %v3205 = vmax.f32 %v3101, 0.0
    %v3206 = vmax.f32 %v3103, 0.0
    %v3207 = vmax.f32 %v3144, 0.0
    %v3208 = vmax.f32 %v3146, 0.0
    %v3209 = vmax.f32 %v3187, 0.0
    %v3210 = vmax.f32 %v3189, 0.0
    %v3211 = vmax.f32 %v2890, 0.0
    %v3212 = vmax.f32 %v2892, 0.0
    %v3213 = vmax.f32 %v2933, 0.0
    %v3214 = vmax.f32 %v2935, 0.0
    %v3215 = vmax.f32 %v2976, 0.0
    %v3216 = vmax.f32 %v2978, 0.0
    %v3217 = vmax.f32 %v3019, 0.0
    %v3218 = vmax.f32 %v3021, 0.0
    %v3219 = vmax.f32 %v3062, 0.0
    %v3220 = vmax.f32 %v3064, 0.0
    %v3221 = vmax.f32 %v3105, 0.0
    %v3222 = vmax.f32 %v3107, 0.0
    %v3223 = vmax.f32 %v3148, 0.0
    %v3224 = vmax.f32 %v3150, 0.0
    %v3225 = vmax.f32 %v3191, 0.0
    %v3226 = vmax.f32 %v3193, 0.0
    %v3227 = vld [vmem:[%s121] sm:$0xf]
    %v3228 = vld [vmem:[%s121 + $0x4] sm:$0xf]
    %v3229 = vld [vmem:[%s121 + $0x8] sm:$0xf]
    %v3230 = vld [vmem:[%s121 + $0xc] sm:$0xf]
    %v3231 = vld [vmem:[%s121 + $0x10] sm:$0xf]
    %v3232 = vld [vmem:[%s121 + $0x14] sm:$0xf]
    %v3233 = vld [vmem:[%s121 + $0x18] sm:$0xf]
    %v3234 = vld [vmem:[%s121 + $0x1c] sm:$0xf]
    %v3235 = vld [vmem:[%s121 + $0x20] sm:$0xf]
    %v3236 = vld [vmem:[%s121 + $0x24] sm:$0xf]
    %v3237 = vld [vmem:[%s121 + $0x28] sm:$0xf]
    %v3238 = vld [vmem:[%s121 + $0x2c] sm:$0xf]
    %v3239 = vld [vmem:[%s121 + $0x30] sm:$0xf]
    %v3240 = vld [vmem:[%s121 + $0x34] sm:$0xf]
    %v3241 = vld [vmem:[%s121 + $0x38] sm:$0xf]
    %v3242 = vld [vmem:[%s121 + $0x3c] sm:$0xf]
    %v3243 = vld [vmem:[%s121 + $0x40] sm:$0xf]
    %v3244 = vld [vmem:[%s121 + $0x44] sm:$0xf]
    %v3245 = vld [vmem:[%s121 + $0x48] sm:$0xf]
    %v3246 = vld [vmem:[%s121 + $0x4c] sm:$0xf]
    %v3247 = vld [vmem:[%s121 + $0x50] sm:$0xf]
    %v3248 = vld [vmem:[%s121 + $0x54] sm:$0xf]
    %v3249 = vld [vmem:[%s121 + $0x58] sm:$0xf]
    %v3250 = vld [vmem:[%s121 + $0x5c] sm:$0xf]
    %v3251 = vld [vmem:[%s121 + $0x60] sm:$0xf]
    %v3252 = vld [vmem:[%s121 + $0x64] sm:$0xf]
    %v3253 = vld [vmem:[%s121 + $0x68] sm:$0xf]
    %v3254 = vld [vmem:[%s121 + $0x6c] sm:$0xf]
    %v3255 = vld [vmem:[%s121 + $0x70] sm:$0xf]
    %v3256 = vld [vmem:[%s121 + $0x74] sm:$0xf]
    %v3257 = vld [vmem:[%s121 + $0x78] sm:$0xf]
    %v3258 = vld [vmem:[%s121 + $0x7c] sm:$0xf]
    %v3259 = vld [vmem:[%s121 + $0x80] sm:$0xf]
    %v3260 = vld [vmem:[%s121 + $0x84] sm:$0xf]
    %v3261 = vld [vmem:[%s121 + $0x88] sm:$0xf]
    %v3262 = vld [vmem:[%s121 + $0x8c] sm:$0xf]
    %v3263 = vld [vmem:[%s121 + $0x90] sm:$0xf]
    %v3264 = vld [vmem:[%s121 + $0x94] sm:$0xf]
    %v3265 = vld [vmem:[%s121 + $0x98] sm:$0xf]
    %v3266 = vld [vmem:[%s121 + $0x9c] sm:$0xf]
    %v3267 = vld [vmem:[%s121 + $0xa0] sm:$0xf]
    %v3268 = vld [vmem:[%s121 + $0xa4] sm:$0xf]
    %v3269 = vld [vmem:[%s121 + $0xa8] sm:$0xf]
    %v3270 = vld [vmem:[%s121 + $0xac] sm:$0xf]
    %v3271 = vld [vmem:[%s121 + $0xb0] sm:$0xf]
    %v3272 = vld [vmem:[%s121 + $0xb4] sm:$0xf]
    %v3273 = vld [vmem:[%s121 + $0xb8] sm:$0xf]
    %v3274 = vld [vmem:[%s121 + $0xbc] sm:$0xf]
    %v3275 = vld [vmem:[%s121 + $0xc0] sm:$0xf]
    %v3276 = vld [vmem:[%s121 + $0xc4] sm:$0xf]
    %v3277 = vld [vmem:[%s121 + $0xc8] sm:$0xf]
    %v3278 = vld [vmem:[%s121 + $0xcc] sm:$0xf]
    %v3279 = vld [vmem:[%s121 + $0xd0] sm:$0xf]
    %v3280 = vld [vmem:[%s121 + $0xd4] sm:$0xf]
    %v3281 = vld [vmem:[%s121 + $0xd8] sm:$0xf]
    %v3282 = vld [vmem:[%s121 + $0xdc] sm:$0xf]
    %v3283 = vld [vmem:[%s121 + $0xe0] sm:$0xf]
    %v3284 = vld [vmem:[%s121 + $0xe4] sm:$0xf]
    %v3285 = vld [vmem:[%s121 + $0xe8] sm:$0xf]
    %v3286 = vld [vmem:[%s121 + $0xec] sm:$0xf]
    %v3287 = vld [vmem:[%s121 + $0xf0] sm:$0xf]
    %v3288 = vld [vmem:[%s121 + $0xf4] sm:$0xf]
    %v3289 = vld [vmem:[%s121 + $0xf8] sm:$0xf]
    %v3290 = vld [vmem:[%s121 + $0xfc] sm:$0xf]
    %v3291 = vld [vmem:[%s121 + $0x100] sm:$0xf]
    %v3292 = vld [vmem:[%s121 + $0x104] sm:$0xf]
    %v3293 = vld [vmem:[%s121 + $0x108] sm:$0xf]
    %v3294 = vld [vmem:[%s121 + $0x10c] sm:$0xf]
    %v3295 = vld [vmem:[%s121 + $0x110] sm:$0xf]
    %v3296 = vld [vmem:[%s121 + $0x114] sm:$0xf]
    %v3297 = vld [vmem:[%s121 + $0x118] sm:$0xf]
    %v3298 = vld [vmem:[%s121 + $0x11c] sm:$0xf]
    %v3299 = vld [vmem:[%s121 + $0x120] sm:$0xf]
    %v3300 = vld [vmem:[%s121 + $0x124] sm:$0xf]
    %v3301 = vld [vmem:[%s121 + $0x128] sm:$0xf]
    %v3302 = vld [vmem:[%s121 + $0x12c] sm:$0xf]
    %v3303 = vld [vmem:[%s121 + $0x130] sm:$0xf]
    %v3304 = vld [vmem:[%s121 + $0x134] sm:$0xf]
    %v3305 = vld [vmem:[%s121 + $0x138] sm:$0xf]
    %v3306 = vld [vmem:[%s121 + $0x13c] sm:$0xf]
    %v3307 = vld [vmem:[%s121 + $0x140] sm:$0xf]
    %v3308 = vld [vmem:[%s121 + $0x144] sm:$0xf]
    %v3309 = vld [vmem:[%s121 + $0x148] sm:$0xf]
    %v3310 = vld [vmem:[%s121 + $0x14c] sm:$0xf]
    %v3311 = vld [vmem:[%s121 + $0x150] sm:$0xf]
    %v3312 = vld [vmem:[%s121 + $0x154] sm:$0xf]
    %v3313 = vld [vmem:[%s121 + $0x158] sm:$0xf]
    %v3314 = vld [vmem:[%s121 + $0x15c] sm:$0xf]
    %v3315 = vld [vmem:[%s121 + $0x160] sm:$0xf]
    %v3316 = vld [vmem:[%s121 + $0x164] sm:$0xf]
    %v3317 = vld [vmem:[%s121 + $0x168] sm:$0xf]
    %v3318 = vld [vmem:[%s121 + $0x16c] sm:$0xf]
    %v3319 = vld [vmem:[%s121 + $0x170] sm:$0xf]
    %v3320 = vld [vmem:[%s121 + $0x174] sm:$0xf]
    %v3321 = vld [vmem:[%s121 + $0x178] sm:$0xf]
    %v3322 = vld [vmem:[%s121 + $0x17c] sm:$0xf]
    %v3323 = vld [vmem:[%s121 + $0x180] sm:$0xf]
    %v3324 = vld [vmem:[%s121 + $0x184] sm:$0xf]
    %v3325 = vld [vmem:[%s121 + $0x188] sm:$0xf]
    %v3326 = vld [vmem:[%s121 + $0x18c] sm:$0xf]
    %v3327 = vld [vmem:[%s121 + $0x190] sm:$0xf]
    %v3328 = vld [vmem:[%s121 + $0x194] sm:$0xf]
    %v3329 = vld [vmem:[%s121 + $0x198] sm:$0xf]
    %v3330 = vld [vmem:[%s121 + $0x19c] sm:$0xf]
    %v3331 = vld [vmem:[%s121 + $0x1a0] sm:$0xf]
    %v3332 = vld [vmem:[%s121 + $0x1a4] sm:$0xf]
    %v3333 = vld [vmem:[%s121 + $0x1a8] sm:$0xf]
    %v3334 = vld [vmem:[%s121 + $0x1ac] sm:$0xf]
    %v3335 = vld [vmem:[%s121 + $0x1b0] sm:$0xf]
    %v3336 = vld [vmem:[%s121 + $0x1b4] sm:$0xf]
    %v3337 = vld [vmem:[%s121 + $0x1b8] sm:$0xf]
    %v3338 = vld [vmem:[%s121 + $0x1bc] sm:$0xf]
    %v3339 = vld [vmem:[%s121 + $0x1c0] sm:$0xf]
    %v3340 = vld [vmem:[%s121 + $0x1c4] sm:$0xf]
    %v3341 = vld [vmem:[%s121 + $0x1c8] sm:$0xf]
    %v3342 = vld [vmem:[%s121 + $0x1cc] sm:$0xf]
    %v3343 = vld [vmem:[%s121 + $0x1d0] sm:$0xf]
    %v3344 = vld [vmem:[%s121 + $0x1d4] sm:$0xf]
    %v3345 = vld [vmem:[%s121 + $0x1d8] sm:$0xf]
    %v3346 = vld [vmem:[%s121 + $0x1dc] sm:$0xf]
    %v3347 = vld [vmem:[%s121 + $0x1e0] sm:$0xf]
    %v3348 = vld [vmem:[%s121 + $0x1e4] sm:$0xf]
    %v3349 = vld [vmem:[%s121 + $0x1e8] sm:$0xf]
    %v3350 = vld [vmem:[%s121 + $0x1ec] sm:$0xf]
    %v3351 = vld [vmem:[%s121 + $0x1f0] sm:$0xf]
    %v3352 = vld [vmem:[%s121 + $0x1f4] sm:$0xf]
    %v3353 = vld [vmem:[%s121 + $0x1f8] sm:$0xf]
    %v3354 = vld [vmem:[%s121 + $0x1fc] sm:$0xf]
    %v3355 = vld [vmem:[%s121 + $0x200] sm:$0xf]
    %v3356 = vld [vmem:[%s121 + $0x204] sm:$0xf]
    %v3357 = vld [vmem:[%s121 + $0x208] sm:$0xf]
    %v3358 = vld [vmem:[%s121 + $0x20c] sm:$0xf]
    %v3359 = vld [vmem:[%s121 + $0x210] sm:$0xf]
    %v3360 = vld [vmem:[%s121 + $0x214] sm:$0xf]
    %v3361 = vld [vmem:[%s121 + $0x218] sm:$0xf]
    %v3362 = vld [vmem:[%s121 + $0x21c] sm:$0xf]
    %v3363 = vld [vmem:[%s121 + $0x220] sm:$0xf]
    %v3364 = vld [vmem:[%s121 + $0x224] sm:$0xf]
    %v3365 = vld [vmem:[%s121 + $0x228] sm:$0xf]
    %v3366 = vld [vmem:[%s121 + $0x22c] sm:$0xf]
    %v3367 = vld [vmem:[%s121 + $0x230] sm:$0xf]
    %v3368 = vld [vmem:[%s121 + $0x234] sm:$0xf]
    %v3369 = vld [vmem:[%s121 + $0x238] sm:$0xf]
    %v3370 = vld [vmem:[%s121 + $0x23c] sm:$0xf]
    %v3371 = vld [vmem:[%s121 + $0x240] sm:$0xf]
    %v3372 = vld [vmem:[%s121 + $0x244] sm:$0xf]
    %v3373 = vld [vmem:[%s121 + $0x248] sm:$0xf]
    %v3374 = vld [vmem:[%s121 + $0x24c] sm:$0xf]
    %v3375 = vld [vmem:[%s121 + $0x250] sm:$0xf]
    %v3376 = vld [vmem:[%s121 + $0x254] sm:$0xf]
    %v3377 = vld [vmem:[%s121 + $0x258] sm:$0xf]
    %v3378 = vld [vmem:[%s121 + $0x25c] sm:$0xf]
    %v3379 = vld [vmem:[%s121 + $0x260] sm:$0xf]
    %v3380 = vld [vmem:[%s121 + $0x264] sm:$0xf]
    %v3381 = vld [vmem:[%s121 + $0x268] sm:$0xf]
    %v3382 = vld [vmem:[%s121 + $0x26c] sm:$0xf]
    %v3383 = vld [vmem:[%s121 + $0x270] sm:$0xf]
    %v3384 = vld [vmem:[%s121 + $0x274] sm:$0xf]
    %v3385 = vld [vmem:[%s121 + $0x278] sm:$0xf]
    %v3386 = vld [vmem:[%s121 + $0x27c] sm:$0xf]
    %v3387 = vld [vmem:[%s121 + $0x280] sm:$0xf]
    %v3388 = vld [vmem:[%s121 + $0x284] sm:$0xf]
    %v3389 = vld [vmem:[%s121 + $0x288] sm:$0xf]
    %v3390 = vld [vmem:[%s121 + $0x28c] sm:$0xf]
    %v3391 = vld [vmem:[%s121 + $0x290] sm:$0xf]
    %v3392 = vld [vmem:[%s121 + $0x294] sm:$0xf]
    %v3393 = vld [vmem:[%s121 + $0x298] sm:$0xf]
    %v3394 = vld [vmem:[%s121 + $0x29c] sm:$0xf]
    %v3395 = vld [vmem:[%s121 + $0x2a0] sm:$0xf]
    %v3396 = vld [vmem:[%s121 + $0x2a4] sm:$0xf]
    %v3397 = vld [vmem:[%s121 + $0x2a8] sm:$0xf]
    %v3398 = vld [vmem:[%s121 + $0x2ac] sm:$0xf]
    %v3399 = vld [vmem:[%s121 + $0x2b0] sm:$0xf]
    %v3400 = vld [vmem:[%s121 + $0x2b4] sm:$0xf]
    %v3401 = vld [vmem:[%s121 + $0x2b8] sm:$0xf]
    %v3402 = vld [vmem:[%s121 + $0x2bc] sm:$0xf]
    %v3403 = vld [vmem:[%s121 + $0x2c0] sm:$0xf]
    %v3404 = vld [vmem:[%s121 + $0x2c4] sm:$0xf]
    %v3405 = vld [vmem:[%s121 + $0x2c8] sm:$0xf]
    %v3406 = vld [vmem:[%s121 + $0x2cc] sm:$0xf]
    %v3407 = vld [vmem:[%s121 + $0x2d0] sm:$0xf]
    %v3408 = vld [vmem:[%s121 + $0x2d4] sm:$0xf]
    %v3409 = vld [vmem:[%s121 + $0x2d8] sm:$0xf]
    %v3410 = vld [vmem:[%s121 + $0x2dc] sm:$0xf]
    %v3411 = vld [vmem:[%s121 + $0x2e0] sm:$0xf]
    %v3412 = vld [vmem:[%s121 + $0x2e4] sm:$0xf]
    %v3413 = vld [vmem:[%s121 + $0x2e8] sm:$0xf]
    %v3414 = vld [vmem:[%s121 + $0x2ec] sm:$0xf]
    %v3415 = vld [vmem:[%s121 + $0x2f0] sm:$0xf]
    %v3416 = vld [vmem:[%s121 + $0x2f4] sm:$0xf]
    %v3417 = vld [vmem:[%s121 + $0x2f8] sm:$0xf]
    %v3418 = vld [vmem:[%s121 + $0x2fc] sm:$0xf]
    %v3419 = vld [vmem:[%s121 + $0x300] sm:$0xf]
    %v3420 = vld [vmem:[%s121 + $0x304] sm:$0xf]
    %v3421 = vld [vmem:[%s121 + $0x308] sm:$0xf]
    %v3422 = vld [vmem:[%s121 + $0x30c] sm:$0xf]
    %v3423 = vld [vmem:[%s121 + $0x310] sm:$0xf]
    %v3424 = vld [vmem:[%s121 + $0x314] sm:$0xf]
    %v3425 = vld [vmem:[%s121 + $0x318] sm:$0xf]
    %v3426 = vld [vmem:[%s121 + $0x31c] sm:$0xf]
    %v3427 = vld [vmem:[%s121 + $0x320] sm:$0xf]
    %v3428 = vld [vmem:[%s121 + $0x324] sm:$0xf]
    %v3429 = vld [vmem:[%s121 + $0x328] sm:$0xf]
    %v3430 = vld [vmem:[%s121 + $0x32c] sm:$0xf]
    %v3431 = vld [vmem:[%s121 + $0x330] sm:$0xf]
    %v3432 = vld [vmem:[%s121 + $0x334] sm:$0xf]
    %v3433 = vld [vmem:[%s121 + $0x338] sm:$0xf]
    %v3434 = vld [vmem:[%s121 + $0x33c] sm:$0xf]
    %v3435 = vld [vmem:[%s121 + $0x340] sm:$0xf]
    %v3436 = vld [vmem:[%s121 + $0x344] sm:$0xf]
    %v3437 = vld [vmem:[%s121 + $0x348] sm:$0xf]
    %v3438 = vld [vmem:[%s121 + $0x34c] sm:$0xf]
    %v3439 = vld [vmem:[%s121 + $0x350] sm:$0xf]
    %v3440 = vld [vmem:[%s121 + $0x354] sm:$0xf]
    %v3441 = vld [vmem:[%s121 + $0x358] sm:$0xf]
    %v3442 = vld [vmem:[%s121 + $0x35c] sm:$0xf]
    %v3443 = vld [vmem:[%s121 + $0x360] sm:$0xf]
    %v3444 = vld [vmem:[%s121 + $0x364] sm:$0xf]
    %v3445 = vld [vmem:[%s121 + $0x368] sm:$0xf]
    %v3446 = vld [vmem:[%s121 + $0x36c] sm:$0xf]
    %v3447 = vld [vmem:[%s121 + $0x370] sm:$0xf]
    %v3448 = vld [vmem:[%s121 + $0x374] sm:$0xf]
    %v3449 = vld [vmem:[%s121 + $0x378] sm:$0xf]
    %v3450 = vld [vmem:[%s121 + $0x37c] sm:$0xf]
    %v3451 = vld [vmem:[%s121 + $0x380] sm:$0xf]
    %v3452 = vld [vmem:[%s121 + $0x384] sm:$0xf]
    %v3453 = vld [vmem:[%s121 + $0x388] sm:$0xf]
    %v3454 = vld [vmem:[%s121 + $0x38c] sm:$0xf]
    %v3455 = vld [vmem:[%s121 + $0x390] sm:$0xf]
    %v3456 = vld [vmem:[%s121 + $0x394] sm:$0xf]
    %v3457 = vld [vmem:[%s121 + $0x398] sm:$0xf]
    %v3458 = vld [vmem:[%s121 + $0x39c] sm:$0xf]
    %v3459 = vld [vmem:[%s121 + $0x3a0] sm:$0xf]
    %v3460 = vld [vmem:[%s121 + $0x3a4] sm:$0xf]
    %v3461 = vld [vmem:[%s121 + $0x3a8] sm:$0xf]
    %v3462 = vld [vmem:[%s121 + $0x3ac] sm:$0xf]
    %v3463 = vld [vmem:[%s121 + $0x3b0] sm:$0xf]
    %v3464 = vld [vmem:[%s121 + $0x3b4] sm:$0xf]
    %v3465 = vld [vmem:[%s121 + $0x3b8] sm:$0xf]
    %v3466 = vld [vmem:[%s121 + $0x3bc] sm:$0xf]
    %v3467 = vld [vmem:[%s121 + $0x3c0] sm:$0xf]
    %v3468 = vld [vmem:[%s121 + $0x3c4] sm:$0xf]
    %v3469 = vld [vmem:[%s121 + $0x3c8] sm:$0xf]
    %v3470 = vld [vmem:[%s121 + $0x3cc] sm:$0xf]
    %v3471 = vld [vmem:[%s121 + $0x3d0] sm:$0xf]
    %v3472 = vld [vmem:[%s121 + $0x3d4] sm:$0xf]
    %v3473 = vld [vmem:[%s121 + $0x3d8] sm:$0xf]
    %v3474 = vld [vmem:[%s121 + $0x3dc] sm:$0xf]
    %v3475 = vld [vmem:[%s121 + $0x3e0] sm:$0xf]
    %v3476 = vld [vmem:[%s121 + $0x3e4] sm:$0xf]
    %v3477 = vld [vmem:[%s121 + $0x3e8] sm:$0xf]
    %v3478 = vld [vmem:[%s121 + $0x3ec] sm:$0xf]
    %v3479 = vld [vmem:[%s121 + $0x3f0] sm:$0xf]
    %v3480 = vld [vmem:[%s121 + $0x3f4] sm:$0xf]
    %v3481 = vld [vmem:[%s121 + $0x3f8] sm:$0xf]
    %v3482 = vld [vmem:[%s121 + $0x3fc] sm:$0xf]
    %v3483 = vpack.c.bf16 %v3211, %v3195
    %v3484 = vpack.c.bf16 %v3212, %v3196
    %v3485 = vpack.c.bf16 %v3213, %v3197
    %v3486 = vpack.c.bf16 %v3214, %v3198
    %v3487 = vpack.c.bf16 %v3215, %v3199
    %v3488 = vpack.c.bf16 %v3216, %v3200
    %v3489 = vpack.c.bf16 %v3217, %v3201
    %v3490 = vpack.c.bf16 %v3218, %v3202
    %v3491 = vpack.c.bf16 %v3219, %v3203
    %v3492 = vpack.c.bf16 %v3220, %v3204
    %v3493 = vpack.c.bf16 %v3221, %v3205
    %v3494 = vpack.c.bf16 %v3222, %v3206
    %v3495 = vpack.c.bf16 %v3223, %v3207
    %v3496 = vpack.c.bf16 %v3224, %v3208
    %v3497 = vpack.c.bf16 %v3225, %v3209
    %v3498 = vpack.c.bf16 %v3226, %v3210
    %v3499 = vld [vmem:[#allocation35] sm:$0x1]
    %v3501 = vlaneseq
    %v3502 = vshrl.u32 %v3501, 7
    %v3503 = vsub.s32 0, %v3502
    %v3504 = vrot.slane %v3499, %v3503
    %v3762 = vunpack.c.l.b16 %v3227
    %v3763 = vunpack.c.l.b16 %v3228
    %v3764 = vunpack.c.l.b16 %v3229
    %v3765 = vunpack.c.l.b16 %v3230
    %v3766 = vunpack.c.l.b16 %v3231
    %v3767 = vunpack.c.l.b16 %v3232
    %v3768 = vunpack.c.l.b16 %v3233
    %v3769 = vunpack.c.l.b16 %v3234
    %v3770 = vunpack.c.l.b16 %v3235
    %v3771 = vunpack.c.l.b16 %v3236
    %v3772 = vunpack.c.l.b16 %v3237
    %v3773 = vunpack.c.l.b16 %v3238
    %v3774 = vunpack.c.l.b16 %v3239
    %v3775 = vunpack.c.l.b16 %v3240
    %v3776 = vunpack.c.l.b16 %v3241
    %v3777 = vunpack.c.l.b16 %v3242
    %v3778 = vunpack.c.l.b16 %v3243
    %v3779 = vunpack.c.l.b16 %v3244
    %v3780 = vunpack.c.l.b16 %v3245
    %v3781 = vunpack.c.l.b16 %v3246
    %v3782 = vunpack.c.l.b16 %v3247
    %v3783 = vunpack.c.l.b16 %v3248
    %v3784 = vunpack.c.l.b16 %v3249
    %v3785 = vunpack.c.l.b16 %v3250
    %v3786 = vunpack.c.l.b16 %v3251
    %v3787 = vunpack.c.l.b16 %v3252
    %v3788 = vunpack.c.l.b16 %v3253
    %v3789 = vunpack.c.l.b16 %v3254
    %v3790 = vunpack.c.l.b16 %v3255
    %v3791 = vunpack.c.l.b16 %v3256
    %v3792 = vunpack.c.l.b16 %v3257
    %v3793 = vunpack.c.l.b16 %v3258
    %v3794 = vunpack.c.l.b16 %v3259
    %v3795 = vunpack.c.l.b16 %v3260
    %v3796 = vunpack.c.l.b16 %v3261
    %v3797 = vunpack.c.l.b16 %v3262
    %v3798 = vunpack.c.l.b16 %v3263
    %v3799 = vunpack.c.l.b16 %v3264
    %v3800 = vunpack.c.l.b16 %v3265
    %v3801 = vunpack.c.l.b16 %v3266
    %v3802 = vunpack.c.l.b16 %v3267
    %v3803 = vunpack.c.l.b16 %v3268
    %v3804 = vunpack.c.l.b16 %v3269
    %v3805 = vunpack.c.l.b16 %v3270
    %v3806 = vunpack.c.l.b16 %v3271
    %v3807 = vunpack.c.l.b16 %v3272
    %v3808 = vunpack.c.l.b16 %v3273
    %v3809 = vunpack.c.l.b16 %v3274
    %v3810 = vunpack.c.l.b16 %v3275
    %v3811 = vunpack.c.l.b16 %v3276
    %v3812 = vunpack.c.l.b16 %v3277
    %v3813 = vunpack.c.l.b16 %v3278
    %v3814 = vunpack.c.l.b16 %v3279
    %v3815 = vunpack.c.l.b16 %v3280
    %v3816 = vunpack.c.l.b16 %v3281
    %v3817 = vunpack.c.l.b16 %v3282
    %v3818 = vunpack.c.l.b16 %v3283
    %v3819 = vunpack.c.l.b16 %v3284
    %v3820 = vunpack.c.l.b16 %v3285
    %v3821 = vunpack.c.l.b16 %v3286
    %v3822 = vunpack.c.l.b16 %v3287
    %v3823 = vunpack.c.l.b16 %v3288
    %v3824 = vunpack.c.l.b16 %v3289
    %v3825 = vunpack.c.l.b16 %v3290
    %v3826 = vunpack.c.l.b16 %v3291
    %v3827 = vunpack.c.l.b16 %v3292
    %v3828 = vunpack.c.l.b16 %v3293
    %v3829 = vunpack.c.l.b16 %v3294
    %v3830 = vunpack.c.l.b16 %v3295
    %v3831 = vunpack.c.l.b16 %v3296
    %v3832 = vunpack.c.l.b16 %v3297
    %v3833 = vunpack.c.l.b16 %v3298
    %v3834 = vunpack.c.l.b16 %v3299
    %v3835 = vunpack.c.l.b16 %v3300
    %v3836 = vunpack.c.l.b16 %v3301
    %v3837 = vunpack.c.l.b16 %v3302
    %v3838 = vunpack.c.l.b16 %v3303
    %v3839 = vunpack.c.l.b16 %v3304
    %v3840 = vunpack.c.l.b16 %v3305
    %v3841 = vunpack.c.l.b16 %v3306
    %v3842 = vunpack.c.l.b16 %v3307
    %v3843 = vunpack.c.l.b16 %v3308
    %v3844 = vunpack.c.l.b16 %v3309
    %v3845 = vunpack.c.l.b16 %v3310
    %v3846 = vunpack.c.l.b16 %v3311
    %v3847 = vunpack.c.l.b16 %v3312
    %v3848 = vunpack.c.l.b16 %v3313
    %v3849 = vunpack.c.l.b16 %v3314
    %v3850 = vunpack.c.l.b16 %v3315
    %v3851 = vunpack.c.l.b16 %v3316
    %v3852 = vunpack.c.l.b16 %v3317
    %v3853 = vunpack.c.l.b16 %v3318
    %v3854 = vunpack.c.l.b16 %v3319
    %v3855 = vunpack.c.l.b16 %v3320
    %v3856 = vunpack.c.l.b16 %v3321
    %v3857 = vunpack.c.l.b16 %v3322
    %v3858 = vunpack.c.l.b16 %v3323
    %v3859 = vunpack.c.l.b16 %v3324
    %v3860 = vunpack.c.l.b16 %v3325
    %v3861 = vunpack.c.l.b16 %v3326
    %v3862 = vunpack.c.l.b16 %v3327
    %v3863 = vunpack.c.l.b16 %v3328
    %v3864 = vunpack.c.l.b16 %v3329
    %v3865 = vunpack.c.l.b16 %v3330
    %v3866 = vunpack.c.l.b16 %v3331
    %v3867 = vunpack.c.l.b16 %v3332
    %v3868 = vunpack.c.l.b16 %v3333
    %v3869 = vunpack.c.l.b16 %v3334
    %v3870 = vunpack.c.l.b16 %v3335
    %v3871 = vunpack.c.l.b16 %v3336
    %v3872 = vunpack.c.l.b16 %v3337
    %v3873 = vunpack.c.l.b16 %v3338
    %v3874 = vunpack.c.l.b16 %v3339
    %v3875 = vunpack.c.l.b16 %v3340
    %v3876 = vunpack.c.l.b16 %v3341
    %v3877 = vunpack.c.l.b16 %v3342
    %v3878 = vunpack.c.l.b16 %v3343
    %v3879 = vunpack.c.l.b16 %v3344
    %v3880 = vunpack.c.l.b16 %v3345
    %v3881 = vunpack.c.l.b16 %v3346
    %v3882 = vunpack.c.l.b16 %v3347
    %v3883 = vunpack.c.l.b16 %v3348
    %v3884 = vunpack.c.l.b16 %v3349
    %v3885 = vunpack.c.l.b16 %v3350
    %v3886 = vunpack.c.l.b16 %v3351
    %v3887 = vunpack.c.l.b16 %v3352
    %v3888 = vunpack.c.l.b16 %v3353
    %v3889 = vunpack.c.l.b16 %v3354
    %v3890 = vunpack.c.l.b16 %v3355
    %v3891 = vunpack.c.l.b16 %v3356
    %v3892 = vunpack.c.l.b16 %v3357
    %v3893 = vunpack.c.l.b16 %v3358
    %v3894 = vunpack.c.l.b16 %v3359
    %v3895 = vunpack.c.l.b16 %v3360
    %v3896 = vunpack.c.l.b16 %v3361
    %v3897 = vunpack.c.l.b16 %v3362
    %v3898 = vunpack.c.l.b16 %v3363
    %v3899 = vunpack.c.l.b16 %v3364
    %v3900 = vunpack.c.l.b16 %v3365
    %v3901 = vunpack.c.l.b16 %v3366
    %v3902 = vunpack.c.l.b16 %v3367
    %v3903 = vunpack.c.l.b16 %v3368
    %v3904 = vunpack.c.l.b16 %v3369
    %v3905 = vunpack.c.l.b16 %v3370
    %v3906 = vunpack.c.l.b16 %v3371
    %v3907 = vunpack.c.l.b16 %v3372
    %v3908 = vunpack.c.l.b16 %v3373
    %v3909 = vunpack.c.l.b16 %v3374
    %v3910 = vunpack.c.l.b16 %v3375
    %v3911 = vunpack.c.l.b16 %v3376
    %v3912 = vunpack.c.l.b16 %v3377
    %v3913 = vunpack.c.l.b16 %v3378
    %v3914 = vunpack.c.l.b16 %v3379
    %v3915 = vunpack.c.l.b16 %v3380
    %v3916 = vunpack.c.l.b16 %v3381
    %v3917 = vunpack.c.l.b16 %v3382
    %v3918 = vunpack.c.l.b16 %v3383
    %v3919 = vunpack.c.l.b16 %v3384
    %v3920 = vunpack.c.l.b16 %v3385
    %v3921 = vunpack.c.l.b16 %v3386
    %v3922 = vunpack.c.l.b16 %v3387
    %v3923 = vunpack.c.l.b16 %v3388
    %v3924 = vunpack.c.l.b16 %v3389
    %v3925 = vunpack.c.l.b16 %v3390
    %v3926 = vunpack.c.l.b16 %v3391
    %v3927 = vunpack.c.l.b16 %v3392
    %v3928 = vunpack.c.l.b16 %v3393
    %v3929 = vunpack.c.l.b16 %v3394
    %v3930 = vunpack.c.l.b16 %v3395
    %v3931 = vunpack.c.l.b16 %v3396
    %v3932 = vunpack.c.l.b16 %v3397
    %v3933 = vunpack.c.l.b16 %v3398
    %v3934 = vunpack.c.l.b16 %v3399
    %v3935 = vunpack.c.l.b16 %v3400
    %v3936 = vunpack.c.l.b16 %v3401
    %v3937 = vunpack.c.l.b16 %v3402
    %v3938 = vunpack.c.l.b16 %v3403
    %v3939 = vunpack.c.l.b16 %v3404
    %v3940 = vunpack.c.l.b16 %v3405
    %v3941 = vunpack.c.l.b16 %v3406
    %v3942 = vunpack.c.l.b16 %v3407
    %v3943 = vunpack.c.l.b16 %v3408
    %v3944 = vunpack.c.l.b16 %v3409
    %v3945 = vunpack.c.l.b16 %v3410
    %v3946 = vunpack.c.l.b16 %v3411
    %v3947 = vunpack.c.l.b16 %v3412
    %v3948 = vunpack.c.l.b16 %v3413
    %v3949 = vunpack.c.l.b16 %v3414
    %v3950 = vunpack.c.l.b16 %v3415
    %v3951 = vunpack.c.l.b16 %v3416
    %v3952 = vunpack.c.l.b16 %v3417
    %v3953 = vunpack.c.l.b16 %v3418
    %v3954 = vunpack.c.l.b16 %v3419
    %v3955 = vunpack.c.l.b16 %v3420
    %v3956 = vunpack.c.l.b16 %v3421
    %v3957 = vunpack.c.l.b16 %v3422
    %v3958 = vunpack.c.l.b16 %v3423
    %v3959 = vunpack.c.l.b16 %v3424
    %v3960 = vunpack.c.l.b16 %v3425
    %v3961 = vunpack.c.l.b16 %v3426
    %v3962 = vunpack.c.l.b16 %v3427
    %v3963 = vunpack.c.l.b16 %v3428
    %v3964 = vunpack.c.l.b16 %v3429
    %v3965 = vunpack.c.l.b16 %v3430
    %v3966 = vunpack.c.l.b16 %v3431
    %v3967 = vunpack.c.l.b16 %v3432
    %v3968 = vunpack.c.l.b16 %v3433
    %v3969 = vunpack.c.l.b16 %v3434
    %v3970 = vunpack.c.l.b16 %v3435
    %v3971 = vunpack.c.l.b16 %v3436
    %v3972 = vunpack.c.l.b16 %v3437
    %v3973 = vunpack.c.l.b16 %v3438
    %v3974 = vunpack.c.l.b16 %v3439
    %v3975 = vunpack.c.l.b16 %v3440
    %v3976 = vunpack.c.l.b16 %v3441
    %v3977 = vunpack.c.l.b16 %v3442
    %v3978 = vunpack.c.l.b16 %v3443
    %v3979 = vunpack.c.l.b16 %v3444
    %v3980 = vunpack.c.l.b16 %v3445
    %v3981 = vunpack.c.l.b16 %v3446
    %v3982 = vunpack.c.l.b16 %v3447
    %v3983 = vunpack.c.l.b16 %v3448
    %v3984 = vunpack.c.l.b16 %v3449
    %v3985 = vunpack.c.l.b16 %v3450
    %v3986 = vunpack.c.l.b16 %v3451
    %v3987 = vunpack.c.l.b16 %v3452
    %v3988 = vunpack.c.l.b16 %v3453
    %v3989 = vunpack.c.l.b16 %v3454
    %v3990 = vunpack.c.l.b16 %v3455
    %v3991 = vunpack.c.l.b16 %v3456
    %v3992 = vunpack.c.l.b16 %v3457
    %v3993 = vunpack.c.l.b16 %v3458
    %v3994 = vunpack.c.l.b16 %v3459
    %v3995 = vunpack.c.l.b16 %v3460
    %v3996 = vunpack.c.l.b16 %v3461
    %v3997 = vunpack.c.l.b16 %v3462
    %v3998 = vunpack.c.l.b16 %v3463
    %v3999 = vunpack.c.l.b16 %v3464
    %v4000 = vunpack.c.l.b16 %v3465
    %v4001 = vunpack.c.l.b16 %v3466
    %v4002 = vunpack.c.l.b16 %v3467
    %v4003 = vunpack.c.l.b16 %v3468
    %v4004 = vunpack.c.l.b16 %v3469
    %v4005 = vunpack.c.l.b16 %v3470
    %v4006 = vunpack.c.l.b16 %v3471
    %v4007 = vunpack.c.l.b16 %v3472
    %v4008 = vunpack.c.l.b16 %v3473
    %v4009 = vunpack.c.l.b16 %v3474
    %v4010 = vunpack.c.l.b16 %v3475
    %v4011 = vunpack.c.l.b16 %v3476
    %v4012 = vunpack.c.l.b16 %v3477
    %v4013 = vunpack.c.l.b16 %v3478
    %v4014 = vunpack.c.l.b16 %v3479
    %v4015 = vunpack.c.l.b16 %v3480
    %v4016 = vunpack.c.l.b16 %v3481
    %v4017 = vunpack.c.l.b16 %v3482
    %v4018 = vpack.c.b16 %v3763, %v3762
    %v4019 = vpack.c.b16 %v3765, %v3764
    %v4020 = vpack.c.b16 %v3767, %v3766
    %v4021 = vpack.c.b16 %v3769, %v3768
    %v4022 = vpack.c.b16 %v3771, %v3770
    %v4023 = vpack.c.b16 %v3773, %v3772
    %v4024 = vpack.c.b16 %v3775, %v3774
    %v4025 = vpack.c.b16 %v3777, %v3776
    %v4026 = vpack.c.b16 %v3779, %v3778
    %v4027 = vpack.c.b16 %v3781, %v3780
    %v4028 = vpack.c.b16 %v3783, %v3782
    %v4029 = vpack.c.b16 %v3785, %v3784
    %v4030 = vpack.c.b16 %v3787, %v3786
    %v4031 = vpack.c.b16 %v3789, %v3788
    %v4032 = vpack.c.b16 %v3791, %v3790
    %v4033 = vpack.c.b16 %v3793, %v3792
    %v4034 = vpack.c.b16 %v3795, %v3794
    %v4035 = vpack.c.b16 %v3797, %v3796
    %v4036 = vpack.c.b16 %v3799, %v3798
    %v4037 = vpack.c.b16 %v3801, %v3800
    %v4038 = vpack.c.b16 %v3803, %v3802
    %v4039 = vpack.c.b16 %v3805, %v3804
    %v4040 = vpack.c.b16 %v3807, %v3806
    %v4041 = vpack.c.b16 %v3809, %v3808
    %v4042 = vpack.c.b16 %v3811, %v3810
    %v4043 = vpack.c.b16 %v3813, %v3812
    %v4044 = vpack.c.b16 %v3815, %v3814
    %v4045 = vpack.c.b16 %v3817, %v3816
    %v4046 = vpack.c.b16 %v3819, %v3818
    %v4047 = vpack.c.b16 %v3821, %v3820
    %v4048 = vpack.c.b16 %v3823, %v3822
    %v4049 = vpack.c.b16 %v3825, %v3824
    %v4050 = vpack.c.b16 %v3827, %v3826
    %v4051 = vpack.c.b16 %v3829, %v3828
    %v4052 = vpack.c.b16 %v3831, %v3830
    %v4053 = vpack.c.b16 %v3833, %v3832
    %v4054 = vpack.c.b16 %v3835, %v3834
    %v4055 = vpack.c.b16 %v3837, %v3836
    %v4056 = vpack.c.b16 %v3839, %v3838
    %v4057 = vpack.c.b16 %v3841, %v3840
    %v4058 = vpack.c.b16 %v3843, %v3842
    %v4059 = vpack.c.b16 %v3845, %v3844
    %v4060 = vpack.c.b16 %v3847, %v3846
    %v4061 = vpack.c.b16 %v3849, %v3848
    %v4062 = vpack.c.b16 %v3851, %v3850
    %v4063 = vpack.c.b16 %v3853, %v3852
    %v4064 = vpack.c.b16 %v3855, %v3854
    %v4065 = vpack.c.b16 %v3857, %v3856
    %v4066 = vpack.c.b16 %v3859, %v3858
    %v4067 = vpack.c.b16 %v3861, %v3860
    %v4068 = vpack.c.b16 %v3863, %v3862
    %v4069 = vpack.c.b16 %v3865, %v3864
    %v4070 = vpack.c.b16 %v3867, %v3866
    %v4071 = vpack.c.b16 %v3869, %v3868
    %v4072 = vpack.c.b16 %v3871, %v3870
    %v4073 = vpack.c.b16 %v3873, %v3872
    %v4074 = vpack.c.b16 %v3875, %v3874
    %v4075 = vpack.c.b16 %v3877, %v3876
    %v4076 = vpack.c.b16 %v3879, %v3878
    %v4077 = vpack.c.b16 %v3881, %v3880
    %v4078 = vpack.c.b16 %v3883, %v3882
    %v4079 = vpack.c.b16 %v3885, %v3884
    %v4080 = vpack.c.b16 %v3887, %v3886
    %v4081 = vpack.c.b16 %v3889, %v3888
    %v4082 = vpack.c.b16 %v3891, %v3890
    %v4083 = vpack.c.b16 %v3893, %v3892
    %v4084 = vpack.c.b16 %v3895, %v3894
    %v4085 = vpack.c.b16 %v3897, %v3896
    %v4086 = vpack.c.b16 %v3899, %v3898
    %v4087 = vpack.c.b16 %v3901, %v3900
    %v4088 = vpack.c.b16 %v3903, %v3902
    %v4089 = vpack.c.b16 %v3905, %v3904
    %v4090 = vpack.c.b16 %v3907, %v3906
    %v4091 = vpack.c.b16 %v3909, %v3908
    %v4092 = vpack.c.b16 %v3911, %v3910
    %v4093 = vpack.c.b16 %v3913, %v3912
    %v4094 = vpack.c.b16 %v3915, %v3914
    %v4095 = vpack.c.b16 %v3917, %v3916
    %v4096 = vpack.c.b16 %v3919, %v3918
    %v4097 = vpack.c.b16 %v3921, %v3920
    %v4098 = vpack.c.b16 %v3923, %v3922
    %v4099 = vpack.c.b16 %v3925, %v3924
    %v4100 = vpack.c.b16 %v3927, %v3926
    %v4101 = vpack.c.b16 %v3929, %v3928
    %v4102 = vpack.c.b16 %v3931, %v3930
    %v4103 = vpack.c.b16 %v3933, %v3932
    %v4104 = vpack.c.b16 %v3935, %v3934
    %v4105 = vpack.c.b16 %v3937, %v3936
    %v4106 = vpack.c.b16 %v3939, %v3938
    %v4107 = vpack.c.b16 %v3941, %v3940
    %v4108 = vpack.c.b16 %v3943, %v3942
    %v4109 = vpack.c.b16 %v3945, %v3944
    %v4110 = vpack.c.b16 %v3947, %v3946
    %v4111 = vpack.c.b16 %v3949, %v3948
    %v4112 = vpack.c.b16 %v3951, %v3950
    %v4113 = vpack.c.b16 %v3953, %v3952
    %v4114 = vpack.c.b16 %v3955, %v3954
    %v4115 = vpack.c.b16 %v3957, %v3956
    %v4116 = vpack.c.b16 %v3959, %v3958
    %v4117 = vpack.c.b16 %v3961, %v3960
    %v4118 = vpack.c.b16 %v3963, %v3962
    %v4119 = vpack.c.b16 %v3965, %v3964
    %v4120 = vpack.c.b16 %v3967, %v3966
    %v4121 = vpack.c.b16 %v3969, %v3968
    %v4122 = vpack.c.b16 %v3971, %v3970
    %v4123 = vpack.c.b16 %v3973, %v3972
    %v4124 = vpack.c.b16 %v3975, %v3974
    %v4125 = vpack.c.b16 %v3977, %v3976
    %v4126 = vpack.c.b16 %v3979, %v3978
    %v4127 = vpack.c.b16 %v3981, %v3980
    %v4128 = vpack.c.b16 %v3983, %v3982
    %v4129 = vpack.c.b16 %v3985, %v3984
    %v4130 = vpack.c.b16 %v3987, %v3986
    %v4131 = vpack.c.b16 %v3989, %v3988
    %v4132 = vpack.c.b16 %v3991, %v3990
    %v4133 = vpack.c.b16 %v3993, %v3992
    %v4134 = vpack.c.b16 %v3995, %v3994
    %v4135 = vpack.c.b16 %v3997, %v3996
    %v4136 = vpack.c.b16 %v3999, %v3998
    %v4137 = vpack.c.b16 %v4001, %v4000
    %v4138 = vpack.c.b16 %v4003, %v4002
    %v4139 = vpack.c.b16 %v4005, %v4004
    %v4140 = vpack.c.b16 %v4007, %v4006
    %v4141 = vpack.c.b16 %v4009, %v4008
    %v4142 = vpack.c.b16 %v4011, %v4010
    %v4143 = vpack.c.b16 %v4013, %v4012
    %v4144 = vpack.c.b16 %v4015, %v4014
    %v4145 = vpack.c.b16 %v4017, %v4016
    %4274 = vmatprep.subr.bf16.mxu0 0
    %4275 = vmatpush1.bf16.msra.mxu0 %v4018
    %4276 = vmatprep.subr.bf16.mxu0 0
    %4277 = vmatpush1.bf16.msra.mxu0 %v4019
    %4278 = vmatprep.subr.bf16.mxu0 0
    %4279 = vmatpush1.bf16.msra.mxu0 %v4020
    %4280 = vmatprep.subr.bf16.mxu0 0
    %4281 = vmatpush1.bf16.msra.mxu0 %v4021
    %4282 = vmatprep.subr.bf16.mxu0 0
    %4283 = vmatpush1.bf16.msra.mxu0 %v4022
    %4284 = vmatprep.subr.bf16.mxu0 0
    %4285 = vmatpush1.bf16.msra.mxu0 %v4023
    %4286 = vmatprep.subr.bf16.mxu0 0
    %4287 = vmatpush1.bf16.msra.mxu0 %v4024
    %4288 = vmatprep.subr.bf16.mxu0 0
    %4289 = vmatpush1.bf16.msra.mxu0 %v4025
    %4290 = vmatprep.subr.bf16.mxu0 0
    %4291 = vmatpush1.bf16.msra.mxu0 %v4026
    %4292 = vmatprep.subr.bf16.mxu0 0
    %4293 = vmatpush1.bf16.msra.mxu0 %v4027
    %4294 = vmatprep.subr.bf16.mxu0 0
    %4295 = vmatpush1.bf16.msra.mxu0 %v4028
    %4296 = vmatprep.subr.bf16.mxu0 0
    %4297 = vmatpush1.bf16.msra.mxu0 %v4029
    %4298 = vmatprep.subr.bf16.mxu0 0
    %4299 = vmatpush1.bf16.msra.mxu0 %v4030
    %4300 = vmatprep.subr.bf16.mxu0 0
    %4301 = vmatpush1.bf16.msra.mxu0 %v4031
    %4302 = vmatprep.subr.bf16.mxu0 0
    %4303 = vmatpush1.bf16.msra.mxu0 %v4032
    %4304 = vmatprep.subr.bf16.mxu0 0
    %4305 = vmatpush1.bf16.msra.mxu0 %v4033
    %4306 = vmatprep.mubr.bf16.mxu0 %v3484
    %4307 = vmatmul.mubr.bf16.gmra.mrb[0].mxu0 %v3483
    %v4308 = vpop.f32.mrb[0].mxu0
    %v4309 = vadd.f32 %v3504, %v4308
    %v4310 = vpop.f32.mrb[0].mxu0
    %v4311 = vpop.f32.mrb[0].mxu0
    %v4312 = vadd.f32 %v3504, %v4311
    %v4313 = vpop.f32.mrb[0].mxu0
    %4314 = vdwg.mxu0
    %4315 = vmatprep.subr.bf16.mxu0 0
    %4316 = vmatpush1.bf16.msra.mxu0 %v4034
    %4317 = vmatprep.subr.bf16.mxu0 0
    %4318 = vmatpush1.bf16.msra.mxu0 %v4035
    %4319 = vmatprep.subr.bf16.mxu0 0
    %4320 = vmatpush1.bf16.msra.mxu0 %v4036
    %4321 = vmatprep.subr.bf16.mxu0 0
    %4322 = vmatpush1.bf16.msra.mxu0 %v4037
    %4323 = vmatprep.subr.bf16.mxu0 0
    %4324 = vmatpush1.bf16.msra.mxu0 %v4038
    %4325 = vmatprep.subr.bf16.mxu0 0
    %4326 = vmatpush1.bf16.msra.mxu0 %v4039
    %4327 = vmatprep.subr.bf16.mxu0 0
    %4328 = vmatpush1.bf16.msra.mxu0 %v4040
    %4329 = vmatprep.subr.bf16.mxu0 0
    %4330 = vmatpush1.bf16.msra.mxu0 %v4041
    %4331 = vmatprep.subr.bf16.mxu0 0
    %4332 = vmatpush1.bf16.msra.mxu0 %v4042
    %4333 = vmatprep.subr.bf16.mxu0 0
    %4334 = vmatpush1.bf16.msra.mxu0 %v4043
    %4335 = vmatprep.subr.bf16.mxu0 0
    %4336 = vmatpush1.bf16.msra.mxu0 %v4044
    %4337 = vmatprep.subr.bf16.mxu0 0
    %4338 = vmatpush1.bf16.msra.mxu0 %v4045
    %4339 = vmatprep.subr.bf16.mxu0 0
    %4340 = vmatpush1.bf16.msra.mxu0 %v4046
    %4341 = vmatprep.subr.bf16.mxu0 0
    %4342 = vmatpush1.bf16.msra.mxu0 %v4047
    %4343 = vmatprep.subr.bf16.mxu0 0
    %4344 = vmatpush1.bf16.msra.mxu0 %v4048
    %4345 = vmatprep.subr.bf16.mxu0 0
    %4346 = vmatpush1.bf16.msra.mxu0 %v4049
    %4347 = vmatprep.mubr.bf16.mxu0 %v3486
    %4348 = vmatmul.mubr.bf16.gmra.mrb[0].mxu0 %v3485
    %v4349 = vpop.f32.mrb[0].mxu0
    %v4350 = vadd.f32 %v4309, %v4349
    %v4351 = vpop.f32.mrb[0].mxu0
    %v4352 = vpop.f32.mrb[0].mxu0
    %v4353 = vadd.f32 %v4312, %v4352
    %v4354 = vpop.f32.mrb[0].mxu0
    %4355 = vdwg.mxu0
    %4356 = vmatprep.subr.bf16.mxu0 0
    %4357 = vmatpush1.bf16.msra.mxu0 %v4050
    %4358 = vmatprep.subr.bf16.mxu0 0
    %4359 = vmatpush1.bf16.msra.mxu0 %v4051
    %4360 = vmatprep.subr.bf16.mxu0 0
    %4361 = vmatpush1.bf16.msra.mxu0 %v4052
    %4362 = vmatprep.subr.bf16.mxu0 0
    %4363 = vmatpush1.bf16.msra.mxu0 %v4053
    %4364 = vmatprep.subr.bf16.mxu0 0
    %4365 = vmatpush1.bf16.msra.mxu0 %v4054
    %4366 = vmatprep.subr.bf16.mxu0 0
    %4367 = vmatpush1.bf16.msra.mxu0 %v4055
    %4368 = vmatprep.subr.bf16.mxu0 0
    %4369 = vmatpush1.bf16.msra.mxu0 %v4056
    %4370 = vmatprep.subr.bf16.mxu0 0
    %4371 = vmatpush1.bf16.msra.mxu0 %v4057
    %4372 = vmatprep.subr.bf16.mxu0 0
    %4373 = vmatpush1.bf16.msra.mxu0 %v4058
    %4374 = vmatprep.subr.bf16.mxu0 0
    %4375 = vmatpush1.bf16.msra.mxu0 %v4059
    %4376 = vmatprep.subr.bf16.mxu0 0
    %4377 = vmatpush1.bf16.msra.mxu0 %v4060
    %4378 = vmatprep.subr.bf16.mxu0 0
    %4379 = vmatpush1.bf16.msra.mxu0 %v4061
    %4380 = vmatprep.subr.bf16.mxu0 0
    %4381 = vmatpush1.bf16.msra.mxu0 %v4062
    %4382 = vmatprep.subr.bf16.mxu0 0
    %4383 = vmatpush1.bf16.msra.mxu0 %v4063
    %4384 = vmatprep.subr.bf16.mxu0 0
    %4385 = vmatpush1.bf16.msra.mxu0 %v4064
    %4386 = vmatprep.subr.bf16.mxu0 0
    %4387 = vmatpush1.bf16.msra.mxu0 %v4065
    %4388 = vmatprep.mubr.bf16.mxu0 %v3488
    %4389 = vmatmul.mubr.bf16.gmra.mrb[0].mxu0 %v3487
    %v4390 = vpop.f32.mrb[0].mxu0
    %v4391 = vadd.f32 %v4350, %v4390
    %v4392 = vpop.f32.mrb[0].mxu0
    %v4393 = vpop.f32.mrb[0].mxu0
    %v4394 = vadd.f32 %v4353, %v4393
    %v4395 = vpop.f32.mrb[0].mxu0
    %4396 = vdwg.mxu0
    %4397 = vmatprep.subr.bf16.mxu0 0
    %4398 = vmatpush1.bf16.msra.mxu0 %v4066
    %4399 = vmatprep.subr.bf16.mxu0 0
    %4400 = vmatpush1.bf16.msra.mxu0 %v4067
    %4401 = vmatprep.subr.bf16.mxu0 0
    %4402 = vmatpush1.bf16.msra.mxu0 %v4068
    %4403 = vmatprep.subr.bf16.mxu0 0
    %4404 = vmatpush1.bf16.msra.mxu0 %v4069
    %4405 = vmatprep.subr.bf16.mxu0 0
    %4406 = vmatpush1.bf16.msra.mxu0 %v4070
    %4407 = vmatprep.subr.bf16.mxu0 0
    %4408 = vmatpush1.bf16.msra.mxu0 %v4071
    %4409 = vmatprep.subr.bf16.mxu0 0
    %4410 = vmatpush1.bf16.msra.mxu0 %v4072
    %4411 = vmatprep.subr.bf16.mxu0 0
    %4412 = vmatpush1.bf16.msra.mxu0 %v4073
    %4413 = vmatprep.subr.bf16.mxu0 0
    %4414 = vmatpush1.bf16.msra.mxu0 %v4074
    %4415 = vmatprep.subr.bf16.mxu0 0
    %4416 = vmatpush1.bf16.msra.mxu0 %v4075
    %4417 = vmatprep.subr.bf16.mxu0 0
    %4418 = vmatpush1.bf16.msra.mxu0 %v4076
    %4419 = vmatprep.subr.bf16.mxu0 0
    %4420 = vmatpush1.bf16.msra.mxu0 %v4077
    %4421 = vmatprep.subr.bf16.mxu0 0
    %4422 = vmatpush1.bf16.msra.mxu0 %v4078
    %4423 = vmatprep.subr.bf16.mxu0 0
    %4424 = vmatpush1.bf16.msra.mxu0 %v4079
    %4425 = vmatprep.subr.bf16.mxu0 0
    %4426 = vmatpush1.bf16.msra.mxu0 %v4080
    %4427 = vmatprep.subr.bf16.mxu0 0
    %4428 = vmatpush1.bf16.msra.mxu0 %v4081
    %4429 = vmatprep.mubr.bf16.mxu0 %v3490
    %4430 = vmatmul.mubr.bf16.gmra.mrb[0].mxu0 %v3489
    %v4431 = vpop.f32.mrb[0].mxu0
    %v4432 = vadd.f32 %v4391, %v4431
    %v4433 = vpop.f32.mrb[0].mxu0
    %v4434 = vpop.f32.mrb[0].mxu0
    %v4435 = vadd.f32 %v4394, %v4434
    %v4436 = vpop.f32.mrb[0].mxu0
    %4437 = vdwg.mxu0
    %4438 = vmatprep.subr.bf16.mxu0 0
    %4439 = vmatpush1.bf16.msra.mxu0 %v4082
    %4440 = vmatprep.subr.bf16.mxu0 0
    %4441 = vmatpush1.bf16.msra.mxu0 %v4083
    %4442 = vmatprep.subr.bf16.mxu0 0
    %4443 = vmatpush1.bf16.msra.mxu0 %v4084
    %4444 = vmatprep.subr.bf16.mxu0 0
    %4445 = vmatpush1.bf16.msra.mxu0 %v4085
    %4446 = vmatprep.subr.bf16.mxu0 0
    %4447 = vmatpush1.bf16.msra.mxu0 %v4086
    %4448 = vmatprep.subr.bf16.mxu0 0
    %4449 = vmatpush1.bf16.msra.mxu0 %v4087
    %4450 = vmatprep.subr.bf16.mxu0 0
    %4451 = vmatpush1.bf16.msra.mxu0 %v4088
    %4452 = vmatprep.subr.bf16.mxu0 0
    %4453 = vmatpush1.bf16.msra.mxu0 %v4089
    %4454 = vmatprep.subr.bf16.mxu0 0
    %4455 = vmatpush1.bf16.msra.mxu0 %v4090
    %4456 = vmatprep.subr.bf16.mxu0 0
    %4457 = vmatpush1.bf16.msra.mxu0 %v4091
    %4458 = vmatprep.subr.bf16.mxu0 0
    %4459 = vmatpush1.bf16.msra.mxu0 %v4092
    %4460 = vmatprep.subr.bf16.mxu0 0
    %4461 = vmatpush1.bf16.msra.mxu0 %v4093
    %4462 = vmatprep.subr.bf16.mxu0 0
    %4463 = vmatpush1.bf16.msra.mxu0 %v4094
    %4464 = vmatprep.subr.bf16.mxu0 0
    %4465 = vmatpush1.bf16.msra.mxu0 %v4095
    %4466 = vmatprep.subr.bf16.mxu0 0
    %4467 = vmatpush1.bf16.msra.mxu0 %v4096
    %4468 = vmatprep.subr.bf16.mxu0 0
    %4469 = vmatpush1.bf16.msra.mxu0 %v4097
    %4470 = vmatprep.mubr.bf16.mxu0 %v3492
    %4471 = vmatmul.mubr.bf16.gmra.mrb[0].mxu0 %v3491
    %v4472 = vpop.f32.mrb[0].mxu0
    %v4473 = vadd.f32 %v4432, %v4472
    %v4474 = vpop.f32.mrb[0].mxu0
    %v4475 = vpop.f32.mrb[0].mxu0
    %v4476 = vadd.f32 %v4435, %v4475
    %v4477 = vpop.f32.mrb[0].mxu0
    %4478 = vdwg.mxu0
    %4479 = vmatprep.subr.bf16.mxu0 0
    %4480 = vmatpush1.bf16.msra.mxu0 %v4098
    %4481 = vmatprep.subr.bf16.mxu0 0
    %4482 = vmatpush1.bf16.msra.mxu0 %v4099
    %4483 = vmatprep.subr.bf16.mxu0 0
    %4484 = vmatpush1.bf16.msra.mxu0 %v4100
    %4485 = vmatprep.subr.bf16.mxu0 0
    %4486 = vmatpush1.bf16.msra.mxu0 %v4101
    %4487 = vmatprep.subr.bf16.mxu0 0
    %4488 = vmatpush1.bf16.msra.mxu0 %v4102
    %4489 = vmatprep.subr.bf16.mxu0 0
    %4490 = vmatpush1.bf16.msra.mxu0 %v4103
    %4491 = vmatprep.subr.bf16.mxu0 0
    %4492 = vmatpush1.bf16.msra.mxu0 %v4104
    %4493 = vmatprep.subr.bf16.mxu0 0
    %4494 = vmatpush1.bf16.msra.mxu0 %v4105
    %4495 = vmatprep.subr.bf16.mxu0 0
    %4496 = vmatpush1.bf16.msra.mxu0 %v4106
    %4497 = vmatprep.subr.bf16.mxu0 0
    %4498 = vmatpush1.bf16.msra.mxu0 %v4107
    %4499 = vmatprep.subr.bf16.mxu0 0
    %4500 = vmatpush1.bf16.msra.mxu0 %v4108
    %4501 = vmatprep.subr.bf16.mxu0 0
    %4502 = vmatpush1.bf16.msra.mxu0 %v4109
    %4503 = vmatprep.subr.bf16.mxu0 0
    %4504 = vmatpush1.bf16.msra.mxu0 %v4110
    %4505 = vmatprep.subr.bf16.mxu0 0
    %4506 = vmatpush1.bf16.msra.mxu0 %v4111
    %4507 = vmatprep.subr.bf16.mxu0 0
    %4508 = vmatpush1.bf16.msra.mxu0 %v4112
    %4509 = vmatprep.subr.bf16.mxu0 0
    %4510 = vmatpush1.bf16.msra.mxu0 %v4113
    %4511 = vmatprep.mubr.bf16.mxu0 %v3494
    %4512 = vmatmul.mubr.bf16.gmra.mrb[0].mxu0 %v3493
    %v4513 = vpop.f32.mrb[0].mxu0
    %v4514 = vadd.f32 %v4473, %v4513
    %v4515 = vpop.f32.mrb[0].mxu0
    %v4516 = vpop.f32.mrb[0].mxu0
    %v4517 = vadd.f32 %v4476, %v4516
    %v4518 = vpop.f32.mrb[0].mxu0
    %4519 = vdwg.mxu0
    %4520 = vmatprep.subr.bf16.mxu0 0
    %4521 = vmatpush1.bf16.msra.mxu0 %v4114
    %4522 = vmatprep.subr.bf16.mxu0 0
    %4523 = vmatpush1.bf16.msra.mxu0 %v4115
    %4524 = vmatprep.subr.bf16.mxu0 0
    %4525 = vmatpush1.bf16.msra.mxu0 %v4116
    %4526 = vmatprep.subr.bf16.mxu0 0
    %4527 = vmatpush1.bf16.msra.mxu0 %v4117
    %4528 = vmatprep.subr.bf16.mxu0 0
    %4529 = vmatpush1.bf16.msra.mxu0 %v4118
    %4530 = vmatprep.subr.bf16.mxu0 0
    %4531 = vmatpush1.bf16.msra.mxu0 %v4119
    %4532 = vmatprep.subr.bf16.mxu0 0
    %4533 = vmatpush1.bf16.msra.mxu0 %v4120
    %4534 = vmatprep.subr.bf16.mxu0 0
    %4535 = vmatpush1.bf16.msra.mxu0 %v4121
    %4536 = vmatprep.subr.bf16.mxu0 0
    %4537 = vmatpush1.bf16.msra.mxu0 %v4122
    %4538 = vmatprep.subr.bf16.mxu0 0
    %4539 = vmatpush1.bf16.msra.mxu0 %v4123
    %4540 = vmatprep.subr.bf16.mxu0 0
    %4541 = vmatpush1.bf16.msra.mxu0 %v4124
    %4542 = vmatprep.subr.bf16.mxu0 0
    %4543 = vmatpush1.bf16.msra.mxu0 %v4125
    %4544 = vmatprep.subr.bf16.mxu0 0
    %4545 = vmatpush1.bf16.msra.mxu0 %v4126
    %4546 = vmatprep.subr.bf16.mxu0 0
    %4547 = vmatpush1.bf16.msra.mxu0 %v4127
    %4548 = vmatprep.subr.bf16.mxu0 0
    %4549 = vmatpush1.bf16.msra.mxu0 %v4128
    %4550 = vmatprep.subr.bf16.mxu0 0
    %4551 = vmatpush1.bf16.msra.mxu0 %v4129
    %4552 = vmatprep.mubr.bf16.mxu0 %v3496
    %4553 = vmatmul.mubr.bf16.gmra.mrb[0].mxu0 %v3495
    %v4554 = vpop.f32.mrb[0].mxu0
    %v4555 = vadd.f32 %v4514, %v4554
    %v4556 = vpop.f32.mrb[0].mxu0
    %v4557 = vpop.f32.mrb[0].mxu0
    %v4558 = vadd.f32 %v4517, %v4557
    %v4559 = vpop.f32.mrb[0].mxu0
    %4560 = vdwg.mxu0
    %4561 = vmatprep.subr.bf16.mxu0 0
    %4562 = vmatpush1.bf16.msra.mxu0 %v4130
    %4563 = vmatprep.subr.bf16.mxu0 0
    %4564 = vmatpush1.bf16.msra.mxu0 %v4131
    %4565 = vmatprep.subr.bf16.mxu0 0
    %4566 = vmatpush1.bf16.msra.mxu0 %v4132
    %4567 = vmatprep.subr.bf16.mxu0 0
    %4568 = vmatpush1.bf16.msra.mxu0 %v4133
    %4569 = vmatprep.subr.bf16.mxu0 0
    %4570 = vmatpush1.bf16.msra.mxu0 %v4134
    %4571 = vmatprep.subr.bf16.mxu0 0
    %4572 = vmatpush1.bf16.msra.mxu0 %v4135
    %4573 = vmatprep.subr.bf16.mxu0 0
    %4574 = vmatpush1.bf16.msra.mxu0 %v4136
    %4575 = vmatprep.subr.bf16.mxu0 0
    %4576 = vmatpush1.bf16.msra.mxu0 %v4137
    %4577 = vmatprep.subr.bf16.mxu0 0
    %4578 = vmatpush1.bf16.msra.mxu0 %v4138
    %4579 = vmatprep.subr.bf16.mxu0 0
    %4580 = vmatpush1.bf16.msra.mxu0 %v4139
    %4581 = vmatprep.subr.bf16.mxu0 0
    %4582 = vmatpush1.bf16.msra.mxu0 %v4140
    %4583 = vmatprep.subr.bf16.mxu0 0
    %4584 = vmatpush1.bf16.msra.mxu0 %v4141
    %4585 = vmatprep.subr.bf16.mxu0 0
    %4586 = vmatpush1.bf16.msra.mxu0 %v4142
    %4587 = vmatprep.subr.bf16.mxu0 0
    %4588 = vmatpush1.bf16.msra.mxu0 %v4143
    %4589 = vmatprep.subr.bf16.mxu0 0
    %4590 = vmatpush1.bf16.msra.mxu0 %v4144
    %4591 = vmatprep.subr.bf16.mxu0 0
    %4592 = vmatpush1.bf16.msra.mxu0 %v4145
    %4593 = vmatprep.mubr.bf16.mxu0 %v3498
    %4594 = vmatmul.mubr.bf16.gmra.mrb[0].mxu0 %v3497
    %v4595 = vpop.f32.mrb[0].mxu0
    %v4596 = vadd.f32 %v4555, %v4595
    %v4597 = vpop.f32.mrb[0].mxu0
    %v4598 = vpop.f32.mrb[0].mxu0
    %v4599 = vadd.f32 %v4558, %v4598
    %v4600 = vpop.f32.mrb[0].mxu0
    %4601 = vdwg.mxu0
    %v4602 = vadd.f32 %v2569, %v4596
    %v4603 = vadd.f32 %v2570, %v4599
    %v4604 = vld [vmem:[#allocation41] sm:$0x1]
    %v4605 = vld [vmem:[#allocation40] sm:$0x1]
    %v4606 = vsel %vm848, %v4602, 0.0
    %4607 = vadd.xlane.f32.xlu0 %v4606
    %v4608 = vpop.xlane.xlu0 %4607
    %v4609 = vsel %vm848, %v4603, 0.0
    %4610 = vadd.xlane.f32.xlu0 %v4609
    %v4611 = vpop.xlane.xlu0 %4610
    %v4612 = vmul.f32 %v4608, %v2534
    %v4613 = vmul.f32 %v4611, %v2534
    %v4614 = vsub.f32 %v4602, %v4612
    %v4615 = vsub.f32 %v4603, %v4613
    %v4616 = vmul.f32 %v4614, %v4614
    %v4617 = vmul.f32 %v4615, %v4615
    %v4618 = vsel %vm848, %v4616, 0.0
    %4619 = vadd.xlane.f32.xlu0 %v4618
    %v4620 = vpop.xlane.xlu0 %4619
    %v4621 = vsel %vm848, %v4617, 0.0
    %4622 = vadd.xlane.f32.xlu0 %v4621
    %v4623 = vpop.xlane.xlu0 %4622
    %v4624 = vmul.f32 %v4620, %v2534
    %v4625 = vmul.f32 %v4623, %v2534
    %v4626 = vadd.f32 %v4624, 1e-05
    %v4627 = vadd.f32 %v4625, 1e-05
    %v4628 = vrsqrt.pop %v4626
    %v4629 = vrsqrt.pop %v4627
    %v4630 = vmul.f32 %v4614, %v4628
    %v4631 = vmul.f32 %v4615, %v4629
    %v4633 = vlaneseq
    %v4634 = vshrl.u32 %v4633, 7
    %v4635 = vsub.s32 0, %v4634
    %v4636 = vrot.slane %v4604, %v4635
    %v4638 = vmul.f32 %v4630, %v4636
    %v4639 = vmul.f32 %v4631, %v4636
    %v4641 = vlaneseq
    %v4642 = vshrl.u32 %v4641, 7
    %v4643 = vsub.s32 0, %v4642
    %v4644 = vrot.slane %v4605, %v4643
    %v4646 = vadd.f32 %v4638, %v4644
    %v4647 = vadd.f32 %v4639, %v4644
    %v4648 = vld [vmem:[#allocation49] sm:$0x1]
    %v4649 = vld [vmem:[#allocation47] sm:$0x1]
    %v4650 = vsel %vm848, %v4646, 0.0
    %4651 = vadd.xlane.f32.xlu0 %v4650
    %v4652 = vpop.xlane.xlu0 %4651
    %v4653 = vsel %vm848, %v4647, 0.0
    %4654 = vadd.xlane.f32.xlu0 %v4653
    %v4655 = vpop.xlane.xlu0 %4654
    %v4656 = vmul.f32 %v4652, %v2534
    %v4657 = vmul.f32 %v4655, %v2534
    %v4658 = vsub.f32 %v4646, %v4656
    %v4659 = vsub.f32 %v4647, %v4657
    %v4660 = vmul.f32 %v4658, %v4658
    %v4661 = vmul.f32 %v4659, %v4659
    %v4662 = vsel %vm848, %v4660, 0.0
    %4663 = vadd.xlane.f32.xlu0 %v4662
    %v4664 = vpop.xlane.xlu0 %4663
    %v4665 = vsel %vm848, %v4661, 0.0
    %4666 = vadd.xlane.f32.xlu0 %v4665
    %v4667 = vpop.xlane.xlu0 %4666
    %v4668 = vmul.f32 %v4664, %v2534
    %v4669 = vmul.f32 %v4667, %v2534
    %v4670 = vadd.f32 %v4668, 1e-05
    %v4671 = vadd.f32 %v4669, 1e-05
    %v4672 = vrsqrt.pop %v4670
    %v4673 = vrsqrt.pop %v4671
    %v4674 = vmul.f32 %v4658, %v4672
    %v4675 = vmul.f32 %v4659, %v4673
    %v4677 = vlaneseq
    %v4678 = vshrl.u32 %v4677, 7
    %v4679 = vsub.s32 0, %v4678
    %v4680 = vrot.slane %v4648, %v4679
    %v4682 = vmul.f32 %v4674, %v4680
    %v4683 = vmul.f32 %v4675, %v4680
    %v4685 = vlaneseq
    %v4686 = vshrl.u32 %v4685, 7
    %v4687 = vsub.s32 0, %v4686
    %v4688 = vrot.slane %v4649, %v4687
    %v4690 = vadd.f32 %v4682, %v4688
    %v4691 = vadd.f32 %v4683, %v4688
    %v4692 = vld [vmem:[%s109] sm:$0xf]
    %v4693 = vld [vmem:[%s109 + $0x4] sm:$0xf]
    %v4694 = vld [vmem:[%s109 + $0x8] sm:$0xf]
    %v4695 = vld [vmem:[%s109 + $0xc] sm:$0xf]
    %v4696 = vpack.c.bf16 %v1783, %v1780
    %v4697 = vld [vmem:[#allocation31] sm:$0x1]
    %v4699 = vlaneseq
    %v4700 = vshrl.u32 %v4699, 7
    %v4701 = vsub.s32 0, %v4700
    %v4702 = vrot.slane %v4697, %v4701
    %v4708 = vunpack.c.l.b16 %v4692
    %v4709 = vunpack.c.l.b16 %v4693
    %v4710 = vunpack.c.l.b16 %v4694
    %v4711 = vunpack.c.l.b16 %v4695
    %v4712 = vpack.c.b16 %v4709, %v4708
    %v4713 = vpack.c.b16 %v4711, %v4710
    %v4717 = vsel %vm848, %v4696, 0
    %4719 = vmatprep.subr.bf16.mxu0 0
    %4720 = vmatpush1.bf16.msra.mxu0 %v4712
    %4721 = vmatprep.subr.bf16.mxu0 0
    %4722 = vmatpush1.bf16.msra.mxu0 %v4713
    %4723 = vmatprep.subr.bf16.mxu0 0
    %4724 = vmatpush1.bf16.msra.mxu0 0
    %4725 = vmatprep.subr.bf16.mxu0 0
    %4726 = vmatpush1.bf16.msra.mxu0 0
    %4727 = vmatprep.subr.bf16.mxu0 0
    %4728 = vmatpush1.bf16.msra.mxu0 0
    %4729 = vmatprep.subr.bf16.mxu0 0
    %4730 = vmatpush1.bf16.msra.mxu0 0
    %4731 = vmatprep.subr.bf16.mxu0 0
    %4732 = vmatpush1.bf16.msra.mxu0 0
    %4733 = vmatprep.subr.bf16.mxu0 0
    %4734 = vmatpush1.bf16.msra.mxu0 0
    %4735 = vmatprep.subr.bf16.mxu0 0
    %4736 = vmatpush1.bf16.msra.mxu0 0
    %4737 = vmatprep.subr.bf16.mxu0 0
    %4738 = vmatpush1.bf16.msra.mxu0 0
    %4739 = vmatprep.subr.bf16.mxu0 0
    %4740 = vmatpush1.bf16.msra.mxu0 0
    %4741 = vmatprep.subr.bf16.mxu0 0
    %4742 = vmatpush1.bf16.msra.mxu0 0
    %4743 = vmatprep.subr.bf16.mxu0 0
    %4744 = vmatpush1.bf16.msra.mxu0 0
    %4745 = vmatprep.subr.bf16.mxu0 0
    %4746 = vmatpush1.bf16.msra.mxu0 0
    %4747 = vmatprep.subr.bf16.mxu0 0
    %4748 = vmatpush1.bf16.msra.mxu0 0
    %4749 = vmatprep.subr.bf16.mxu0 0
    %4750 = vmatpush1.bf16.msra.mxu0 0
    %4751 = vmatprep.mubr.bf16.mxu0 0
    %4752 = vmatmul.mubr.bf16.gmra.mrb[0].mxu0 %v4717
    %v4753 = vpop.f32.mrb[0].mxu0
    %v4754 = vadd.f32 %v4702, %v4753
    %v4755 = vpop.f32.mrb[0].mxu0
    %v4756 = vpop.f32.mrb[0].mxu0
    %v4757 = vadd.f32 %v4702, %v4756
    %v4758 = vpop.f32.mrb[0].mxu0
    %4759 = vdwg.mxu0
    %v4760 = vld [vmem:[%s105] sm:$0xf]
    %v4761 = vld [vmem:[%s105 + $0x4] sm:$0xf]
    %v4762 = vld [vmem:[%s105 + $0x8] sm:$0xf]
    %v4763 = vld [vmem:[%s105 + $0xc] sm:$0xf]
    %v4764 = vld [vmem:[#allocation28] sm:$0x1]
    %v4766 = vlaneseq
    %v4767 = vshrl.u32 %v4766, 7
    %v4768 = vsub.s32 0, %v4767
    %v4769 = vrot.slane %v4764, %v4768
    %v4775 = vunpack.c.l.b16 %v4760
    %v4776 = vunpack.c.l.b16 %v4761
    %v4777 = vunpack.c.l.b16 %v4762
    %v4778 = vunpack.c.l.b16 %v4763
    %v4779 = vpack.c.b16 %v4776, %v4775
    %v4780 = vpack.c.b16 %v4778, %v4777
    %4783 = vmatprep.subr.bf16.mxu0 0
    %4784 = vmatpush1.bf16.msra.mxu0 %v4779
    %4785 = vmatprep.subr.bf16.mxu0 0
    %4786 = vmatpush1.bf16.msra.mxu0 %v4780
    %4787 = vmatprep.subr.bf16.mxu0 0
    %4788 = vmatpush1.bf16.msra.mxu0 0
    %4789 = vmatprep.subr.bf16.mxu0 0
    %4790 = vmatpush1.bf16.msra.mxu0 0
    %4791 = vmatprep.subr.bf16.mxu0 0
    %4792 = vmatpush1.bf16.msra.mxu0 0
    %4793 = vmatprep.subr.bf16.mxu0 0
    %4794 = vmatpush1.bf16.msra.mxu0 0
    %4795 = vmatprep.subr.bf16.mxu0 0
    %4796 = vmatpush1.bf16.msra.mxu0 0
    %4797 = vmatprep.subr.bf16.mxu0 0
    %4798 = vmatpush1.bf16.msra.mxu0 0
    %4799 = vmatprep.subr.bf16.mxu0 0
    %4800 = vmatpush1.bf16.msra.mxu0 0
    %4801 = vmatprep.subr.bf16.mxu0 0
    %4802 = vmatpush1.bf16.msra.mxu0 0
    %4803 = vmatprep.subr.bf16.mxu0 0
    %4804 = vmatpush1.bf16.msra.mxu0 0
    %4805 = vmatprep.subr.bf16.mxu0 0
    %4806 = vmatpush1.bf16.msra.mxu0 0
    %4807 = vmatprep.subr.bf16.mxu0 0
    %4808 = vmatpush1.bf16.msra.mxu0 0
    %4809 = vmatprep.subr.bf16.mxu0 0
    %4810 = vmatpush1.bf16.msra.mxu0 0
    %4811 = vmatprep.subr.bf16.mxu0 0
    %4812 = vmatpush1.bf16.msra.mxu0 0
    %4813 = vmatprep.subr.bf16.mxu0 0
    %4814 = vmatpush1.bf16.msra.mxu0 0
    %4815 = vmatprep.mubr.bf16.mxu0 0
    %4816 = vmatmul.mubr.bf16.gmra.mrb[0].mxu0 %v4717
    %v4817 = vpop.f32.mrb[0].mxu0
    %v4818 = vadd.f32 %v4769, %v4817
    %v4819 = vpop.f32.mrb[0].mxu0
    %v4820 = vpop.f32.mrb[0].mxu0
    %v4821 = vadd.f32 %v4769, %v4820
    %v4822 = vpop.f32.mrb[0].mxu0
    %4823 = vdwg.mxu0
    %v4824 = vpack.c.bf16 %v4757, %v4754
    %v4825 = vpack.c.bf16 %v4821, %v4818
    %v4827 = vsel %vm1926, %v4824, 0
    %v4830 = vsel %vm1926, %v4825, 0
    %4832 = vmatprep.subr.bf16.mxu0 0
    %4833 = vmatpush1.bf16.xpose.msra.mxu0 %v4830
    %4834 = vmatprep.subr.bf16.mxu0 0
    %4835 = vmatpush1.bf16.xpose.msra.mxu0 0
    %4836 = vmatprep.subr.bf16.mxu0 0
    %4837 = vmatpush1.bf16.xpose.msra.mxu0 0
    %4838 = vmatprep.subr.bf16.mxu0 0
    %4839 = vmatpush1.bf16.xpose.msra.mxu0 0
    %4840 = vmatprep.subr.bf16.mxu0 0
    %4841 = vmatpush1.bf16.xpose.msra.mxu0 0
    %4842 = vmatprep.subr.bf16.mxu0 0
    %4843 = vmatpush1.bf16.xpose.msra.mxu0 0
    %4844 = vmatprep.subr.bf16.mxu0 0
    %4845 = vmatpush1.bf16.xpose.msra.mxu0 0
    %4846 = vmatprep.subr.bf16.mxu0 0
    %4847 = vmatpush1.bf16.xpose.msra.mxu0 0
    %4848 = vmatprep.subr.bf16.mxu0 0
    %4849 = vmatpush1.bf16.xpose.msra.mxu0 0
    %4850 = vmatprep.subr.bf16.mxu0 0
    %4851 = vmatpush1.bf16.xpose.msra.mxu0 0
    %4852 = vmatprep.subr.bf16.mxu0 0
    %4853 = vmatpush1.bf16.xpose.msra.mxu0 0
    %4854 = vmatprep.subr.bf16.mxu0 0
    %4855 = vmatpush1.bf16.xpose.msra.mxu0 0
    %4856 = vmatprep.subr.bf16.mxu0 0
    %4857 = vmatpush1.bf16.xpose.msra.mxu0 0
    %4858 = vmatprep.subr.bf16.mxu0 0
    %4859 = vmatpush1.bf16.xpose.msra.mxu0 0
    %4860 = vmatprep.subr.bf16.mxu0 0
    %4861 = vmatpush1.bf16.xpose.msra.mxu0 0
    %4862 = vmatprep.subr.bf16.mxu0 0
    %4863 = vmatpush1.bf16.xpose.msra.mxu0 0
    %4864 = vmatprep.mubr.bf16.mxu0 0
    %4865 = vmatmul.mubr.bf16.gmra.mrb[0].mxu0 %v4827
    %v4866 = vpop.f32.mrb[0].mxu0
    %v4867 = vadd.f32 0.0, %v4866
    %v4868 = vpop.f32.mrb[0].mxu0
    %v4869 = vpop.f32.mrb[0].mxu0
    %v4870 = vadd.f32 0.0, %v4869
    %v4871 = vpop.f32.mrb[0].mxu0
    %4872 = vdwg.mxu0
    %v4873 = vmul.f32 %v4867, 0.35355338
    %v4874 = vmul.f32 %v4870, 0.35355338
    %v4875 = vadd.f32 %v4873, %v750
    %v4876 = vadd.f32 %v4874, %v751
    %v4877 = vsel %vm1327, %v4875, -inf
    %4878 = vmax.xlane.f32.xlu0 %v4877
    %v4879 = vpop.xlane.xlu0 %4878
    %v4880 = vsel %vm1327, %v4876, -inf
    %4881 = vmax.xlane.f32.xlu0 %v4880
    %v4882 = vpop.xlane.xlu0 %4881
    %v4883 = vsub.f32 %v4875, %v4879
    %v4884 = vsub.f32 %v4876, %v4882
    %v4885 = vmul.f32 %v4883, 1.442695
    %v4886 = vpow.pop %v4885
    %v4887 = vmul.f32 %v4884, 1.442695
    %v4888 = vpow.pop %v4887
    %v4889 = vsel %vm1327, %v4886, 0.0
    %4890 = vadd.xlane.f32.xlu0 %v4889
    %v4891 = vpop.xlane.xlu0 %4890
    %v4892 = vsel %vm1327, %v4888, 0.0
    %4893 = vadd.xlane.f32.xlu0 %v4892
    %v4894 = vpop.xlane.xlu0 %4893
    %v4895 = vrcp.pop %v4891
    %v4896 = vrcp.pop %v4894
    %v4897 = vmul.f32 %v4886, %v4895
    %v4898 = vmul.f32 %v4888, %v4896
    %v4899 = vpack.c.bf16 %v4898, %v4897
    %4901 = vrot.lane.b32.xlu0 %v4825, 96
    %v4902 = vpop.permute.xlu0 %4901
    %v4905 = vsel %vm1327, %v4899, 0
    %4907 = vmatprep.subr.bf16.mxu0 0
    %4908 = vmatpush1.bf16.msra.mxu0 %v4902
    %4909 = vmatprep.subr.bf16.mxu0 0
    %4910 = vmatpush1.bf16.msra.mxu0 0
    %4911 = vmatprep.subr.bf16.mxu0 0
    %4912 = vmatpush1.bf16.msra.mxu0 0
    %4913 = vmatprep.subr.bf16.mxu0 0
    %4914 = vmatpush1.bf16.msra.mxu0 0
    %4915 = vmatprep.subr.bf16.mxu0 0
    %4916 = vmatpush1.bf16.msra.mxu0 0
    %4917 = vmatprep.subr.bf16.mxu0 0
    %4918 = vmatpush1.bf16.msra.mxu0 0
    %4919 = vmatprep.subr.bf16.mxu0 0
    %4920 = vmatpush1.bf16.msra.mxu0 0
    %4921 = vmatprep.subr.bf16.mxu0 0
    %4922 = vmatpush1.bf16.msra.mxu0 0
    %4923 = vmatprep.subr.bf16.mxu0 0
    %4924 = vmatpush1.bf16.msra.mxu0 0
    %4925 = vmatprep.subr.bf16.mxu0 0
    %4926 = vmatpush1.bf16.msra.mxu0 0
    %4927 = vmatprep.subr.bf16.mxu0 0
    %4928 = vmatpush1.bf16.msra.mxu0 0
    %4929 = vmatprep.subr.bf16.mxu0 0
    %4930 = vmatpush1.bf16.msra.mxu0 0
    %4931 = vmatprep.subr.bf16.mxu0 0
    %4932 = vmatpush1.bf16.msra.mxu0 0
    %4933 = vmatprep.subr.bf16.mxu0 0
    %4934 = vmatpush1.bf16.msra.mxu0 0
    %4935 = vmatprep.subr.bf16.mxu0 0
    %4936 = vmatpush1.bf16.msra.mxu0 0
    %4937 = vmatprep.subr.bf16.mxu0 0
    %4938 = vmatpush1.bf16.msra.mxu0 0
    %4939 = vmatprep.mubr.bf16.mxu0 0
    %4940 = vmatmul.mubr.bf16.gmra.mrb[0].mxu0 %v4905
    %v4941 = vpop.f32.mrb[0].mxu0
    %v4942 = vadd.f32 0.0, %v4941
    %v4943 = vpop.f32.mrb[0].mxu0
    %v4944 = vpop.f32.mrb[0].mxu0
    %v4945 = vadd.f32 0.0, %v4944
    %v4946 = vpop.f32.mrb[0].mxu0
    %4947 = vdwg.mxu0
    %4949 = vrot.lane.b32.xlu0 %v4824, 120
    %v4950 = vpop.permute.xlu0 %4949
    %4951 = vrot.lane.b32.xlu0 %v4825, 120
    %v4952 = vpop.permute.xlu0 %4951
    %v4954 = vsel %vm1926, %v4950, 0
    %v4957 = vsel %vm1926, %v4952, 0
    %4959 = vmatprep.subr.bf16.mxu0 0
    %4960 = vmatpush1.bf16.xpose.msra.mxu0 %v4957
    %4961 = vmatprep.subr.bf16.mxu0 0
    %4962 = vmatpush1.bf16.xpose.msra.mxu0 0
    %4963 = vmatprep.subr.bf16.mxu0 0
    %4964 = vmatpush1.bf16.xpose.msra.mxu0 0
    %4965 = vmatprep.subr.bf16.mxu0 0
    %4966 = vmatpush1.bf16.xpose.msra.mxu0 0
    %4967 = vmatprep.subr.bf16.mxu0 0
    %4968 = vmatpush1.bf16.xpose.msra.mxu0 0
    %4969 = vmatprep.subr.bf16.mxu0 0
    %4970 = vmatpush1.bf16.xpose.msra.mxu0 0
    %4971 = vmatprep.subr.bf16.mxu0 0
    %4972 = vmatpush1.bf16.xpose.msra.mxu0 0
    %4973 = vmatprep.subr.bf16.mxu0 0
    %4974 = vmatpush1.bf16.xpose.msra.mxu0 0
    %4975 = vmatprep.subr.bf16.mxu0 0
    %4976 = vmatpush1.bf16.xpose.msra.mxu0 0
    %4977 = vmatprep.subr.bf16.mxu0 0
    %4978 = vmatpush1.bf16.xpose.msra.mxu0 0
    %4979 = vmatprep.subr.bf16.mxu0 0
    %4980 = vmatpush1.bf16.xpose.msra.mxu0 0
    %4981 = vmatprep.subr.bf16.mxu0 0
    %4982 = vmatpush1.bf16.xpose.msra.mxu0 0
    %4983 = vmatprep.subr.bf16.mxu0 0
    %4984 = vmatpush1.bf16.xpose.msra.mxu0 0
    %4985 = vmatprep.subr.bf16.mxu0 0
    %4986 = vmatpush1.bf16.xpose.msra.mxu0 0
    %4987 = vmatprep.subr.bf16.mxu0 0
    %4988 = vmatpush1.bf16.xpose.msra.mxu0 0
    %4989 = vmatprep.subr.bf16.mxu0 0
    %4990 = vmatpush1.bf16.xpose.msra.mxu0 0
    %4991 = vmatprep.mubr.bf16.mxu0 0
    %4992 = vmatmul.mubr.bf16.gmra.mrb[0].mxu0 %v4954
    %v4993 = vpop.f32.mrb[0].mxu0
    %v4994 = vadd.f32 0.0, %v4993
    %v4995 = vpop.f32.mrb[0].mxu0
    %v4996 = vpop.f32.mrb[0].mxu0
    %v4997 = vadd.f32 0.0, %v4996
    %v4998 = vpop.f32.mrb[0].mxu0
    %4999 = vdwg.mxu0
    %v5000 = vmul.f32 %v4994, 0.35355338
    %v5001 = vmul.f32 %v4997, 0.35355338
    %v5002 = vadd.f32 %v5000, %v750
    %v5003 = vadd.f32 %v5001, %v751
    %v5004 = vsel %vm1327, %v5002, -inf
    %5005 = vmax.xlane.f32.xlu0 %v5004
    %v5006 = vpop.xlane.xlu0 %5005
    %v5007 = vsel %vm1327, %v5003, -inf
    %5008 = vmax.xlane.f32.xlu0 %v5007
    %v5009 = vpop.xlane.xlu0 %5008
    %v5010 = vsub.f32 %v5002, %v5006
    %v5011 = vsub.f32 %v5003, %v5009
    %v5012 = vmul.f32 %v5010, 1.442695
    %v5013 = vpow.pop %v5012
    %v5014 = vmul.f32 %v5011, 1.442695
    %v5015 = vpow.pop %v5014
    %v5016 = vsel %vm1327, %v5013, 0.0
    %5017 = vadd.xlane.f32.xlu0 %v5016
    %v5018 = vpop.xlane.xlu0 %5017
    %v5019 = vsel %vm1327, %v5015, 0.0
    %5020 = vadd.xlane.f32.xlu0 %v5019
    %v5021 = vpop.xlane.xlu0 %5020
    %v5022 = vrcp.pop %v5018
    %v5023 = vrcp.pop %v5021
    %v5024 = vmul.f32 %v5013, %v5022
    %v5025 = vmul.f32 %v5015, %v5023
    %v5026 = vpack.c.bf16 %v5025, %v5024
    %5027 = vrot.lane.b32.xlu0 %v4825, 88
    %v5028 = vpop.permute.xlu0 %5027
    %v5031 = vsel %vm1327, %v5026, 0
    %5033 = vmatprep.subr.bf16.mxu0 0
    %5034 = vmatpush1.bf16.msra.mxu0 %v5028
    %5035 = vmatprep.subr.bf16.mxu0 0
    %5036 = vmatpush1.bf16.msra.mxu0 0
    %5037 = vmatprep.subr.bf16.mxu0 0
    %5038 = vmatpush1.bf16.msra.mxu0 0
    %5039 = vmatprep.subr.bf16.mxu0 0
    %5040 = vmatpush1.bf16.msra.mxu0 0
    %5041 = vmatprep.subr.bf16.mxu0 0
    %5042 = vmatpush1.bf16.msra.mxu0 0
    %5043 = vmatprep.subr.bf16.mxu0 0
    %5044 = vmatpush1.bf16.msra.mxu0 0
    %5045 = vmatprep.subr.bf16.mxu0 0
    %5046 = vmatpush1.bf16.msra.mxu0 0
    %5047 = vmatprep.subr.bf16.mxu0 0
    %5048 = vmatpush1.bf16.msra.mxu0 0
    %5049 = vmatprep.subr.bf16.mxu0 0
    %5050 = vmatpush1.bf16.msra.mxu0 0
    %5051 = vmatprep.subr.bf16.mxu0 0
    %5052 = vmatpush1.bf16.msra.mxu0 0
    %5053 = vmatprep.subr.bf16.mxu0 0
    %5054 = vmatpush1.bf16.msra.mxu0 0
    %5055 = vmatprep.subr.bf16.mxu0 0
    %5056 = vmatpush1.bf16.msra.mxu0 0
    %5057 = vmatprep.subr.bf16.mxu0 0
    %5058 = vmatpush1.bf16.msra.mxu0 0
    %5059 = vmatprep.subr.bf16.mxu0 0
    %5060 = vmatpush1.bf16.msra.mxu0 0
    %5061 = vmatprep.subr.bf16.mxu0 0
    %5062 = vmatpush1.bf16.msra.mxu0 0
    %5063 = vmatprep.subr.bf16.mxu0 0
    %5064 = vmatpush1.bf16.msra.mxu0 0
    %5065 = vmatprep.mubr.bf16.mxu0 0
    %5066 = vmatmul.mubr.bf16.gmra.mrb[0].mxu0 %v5031
    %v5067 = vpop.f32.mrb[0].mxu0
    %v5068 = vadd.f32 0.0, %v5067
    %v5069 = vpop.f32.mrb[0].mxu0
    %v5070 = vpop.f32.mrb[0].mxu0
    %v5071 = vadd.f32 0.0, %v5070
    %v5072 = vpop.f32.mrb[0].mxu0
    %5073 = vdwg.mxu0
    %5074 = vrot.lane.b32.xlu0 %v4824, 112
    %v5075 = vpop.permute.xlu0 %5074
    %5076 = vrot.lane.b32.xlu0 %v4825, 112
    %v5077 = vpop.permute.xlu0 %5076
    %v5079 = vsel %vm1926, %v5075, 0
    %v5082 = vsel %vm1926, %v5077, 0
    %5084 = vmatprep.subr.bf16.mxu0 0
    %5085 = vmatpush1.bf16.xpose.msra.mxu0 %v5082
    %5086 = vmatprep.subr.bf16.mxu0 0
    %5087 = vmatpush1.bf16.xpose.msra.mxu0 0
    %5088 = vmatprep.subr.bf16.mxu0 0
    %5089 = vmatpush1.bf16.xpose.msra.mxu0 0
    %5090 = vmatprep.subr.bf16.mxu0 0
    %5091 = vmatpush1.bf16.xpose.msra.mxu0 0
    %5092 = vmatprep.subr.bf16.mxu0 0
    %5093 = vmatpush1.bf16.xpose.msra.mxu0 0
    %5094 = vmatprep.subr.bf16.mxu0 0
    %5095 = vmatpush1.bf16.xpose.msra.mxu0 0
    %5096 = vmatprep.subr.bf16.mxu0 0
    %5097 = vmatpush1.bf16.xpose.msra.mxu0 0
    %5098 = vmatprep.subr.bf16.mxu0 0
    %5099 = vmatpush1.bf16.xpose.msra.mxu0 0
    %5100 = vmatprep.subr.bf16.mxu0 0
    %5101 = vmatpush1.bf16.xpose.msra.mxu0 0
    %5102 = vmatprep.subr.bf16.mxu0 0
    %5103 = vmatpush1.bf16.xpose.msra.mxu0 0
    %5104 = vmatprep.subr.bf16.mxu0 0
    %5105 = vmatpush1.bf16.xpose.msra.mxu0 0
    %5106 = vmatprep.subr.bf16.mxu0 0
    %5107 = vmatpush1.bf16.xpose.msra.mxu0 0
    %5108 = vmatprep.subr.bf16.mxu0 0
    %5109 = vmatpush1.bf16.xpose.msra.mxu0 0
    %5110 = vmatprep.subr.bf16.mxu0 0
    %5111 = vmatpush1.bf16.xpose.msra.mxu0 0
    %5112 = vmatprep.subr.bf16.mxu0 0
    %5113 = vmatpush1.bf16.xpose.msra.mxu0 0
    %5114 = vmatprep.subr.bf16.mxu0 0
    %5115 = vmatpush1.bf16.xpose.msra.mxu0 0
    %5116 = vmatprep.mubr.bf16.mxu0 0
    %5117 = vmatmul.mubr.bf16.gmra.mrb[0].mxu0 %v5079
    %v5118 = vpop.f32.mrb[0].mxu0
    %v5119 = vadd.f32 0.0, %v5118
    %v5120 = vpop.f32.mrb[0].mxu0
    %v5121 = vpop.f32.mrb[0].mxu0
    %v5122 = vadd.f32 0.0, %v5121
    %v5123 = vpop.f32.mrb[0].mxu0
    %5124 = vdwg.mxu0
    %v5125 = vmul.f32 %v5119, 0.35355338
    %v5126 = vmul.f32 %v5122, 0.35355338
    %v5127 = vadd.f32 %v5125, %v750
    %v5128 = vadd.f32 %v5126, %v751
    %v5129 = vsel %vm1327, %v5127, -inf
    %5130 = vmax.xlane.f32.xlu0 %v5129
    %v5131 = vpop.xlane.xlu0 %5130
    %v5132 = vsel %vm1327, %v5128, -inf
    %5133 = vmax.xlane.f32.xlu0 %v5132
    %v5134 = vpop.xlane.xlu0 %5133
    %v5135 = vsub.f32 %v5127, %v5131
    %v5136 = vsub.f32 %v5128, %v5134
    %v5137 = vmul.f32 %v5135, 1.442695
    %v5138 = vpow.pop %v5137
    %v5139 = vmul.f32 %v5136, 1.442695
    %v5140 = vpow.pop %v5139
    %v5141 = vsel %vm1327, %v5138, 0.0
    %5142 = vadd.xlane.f32.xlu0 %v5141
    %v5143 = vpop.xlane.xlu0 %5142
    %v5144 = vsel %vm1327, %v5140, 0.0
    %5145 = vadd.xlane.f32.xlu0 %v5144
    %v5146 = vpop.xlane.xlu0 %5145
    %v5147 = vrcp.pop %v5143
    %v5148 = vrcp.pop %v5146
    %v5149 = vmul.f32 %v5138, %v5147
    %v5150 = vmul.f32 %v5140, %v5148
    %v5151 = vpack.c.bf16 %v5150, %v5149
    %5152 = vrot.lane.b32.xlu0 %v4825, 80
    %v5153 = vpop.permute.xlu0 %5152
    %v5156 = vsel %vm1327, %v5151, 0
    %5158 = vmatprep.subr.bf16.mxu0 0
    %5159 = vmatpush1.bf16.msra.mxu0 %v5153
    %5160 = vmatprep.subr.bf16.mxu0 0
    %5161 = vmatpush1.bf16.msra.mxu0 0
    %5162 = vmatprep.subr.bf16.mxu0 0
    %5163 = vmatpush1.bf16.msra.mxu0 0
    %5164 = vmatprep.subr.bf16.mxu0 0
    %5165 = vmatpush1.bf16.msra.mxu0 0
    %5166 = vmatprep.subr.bf16.mxu0 0
    %5167 = vmatpush1.bf16.msra.mxu0 0
    %5168 = vmatprep.subr.bf16.mxu0 0
    %5169 = vmatpush1.bf16.msra.mxu0 0
    %5170 = vmatprep.subr.bf16.mxu0 0
    %5171 = vmatpush1.bf16.msra.mxu0 0
    %5172 = vmatprep.subr.bf16.mxu0 0
    %5173 = vmatpush1.bf16.msra.mxu0 0
    %5174 = vmatprep.subr.bf16.mxu0 0
    %5175 = vmatpush1.bf16.msra.mxu0 0
    %5176 = vmatprep.subr.bf16.mxu0 0
    %5177 = vmatpush1.bf16.msra.mxu0 0
    %5178 = vmatprep.subr.bf16.mxu0 0
    %5179 = vmatpush1.bf16.msra.mxu0 0
    %5180 = vmatprep.subr.bf16.mxu0 0
    %5181 = vmatpush1.bf16.msra.mxu0 0
    %5182 = vmatprep.subr.bf16.mxu0 0
    %5183 = vmatpush1.bf16.msra.mxu0 0
    %5184 = vmatprep.subr.bf16.mxu0 0
    %5185 = vmatpush1.bf16.msra.mxu0 0
    %5186 = vmatprep.subr.bf16.mxu0 0
    %5187 = vmatpush1.bf16.msra.mxu0 0
    %5188 = vmatprep.subr.bf16.mxu0 0
    %5189 = vmatpush1.bf16.msra.mxu0 0
    %5190 = vmatprep.mubr.bf16.mxu0 0
    %5191 = vmatmul.mubr.bf16.gmra.mrb[0].mxu0 %v5156
    %v5192 = vpop.f32.mrb[0].mxu0
    %v5193 = vadd.f32 0.0, %v5192
    %v5194 = vpop.f32.mrb[0].mxu0
    %v5195 = vpop.f32.mrb[0].mxu0
    %v5196 = vadd.f32 0.0, %v5195
    %v5197 = vpop.f32.mrb[0].mxu0
    %5198 = vdwg.mxu0
    %5199 = vrot.lane.b32.xlu0 %v4824, 104
    %v5200 = vpop.permute.xlu0 %5199
    %5201 = vrot.lane.b32.xlu0 %v4825, 104
    %v5202 = vpop.permute.xlu0 %5201
    %v5204 = vsel %vm1926, %v5200, 0
    %v5207 = vsel %vm1926, %v5202, 0
    %5209 = vmatprep.subr.bf16.mxu0 0
    %5210 = vmatpush1.bf16.xpose.msra.mxu0 %v5207
    %5211 = vmatprep.subr.bf16.mxu0 0
    %5212 = vmatpush1.bf16.xpose.msra.mxu0 0
    %5213 = vmatprep.subr.bf16.mxu0 0
    %5214 = vmatpush1.bf16.xpose.msra.mxu0 0
    %5215 = vmatprep.subr.bf16.mxu0 0
    %5216 = vmatpush1.bf16.xpose.msra.mxu0 0
    %5217 = vmatprep.subr.bf16.mxu0 0
    %5218 = vmatpush1.bf16.xpose.msra.mxu0 0
    %5219 = vmatprep.subr.bf16.mxu0 0
    %5220 = vmatpush1.bf16.xpose.msra.mxu0 0
    %5221 = vmatprep.subr.bf16.mxu0 0
    %5222 = vmatpush1.bf16.xpose.msra.mxu0 0
    %5223 = vmatprep.subr.bf16.mxu0 0
    %5224 = vmatpush1.bf16.xpose.msra.mxu0 0
    %5225 = vmatprep.subr.bf16.mxu0 0
    %5226 = vmatpush1.bf16.xpose.msra.mxu0 0
    %5227 = vmatprep.subr.bf16.mxu0 0
    %5228 = vmatpush1.bf16.xpose.msra.mxu0 0
    %5229 = vmatprep.subr.bf16.mxu0 0
    %5230 = vmatpush1.bf16.xpose.msra.mxu0 0
    %5231 = vmatprep.subr.bf16.mxu0 0
    %5232 = vmatpush1.bf16.xpose.msra.mxu0 0
    %5233 = vmatprep.subr.bf16.mxu0 0
    %5234 = vmatpush1.bf16.xpose.msra.mxu0 0
    %5235 = vmatprep.subr.bf16.mxu0 0
    %5236 = vmatpush1.bf16.xpose.msra.mxu0 0
    %5237 = vmatprep.subr.bf16.mxu0 0
    %5238 = vmatpush1.bf16.xpose.msra.mxu0 0
    %5239 = vmatprep.subr.bf16.mxu0 0
    %5240 = vmatpush1.bf16.xpose.msra.mxu0 0
    %5241 = vmatprep.mubr.bf16.mxu0 0
    %5242 = vmatmul.mubr.bf16.gmra.mrb[0].mxu0 %v5204
    %v5243 = vpop.f32.mrb[0].mxu0
    %v5244 = vadd.f32 0.0, %v5243
    %v5245 = vpop.f32.mrb[0].mxu0
    %v5246 = vpop.f32.mrb[0].mxu0
    %v5247 = vadd.f32 0.0, %v5246
    %v5248 = vpop.f32.mrb[0].mxu0
    %5249 = vdwg.mxu0
    %v5250 = vmul.f32 %v5244, 0.35355338
    %v5251 = vmul.f32 %v5247, 0.35355338
    %v5252 = vadd.f32 %v5250, %v750
    %v5253 = vadd.f32 %v5251, %v751
    %v5254 = vsel %vm1327, %v5252, -inf
    %5255 = vmax.xlane.f32.xlu0 %v5254
    %v5256 = vpop.xlane.xlu0 %5255
    %v5257 = vsel %vm1327, %v5253, -inf
    %5258 = vmax.xlane.f32.xlu0 %v5257
    %v5259 = vpop.xlane.xlu0 %5258
    %v5260 = vsub.f32 %v5252, %v5256
    %v5261 = vsub.f32 %v5253, %v5259
    %v5262 = vmul.f32 %v5260, 1.442695
    %v5263 = vpow.pop %v5262
    %v5264 = vmul.f32 %v5261, 1.442695
    %v5265 = vpow.pop %v5264
    %v5266 = vsel %vm1327, %v5263, 0.0
    %5267 = vadd.xlane.f32.xlu0 %v5266
    %v5268 = vpop.xlane.xlu0 %5267
    %v5269 = vsel %vm1327, %v5265, 0.0
    %5270 = vadd.xlane.f32.xlu0 %v5269
    %v5271 = vpop.xlane.xlu0 %5270
    %v5272 = vrcp.pop %v5268
    %v5273 = vrcp.pop %v5271
    %v5274 = vmul.f32 %v5263, %v5272
    %v5275 = vmul.f32 %v5265, %v5273
    %v5276 = vpack.c.bf16 %v5275, %v5274
    %5277 = vrot.lane.b32.xlu0 %v4825, 72
    %v5278 = vpop.permute.xlu0 %5277
    %v5281 = vsel %vm1327, %v5276, 0
    %5283 = vmatprep.subr.bf16.mxu0 0
    %5284 = vmatpush1.bf16.msra.mxu0 %v5278
    %5285 = vmatprep.subr.bf16.mxu0 0
    %5286 = vmatpush1.bf16.msra.mxu0 0
    %5287 = vmatprep.subr.bf16.mxu0 0
    %5288 = vmatpush1.bf16.msra.mxu0 0
    %5289 = vmatprep.subr.bf16.mxu0 0
    %5290 = vmatpush1.bf16.msra.mxu0 0
    %5291 = vmatprep.subr.bf16.mxu0 0
    %5292 = vmatpush1.bf16.msra.mxu0 0
    %5293 = vmatprep.subr.bf16.mxu0 0
    %5294 = vmatpush1.bf16.msra.mxu0 0
    %5295 = vmatprep.subr.bf16.mxu0 0
    %5296 = vmatpush1.bf16.msra.mxu0 0
    %5297 = vmatprep.subr.bf16.mxu0 0
    %5298 = vmatpush1.bf16.msra.mxu0 0
    %5299 = vmatprep.subr.bf16.mxu0 0
    %5300 = vmatpush1.bf16.msra.mxu0 0
    %5301 = vmatprep.subr.bf16.mxu0 0
    %5302 = vmatpush1.bf16.msra.mxu0 0
    %5303 = vmatprep.subr.bf16.mxu0 0
    %5304 = vmatpush1.bf16.msra.mxu0 0
    %5305 = vmatprep.subr.bf16.mxu0 0
    %5306 = vmatpush1.bf16.msra.mxu0 0
    %5307 = vmatprep.subr.bf16.mxu0 0
    %5308 = vmatpush1.bf16.msra.mxu0 0
    %5309 = vmatprep.subr.bf16.mxu0 0
    %5310 = vmatpush1.bf16.msra.mxu0 0
    %5311 = vmatprep.subr.bf16.mxu0 0
    %5312 = vmatpush1.bf16.msra.mxu0 0
    %5313 = vmatprep.subr.bf16.mxu0 0
    %5314 = vmatpush1.bf16.msra.mxu0 0
    %5315 = vmatprep.mubr.bf16.mxu0 0
    %5316 = vmatmul.mubr.bf16.gmra.mrb[0].mxu0 %v5281
    %v5317 = vpop.f32.mrb[0].mxu0
    %v5318 = vadd.f32 0.0, %v5317
    %v5319 = vpop.f32.mrb[0].mxu0
    %v5320 = vpop.f32.mrb[0].mxu0
    %v5321 = vadd.f32 0.0, %v5320
    %v5322 = vpop.f32.mrb[0].mxu0
    %5323 = vdwg.mxu0
    %5326 = vrot.lane.b32.xlu0 %v5068, 8
    %v5327 = vpop.permute.xlu0 %5326
    %5328 = vrot.lane.b32.xlu0 %v5071, 8
    %v5329 = vpop.permute.xlu0 %5328
    %5334 = vrot.lane.b32.xlu0 %v5193, 16
    %v5335 = vpop.permute.xlu0 %5334
    %5336 = vrot.lane.b32.xlu0 %v5196, 16
    %v5337 = vpop.permute.xlu0 %5336
    %5342 = vrot.lane.b32.xlu0 %v5318, 24
    %v5343 = vpop.permute.xlu0 %5342
    %5344 = vrot.lane.b32.xlu0 %v5321, 24
    %v5345 = vpop.permute.xlu0 %5344
    %v5348 = vsel %vm1926, %v4942, %v5327
    %v5349 = vsel %vm1926, %v4945, %v5329
    %v5350 = vsel %vm1327, %v5348, %v5335
    %v5351 = vsel %vm1327, %v5349, %v5337
    %v5352 = vsel %vm2453, %v5350, %v5343
    %v5353 = vsel %vm2453, %v5351, %v5345
    %v5354 = vld [vmem:[%s107] sm:$0xf]
    %v5355 = vld [vmem:[%s107 + $0x4] sm:$0xf]
    %v5356 = vld [vmem:[%s107 + $0x8] sm:$0xf]
    %v5357 = vld [vmem:[%s107 + $0xc] sm:$0xf]
    %v5358 = vpack.c.bf16 %v5353, %v5352
    %v5359 = vld [vmem:[#allocation29] sm:$0x1]
    %v5361 = vlaneseq
    %v5362 = vshrl.u32 %v5361, 7
    %v5363 = vsub.s32 0, %v5362
    %v5364 = vrot.slane %v5359, %v5363
    %v5370 = vunpack.c.l.b16 %v5354
    %v5371 = vunpack.c.l.b16 %v5355
    %v5372 = vunpack.c.l.b16 %v5356
    %v5373 = vunpack.c.l.b16 %v5357
    %v5374 = vpack.c.b16 %v5371, %v5370
    %v5375 = vpack.c.b16 %v5373, %v5372
    %v5379 = vsel %vm848, %v5358, 0
    %5381 = vmatprep.subr.bf16.mxu0 0
    %5382 = vmatpush1.bf16.msra.mxu0 %v5374
    %5383 = vmatprep.subr.bf16.mxu0 0
    %5384 = vmatpush1.bf16.msra.mxu0 %v5375
    %5385 = vmatprep.subr.bf16.mxu0 0
    %5386 = vmatpush1.bf16.msra.mxu0 0
    %5387 = vmatprep.subr.bf16.mxu0 0
    %5388 = vmatpush1.bf16.msra.mxu0 0
    %5389 = vmatprep.subr.bf16.mxu0 0
    %5390 = vmatpush1.bf16.msra.mxu0 0
    %5391 = vmatprep.subr.bf16.mxu0 0
    %5392 = vmatpush1.bf16.msra.mxu0 0
    %5393 = vmatprep.subr.bf16.mxu0 0
    %5394 = vmatpush1.bf16.msra.mxu0 0
    %5395 = vmatprep.subr.bf16.mxu0 0
    %5396 = vmatpush1.bf16.msra.mxu0 0
    %5397 = vmatprep.subr.bf16.mxu0 0
    %5398 = vmatpush1.bf16.msra.mxu0 0
    %5399 = vmatprep.subr.bf16.mxu0 0
    %5400 = vmatpush1.bf16.msra.mxu0 0
    %5401 = vmatprep.subr.bf16.mxu0 0
    %5402 = vmatpush1.bf16.msra.mxu0 0
    %5403 = vmatprep.subr.bf16.mxu0 0
    %5404 = vmatpush1.bf16.msra.mxu0 0
    %5405 = vmatprep.subr.bf16.mxu0 0
    %5406 = vmatpush1.bf16.msra.mxu0 0
    %5407 = vmatprep.subr.bf16.mxu0 0
    %5408 = vmatpush1.bf16.msra.mxu0 0
    %5409 = vmatprep.subr.bf16.mxu0 0
    %5410 = vmatpush1.bf16.msra.mxu0 0
    %5411 = vmatprep.subr.bf16.mxu0 0
    %5412 = vmatpush1.bf16.msra.mxu0 0
    %5413 = vmatprep.mubr.bf16.mxu0 0
    %5414 = vmatmul.mubr.bf16.gmra.mrb[0].mxu0 %v5379
    %v5415 = vpop.f32.mrb[0].mxu0
    %v5416 = vadd.f32 %v5364, %v5415
    %v5417 = vpop.f32.mrb[0].mxu0
    %v5418 = vpop.f32.mrb[0].mxu0
    %v5419 = vadd.f32 %v5364, %v5418
    %v5420 = vpop.f32.mrb[0].mxu0
    %5421 = vdwg.mxu0
    %v5422 = vadd.f32 %v1780, %v5416
    %v5423 = vadd.f32 %v1783, %v5419
    %v5424 = vld [vmem:[#allocation20] sm:$0x1]
    %v5425 = vld [vmem:[#allocation19] sm:$0x1]
    %v5426 = vsel %vm848, %v5422, 0.0
    %5427 = vadd.xlane.f32.xlu0 %v5426
    %v5428 = vpop.xlane.xlu0 %5427
    %v5429 = vsel %vm848, %v5423, 0.0
    %5430 = vadd.xlane.f32.xlu0 %v5429
    %v5431 = vpop.xlane.xlu0 %5430
    %v5432 = vmul.f32 %v5428, %v2534
    %v5433 = vmul.f32 %v5431, %v2534
    %v5434 = vsub.f32 %v5422, %v5432
    %v5435 = vsub.f32 %v5423, %v5433
    %v5436 = vmul.f32 %v5434, %v5434
    %v5437 = vmul.f32 %v5435, %v5435
    %v5438 = vsel %vm848, %v5436, 0.0
    %5439 = vadd.xlane.f32.xlu0 %v5438
    %v5440 = vpop.xlane.xlu0 %5439
    %v5441 = vsel %vm848, %v5437, 0.0
    %5442 = vadd.xlane.f32.xlu0 %v5441
    %v5443 = vpop.xlane.xlu0 %5442
    %v5444 = vmul.f32 %v5440, %v2534
    %v5445 = vmul.f32 %v5443, %v2534
    %v5446 = vadd.f32 %v5444, 1e-05
    %v5447 = vadd.f32 %v5445, 1e-05
    %v5448 = vrsqrt.pop %v5446
    %v5449 = vrsqrt.pop %v5447
    %v5450 = vmul.f32 %v5434, %v5448
    %v5451 = vmul.f32 %v5435, %v5449
    %v5453 = vlaneseq
    %v5454 = vshrl.u32 %v5453, 7
    %v5455 = vsub.s32 0, %v5454
    %v5456 = vrot.slane %v5424, %v5455
    %v5458 = vmul.f32 %v5450, %v5456
    %v5459 = vmul.f32 %v5451, %v5456
    %v5461 = vlaneseq
    %v5462 = vshrl.u32 %v5461, 7
    %v5463 = vsub.s32 0, %v5462
    %v5464 = vrot.slane %v5425, %v5463
    %v5466 = vadd.f32 %v5458, %v5464
    %v5467 = vadd.f32 %v5459, %v5464
    %v5468 = vld [vmem:[%s77] sm:$0xf]
    %v5469 = vld [vmem:[%s77 + $0x4] sm:$0xf]
    %v5470 = vld [vmem:[%s77 + $0x8] sm:$0xf]
    %v5471 = vld [vmem:[%s77 + $0xc] sm:$0xf]
    %v5472 = vpack.c.bf16 %v5467, %v5466
    %v5473 = vld [vmem:[#allocation16] sm:$0x1]
    %v5475 = vlaneseq
    %v5476 = vshrl.u32 %v5475, 7
    %v5477 = vsub.s32 0, %v5476
    %v5478 = vrot.slane %v5473, %v5477
    %v5484 = vunpack.c.l.b16 %v5468
    %v5485 = vunpack.c.l.b16 %v5469
    %v5486 = vunpack.c.l.b16 %v5470
    %v5487 = vunpack.c.l.b16 %v5471
    %v5488 = vpack.c.b16 %v5485, %v5484
    %v5489 = vpack.c.b16 %v5487, %v5486
    %v5493 = vsel %vm848, %v5472, 0
    %5495 = vmatprep.subr.bf16.mxu0 0
    %5496 = vmatpush1.bf16.msra.mxu0 %v5488
    %5497 = vmatprep.subr.bf16.mxu0 0
    %5498 = vmatpush1.bf16.msra.mxu0 %v5489
    %5499 = vmatprep.subr.bf16.mxu0 0
    %5500 = vmatpush1.bf16.msra.mxu0 0
    %5501 = vmatprep.subr.bf16.mxu0 0
    %5502 = vmatpush1.bf16.msra.mxu0 0
    %5503 = vmatprep.subr.bf16.mxu0 0
    %5504 = vmatpush1.bf16.msra.mxu0 0
    %5505 = vmatprep.subr.bf16.mxu0 0
    %5506 = vmatpush1.bf16.msra.mxu0 0
    %5507 = vmatprep.subr.bf16.mxu0 0
    %5508 = vmatpush1.bf16.msra.mxu0 0
    %5509 = vmatprep.subr.bf16.mxu0 0
    %5510 = vmatpush1.bf16.msra.mxu0 0
    %5511 = vmatprep.subr.bf16.mxu0 0
    %5512 = vmatpush1.bf16.msra.mxu0 0
    %5513 = vmatprep.subr.bf16.mxu0 0
    %5514 = vmatpush1.bf16.msra.mxu0 0
    %5515 = vmatprep.subr.bf16.mxu0 0
    %5516 = vmatpush1.bf16.msra.mxu0 0
    %5517 = vmatprep.subr.bf16.mxu0 0
    %5518 = vmatpush1.bf16.msra.mxu0 0
    %5519 = vmatprep.subr.bf16.mxu0 0
    %5520 = vmatpush1.bf16.msra.mxu0 0
    %5521 = vmatprep.subr.bf16.mxu0 0
    %5522 = vmatpush1.bf16.msra.mxu0 0
    %5523 = vmatprep.subr.bf16.mxu0 0
    %5524 = vmatpush1.bf16.msra.mxu0 0
    %5525 = vmatprep.subr.bf16.mxu0 0
    %5526 = vmatpush1.bf16.msra.mxu0 0
    %5527 = vmatprep.mubr.bf16.mxu0 0
    %5528 = vmatmul.mubr.bf16.gmra.mrb[0].mxu0 %v5493
    %v5529 = vpop.f32.mrb[0].mxu0
    %v5530 = vadd.f32 %v5478, %v5529
    %v5531 = vpop.f32.mrb[0].mxu0
    %v5532 = vpop.f32.mrb[0].mxu0
    %v5533 = vadd.f32 %v5478, %v5532
    %v5534 = vpop.f32.mrb[0].mxu0
    %5535 = vdwg.mxu0
    %v5536 = vld [vmem:[%s73] sm:$0xf]
    %v5537 = vld [vmem:[%s73 + $0x4] sm:$0xf]
    %v5538 = vld [vmem:[%s73 + $0x8] sm:$0xf]
    %v5539 = vld [vmem:[%s73 + $0xc] sm:$0xf]
    %v5540 = vpack.c.bf16 %v4691, %v4690
    %v5541 = vld [vmem:[#allocation13] sm:$0x1]
    %v5543 = vlaneseq
    %v5544 = vshrl.u32 %v5543, 7
    %v5545 = vsub.s32 0, %v5544
    %v5546 = vrot.slane %v5541, %v5545
    %v5552 = vunpack.c.l.b16 %v5536
    %v5553 = vunpack.c.l.b16 %v5537
    %v5554 = vunpack.c.l.b16 %v5538
    %v5555 = vunpack.c.l.b16 %v5539
    %v5556 = vpack.c.b16 %v5553, %v5552
    %v5557 = vpack.c.b16 %v5555, %v5554
    %v5561 = vsel %vm848, %v5540, 0
    %5563 = vmatprep.subr.bf16.mxu0 0
    %5564 = vmatpush1.bf16.msra.mxu0 %v5556
    %5565 = vmatprep.subr.bf16.mxu0 0
    %5566 = vmatpush1.bf16.msra.mxu0 %v5557
    %5567 = vmatprep.subr.bf16.mxu0 0
    %5568 = vmatpush1.bf16.msra.mxu0 0
    %5569 = vmatprep.subr.bf16.mxu0 0
    %5570 = vmatpush1.bf16.msra.mxu0 0
    %5571 = vmatprep.subr.bf16.mxu0 0
    %5572 = vmatpush1.bf16.msra.mxu0 0
    %5573 = vmatprep.subr.bf16.mxu0 0
    %5574 = vmatpush1.bf16.msra.mxu0 0
    %5575 = vmatprep.subr.bf16.mxu0 0
    %5576 = vmatpush1.bf16.msra.mxu0 0
    %5577 = vmatprep.subr.bf16.mxu0 0
    %5578 = vmatpush1.bf16.msra.mxu0 0
    %5579 = vmatprep.subr.bf16.mxu0 0
    %5580 = vmatpush1.bf16.msra.mxu0 0
    %5581 = vmatprep.subr.bf16.mxu0 0
    %5582 = vmatpush1.bf16.msra.mxu0 0
    %5583 = vmatprep.subr.bf16.mxu0 0
    %5584 = vmatpush1.bf16.msra.mxu0 0
    %5585 = vmatprep.subr.bf16.mxu0 0
    %5586 = vmatpush1.bf16.msra.mxu0 0
    %5587 = vmatprep.subr.bf16.mxu0 0
    %5588 = vmatpush1.bf16.msra.mxu0 0
    %5589 = vmatprep.subr.bf16.mxu0 0
    %5590 = vmatpush1.bf16.msra.mxu0 0
    %5591 = vmatprep.subr.bf16.mxu0 0
    %5592 = vmatpush1.bf16.msra.mxu0 0
    %5593 = vmatprep.subr.bf16.mxu0 0
    %5594 = vmatpush1.bf16.msra.mxu0 0
    %5595 = vmatprep.mubr.bf16.mxu0 0
    %5596 = vmatmul.mubr.bf16.gmra.mrb[0].mxu0 %v5561
    %v5597 = vpop.f32.mrb[0].mxu0
    %v5598 = vadd.f32 %v5546, %v5597
    %v5599 = vpop.f32.mrb[0].mxu0
    %v5600 = vpop.f32.mrb[0].mxu0
    %v5601 = vadd.f32 %v5546, %v5600
    %v5602 = vpop.f32.mrb[0].mxu0
    %5603 = vdwg.mxu0
    %v5604 = vpack.c.bf16 %v5533, %v5530
    %v5605 = vpack.c.bf16 %v5601, %v5598
    %v5607 = vsel %vm1926, %v5604, 0
    %v5610 = vsel %vm1926, %v5605, 0
    %5612 = vmatprep.subr.bf16.mxu0 0
    %5613 = vmatpush1.bf16.xpose.msra.mxu0 %v5610
    %5614 = vmatprep.subr.bf16.mxu0 0
    %5615 = vmatpush1.bf16.xpose.msra.mxu0 0
    %5616 = vmatprep.subr.bf16.mxu0 0
    %5617 = vmatpush1.bf16.xpose.msra.mxu0 0
    %5618 = vmatprep.subr.bf16.mxu0 0
    %5619 = vmatpush1.bf16.xpose.msra.mxu0 0
    %5620 = vmatprep.subr.bf16.mxu0 0
    %5621 = vmatpush1.bf16.xpose.msra.mxu0 0
    %5622 = vmatprep.subr.bf16.mxu0 0
    %5623 = vmatpush1.bf16.xpose.msra.mxu0 0
    %5624 = vmatprep.subr.bf16.mxu0 0
    %5625 = vmatpush1.bf16.xpose.msra.mxu0 0
    %5626 = vmatprep.subr.bf16.mxu0 0
    %5627 = vmatpush1.bf16.xpose.msra.mxu0 0
    %5628 = vmatprep.subr.bf16.mxu0 0
    %5629 = vmatpush1.bf16.xpose.msra.mxu0 0
    %5630 = vmatprep.subr.bf16.mxu0 0
    %5631 = vmatpush1.bf16.xpose.msra.mxu0 0
    %5632 = vmatprep.subr.bf16.mxu0 0
    %5633 = vmatpush1.bf16.xpose.msra.mxu0 0
    %5634 = vmatprep.subr.bf16.mxu0 0
    %5635 = vmatpush1.bf16.xpose.msra.mxu0 0
    %5636 = vmatprep.subr.bf16.mxu0 0
    %5637 = vmatpush1.bf16.xpose.msra.mxu0 0
    %5638 = vmatprep.subr.bf16.mxu0 0
    %5639 = vmatpush1.bf16.xpose.msra.mxu0 0
    %5640 = vmatprep.subr.bf16.mxu0 0
    %5641 = vmatpush1.bf16.xpose.msra.mxu0 0
    %5642 = vmatprep.subr.bf16.mxu0 0
    %5643 = vmatpush1.bf16.xpose.msra.mxu0 0
    %5644 = vmatprep.mubr.bf16.mxu0 0
    %5645 = vmatmul.mubr.bf16.gmra.mrb[0].mxu0 %v5607
    %v5646 = vpop.f32.mrb[0].mxu0
    %v5647 = vadd.f32 0.0, %v5646
    %v5648 = vpop.f32.mrb[0].mxu0
    %v5649 = vpop.f32.mrb[0].mxu0
    %v5650 = vadd.f32 0.0, %v5649
    %v5651 = vpop.f32.mrb[0].mxu0
    %5652 = vdwg.mxu0
    %v5653 = vmul.f32 %v5647, 0.35355338
    %v5654 = vmul.f32 %v5650, 0.35355338
    %v5655 = vadd.f32 %v5653, %v750
    %v5656 = vadd.f32 %v5654, %v751
    %v5657 = vsel %vm1327, %v5655, -inf
    %5658 = vmax.xlane.f32.xlu0 %v5657
    %v5659 = vpop.xlane.xlu0 %5658
    %v5660 = vsel %vm1327, %v5656, -inf
    %5661 = vmax.xlane.f32.xlu0 %v5660
    %v5662 = vpop.xlane.xlu0 %5661
    %v5663 = vsub.f32 %v5655, %v5659
    %v5664 = vsub.f32 %v5656, %v5662
    %v5665 = vmul.f32 %v5663, 1.442695
    %v5666 = vpow.pop %v5665
    %v5667 = vmul.f32 %v5664, 1.442695
    %v5668 = vpow.pop %v5667
    %v5669 = vsel %vm1327, %v5666, 0.0
    %5670 = vadd.xlane.f32.xlu0 %v5669
    %v5671 = vpop.xlane.xlu0 %5670
    %v5672 = vsel %vm1327, %v5668, 0.0
    %5673 = vadd.xlane.f32.xlu0 %v5672
    %v5674 = vpop.xlane.xlu0 %5673
    %v5675 = vrcp.pop %v5671
    %v5676 = vrcp.pop %v5674
    %v5677 = vmul.f32 %v5666, %v5675
    %v5678 = vmul.f32 %v5668, %v5676
    %v5679 = vpack.c.bf16 %v5678, %v5677
    %5681 = vrot.lane.b32.xlu0 %v5605, 96
    %v5682 = vpop.permute.xlu0 %5681
    %v5685 = vsel %vm1327, %v5679, 0
    %5687 = vmatprep.subr.bf16.mxu0 0
    %5688 = vmatpush1.bf16.msra.mxu0 %v5682
    %5689 = vmatprep.subr.bf16.mxu0 0
    %5690 = vmatpush1.bf16.msra.mxu0 0
    %5691 = vmatprep.subr.bf16.mxu0 0
    %5692 = vmatpush1.bf16.msra.mxu0 0
    %5693 = vmatprep.subr.bf16.mxu0 0
    %5694 = vmatpush1.bf16.msra.mxu0 0
    %5695 = vmatprep.subr.bf16.mxu0 0
    %5696 = vmatpush1.bf16.msra.mxu0 0
    %5697 = vmatprep.subr.bf16.mxu0 0
    %5698 = vmatpush1.bf16.msra.mxu0 0
    %5699 = vmatprep.subr.bf16.mxu0 0
    %5700 = vmatpush1.bf16.msra.mxu0 0
    %5701 = vmatprep.subr.bf16.mxu0 0
    %5702 = vmatpush1.bf16.msra.mxu0 0
    %5703 = vmatprep.subr.bf16.mxu0 0
    %5704 = vmatpush1.bf16.msra.mxu0 0
    %5705 = vmatprep.subr.bf16.mxu0 0
    %5706 = vmatpush1.bf16.msra.mxu0 0
    %5707 = vmatprep.subr.bf16.mxu0 0
    %5708 = vmatpush1.bf16.msra.mxu0 0
    %5709 = vmatprep.subr.bf16.mxu0 0
    %5710 = vmatpush1.bf16.msra.mxu0 0
    %5711 = vmatprep.subr.bf16.mxu0 0
    %5712 = vmatpush1.bf16.msra.mxu0 0
    %5713 = vmatprep.subr.bf16.mxu0 0
    %5714 = vmatpush1.bf16.msra.mxu0 0
    %5715 = vmatprep.subr.bf16.mxu0 0
    %5716 = vmatpush1.bf16.msra.mxu0 0
    %5717 = vmatprep.subr.bf16.mxu0 0
    %5718 = vmatpush1.bf16.msra.mxu0 0
    %5719 = vmatprep.mubr.bf16.mxu0 0
    %5720 = vmatmul.mubr.bf16.gmra.mrb[0].mxu0 %v5685
    %v5721 = vpop.f32.mrb[0].mxu0
    %v5722 = vadd.f32 0.0, %v5721
    %v5723 = vpop.f32.mrb[0].mxu0
    %v5724 = vpop.f32.mrb[0].mxu0
    %v5725 = vadd.f32 0.0, %v5724
    %v5726 = vpop.f32.mrb[0].mxu0
    %5727 = vdwg.mxu0
    %5729 = vrot.lane.b32.xlu0 %v5604, 120
    %v5730 = vpop.permute.xlu0 %5729
    %5731 = vrot.lane.b32.xlu0 %v5605, 120
    %v5732 = vpop.permute.xlu0 %5731
    %v5734 = vsel %vm1926, %v5730, 0
    %v5737 = vsel %vm1926, %v5732, 0
    %5739 = vmatprep.subr.bf16.mxu0 0
    %5740 = vmatpush1.bf16.xpose.msra.mxu0 %v5737
    %5741 = vmatprep.subr.bf16.mxu0 0
    %5742 = vmatpush1.bf16.xpose.msra.mxu0 0
    %5743 = vmatprep.subr.bf16.mxu0 0
    %5744 = vmatpush1.bf16.xpose.msra.mxu0 0
    %5745 = vmatprep.subr.bf16.mxu0 0
    %5746 = vmatpush1.bf16.xpose.msra.mxu0 0
    %5747 = vmatprep.subr.bf16.mxu0 0
    %5748 = vmatpush1.bf16.xpose.msra.mxu0 0
    %5749 = vmatprep.subr.bf16.mxu0 0
    %5750 = vmatpush1.bf16.xpose.msra.mxu0 0
    %5751 = vmatprep.subr.bf16.mxu0 0
    %5752 = vmatpush1.bf16.xpose.msra.mxu0 0
    %5753 = vmatprep.subr.bf16.mxu0 0
    %5754 = vmatpush1.bf16.xpose.msra.mxu0 0
    %5755 = vmatprep.subr.bf16.mxu0 0
    %5756 = vmatpush1.bf16.xpose.msra.mxu0 0
    %5757 = vmatprep.subr.bf16.mxu0 0
    %5758 = vmatpush1.bf16.xpose.msra.mxu0 0
    %5759 = vmatprep.subr.bf16.mxu0 0
    %5760 = vmatpush1.bf16.xpose.msra.mxu0 0
    %5761 = vmatprep.subr.bf16.mxu0 0
    %5762 = vmatpush1.bf16.xpose.msra.mxu0 0
    %5763 = vmatprep.subr.bf16.mxu0 0
    %5764 = vmatpush1.bf16.xpose.msra.mxu0 0
    %5765 = vmatprep.subr.bf16.mxu0 0
    %5766 = vmatpush1.bf16.xpose.msra.mxu0 0
    %5767 = vmatprep.subr.bf16.mxu0 0
    %5768 = vmatpush1.bf16.xpose.msra.mxu0 0
    %5769 = vmatprep.subr.bf16.mxu0 0
    %5770 = vmatpush1.bf16.xpose.msra.mxu0 0
    %5771 = vmatprep.mubr.bf16.mxu0 0
    %5772 = vmatmul.mubr.bf16.gmra.mrb[0].mxu0 %v5734
    %v5773 = vpop.f32.mrb[0].mxu0
    %v5774 = vadd.f32 0.0, %v5773
    %v5775 = vpop.f32.mrb[0].mxu0
    %v5776 = vpop.f32.mrb[0].mxu0
    %v5777 = vadd.f32 0.0, %v5776
    %v5778 = vpop.f32.mrb[0].mxu0
    %5779 = vdwg.mxu0
    %v5780 = vmul.f32 %v5774, 0.35355338
    %v5781 = vmul.f32 %v5777, 0.35355338
    %v5782 = vadd.f32 %v5780, %v750
    %v5783 = vadd.f32 %v5781, %v751
    %v5784 = vsel %vm1327, %v5782, -inf
    %5785 = vmax.xlane.f32.xlu0 %v5784
    %v5786 = vpop.xlane.xlu0 %5785
    %v5787 = vsel %vm1327, %v5783, -inf
    %5788 = vmax.xlane.f32.xlu0 %v5787
    %v5789 = vpop.xlane.xlu0 %5788
    %v5790 = vsub.f32 %v5782, %v5786
    %v5791 = vsub.f32 %v5783, %v5789
    %v5792 = vmul.f32 %v5790, 1.442695
    %v5793 = vpow.pop %v5792
    %v5794 = vmul.f32 %v5791, 1.442695
    %v5795 = vpow.pop %v5794
    %v5796 = vsel %vm1327, %v5793, 0.0
    %5797 = vadd.xlane.f32.xlu0 %v5796
    %v5798 = vpop.xlane.xlu0 %5797
    %v5799 = vsel %vm1327, %v5795, 0.0
    %5800 = vadd.xlane.f32.xlu0 %v5799
    %v5801 = vpop.xlane.xlu0 %5800
    %v5802 = vrcp.pop %v5798
    %v5803 = vrcp.pop %v5801
    %v5804 = vmul.f32 %v5793, %v5802
    %v5805 = vmul.f32 %v5795, %v5803
    %v5806 = vpack.c.bf16 %v5805, %v5804
    %5807 = vrot.lane.b32.xlu0 %v5605, 88
    %v5808 = vpop.permute.xlu0 %5807
    %v5811 = vsel %vm1327, %v5806, 0
    %5813 = vmatprep.subr.bf16.mxu0 0
    %5814 = vmatpush1.bf16.msra.mxu0 %v5808
    %5815 = vmatprep.subr.bf16.mxu0 0
    %5816 = vmatpush1.bf16.msra.mxu0 0
    %5817 = vmatprep.subr.bf16.mxu0 0
    %5818 = vmatpush1.bf16.msra.mxu0 0
    %5819 = vmatprep.subr.bf16.mxu0 0
    %5820 = vmatpush1.bf16.msra.mxu0 0
    %5821 = vmatprep.subr.bf16.mxu0 0
    %5822 = vmatpush1.bf16.msra.mxu0 0
    %5823 = vmatprep.subr.bf16.mxu0 0
    %5824 = vmatpush1.bf16.msra.mxu0 0
    %5825 = vmatprep.subr.bf16.mxu0 0
    %5826 = vmatpush1.bf16.msra.mxu0 0
    %5827 = vmatprep.subr.bf16.mxu0 0
    %5828 = vmatpush1.bf16.msra.mxu0 0
    %5829 = vmatprep.subr.bf16.mxu0 0
    %5830 = vmatpush1.bf16.msra.mxu0 0
    %5831 = vmatprep.subr.bf16.mxu0 0
    %5832 = vmatpush1.bf16.msra.mxu0 0
    %5833 = vmatprep.subr.bf16.mxu0 0
    %5834 = vmatpush1.bf16.msra.mxu0 0
    %5835 = vmatprep.subr.bf16.mxu0 0
    %5836 = vmatpush1.bf16.msra.mxu0 0
    %5837 = vmatprep.subr.bf16.mxu0 0
    %5838 = vmatpush1.bf16.msra.mxu0 0
    %5839 = vmatprep.subr.bf16.mxu0 0
    %5840 = vmatpush1.bf16.msra.mxu0 0
    %5841 = vmatprep.subr.bf16.mxu0 0
    %5842 = vmatpush1.bf16.msra.mxu0 0
    %5843 = vmatprep.subr.bf16.mxu0 0
    %5844 = vmatpush1.bf16.msra.mxu0 0
    %5845 = vmatprep.mubr.bf16.mxu0 0
    %5846 = vmatmul.mubr.bf16.gmra.mrb[0].mxu0 %v5811
    %v5847 = vpop.f32.mrb[0].mxu0
    %v5848 = vadd.f32 0.0, %v5847
    %v5849 = vpop.f32.mrb[0].mxu0
    %v5850 = vpop.f32.mrb[0].mxu0
    %v5851 = vadd.f32 0.0, %v5850
    %v5852 = vpop.f32.mrb[0].mxu0
    %5853 = vdwg.mxu0
    %5854 = vrot.lane.b32.xlu0 %v5604, 112
    %v5855 = vpop.permute.xlu0 %5854
    %5856 = vrot.lane.b32.xlu0 %v5605, 112
    %v5857 = vpop.permute.xlu0 %5856
    %v5859 = vsel %vm1926, %v5855, 0
    %v5862 = vsel %vm1926, %v5857, 0
    %5864 = vmatprep.subr.bf16.mxu0 0
    %5865 = vmatpush1.bf16.xpose.msra.mxu0 %v5862
    %5866 = vmatprep.subr.bf16.mxu0 0
    %5867 = vmatpush1.bf16.xpose.msra.mxu0 0
    %5868 = vmatprep.subr.bf16.mxu0 0
    %5869 = vmatpush1.bf16.xpose.msra.mxu0 0
    %5870 = vmatprep.subr.bf16.mxu0 0
    %5871 = vmatpush1.bf16.xpose.msra.mxu0 0
    %5872 = vmatprep.subr.bf16.mxu0 0
    %5873 = vmatpush1.bf16.xpose.msra.mxu0 0
    %5874 = vmatprep.subr.bf16.mxu0 0
    %5875 = vmatpush1.bf16.xpose.msra.mxu0 0
    %5876 = vmatprep.subr.bf16.mxu0 0
    %5877 = vmatpush1.bf16.xpose.msra.mxu0 0
    %5878 = vmatprep.subr.bf16.mxu0 0
    %5879 = vmatpush1.bf16.xpose.msra.mxu0 0
    %5880 = vmatprep.subr.bf16.mxu0 0
    %5881 = vmatpush1.bf16.xpose.msra.mxu0 0
    %5882 = vmatprep.subr.bf16.mxu0 0
    %5883 = vmatpush1.bf16.xpose.msra.mxu0 0
    %5884 = vmatprep.subr.bf16.mxu0 0
    %5885 = vmatpush1.bf16.xpose.msra.mxu0 0
    %5886 = vmatprep.subr.bf16.mxu0 0
    %5887 = vmatpush1.bf16.xpose.msra.mxu0 0
    %5888 = vmatprep.subr.bf16.mxu0 0
    %5889 = vmatpush1.bf16.xpose.msra.mxu0 0
    %5890 = vmatprep.subr.bf16.mxu0 0
    %5891 = vmatpush1.bf16.xpose.msra.mxu0 0
    %5892 = vmatprep.subr.bf16.mxu0 0
    %5893 = vmatpush1.bf16.xpose.msra.mxu0 0
    %5894 = vmatprep.subr.bf16.mxu0 0
    %5895 = vmatpush1.bf16.xpose.msra.mxu0 0
    %5896 = vmatprep.mubr.bf16.mxu0 0
    %5897 = vmatmul.mubr.bf16.gmra.mrb[0].mxu0 %v5859
    %v5898 = vpop.f32.mrb[0].mxu0
    %v5899 = vadd.f32 0.0, %v5898
    %v5900 = vpop.f32.mrb[0].mxu0
    %v5901 = vpop.f32.mrb[0].mxu0
    %v5902 = vadd.f32 0.0, %v5901
    %v5903 = vpop.f32.mrb[0].mxu0
    %5904 = vdwg.mxu0
    %v5905 = vmul.f32 %v5899, 0.35355338
    %v5906 = vmul.f32 %v5902, 0.35355338
    %v5907 = vadd.f32 %v5905, %v750
    %v5908 = vadd.f32 %v5906, %v751
    %v5909 = vsel %vm1327, %v5907, -inf
    %5910 = vmax.xlane.f32.xlu0 %v5909
    %v5911 = vpop.xlane.xlu0 %5910
    %v5912 = vsel %vm1327, %v5908, -inf
    %5913 = vmax.xlane.f32.xlu0 %v5912
    %v5914 = vpop.xlane.xlu0 %5913
    %v5915 = vsub.f32 %v5907, %v5911
    %v5916 = vsub.f32 %v5908, %v5914
    %v5917 = vmul.f32 %v5915, 1.442695
    %v5918 = vpow.pop %v5917
    %v5919 = vmul.f32 %v5916, 1.442695
    %v5920 = vpow.pop %v5919
    %v5921 = vsel %vm1327, %v5918, 0.0
    %5922 = vadd.xlane.f32.xlu0 %v5921
    %v5923 = vpop.xlane.xlu0 %5922
    %v5924 = vsel %vm1327, %v5920, 0.0
    %5925 = vadd.xlane.f32.xlu0 %v5924
    %v5926 = vpop.xlane.xlu0 %5925
    %v5927 = vrcp.pop %v5923
    %v5928 = vrcp.pop %v5926
    %v5929 = vmul.f32 %v5918, %v5927
    %v5930 = vmul.f32 %v5920, %v5928
    %v5931 = vpack.c.bf16 %v5930, %v5929
    %5932 = vrot.lane.b32.xlu0 %v5605, 80
    %v5933 = vpop.permute.xlu0 %5932
    %v5936 = vsel %vm1327, %v5931, 0
    %5938 = vmatprep.subr.bf16.mxu0 0
    %5939 = vmatpush1.bf16.msra.mxu0 %v5933
    %5940 = vmatprep.subr.bf16.mxu0 0
    %5941 = vmatpush1.bf16.msra.mxu0 0
    %5942 = vmatprep.subr.bf16.mxu0 0
    %5943 = vmatpush1.bf16.msra.mxu0 0
    %5944 = vmatprep.subr.bf16.mxu0 0
    %5945 = vmatpush1.bf16.msra.mxu0 0
    %5946 = vmatprep.subr.bf16.mxu0 0
    %5947 = vmatpush1.bf16.msra.mxu0 0
    %5948 = vmatprep.subr.bf16.mxu0 0
    %5949 = vmatpush1.bf16.msra.mxu0 0
    %5950 = vmatprep.subr.bf16.mxu0 0
    %5951 = vmatpush1.bf16.msra.mxu0 0
    %5952 = vmatprep.subr.bf16.mxu0 0
    %5953 = vmatpush1.bf16.msra.mxu0 0
    %5954 = vmatprep.subr.bf16.mxu0 0
    %5955 = vmatpush1.bf16.msra.mxu0 0
    %5956 = vmatprep.subr.bf16.mxu0 0
    %5957 = vmatpush1.bf16.msra.mxu0 0
    %5958 = vmatprep.subr.bf16.mxu0 0
    %5959 = vmatpush1.bf16.msra.mxu0 0
    %5960 = vmatprep.subr.bf16.mxu0 0
    %5961 = vmatpush1.bf16.msra.mxu0 0
    %5962 = vmatprep.subr.bf16.mxu0 0
    %5963 = vmatpush1.bf16.msra.mxu0 0
    %5964 = vmatprep.subr.bf16.mxu0 0
    %5965 = vmatpush1.bf16.msra.mxu0 0
    %5966 = vmatprep.subr.bf16.mxu0 0
    %5967 = vmatpush1.bf16.msra.mxu0 0
    %5968 = vmatprep.subr.bf16.mxu0 0
    %5969 = vmatpush1.bf16.msra.mxu0 0
    %5970 = vmatprep.mubr.bf16.mxu0 0
    %5971 = vmatmul.mubr.bf16.gmra.mrb[0].mxu0 %v5936
    %v5972 = vpop.f32.mrb[0].mxu0
    %v5973 = vadd.f32 0.0, %v5972
    %v5974 = vpop.f32.mrb[0].mxu0
    %v5975 = vpop.f32.mrb[0].mxu0
    %v5976 = vadd.f32 0.0, %v5975
    %v5977 = vpop.f32.mrb[0].mxu0
    %5978 = vdwg.mxu0
    %5979 = vrot.lane.b32.xlu0 %v5604, 104
    %v5980 = vpop.permute.xlu0 %5979
    %5981 = vrot.lane.b32.xlu0 %v5605, 104
    %v5982 = vpop.permute.xlu0 %5981
    %v5984 = vsel %vm1926, %v5980, 0
    %v5987 = vsel %vm1926, %v5982, 0
    %5989 = vmatprep.subr.bf16.mxu0 0
    %5990 = vmatpush1.bf16.xpose.msra.mxu0 %v5987
    %5991 = vmatprep.subr.bf16.mxu0 0
    %5992 = vmatpush1.bf16.xpose.msra.mxu0 0
    %5993 = vmatprep.subr.bf16.mxu0 0
    %5994 = vmatpush1.bf16.xpose.msra.mxu0 0
    %5995 = vmatprep.subr.bf16.mxu0 0
    %5996 = vmatpush1.bf16.xpose.msra.mxu0 0
    %5997 = vmatprep.subr.bf16.mxu0 0
    %5998 = vmatpush1.bf16.xpose.msra.mxu0 0
    %5999 = vmatprep.subr.bf16.mxu0 0
    %6000 = vmatpush1.bf16.xpose.msra.mxu0 0
    %6001 = vmatprep.subr.bf16.mxu0 0
    %6002 = vmatpush1.bf16.xpose.msra.mxu0 0
    %6003 = vmatprep.subr.bf16.mxu0 0
    %6004 = vmatpush1.bf16.xpose.msra.mxu0 0
    %6005 = vmatprep.subr.bf16.mxu0 0
    %6006 = vmatpush1.bf16.xpose.msra.mxu0 0
    %6007 = vmatprep.subr.bf16.mxu0 0
    %6008 = vmatpush1.bf16.xpose.msra.mxu0 0
    %6009 = vmatprep.subr.bf16.mxu0 0
    %6010 = vmatpush1.bf16.xpose.msra.mxu0 0
    %6011 = vmatprep.subr.bf16.mxu0 0
    %6012 = vmatpush1.bf16.xpose.msra.mxu0 0
    %6013 = vmatprep.subr.bf16.mxu0 0
    %6014 = vmatpush1.bf16.xpose.msra.mxu0 0
    %6015 = vmatprep.subr.bf16.mxu0 0
    %6016 = vmatpush1.bf16.xpose.msra.mxu0 0
    %6017 = vmatprep.subr.bf16.mxu0 0
    %6018 = vmatpush1.bf16.xpose.msra.mxu0 0
    %6019 = vmatprep.subr.bf16.mxu0 0
    %6020 = vmatpush1.bf16.xpose.msra.mxu0 0
    %6021 = vmatprep.mubr.bf16.mxu0 0
    %6022 = vmatmul.mubr.bf16.gmra.mrb[0].mxu0 %v5984
    %v6023 = vpop.f32.mrb[0].mxu0
    %v6024 = vadd.f32 0.0, %v6023
    %v6025 = vpop.f32.mrb[0].mxu0
    %v6026 = vpop.f32.mrb[0].mxu0
    %v6027 = vadd.f32 0.0, %v6026
    %v6028 = vpop.f32.mrb[0].mxu0
    %6029 = vdwg.mxu0
    %v6030 = vmul.f32 %v6024, 0.35355338
    %v6031 = vmul.f32 %v6027, 0.35355338
    %v6032 = vadd.f32 %v6030, %v750
    %v6033 = vadd.f32 %v6031, %v751
    %v6034 = vsel %vm1327, %v6032, -inf
    %6035 = vmax.xlane.f32.xlu0 %v6034
    %v6036 = vpop.xlane.xlu0 %6035
    %v6037 = vsel %vm1327, %v6033, -inf
    %6038 = vmax.xlane.f32.xlu0 %v6037
    %v6039 = vpop.xlane.xlu0 %6038
    %v6040 = vsub.f32 %v6032, %v6036
    %v6041 = vsub.f32 %v6033, %v6039
    %v6042 = vmul.f32 %v6040, 1.442695
    %v6043 = vpow.pop %v6042
    %v6044 = vmul.f32 %v6041, 1.442695
    %v6045 = vpow.pop %v6044
    %v6046 = vsel %vm1327, %v6043, 0.0
    %6047 = vadd.xlane.f32.xlu0 %v6046
    %v6048 = vpop.xlane.xlu0 %6047
    %v6049 = vsel %vm1327, %v6045, 0.0
    %6050 = vadd.xlane.f32.xlu0 %v6049
    %v6051 = vpop.xlane.xlu0 %6050
    %v6052 = vrcp.pop %v6048
    %v6053 = vrcp.pop %v6051
    %v6054 = vmul.f32 %v6043, %v6052
    %v6055 = vmul.f32 %v6045, %v6053
    %v6056 = vpack.c.bf16 %v6055, %v6054
    %6057 = vrot.lane.b32.xlu0 %v5605, 72
    %v6058 = vpop.permute.xlu0 %6057
    %v6061 = vsel %vm1327, %v6056, 0
    %6063 = vmatprep.subr.bf16.mxu0 0
    %6064 = vmatpush1.bf16.msra.mxu0 %v6058
    %6065 = vmatprep.subr.bf16.mxu0 0
    %6066 = vmatpush1.bf16.msra.mxu0 0
    %6067 = vmatprep.subr.bf16.mxu0 0
    %6068 = vmatpush1.bf16.msra.mxu0 0
    %6069 = vmatprep.subr.bf16.mxu0 0
    %6070 = vmatpush1.bf16.msra.mxu0 0
    %6071 = vmatprep.subr.bf16.mxu0 0
    %6072 = vmatpush1.bf16.msra.mxu0 0
    %6073 = vmatprep.subr.bf16.mxu0 0
    %6074 = vmatpush1.bf16.msra.mxu0 0
    %6075 = vmatprep.subr.bf16.mxu0 0
    %6076 = vmatpush1.bf16.msra.mxu0 0
    %6077 = vmatprep.subr.bf16.mxu0 0
    %6078 = vmatpush1.bf16.msra.mxu0 0
    %6079 = vmatprep.subr.bf16.mxu0 0
    %6080 = vmatpush1.bf16.msra.mxu0 0
    %6081 = vmatprep.subr.bf16.mxu0 0
    %6082 = vmatpush1.bf16.msra.mxu0 0
    %6083 = vmatprep.subr.bf16.mxu0 0
    %6084 = vmatpush1.bf16.msra.mxu0 0
    %6085 = vmatprep.subr.bf16.mxu0 0
    %6086 = vmatpush1.bf16.msra.mxu0 0
    %6087 = vmatprep.subr.bf16.mxu0 0
    %6088 = vmatpush1.bf16.msra.mxu0 0
    %6089 = vmatprep.subr.bf16.mxu0 0
    %6090 = vmatpush1.bf16.msra.mxu0 0
    %6091 = vmatprep.subr.bf16.mxu0 0
    %6092 = vmatpush1.bf16.msra.mxu0 0
    %6093 = vmatprep.subr.bf16.mxu0 0
    %6094 = vmatpush1.bf16.msra.mxu0 0
    %6095 = vmatprep.mubr.bf16.mxu0 0
    %6096 = vmatmul.mubr.bf16.gmra.mrb[0].mxu0 %v6061
    %v6097 = vpop.f32.mrb[0].mxu0
    %v6098 = vadd.f32 0.0, %v6097
    %v6099 = vpop.f32.mrb[0].mxu0
    %v6100 = vpop.f32.mrb[0].mxu0
    %v6101 = vadd.f32 0.0, %v6100
    %v6102 = vpop.f32.mrb[0].mxu0
    %6103 = vdwg.mxu0
    %6106 = vrot.lane.b32.xlu0 %v5848, 8
    %v6107 = vpop.permute.xlu0 %6106
    %6108 = vrot.lane.b32.xlu0 %v5851, 8
    %v6109 = vpop.permute.xlu0 %6108
    %6114 = vrot.lane.b32.xlu0 %v5973, 16
    %v6115 = vpop.permute.xlu0 %6114
    %6116 = vrot.lane.b32.xlu0 %v5976, 16
    %v6117 = vpop.permute.xlu0 %6116
    %6122 = vrot.lane.b32.xlu0 %v6098, 24
    %v6123 = vpop.permute.xlu0 %6122
    %6124 = vrot.lane.b32.xlu0 %v6101, 24
    %v6125 = vpop.permute.xlu0 %6124
    %v6128 = vsel %vm1926, %v5722, %v6107
    %v6129 = vsel %vm1926, %v5725, %v6109
    %v6130 = vsel %vm1327, %v6128, %v6115
    %v6131 = vsel %vm1327, %v6129, %v6117
    %v6132 = vsel %vm2453, %v6130, %v6123
    %v6133 = vsel %vm2453, %v6131, %v6125
    %v6134 = vld [vmem:[%s75] sm:$0xf]
    %v6135 = vld [vmem:[%s75 + $0x4] sm:$0xf]
    %v6136 = vld [vmem:[%s75 + $0x8] sm:$0xf]
    %v6137 = vld [vmem:[%s75 + $0xc] sm:$0xf]
    %v6138 = vpack.c.bf16 %v6133, %v6132
    %v6139 = vld [vmem:[#allocation14] sm:$0x1]
    %v6141 = vlaneseq
    %v6142 = vshrl.u32 %v6141, 7
    %v6143 = vsub.s32 0, %v6142
    %v6144 = vrot.slane %v6139, %v6143
    %v6150 = vunpack.c.l.b16 %v6134
    %v6151 = vunpack.c.l.b16 %v6135
    %v6152 = vunpack.c.l.b16 %v6136
    %v6153 = vunpack.c.l.b16 %v6137
    %v6154 = vpack.c.b16 %v6151, %v6150
    %v6155 = vpack.c.b16 %v6153, %v6152
    %v6159 = vsel %vm848, %v6138, 0
    %6161 = vmatprep.subr.bf16.mxu0 0
    %6162 = vmatpush1.bf16.msra.mxu0 %v6154
    %6163 = vmatprep.subr.bf16.mxu0 0
    %6164 = vmatpush1.bf16.msra.mxu0 %v6155
    %6165 = vmatprep.subr.bf16.mxu0 0
    %6166 = vmatpush1.bf16.msra.mxu0 0
    %6167 = vmatprep.subr.bf16.mxu0 0
    %6168 = vmatpush1.bf16.msra.mxu0 0
    %6169 = vmatprep.subr.bf16.mxu0 0
    %6170 = vmatpush1.bf16.msra.mxu0 0
    %6171 = vmatprep.subr.bf16.mxu0 0
    %6172 = vmatpush1.bf16.msra.mxu0 0
    %6173 = vmatprep.subr.bf16.mxu0 0
    %6174 = vmatpush1.bf16.msra.mxu0 0
    %6175 = vmatprep.subr.bf16.mxu0 0
    %6176 = vmatpush1.bf16.msra.mxu0 0
    %6177 = vmatprep.subr.bf16.mxu0 0
    %6178 = vmatpush1.bf16.msra.mxu0 0
    %6179 = vmatprep.subr.bf16.mxu0 0
    %6180 = vmatpush1.bf16.msra.mxu0 0
    %6181 = vmatprep.subr.bf16.mxu0 0
    %6182 = vmatpush1.bf16.msra.mxu0 0
    %6183 = vmatprep.subr.bf16.mxu0 0
    %6184 = vmatpush1.bf16.msra.mxu0 0
    %6185 = vmatprep.subr.bf16.mxu0 0
    %6186 = vmatpush1.bf16.msra.mxu0 0
    %6187 = vmatprep.subr.bf16.mxu0 0
    %6188 = vmatpush1.bf16.msra.mxu0 0
    %6189 = vmatprep.subr.bf16.mxu0 0
    %6190 = vmatpush1.bf16.msra.mxu0 0
    %6191 = vmatprep.subr.bf16.mxu0 0
    %6192 = vmatpush1.bf16.msra.mxu0 0
    %6193 = vmatprep.mubr.bf16.mxu0 0
    %6194 = vmatmul.mubr.bf16.gmra.mrb[0].mxu0 %v6159
    %v6195 = vpop.f32.mrb[0].mxu0
    %v6196 = vadd.f32 %v6144, %v6195
    %v6197 = vpop.f32.mrb[0].mxu0
    %v6198 = vpop.f32.mrb[0].mxu0
    %v6199 = vadd.f32 %v6144, %v6198
    %v6200 = vpop.f32.mrb[0].mxu0
    %6201 = vdwg.mxu0
    %v6202 = vadd.f32 %v5466, %v6196
    %v6203 = vadd.f32 %v5467, %v6199
    %v6204 = vld [vmem:[#allocation23] sm:$0x1]
    %v6205 = vld [vmem:[#allocation22] sm:$0x1]
    %v6206 = vsel %vm848, %v6202, 0.0
    %6207 = vadd.xlane.f32.xlu0 %v6206
    %v6208 = vpop.xlane.xlu0 %6207
    %v6209 = vsel %vm848, %v6203, 0.0
    %6210 = vadd.xlane.f32.xlu0 %v6209
    %v6211 = vpop.xlane.xlu0 %6210
    %v6212 = vmul.f32 %v6208, %v2534
    %v6213 = vmul.f32 %v6211, %v2534
    %v6214 = vsub.f32 %v6202, %v6212
    %v6215 = vsub.f32 %v6203, %v6213
    %v6216 = vmul.f32 %v6214, %v6214
    %v6217 = vmul.f32 %v6215, %v6215
    %v6218 = vsel %vm848, %v6216, 0.0
    %6219 = vadd.xlane.f32.xlu0 %v6218
    %v6220 = vpop.xlane.xlu0 %6219
    %v6221 = vsel %vm848, %v6217, 0.0
    %6222 = vadd.xlane.f32.xlu0 %v6221
    %v6223 = vpop.xlane.xlu0 %6222
    %v6224 = vmul.f32 %v6220, %v2534
    %v6225 = vmul.f32 %v6223, %v2534
    %v6226 = vadd.f32 %v6224, 1e-05
    %v6227 = vadd.f32 %v6225, 1e-05
    %v6228 = vrsqrt.pop %v6226
    %v6229 = vrsqrt.pop %v6227
    %v6230 = vmul.f32 %v6214, %v6228
    %v6231 = vmul.f32 %v6215, %v6229
    %v6233 = vlaneseq
    %v6234 = vshrl.u32 %v6233, 7
    %v6235 = vsub.s32 0, %v6234
    %v6236 = vrot.slane %v6204, %v6235
    %v6238 = vmul.f32 %v6230, %v6236
    %v6239 = vmul.f32 %v6231, %v6236
    %v6241 = vlaneseq
    %v6242 = vshrl.u32 %v6241, 7
    %v6243 = vsub.s32 0, %v6242
    %v6244 = vrot.slane %v6205, %v6243
    %v6246 = vadd.f32 %v6238, %v6244
    %v6247 = vadd.f32 %v6239, %v6244
    %v6248 = vld [vmem:[%s83] sm:$0xff]
    %v6249 = vld [vmem:[%s83 + $0x8] sm:$0xff]
    %v6250 = vld [vmem:[%s83 + $0x10] sm:$0xff]
    %v6251 = vld [vmem:[%s83 + $0x18] sm:$0xff]
    %v6252 = vld [vmem:[%s83 + $0x20] sm:$0xff]
    %v6253 = vld [vmem:[%s83 + $0x28] sm:$0xff]
    %v6254 = vld [vmem:[%s83 + $0x30] sm:$0xff]
    %v6255 = vld [vmem:[%s83 + $0x38] sm:$0xff]
    %v6256 = vld [vmem:[%s83 + $0x40] sm:$0xff]
    %v6257 = vld [vmem:[%s83 + $0x48] sm:$0xff]
    %v6258 = vld [vmem:[%s83 + $0x50] sm:$0xff]
    %v6259 = vld [vmem:[%s83 + $0x58] sm:$0xff]
    %v6260 = vld [vmem:[%s83 + $0x60] sm:$0xff]
    %v6261 = vld [vmem:[%s83 + $0x68] sm:$0xff]
    %v6262 = vld [vmem:[%s83 + $0x70] sm:$0xff]
    %v6263 = vld [vmem:[%s83 + $0x78] sm:$0xff]
    %v6264 = vld [vmem:[%s83 + $0x80] sm:$0xff]
    %v6265 = vld [vmem:[%s83 + $0x88] sm:$0xff]
    %v6266 = vld [vmem:[%s83 + $0x90] sm:$0xff]
    %v6267 = vld [vmem:[%s83 + $0x98] sm:$0xff]
    %v6268 = vld [vmem:[%s83 + $0xa0] sm:$0xff]
    %v6269 = vld [vmem:[%s83 + $0xa8] sm:$0xff]
    %v6270 = vld [vmem:[%s83 + $0xb0] sm:$0xff]
    %v6271 = vld [vmem:[%s83 + $0xb8] sm:$0xff]
    %v6272 = vld [vmem:[%s83 + $0xc0] sm:$0xff]
    %v6273 = vld [vmem:[%s83 + $0xc8] sm:$0xff]
    %v6274 = vld [vmem:[%s83 + $0xd0] sm:$0xff]
    %v6275 = vld [vmem:[%s83 + $0xd8] sm:$0xff]
    %v6276 = vld [vmem:[%s83 + $0xe0] sm:$0xff]
    %v6277 = vld [vmem:[%s83 + $0xe8] sm:$0xff]
    %v6278 = vld [vmem:[%s83 + $0xf0] sm:$0xff]
    %v6279 = vld [vmem:[%s83 + $0xf8] sm:$0xff]
    %v6280 = vpack.c.bf16 %v6247, %v6246
    %v6281 = vld [vmem:[%s79] sm:$0xff]
    %v6282 = vld [vmem:[%s79 + $0x8] sm:$0xff]
    %v6285 = vlaneseq
    %v6286 = vshrl.u32 %v6285, 7
    %v6287 = vsub.s32 0, %v6286
    %v6288 = vrot.slane %v6281, %v6287
    %v6289 = vlaneseq
    %v6290 = vshrl.u32 %v6289, 7
    %v6291 = vsub.s32 1, %v6290
    %v6292 = vrot.slane %v6281, %v6291
    %v6293 = vlaneseq
    %v6294 = vshrl.u32 %v6293, 7
    %v6295 = vsub.s32 2, %v6294
    %v6296 = vrot.slane %v6281, %v6295
    %v6297 = vlaneseq
    %v6298 = vshrl.u32 %v6297, 7
    %v6299 = vsub.s32 3, %v6298
    %v6300 = vrot.slane %v6281, %v6299
    %v6301 = vlaneseq
    %v6302 = vshrl.u32 %v6301, 7
    %v6303 = vsub.s32 4, %v6302
    %v6304 = vrot.slane %v6281, %v6303
    %v6305 = vlaneseq
    %v6306 = vshrl.u32 %v6305, 7
    %v6307 = vsub.s32 5, %v6306
    %v6308 = vrot.slane %v6281, %v6307
    %v6309 = vlaneseq
    %v6310 = vshrl.u32 %v6309, 7
    %v6311 = vsub.s32 6, %v6310
    %v6312 = vrot.slane %v6281, %v6311
    %v6313 = vlaneseq
    %v6314 = vshrl.u32 %v6313, 7
    %v6315 = vsub.s32 7, %v6314
    %v6316 = vrot.slane %v6281, %v6315
    %v6317 = vlaneseq
    %v6318 = vshrl.u32 %v6317, 7
    %v6319 = vsub.s32 0, %v6318
    %v6320 = vrot.slane %v6282, %v6319
    %v6321 = vlaneseq
    %v6322 = vshrl.u32 %v6321, 7
    %v6323 = vsub.s32 1, %v6322
    %v6324 = vrot.slane %v6282, %v6323
    %v6325 = vlaneseq
    %v6326 = vshrl.u32 %v6325, 7
    %v6327 = vsub.s32 2, %v6326
    %v6328 = vrot.slane %v6282, %v6327
    %v6329 = vlaneseq
    %v6330 = vshrl.u32 %v6329, 7
    %v6331 = vsub.s32 3, %v6330
    %v6332 = vrot.slane %v6282, %v6331
    %v6333 = vlaneseq
    %v6334 = vshrl.u32 %v6333, 7
    %v6335 = vsub.s32 4, %v6334
    %v6336 = vrot.slane %v6282, %v6335
    %v6337 = vlaneseq
    %v6338 = vshrl.u32 %v6337, 7
    %v6339 = vsub.s32 5, %v6338
    %v6340 = vrot.slane %v6282, %v6339
    %v6341 = vlaneseq
    %v6342 = vshrl.u32 %v6341, 7
    %v6343 = vsub.s32 6, %v6342
    %v6344 = vrot.slane %v6282, %v6343
    %v6345 = vlaneseq
    %v6346 = vshrl.u32 %v6345, 7
    %v6347 = vsub.s32 7, %v6346
    %v6348 = vrot.slane %v6282, %v6347
    %v6397 = vunpack.c.l.b16 %v6248
    %v6398 = vunpack.c.h.b16 %v6248
    %v6399 = vunpack.c.l.b16 %v6249
    %v6400 = vunpack.c.h.b16 %v6249
    %v6401 = vunpack.c.l.b16 %v6250
    %v6402 = vunpack.c.h.b16 %v6250
    %v6403 = vunpack.c.l.b16 %v6251
    %v6404 = vunpack.c.h.b16 %v6251
    %v6405 = vunpack.c.l.b16 %v6252
    %v6406 = vunpack.c.h.b16 %v6252
    %v6407 = vunpack.c.l.b16 %v6253
    %v6408 = vunpack.c.h.b16 %v6253
    %v6409 = vunpack.c.l.b16 %v6254
    %v6410 = vunpack.c.h.b16 %v6254
    %v6411 = vunpack.c.l.b16 %v6255
    %v6412 = vunpack.c.h.b16 %v6255
    %v6413 = vunpack.c.l.b16 %v6256
    %v6414 = vunpack.c.h.b16 %v6256
    %v6415 = vunpack.c.l.b16 %v6257
    %v6416 = vunpack.c.h.b16 %v6257
    %v6417 = vunpack.c.l.b16 %v6258
    %v6418 = vunpack.c.h.b16 %v6258
    %v6419 = vunpack.c.l.b16 %v6259
    %v6420 = vunpack.c.h.b16 %v6259
    %v6421 = vunpack.c.l.b16 %v6260
    %v6422 = vunpack.c.h.b16 %v6260
    %v6423 = vunpack.c.l.b16 %v6261
    %v6424 = vunpack.c.h.b16 %v6261
    %v6425 = vunpack.c.l.b16 %v6262
    %v6426 = vunpack.c.h.b16 %v6262
    %v6427 = vunpack.c.l.b16 %v6263
    %v6428 = vunpack.c.h.b16 %v6263
    %v6429 = vunpack.c.l.b16 %v6264
    %v6430 = vunpack.c.h.b16 %v6264
    %v6431 = vunpack.c.l.b16 %v6265
    %v6432 = vunpack.c.h.b16 %v6265
    %v6433 = vunpack.c.l.b16 %v6266
    %v6434 = vunpack.c.h.b16 %v6266
    %v6435 = vunpack.c.l.b16 %v6267
    %v6436 = vunpack.c.h.b16 %v6267
    %v6437 = vunpack.c.l.b16 %v6268
    %v6438 = vunpack.c.h.b16 %v6268
    %v6439 = vunpack.c.l.b16 %v6269
    %v6440 = vunpack.c.h.b16 %v6269
    %v6441 = vunpack.c.l.b16 %v6270
    %v6442 = vunpack.c.h.b16 %v6270
    %v6443 = vunpack.c.l.b16 %v6271
    %v6444 = vunpack.c.h.b16 %v6271
    %v6445 = vunpack.c.l.b16 %v6272
    %v6446 = vunpack.c.h.b16 %v6272
    %v6447 = vunpack.c.l.b16 %v6273
    %v6448 = vunpack.c.h.b16 %v6273
    %v6449 = vunpack.c.l.b16 %v6274
    %v6450 = vunpack.c.h.b16 %v6274
    %v6451 = vunpack.c.l.b16 %v6275
    %v6452 = vunpack.c.h.b16 %v6275
    %v6453 = vunpack.c.l.b16 %v6276
    %v6454 = vunpack.c.h.b16 %v6276
    %v6455 = vunpack.c.l.b16 %v6277
    %v6456 = vunpack.c.h.b16 %v6277
    %v6457 = vunpack.c.l.b16 %v6278
    %v6458 = vunpack.c.h.b16 %v6278
    %v6459 = vunpack.c.l.b16 %v6279
    %v6460 = vunpack.c.h.b16 %v6279
    %v6461 = vpack.c.b16 %v6413, %v6397
    %v6462 = vpack.c.b16 %v6414, %v6398
    %v6463 = vpack.c.b16 %v6415, %v6399
    %v6464 = vpack.c.b16 %v6416, %v6400
    %v6465 = vpack.c.b16 %v6417, %v6401
    %v6466 = vpack.c.b16 %v6418, %v6402
    %v6467 = vpack.c.b16 %v6419, %v6403
    %v6468 = vpack.c.b16 %v6420, %v6404
    %v6469 = vpack.c.b16 %v6421, %v6405
    %v6470 = vpack.c.b16 %v6422, %v6406
    %v6471 = vpack.c.b16 %v6423, %v6407
    %v6472 = vpack.c.b16 %v6424, %v6408
    %v6473 = vpack.c.b16 %v6425, %v6409
    %v6474 = vpack.c.b16 %v6426, %v6410
    %v6475 = vpack.c.b16 %v6427, %v6411
    %v6476 = vpack.c.b16 %v6428, %v6412
    %v6477 = vpack.c.b16 %v6445, %v6429
    %v6478 = vpack.c.b16 %v6446, %v6430
    %v6479 = vpack.c.b16 %v6447, %v6431
    %v6480 = vpack.c.b16 %v6448, %v6432
    %v6481 = vpack.c.b16 %v6449, %v6433
    %v6482 = vpack.c.b16 %v6450, %v6434
    %v6483 = vpack.c.b16 %v6451, %v6435
    %v6484 = vpack.c.b16 %v6452, %v6436
    %v6485 = vpack.c.b16 %v6453, %v6437
    %v6486 = vpack.c.b16 %v6454, %v6438
    %v6487 = vpack.c.b16 %v6455, %v6439
    %v6488 = vpack.c.b16 %v6456, %v6440
    %v6489 = vpack.c.b16 %v6457, %v6441
    %v6490 = vpack.c.b16 %v6458, %v6442
    %v6491 = vpack.c.b16 %v6459, %v6443
    %v6492 = vpack.c.b16 %v6460, %v6444
    %v6526 = vsel %vm848, %v6280, 0
    %6528 = vmatprep.subr.bf16.mxu0 %v6462
    %6529 = vmatpush1.bf16.msra.mxu0 %v6461
    %6530 = vmatprep.subr.bf16.mxu0 %v6478
    %6531 = vmatpush1.bf16.msra.mxu0 %v6477
    %6532 = vmatprep.subr.bf16.mxu0 0
    %6533 = vmatpush1.bf16.msra.mxu0 0
    %6534 = vmatprep.subr.bf16.mxu0 0
    %6535 = vmatpush1.bf16.msra.mxu0 0
    %6536 = vmatprep.subr.bf16.mxu0 0
    %6537 = vmatpush1.bf16.msra.mxu0 0
    %6538 = vmatprep.subr.bf16.mxu0 0
    %6539 = vmatpush1.bf16.msra.mxu0 0
    %6540 = vmatprep.subr.bf16.mxu0 0
    %6541 = vmatpush1.bf16.msra.mxu0 0
    %6542 = vmatprep.subr.bf16.mxu0 0
    %6543 = vmatpush1.bf16.msra.mxu0 0
    %6544 = vmatprep.subr.bf16.mxu0 0
    %6545 = vmatpush1.bf16.msra.mxu0 0
    %6546 = vmatprep.subr.bf16.mxu0 0
    %6547 = vmatpush1.bf16.msra.mxu0 0
    %6548 = vmatprep.subr.bf16.mxu0 0
    %6549 = vmatpush1.bf16.msra.mxu0 0
    %6550 = vmatprep.subr.bf16.mxu0 0
    %6551 = vmatpush1.bf16.msra.mxu0 0
    %6552 = vmatprep.subr.bf16.mxu0 0
    %6553 = vmatpush1.bf16.msra.mxu0 0
    %6554 = vmatprep.subr.bf16.mxu0 0
    %6555 = vmatpush1.bf16.msra.mxu0 0
    %6556 = vmatprep.subr.bf16.mxu0 0
    %6557 = vmatpush1.bf16.msra.mxu0 0
    %6558 = vmatprep.subr.bf16.mxu0 0
    %6559 = vmatpush1.bf16.msra.mxu0 0
    %6560 = vmatprep.mubr.bf16.mxu0 0
    %6561 = vmatmul.mubr.bf16.gmra.mrb[0].mxu0 %v6526
    %v6562 = vpop.f32.mrb[0].mxu0
    %v6563 = vadd.f32 %v6288, %v6562
    %v6564 = vpop.f32.mrb[0].mxu0
    %v6565 = vadd.f32 %v6292, %v6564
    %v6566 = vpop.f32.mrb[0].mxu0
    %v6567 = vadd.f32 %v6288, %v6566
    %v6568 = vpop.f32.mrb[0].mxu0
    %v6569 = vadd.f32 %v6292, %v6568
    %6570 = vdwg.mxu0
    %6571 = vmatprep.subr.bf16.mxu0 %v6464
    %6572 = vmatpush1.bf16.msra.mxu0 %v6463
    %6573 = vmatprep.subr.bf16.mxu0 %v6480
    %6574 = vmatpush1.bf16.msra.mxu0 %v6479
    %6575 = vmatprep.subr.bf16.mxu0 0
    %6576 = vmatpush1.bf16.msra.mxu0 0
    %6577 = vmatprep.subr.bf16.mxu0 0
    %6578 = vmatpush1.bf16.msra.mxu0 0
    %6579 = vmatprep.subr.bf16.mxu0 0
    %6580 = vmatpush1.bf16.msra.mxu0 0
    %6581 = vmatprep.subr.bf16.mxu0 0
    %6582 = vmatpush1.bf16.msra.mxu0 0
    %6583 = vmatprep.subr.bf16.mxu0 0
    %6584 = vmatpush1.bf16.msra.mxu0 0
    %6585 = vmatprep.subr.bf16.mxu0 0
    %6586 = vmatpush1.bf16.msra.mxu0 0
    %6587 = vmatprep.subr.bf16.mxu0 0
    %6588 = vmatpush1.bf16.msra.mxu0 0
    %6589 = vmatprep.subr.bf16.mxu0 0
    %6590 = vmatpush1.bf16.msra.mxu0 0
    %6591 = vmatprep.subr.bf16.mxu0 0
    %6592 = vmatpush1.bf16.msra.mxu0 0
    %6593 = vmatprep.subr.bf16.mxu0 0
    %6594 = vmatpush1.bf16.msra.mxu0 0
    %6595 = vmatprep.subr.bf16.mxu0 0
    %6596 = vmatpush1.bf16.msra.mxu0 0
    %6597 = vmatprep.subr.bf16.mxu0 0
    %6598 = vmatpush1.bf16.msra.mxu0 0
    %6599 = vmatprep.subr.bf16.mxu0 0
    %6600 = vmatpush1.bf16.msra.mxu0 0
    %6601 = vmatprep.subr.bf16.mxu0 0
    %6602 = vmatpush1.bf16.msra.mxu0 0
    %6603 = vmatprep.mubr.bf16.mxu0 0
    %6604 = vmatmul.mubr.bf16.gmra.mrb[0].mxu0 %v6526
    %v6605 = vpop.f32.mrb[0].mxu0
    %v6606 = vadd.f32 %v6296, %v6605
    %v6607 = vpop.f32.mrb[0].mxu0
    %v6608 = vadd.f32 %v6300, %v6607
    %v6609 = vpop.f32.mrb[0].mxu0
    %v6610 = vadd.f32 %v6296, %v6609
    %v6611 = vpop.f32.mrb[0].mxu0
    %v6612 = vadd.f32 %v6300, %v6611
    %6613 = vdwg.mxu0
    %6614 = vmatprep.subr.bf16.mxu0 %v6466
    %6615 = vmatpush1.bf16.msra.mxu0 %v6465
    %6616 = vmatprep.subr.bf16.mxu0 %v6482
    %6617 = vmatpush1.bf16.msra.mxu0 %v6481
    %6618 = vmatprep.subr.bf16.mxu0 0
    %6619 = vmatpush1.bf16.msra.mxu0 0
    %6620 = vmatprep.subr.bf16.mxu0 0
    %6621 = vmatpush1.bf16.msra.mxu0 0
    %6622 = vmatprep.subr.bf16.mxu0 0
    %6623 = vmatpush1.bf16.msra.mxu0 0
    %6624 = vmatprep.subr.bf16.mxu0 0
    %6625 = vmatpush1.bf16.msra.mxu0 0
    %6626 = vmatprep.subr.bf16.mxu0 0
    %6627 = vmatpush1.bf16.msra.mxu0 0
    %6628 = vmatprep.subr.bf16.mxu0 0
    %6629 = vmatpush1.bf16.msra.mxu0 0
    %6630 = vmatprep.subr.bf16.mxu0 0
    %6631 = vmatpush1.bf16.msra.mxu0 0
    %6632 = vmatprep.subr.bf16.mxu0 0
    %6633 = vmatpush1.bf16.msra.mxu0 0
    %6634 = vmatprep.subr.bf16.mxu0 0
    %6635 = vmatpush1.bf16.msra.mxu0 0
    %6636 = vmatprep.subr.bf16.mxu0 0
    %6637 = vmatpush1.bf16.msra.mxu0 0
    %6638 = vmatprep.subr.bf16.mxu0 0
    %6639 = vmatpush1.bf16.msra.mxu0 0
    %6640 = vmatprep.subr.bf16.mxu0 0
    %6641 = vmatpush1.bf16.msra.mxu0 0
    %6642 = vmatprep.subr.bf16.mxu0 0
    %6643 = vmatpush1.bf16.msra.mxu0 0
    %6644 = vmatprep.subr.bf16.mxu0 0
    %6645 = vmatpush1.bf16.msra.mxu0 0
    %6646 = vmatprep.mubr.bf16.mxu0 0
    %6647 = vmatmul.mubr.bf16.gmra.mrb[0].mxu0 %v6526
    %v6648 = vpop.f32.mrb[0].mxu0
    %v6649 = vadd.f32 %v6304, %v6648
    %v6650 = vpop.f32.mrb[0].mxu0
    %v6651 = vadd.f32 %v6308, %v6650
    %v6652 = vpop.f32.mrb[0].mxu0
    %v6653 = vadd.f32 %v6304, %v6652
    %v6654 = vpop.f32.mrb[0].mxu0
    %v6655 = vadd.f32 %v6308, %v6654
    %6656 = vdwg.mxu0
    %6657 = vmatprep.subr.bf16.mxu0 %v6468
    %6658 = vmatpush1.bf16.msra.mxu0 %v6467
    %6659 = vmatprep.subr.bf16.mxu0 %v6484
    %6660 = vmatpush1.bf16.msra.mxu0 %v6483
    %6661 = vmatprep.subr.bf16.mxu0 0
    %6662 = vmatpush1.bf16.msra.mxu0 0
    %6663 = vmatprep.subr.bf16.mxu0 0
    %6664 = vmatpush1.bf16.msra.mxu0 0
    %6665 = vmatprep.subr.bf16.mxu0 0
    %6666 = vmatpush1.bf16.msra.mxu0 0
    %6667 = vmatprep.subr.bf16.mxu0 0
    %6668 = vmatpush1.bf16.msra.mxu0 0
    %6669 = vmatprep.subr.bf16.mxu0 0
    %6670 = vmatpush1.bf16.msra.mxu0 0
    %6671 = vmatprep.subr.bf16.mxu0 0
    %6672 = vmatpush1.bf16.msra.mxu0 0
    %6673 = vmatprep.subr.bf16.mxu0 0
    %6674 = vmatpush1.bf16.msra.mxu0 0
    %6675 = vmatprep.subr.bf16.mxu0 0
    %6676 = vmatpush1.bf16.msra.mxu0 0
    %6677 = vmatprep.subr.bf16.mxu0 0
    %6678 = vmatpush1.bf16.msra.mxu0 0
    %6679 = vmatprep.subr.bf16.mxu0 0
    %6680 = vmatpush1.bf16.msra.mxu0 0
    %6681 = vmatprep.subr.bf16.mxu0 0
    %6682 = vmatpush1.bf16.msra.mxu0 0
    %6683 = vmatprep.subr.bf16.mxu0 0
    %6684 = vmatpush1.bf16.msra.mxu0 0
    %6685 = vmatprep.subr.bf16.mxu0 0
    %6686 = vmatpush1.bf16.msra.mxu0 0
    %6687 = vmatprep.subr.bf16.mxu0 0
    %6688 = vmatpush1.bf16.msra.mxu0 0
    %6689 = vmatprep.mubr.bf16.mxu0 0
    %6690 = vmatmul.mubr.bf16.gmra.mrb[0].mxu0 %v6526
    %v6691 = vpop.f32.mrb[0].mxu0
    %v6692 = vadd.f32 %v6312, %v6691
    %v6693 = vpop.f32.mrb[0].mxu0
    %v6694 = vadd.f32 %v6316, %v6693
    %v6695 = vpop.f32.mrb[0].mxu0
    %v6696 = vadd.f32 %v6312, %v6695
    %v6697 = vpop.f32.mrb[0].mxu0
    %v6698 = vadd.f32 %v6316, %v6697
    %6699 = vdwg.mxu0
    %6700 = vmatprep.subr.bf16.mxu0 %v6470
    %6701 = vmatpush1.bf16.msra.mxu0 %v6469
    %6702 = vmatprep.subr.bf16.mxu0 %v6486
    %6703 = vmatpush1.bf16.msra.mxu0 %v6485
    %6704 = vmatprep.subr.bf16.mxu0 0
    %6705 = vmatpush1.bf16.msra.mxu0 0
    %6706 = vmatprep.subr.bf16.mxu0 0
    %6707 = vmatpush1.bf16.msra.mxu0 0
    %6708 = vmatprep.subr.bf16.mxu0 0
    %6709 = vmatpush1.bf16.msra.mxu0 0
    %6710 = vmatprep.subr.bf16.mxu0 0
    %6711 = vmatpush1.bf16.msra.mxu0 0
    %6712 = vmatprep.subr.bf16.mxu0 0
    %6713 = vmatpush1.bf16.msra.mxu0 0
    %6714 = vmatprep.subr.bf16.mxu0 0
    %6715 = vmatpush1.bf16.msra.mxu0 0
    %6716 = vmatprep.subr.bf16.mxu0 0
    %6717 = vmatpush1.bf16.msra.mxu0 0
    %6718 = vmatprep.subr.bf16.mxu0 0
    %6719 = vmatpush1.bf16.msra.mxu0 0
    %6720 = vmatprep.subr.bf16.mxu0 0
    %6721 = vmatpush1.bf16.msra.mxu0 0
    %6722 = vmatprep.subr.bf16.mxu0 0
    %6723 = vmatpush1.bf16.msra.mxu0 0
    %6724 = vmatprep.subr.bf16.mxu0 0
    %6725 = vmatpush1.bf16.msra.mxu0 0
    %6726 = vmatprep.subr.bf16.mxu0 0
    %6727 = vmatpush1.bf16.msra.mxu0 0
    %6728 = vmatprep.subr.bf16.mxu0 0
    %6729 = vmatpush1.bf16.msra.mxu0 0
    %6730 = vmatprep.subr.bf16.mxu0 0
    %6731 = vmatpush1.bf16.msra.mxu0 0
    %6732 = vmatprep.mubr.bf16.mxu0 0
    %6733 = vmatmul.mubr.bf16.gmra.mrb[0].mxu0 %v6526
    %v6734 = vpop.f32.mrb[0].mxu0
    %v6735 = vadd.f32 %v6320, %v6734
    %v6736 = vpop.f32.mrb[0].mxu0
    %v6737 = vadd.f32 %v6324, %v6736
    %v6738 = vpop.f32.mrb[0].mxu0
    %v6739 = vadd.f32 %v6320, %v6738
    %v6740 = vpop.f32.mrb[0].mxu0
    %v6741 = vadd.f32 %v6324, %v6740
    %6742 = vdwg.mxu0
    %6743 = vmatprep.subr.bf16.mxu0 %v6472
    %6744 = vmatpush1.bf16.msra.mxu0 %v6471
    %6745 = vmatprep.subr.bf16.mxu0 %v6488
    %6746 = vmatpush1.bf16.msra.mxu0 %v6487
    %6747 = vmatprep.subr.bf16.mxu0 0
    %6748 = vmatpush1.bf16.msra.mxu0 0
    %6749 = vmatprep.subr.bf16.mxu0 0
    %6750 = vmatpush1.bf16.msra.mxu0 0
    %6751 = vmatprep.subr.bf16.mxu0 0
    %6752 = vmatpush1.bf16.msra.mxu0 0
    %6753 = vmatprep.subr.bf16.mxu0 0
    %6754 = vmatpush1.bf16.msra.mxu0 0
    %6755 = vmatprep.subr.bf16.mxu0 0
    %6756 = vmatpush1.bf16.msra.mxu0 0
    %6757 = vmatprep.subr.bf16.mxu0 0
    %6758 = vmatpush1.bf16.msra.mxu0 0
    %6759 = vmatprep.subr.bf16.mxu0 0
    %6760 = vmatpush1.bf16.msra.mxu0 0
    %6761 = vmatprep.subr.bf16.mxu0 0
    %6762 = vmatpush1.bf16.msra.mxu0 0
    %6763 = vmatprep.subr.bf16.mxu0 0
    %6764 = vmatpush1.bf16.msra.mxu0 0
    %6765 = vmatprep.subr.bf16.mxu0 0
    %6766 = vmatpush1.bf16.msra.mxu0 0
    %6767 = vmatprep.subr.bf16.mxu0 0
    %6768 = vmatpush1.bf16.msra.mxu0 0
    %6769 = vmatprep.subr.bf16.mxu0 0
    %6770 = vmatpush1.bf16.msra.mxu0 0
    %6771 = vmatprep.subr.bf16.mxu0 0
    %6772 = vmatpush1.bf16.msra.mxu0 0
    %6773 = vmatprep.subr.bf16.mxu0 0
    %6774 = vmatpush1.bf16.msra.mxu0 0
    %6775 = vmatprep.mubr.bf16.mxu0 0
    %6776 = vmatmul.mubr.bf16.gmra.mrb[0].mxu0 %v6526
    %v6777 = vpop.f32.mrb[0].mxu0
    %v6778 = vadd.f32 %v6328, %v6777
    %v6779 = vpop.f32.mrb[0].mxu0
    %v6780 = vadd.f32 %v6332, %v6779
    %v6781 = vpop.f32.mrb[0].mxu0
    %v6782 = vadd.f32 %v6328, %v6781
    %v6783 = vpop.f32.mrb[0].mxu0
    %v6784 = vadd.f32 %v6332, %v6783
    %6785 = vdwg.mxu0
    %6786 = vmatprep.subr.bf16.mxu0 %v6474
    %6787 = vmatpush1.bf16.msra.mxu0 %v6473
    %6788 = vmatprep.subr.bf16.mxu0 %v6490
    %6789 = vmatpush1.bf16.msra.mxu0 %v6489
    %6790 = vmatprep.subr.bf16.mxu0 0
    %6791 = vmatpush1.bf16.msra.mxu0 0
    %6792 = vmatprep.subr.bf16.mxu0 0
    %6793 = vmatpush1.bf16.msra.mxu0 0
    %6794 = vmatprep.subr.bf16.mxu0 0
    %6795 = vmatpush1.bf16.msra.mxu0 0
    %6796 = vmatprep.subr.bf16.mxu0 0
    %6797 = vmatpush1.bf16.msra.mxu0 0
    %6798 = vmatprep.subr.bf16.mxu0 0
    %6799 = vmatpush1.bf16.msra.mxu0 0
    %6800 = vmatprep.subr.bf16.mxu0 0
    %6801 = vmatpush1.bf16.msra.mxu0 0
    %6802 = vmatprep.subr.bf16.mxu0 0
    %6803 = vmatpush1.bf16.msra.mxu0 0
    %6804 = vmatprep.subr.bf16.mxu0 0
    %6805 = vmatpush1.bf16.msra.mxu0 0
    %6806 = vmatprep.subr.bf16.mxu0 0
    %6807 = vmatpush1.bf16.msra.mxu0 0
    %6808 = vmatprep.subr.bf16.mxu0 0
    %6809 = vmatpush1.bf16.msra.mxu0 0
    %6810 = vmatprep.subr.bf16.mxu0 0
    %6811 = vmatpush1.bf16.msra.mxu0 0
    %6812 = vmatprep.subr.bf16.mxu0 0
    %6813 = vmatpush1.bf16.msra.mxu0 0
    %6814 = vmatprep.subr.bf16.mxu0 0
    %6815 = vmatpush1.bf16.msra.mxu0 0
    %6816 = vmatprep.subr.bf16.mxu0 0
    %6817 = vmatpush1.bf16.msra.mxu0 0
    %6818 = vmatprep.mubr.bf16.mxu0 0
    %6819 = vmatmul.mubr.bf16.gmra.mrb[0].mxu0 %v6526
    %v6820 = vpop.f32.mrb[0].mxu0
    %v6821 = vadd.f32 %v6336, %v6820
    %v6822 = vpop.f32.mrb[0].mxu0
    %v6823 = vadd.f32 %v6340, %v6822
    %v6824 = vpop.f32.mrb[0].mxu0
    %v6825 = vadd.f32 %v6336, %v6824
    %v6826 = vpop.f32.mrb[0].mxu0
    %v6827 = vadd.f32 %v6340, %v6826
    %6828 = vdwg.mxu0
    %6829 = vmatprep.subr.bf16.mxu0 %v6476
    %6830 = vmatpush1.bf16.msra.mxu0 %v6475
    %6831 = vmatprep.subr.bf16.mxu0 %v6492
    %6832 = vmatpush1.bf16.msra.mxu0 %v6491
    %6833 = vmatprep.subr.bf16.mxu0 0
    %6834 = vmatpush1.bf16.msra.mxu0 0
    %6835 = vmatprep.subr.bf16.mxu0 0
    %6836 = vmatpush1.bf16.msra.mxu0 0
    %6837 = vmatprep.subr.bf16.mxu0 0
    %6838 = vmatpush1.bf16.msra.mxu0 0
    %6839 = vmatprep.subr.bf16.mxu0 0
    %6840 = vmatpush1.bf16.msra.mxu0 0
    %6841 = vmatprep.subr.bf16.mxu0 0
    %6842 = vmatpush1.bf16.msra.mxu0 0
    %6843 = vmatprep.subr.bf16.mxu0 0
    %6844 = vmatpush1.bf16.msra.mxu0 0
    %6845 = vmatprep.subr.bf16.mxu0 0
    %6846 = vmatpush1.bf16.msra.mxu0 0
    %6847 = vmatprep.subr.bf16.mxu0 0
    %6848 = vmatpush1.bf16.msra.mxu0 0
    %6849 = vmatprep.subr.bf16.mxu0 0
    %6850 = vmatpush1.bf16.msra.mxu0 0
    %6851 = vmatprep.subr.bf16.mxu0 0
    %6852 = vmatpush1.bf16.msra.mxu0 0
    %6853 = vmatprep.subr.bf16.mxu0 0
    %6854 = vmatpush1.bf16.msra.mxu0 0
    %6855 = vmatprep.subr.bf16.mxu0 0
    %6856 = vmatpush1.bf16.msra.mxu0 0
    %6857 = vmatprep.subr.bf16.mxu0 0
    %6858 = vmatpush1.bf16.msra.mxu0 0
    %6859 = vmatprep.subr.bf16.mxu0 0
    %6860 = vmatpush1.bf16.msra.mxu0 0
    %6861 = vmatprep.mubr.bf16.mxu0 0
    %6862 = vmatmul.mubr.bf16.gmra.mrb[0].mxu0 %v6526
    %v6863 = vpop.f32.mrb[0].mxu0
    %v6864 = vadd.f32 %v6344, %v6863
    %v6865 = vpop.f32.mrb[0].mxu0
    %v6866 = vadd.f32 %v6348, %v6865
    %v6867 = vpop.f32.mrb[0].mxu0
    %v6868 = vadd.f32 %v6344, %v6867
    %v6869 = vpop.f32.mrb[0].mxu0
    %v6870 = vadd.f32 %v6348, %v6869
    %6871 = vdwg.mxu0
    %v6872 = vmax.f32 %v6563, 0.0
    %v6873 = vmax.f32 %v6565, 0.0
    %v6874 = vmax.f32 %v6606, 0.0
    %v6875 = vmax.f32 %v6608, 0.0
    %v6876 = vmax.f32 %v6649, 0.0
    %v6877 = vmax.f32 %v6651, 0.0
    %v6878 = vmax.f32 %v6692, 0.0
    %v6879 = vmax.f32 %v6694, 0.0
    %v6880 = vmax.f32 %v6735, 0.0
    %v6881 = vmax.f32 %v6737, 0.0
    %v6882 = vmax.f32 %v6778, 0.0
    %v6883 = vmax.f32 %v6780, 0.0
    %v6884 = vmax.f32 %v6821, 0.0
    %v6885 = vmax.f32 %v6823, 0.0
    %v6886 = vmax.f32 %v6864, 0.0
    %v6887 = vmax.f32 %v6866, 0.0
    %v6888 = vmax.f32 %v6567, 0.0
    %v6889 = vmax.f32 %v6569, 0.0
    %v6890 = vmax.f32 %v6610, 0.0
    %v6891 = vmax.f32 %v6612, 0.0
    %v6892 = vmax.f32 %v6653, 0.0
    %v6893 = vmax.f32 %v6655, 0.0
    %v6894 = vmax.f32 %v6696, 0.0
    %v6895 = vmax.f32 %v6698, 0.0
    %v6896 = vmax.f32 %v6739, 0.0
    %v6897 = vmax.f32 %v6741, 0.0
    %v6898 = vmax.f32 %v6782, 0.0
    %v6899 = vmax.f32 %v6784, 0.0
    %v6900 = vmax.f32 %v6825, 0.0
    %v6901 = vmax.f32 %v6827, 0.0
    %v6902 = vmax.f32 %v6868, 0.0
    %v6903 = vmax.f32 %v6870, 0.0
    %v6904 = vld [vmem:[%s85] sm:$0xf]
    %v6905 = vld [vmem:[%s85 + $0x4] sm:$0xf]
    %v6906 = vld [vmem:[%s85 + $0x8] sm:$0xf]
    %v6907 = vld [vmem:[%s85 + $0xc] sm:$0xf]
    %v6908 = vld [vmem:[%s85 + $0x10] sm:$0xf]
    %v6909 = vld [vmem:[%s85 + $0x14] sm:$0xf]
    %v6910 = vld [vmem:[%s85 + $0x18] sm:$0xf]
    %v6911 = vld [vmem:[%s85 + $0x1c] sm:$0xf]
    %v6912 = vld [vmem:[%s85 + $0x20] sm:$0xf]
    %v6913 = vld [vmem:[%s85 + $0x24] sm:$0xf]
    %v6914 = vld [vmem:[%s85 + $0x28] sm:$0xf]
    %v6915 = vld [vmem:[%s85 + $0x2c] sm:$0xf]
    %v6916 = vld [vmem:[%s85 + $0x30] sm:$0xf]
    %v6917 = vld [vmem:[%s85 + $0x34] sm:$0xf]
    %v6918 = vld [vmem:[%s85 + $0x38] sm:$0xf]
    %v6919 = vld [vmem:[%s85 + $0x3c] sm:$0xf]
    %v6920 = vld [vmem:[%s85 + $0x40] sm:$0xf]
    %v6921 = vld [vmem:[%s85 + $0x44] sm:$0xf]
    %v6922 = vld [vmem:[%s85 + $0x48] sm:$0xf]
    %v6923 = vld [vmem:[%s85 + $0x4c] sm:$0xf]
    %v6924 = vld [vmem:[%s85 + $0x50] sm:$0xf]
    %v6925 = vld [vmem:[%s85 + $0x54] sm:$0xf]
    %v6926 = vld [vmem:[%s85 + $0x58] sm:$0xf]
    %v6927 = vld [vmem:[%s85 + $0x5c] sm:$0xf]
    %v6928 = vld [vmem:[%s85 + $0x60] sm:$0xf]
    %v6929 = vld [vmem:[%s85 + $0x64] sm:$0xf]
    %v6930 = vld [vmem:[%s85 + $0x68] sm:$0xf]
    %v6931 = vld [vmem:[%s85 + $0x6c] sm:$0xf]
    %v6932 = vld [vmem:[%s85 + $0x70] sm:$0xf]
    %v6933 = vld [vmem:[%s85 + $0x74] sm:$0xf]
    %v6934 = vld [vmem:[%s85 + $0x78] sm:$0xf]
    %v6935 = vld [vmem:[%s85 + $0x7c] sm:$0xf]
    %v6936 = vld [vmem:[%s85 + $0x80] sm:$0xf]
    %v6937 = vld [vmem:[%s85 + $0x84] sm:$0xf]
    %v6938 = vld [vmem:[%s85 + $0x88] sm:$0xf]
    %v6939 = vld [vmem:[%s85 + $0x8c] sm:$0xf]
    %v6940 = vld [vmem:[%s85 + $0x90] sm:$0xf]
    %v6941 = vld [vmem:[%s85 + $0x94] sm:$0xf]
    %v6942 = vld [vmem:[%s85 + $0x98] sm:$0xf]
    %v6943 = vld [vmem:[%s85 + $0x9c] sm:$0xf]
    %v6944 = vld [vmem:[%s85 + $0xa0] sm:$0xf]
    %v6945 = vld [vmem:[%s85 + $0xa4] sm:$0xf]
    %v6946 = vld [vmem:[%s85 + $0xa8] sm:$0xf]
    %v6947 = vld [vmem:[%s85 + $0xac] sm:$0xf]
    %v6948 = vld [vmem:[%s85 + $0xb0] sm:$0xf]
    %v6949 = vld [vmem:[%s85 + $0xb4] sm:$0xf]
    %v6950 = vld [vmem:[%s85 + $0xb8] sm:$0xf]
    %v6951 = vld [vmem:[%s85 + $0xbc] sm:$0xf]
    %v6952 = vld [vmem:[%s85 + $0xc0] sm:$0xf]
    %v6953 = vld [vmem:[%s85 + $0xc4] sm:$0xf]
    %v6954 = vld [vmem:[%s85 + $0xc8] sm:$0xf]
    %v6955 = vld [vmem:[%s85 + $0xcc] sm:$0xf]
    %v6956 = vld [vmem:[%s85 + $0xd0] sm:$0xf]
    %v6957 = vld [vmem:[%s85 + $0xd4] sm:$0xf]
    %v6958 = vld [vmem:[%s85 + $0xd8] sm:$0xf]
    %v6959 = vld [vmem:[%s85 + $0xdc] sm:$0xf]
    %v6960 = vld [vmem:[%s85 + $0xe0] sm:$0xf]
    %v6961 = vld [vmem:[%s85 + $0xe4] sm:$0xf]
    %v6962 = vld [vmem:[%s85 + $0xe8] sm:$0xf]
    %v6963 = vld [vmem:[%s85 + $0xec] sm:$0xf]
    %v6964 = vld [vmem:[%s85 + $0xf0] sm:$0xf]
    %v6965 = vld [vmem:[%s85 + $0xf4] sm:$0xf]
    %v6966 = vld [vmem:[%s85 + $0xf8] sm:$0xf]
    %v6967 = vld [vmem:[%s85 + $0xfc] sm:$0xf]
    %v6968 = vld [vmem:[%s85 + $0x100] sm:$0xf]
    %v6969 = vld [vmem:[%s85 + $0x104] sm:$0xf]
    %v6970 = vld [vmem:[%s85 + $0x108] sm:$0xf]
    %v6971 = vld [vmem:[%s85 + $0x10c] sm:$0xf]
    %v6972 = vld [vmem:[%s85 + $0x110] sm:$0xf]
    %v6973 = vld [vmem:[%s85 + $0x114] sm:$0xf]
    %v6974 = vld [vmem:[%s85 + $0x118] sm:$0xf]
    %v6975 = vld [vmem:[%s85 + $0x11c] sm:$0xf]
    %v6976 = vld [vmem:[%s85 + $0x120] sm:$0xf]
    %v6977 = vld [vmem:[%s85 + $0x124] sm:$0xf]
    %v6978 = vld [vmem:[%s85 + $0x128] sm:$0xf]
    %v6979 = vld [vmem:[%s85 + $0x12c] sm:$0xf]
    %v6980 = vld [vmem:[%s85 + $0x130] sm:$0xf]
    %v6981 = vld [vmem:[%s85 + $0x134] sm:$0xf]
    %v6982 = vld [vmem:[%s85 + $0x138] sm:$0xf]
    %v6983 = vld [vmem:[%s85 + $0x13c] sm:$0xf]
    %v6984 = vld [vmem:[%s85 + $0x140] sm:$0xf]
    %v6985 = vld [vmem:[%s85 + $0x144] sm:$0xf]
    %v6986 = vld [vmem:[%s85 + $0x148] sm:$0xf]
    %v6987 = vld [vmem:[%s85 + $0x14c] sm:$0xf]
    %v6988 = vld [vmem:[%s85 + $0x150] sm:$0xf]
    %v6989 = vld [vmem:[%s85 + $0x154] sm:$0xf]
    %v6990 = vld [vmem:[%s85 + $0x158] sm:$0xf]
    %v6991 = vld [vmem:[%s85 + $0x15c] sm:$0xf]
    %v6992 = vld [vmem:[%s85 + $0x160] sm:$0xf]
    %v6993 = vld [vmem:[%s85 + $0x164] sm:$0xf]
    %v6994 = vld [vmem:[%s85 + $0x168] sm:$0xf]
    %v6995 = vld [vmem:[%s85 + $0x16c] sm:$0xf]
    %v6996 = vld [vmem:[%s85 + $0x170] sm:$0xf]
    %v6997 = vld [vmem:[%s85 + $0x174] sm:$0xf]
    %v6998 = vld [vmem:[%s85 + $0x178] sm:$0xf]
    %v6999 = vld [vmem:[%s85 + $0x17c] sm:$0xf]
    %v7000 = vld [vmem:[%s85 + $0x180] sm:$0xf]
    %v7001 = vld [vmem:[%s85 + $0x184] sm:$0xf]
    %v7002 = vld [vmem:[%s85 + $0x188] sm:$0xf]
    %v7003 = vld [vmem:[%s85 + $0x18c] sm:$0xf]
    %v7004 = vld [vmem:[%s85 + $0x190] sm:$0xf]
    %v7005 = vld [vmem:[%s85 + $0x194] sm:$0xf]
    %v7006 = vld [vmem:[%s85 + $0x198] sm:$0xf]
    %v7007 = vld [vmem:[%s85 + $0x19c] sm:$0xf]
    %v7008 = vld [vmem:[%s85 + $0x1a0] sm:$0xf]
    %v7009 = vld [vmem:[%s85 + $0x1a4] sm:$0xf]
    %v7010 = vld [vmem:[%s85 + $0x1a8] sm:$0xf]
    %v7011 = vld [vmem:[%s85 + $0x1ac] sm:$0xf]
    %v7012 = vld [vmem:[%s85 + $0x1b0] sm:$0xf]
    %v7013 = vld [vmem:[%s85 + $0x1b4] sm:$0xf]
    %v7014 = vld [vmem:[%s85 + $0x1b8] sm:$0xf]
    %v7015 = vld [vmem:[%s85 + $0x1bc] sm:$0xf]
    %v7016 = vld [vmem:[%s85 + $0x1c0] sm:$0xf]
    %v7017 = vld [vmem:[%s85 + $0x1c4] sm:$0xf]
    %v7018 = vld [vmem:[%s85 + $0x1c8] sm:$0xf]
    %v7019 = vld [vmem:[%s85 + $0x1cc] sm:$0xf]
    %v7020 = vld [vmem:[%s85 + $0x1d0] sm:$0xf]
    %v7021 = vld [vmem:[%s85 + $0x1d4] sm:$0xf]
    %v7022 = vld [vmem:[%s85 + $0x1d8] sm:$0xf]
    %v7023 = vld [vmem:[%s85 + $0x1dc] sm:$0xf]
    %v7024 = vld [vmem:[%s85 + $0x1e0] sm:$0xf]
    %v7025 = vld [vmem:[%s85 + $0x1e4] sm:$0xf]
    %v7026 = vld [vmem:[%s85 + $0x1e8] sm:$0xf]
    %v7027 = vld [vmem:[%s85 + $0x1ec] sm:$0xf]
    %v7028 = vld [vmem:[%s85 + $0x1f0] sm:$0xf]
    %v7029 = vld [vmem:[%s85 + $0x1f4] sm:$0xf]
    %v7030 = vld [vmem:[%s85 + $0x1f8] sm:$0xf]
    %v7031 = vld [vmem:[%s85 + $0x1fc] sm:$0xf]
    %v7032 = vld [vmem:[%s85 + $0x200] sm:$0xf]
    %v7033 = vld [vmem:[%s85 + $0x204] sm:$0xf]
    %v7034 = vld [vmem:[%s85 + $0x208] sm:$0xf]
    %v7035 = vld [vmem:[%s85 + $0x20c] sm:$0xf]
    %v7036 = vld [vmem:[%s85 + $0x210] sm:$0xf]
    %v7037 = vld [vmem:[%s85 + $0x214] sm:$0xf]
    %v7038 = vld [vmem:[%s85 + $0x218] sm:$0xf]
    %v7039 = vld [vmem:[%s85 + $0x21c] sm:$0xf]
    %v7040 = vld [vmem:[%s85 + $0x220] sm:$0xf]
    %v7041 = vld [vmem:[%s85 + $0x224] sm:$0xf]
    %v7042 = vld [vmem:[%s85 + $0x228] sm:$0xf]
    %v7043 = vld [vmem:[%s85 + $0x22c] sm:$0xf]
    %v7044 = vld [vmem:[%s85 + $0x230] sm:$0xf]
    %v7045 = vld [vmem:[%s85 + $0x234] sm:$0xf]
    %v7046 = vld [vmem:[%s85 + $0x238] sm:$0xf]
    %v7047 = vld [vmem:[%s85 + $0x23c] sm:$0xf]
    %v7048 = vld [vmem:[%s85 + $0x240] sm:$0xf]
    %v7049 = vld [vmem:[%s85 + $0x244] sm:$0xf]
    %v7050 = vld [vmem:[%s85 + $0x248] sm:$0xf]
    %v7051 = vld [vmem:[%s85 + $0x24c] sm:$0xf]
    %v7052 = vld [vmem:[%s85 + $0x250] sm:$0xf]
    %v7053 = vld [vmem:[%s85 + $0x254] sm:$0xf]
    %v7054 = vld [vmem:[%s85 + $0x258] sm:$0xf]
    %v7055 = vld [vmem:[%s85 + $0x25c] sm:$0xf]
    %v7056 = vld [vmem:[%s85 + $0x260] sm:$0xf]
    %v7057 = vld [vmem:[%s85 + $0x264] sm:$0xf]
    %v7058 = vld [vmem:[%s85 + $0x268] sm:$0xf]
    %v7059 = vld [vmem:[%s85 + $0x26c] sm:$0xf]
    %v7060 = vld [vmem:[%s85 + $0x270] sm:$0xf]
    %v7061 = vld [vmem:[%s85 + $0x274] sm:$0xf]
    %v7062 = vld [vmem:[%s85 + $0x278] sm:$0xf]
    %v7063 = vld [vmem:[%s85 + $0x27c] sm:$0xf]
    %v7064 = vld [vmem:[%s85 + $0x280] sm:$0xf]
    %v7065 = vld [vmem:[%s85 + $0x284] sm:$0xf]
    %v7066 = vld [vmem:[%s85 + $0x288] sm:$0xf]
    %v7067 = vld [vmem:[%s85 + $0x28c] sm:$0xf]
    %v7068 = vld [vmem:[%s85 + $0x290] sm:$0xf]
    %v7069 = vld [vmem:[%s85 + $0x294] sm:$0xf]
    %v7070 = vld [vmem:[%s85 + $0x298] sm:$0xf]
    %v7071 = vld [vmem:[%s85 + $0x29c] sm:$0xf]
    %v7072 = vld [vmem:[%s85 + $0x2a0] sm:$0xf]
    %v7073 = vld [vmem:[%s85 + $0x2a4] sm:$0xf]
    %v7074 = vld [vmem:[%s85 + $0x2a8] sm:$0xf]
    %v7075 = vld [vmem:[%s85 + $0x2ac] sm:$0xf]
    %v7076 = vld [vmem:[%s85 + $0x2b0] sm:$0xf]
    %v7077 = vld [vmem:[%s85 + $0x2b4] sm:$0xf]
    %v7078 = vld [vmem:[%s85 + $0x2b8] sm:$0xf]
    %v7079 = vld [vmem:[%s85 + $0x2bc] sm:$0xf]
    %v7080 = vld [vmem:[%s85 + $0x2c0] sm:$0xf]
    %v7081 = vld [vmem:[%s85 + $0x2c4] sm:$0xf]
    %v7082 = vld [vmem:[%s85 + $0x2c8] sm:$0xf]
    %v7083 = vld [vmem:[%s85 + $0x2cc] sm:$0xf]
    %v7084 = vld [vmem:[%s85 + $0x2d0] sm:$0xf]
    %v7085 = vld [vmem:[%s85 + $0x2d4] sm:$0xf]
    %v7086 = vld [vmem:[%s85 + $0x2d8] sm:$0xf]
    %v7087 = vld [vmem:[%s85 + $0x2dc] sm:$0xf]
    %v7088 = vld [vmem:[%s85 + $0x2e0] sm:$0xf]
    %v7089 = vld [vmem:[%s85 + $0x2e4] sm:$0xf]
    %v7090 = vld [vmem:[%s85 + $0x2e8] sm:$0xf]
    %v7091 = vld [vmem:[%s85 + $0x2ec] sm:$0xf]
    %v7092 = vld [vmem:[%s85 + $0x2f0] sm:$0xf]
    %v7093 = vld [vmem:[%s85 + $0x2f4] sm:$0xf]
    %v7094 = vld [vmem:[%s85 + $0x2f8] sm:$0xf]
    %v7095 = vld [vmem:[%s85 + $0x2fc] sm:$0xf]
    %v7096 = vld [vmem:[%s85 + $0x300] sm:$0xf]
    %v7097 = vld [vmem:[%s85 + $0x304] sm:$0xf]
    %v7098 = vld [vmem:[%s85 + $0x308] sm:$0xf]
    %v7099 = vld [vmem:[%s85 + $0x30c] sm:$0xf]
    %v7100 = vld [vmem:[%s85 + $0x310] sm:$0xf]
    %v7101 = vld [vmem:[%s85 + $0x314] sm:$0xf]
    %v7102 = vld [vmem:[%s85 + $0x318] sm:$0xf]
    %v7103 = vld [vmem:[%s85 + $0x31c] sm:$0xf]
    %v7104 = vld [vmem:[%s85 + $0x320] sm:$0xf]
    %v7105 = vld [vmem:[%s85 + $0x324] sm:$0xf]
    %v7106 = vld [vmem:[%s85 + $0x328] sm:$0xf]
    %v7107 = vld [vmem:[%s85 + $0x32c] sm:$0xf]
    %v7108 = vld [vmem:[%s85 + $0x330] sm:$0xf]
    %v7109 = vld [vmem:[%s85 + $0x334] sm:$0xf]
    %v7110 = vld [vmem:[%s85 + $0x338] sm:$0xf]
    %v7111 = vld [vmem:[%s85 + $0x33c] sm:$0xf]
    %v7112 = vld [vmem:[%s85 + $0x340] sm:$0xf]
    %v7113 = vld [vmem:[%s85 + $0x344] sm:$0xf]
    %v7114 = vld [vmem:[%s85 + $0x348] sm:$0xf]
    %v7115 = vld [vmem:[%s85 + $0x34c] sm:$0xf]
    %v7116 = vld [vmem:[%s85 + $0x350] sm:$0xf]
    %v7117 = vld [vmem:[%s85 + $0x354] sm:$0xf]
    %v7118 = vld [vmem:[%s85 + $0x358] sm:$0xf]
    %v7119 = vld [vmem:[%s85 + $0x35c] sm:$0xf]
    %v7120 = vld [vmem:[%s85 + $0x360] sm:$0xf]
    %v7121 = vld [vmem:[%s85 + $0x364] sm:$0xf]
    %v7122 = vld [vmem:[%s85 + $0x368] sm:$0xf]
    %v7123 = vld [vmem:[%s85 + $0x36c] sm:$0xf]
    %v7124 = vld [vmem:[%s85 + $0x370] sm:$0xf]
    %v7125 = vld [vmem:[%s85 + $0x374] sm:$0xf]
    %v7126 = vld [vmem:[%s85 + $0x378] sm:$0xf]
    %v7127 = vld [vmem:[%s85 + $0x37c] sm:$0xf]
    %v7128 = vld [vmem:[%s85 + $0x380] sm:$0xf]
    %v7129 = vld [vmem:[%s85 + $0x384] sm:$0xf]
    %v7130 = vld [vmem:[%s85 + $0x388] sm:$0xf]
    %v7131 = vld [vmem:[%s85 + $0x38c] sm:$0xf]
    %v7132 = vld [vmem:[%s85 + $0x390] sm:$0xf]
    %v7133 = vld [vmem:[%s85 + $0x394] sm:$0xf]
    %v7134 = vld [vmem:[%s85 + $0x398] sm:$0xf]
    %v7135 = vld [vmem:[%s85 + $0x39c] sm:$0xf]
    %v7136 = vld [vmem:[%s85 + $0x3a0] sm:$0xf]
    %v7137 = vld [vmem:[%s85 + $0x3a4] sm:$0xf]
    %v7138 = vld [vmem:[%s85 + $0x3a8] sm:$0xf]
    %v7139 = vld [vmem:[%s85 + $0x3ac] sm:$0xf]
    %v7140 = vld [vmem:[%s85 + $0x3b0] sm:$0xf]
    %v7141 = vld [vmem:[%s85 + $0x3b4] sm:$0xf]
    %v7142 = vld [vmem:[%s85 + $0x3b8] sm:$0xf]
    %v7143 = vld [vmem:[%s85 + $0x3bc] sm:$0xf]
    %v7144 = vld [vmem:[%s85 + $0x3c0] sm:$0xf]
    %v7145 = vld [vmem:[%s85 + $0x3c4] sm:$0xf]
    %v7146 = vld [vmem:[%s85 + $0x3c8] sm:$0xf]
    %v7147 = vld [vmem:[%s85 + $0x3cc] sm:$0xf]
    %v7148 = vld [vmem:[%s85 + $0x3d0] sm:$0xf]
    %v7149 = vld [vmem:[%s85 + $0x3d4] sm:$0xf]
    %v7150 = vld [vmem:[%s85 + $0x3d8] sm:$0xf]
    %v7151 = vld [vmem:[%s85 + $0x3dc] sm:$0xf]
    %v7152 = vld [vmem:[%s85 + $0x3e0] sm:$0xf]
    %v7153 = vld [vmem:[%s85 + $0x3e4] sm:$0xf]
    %v7154 = vld [vmem:[%s85 + $0x3e8] sm:$0xf]
    %v7155 = vld [vmem:[%s85 + $0x3ec] sm:$0xf]
    %v7156 = vld [vmem:[%s85 + $0x3f0] sm:$0xf]
    %v7157 = vld [vmem:[%s85 + $0x3f4] sm:$0xf]
    %v7158 = vld [vmem:[%s85 + $0x3f8] sm:$0xf]
    %v7159 = vld [vmem:[%s85 + $0x3fc] sm:$0xf]
    %v7160 = vpack.c.bf16 %v6888, %v6872
    %v7161 = vpack.c.bf16 %v6889, %v6873
    %v7162 = vpack.c.bf16 %v6890, %v6874
    %v7163 = vpack.c.bf16 %v6891, %v6875
    %v7164 = vpack.c.bf16 %v6892, %v6876
    %v7165 = vpack.c.bf16 %v6893, %v6877
    %v7166 = vpack.c.bf16 %v6894, %v6878
    %v7167 = vpack.c.bf16 %v6895, %v6879
    %v7168 = vpack.c.bf16 %v6896, %v6880
    %v7169 = vpack.c.bf16 %v6897, %v6881
    %v7170 = vpack.c.bf16 %v6898, %v6882
    %v7171 = vpack.c.bf16 %v6899, %v6883
    %v7172 = vpack.c.bf16 %v6900, %v6884
    %v7173 = vpack.c.bf16 %v6901, %v6885
    %v7174 = vpack.c.bf16 %v6902, %v6886
    %v7175 = vpack.c.bf16 %v6903, %v6887
    %v7176 = vld [vmem:[#allocation17] sm:$0x1]
    %v7178 = vlaneseq
    %v7179 = vshrl.u32 %v7178, 7
    %v7180 = vsub.s32 0, %v7179
    %v7181 = vrot.slane %v7176, %v7180
    %v7439 = vunpack.c.l.b16 %v6904
    %v7440 = vunpack.c.l.b16 %v6905
    %v7441 = vunpack.c.l.b16 %v6906
    %v7442 = vunpack.c.l.b16 %v6907
    %v7443 = vunpack.c.l.b16 %v6908
    %v7444 = vunpack.c.l.b16 %v6909
    %v7445 = vunpack.c.l.b16 %v6910
    %v7446 = vunpack.c.l.b16 %v6911
    %v7447 = vunpack.c.l.b16 %v6912
    %v7448 = vunpack.c.l.b16 %v6913
    %v7449 = vunpack.c.l.b16 %v6914
    %v7450 = vunpack.c.l.b16 %v6915
    %v7451 = vunpack.c.l.b16 %v6916
    %v7452 = vunpack.c.l.b16 %v6917
    %v7453 = vunpack.c.l.b16 %v6918
    %v7454 = vunpack.c.l.b16 %v6919
    %v7455 = vunpack.c.l.b16 %v6920
    %v7456 = vunpack.c.l.b16 %v6921
    %v7457 = vunpack.c.l.b16 %v6922
    %v7458 = vunpack.c.l.b16 %v6923
    %v7459 = vunpack.c.l.b16 %v6924
    %v7460 = vunpack.c.l.b16 %v6925
    %v7461 = vunpack.c.l.b16 %v6926
    %v7462 = vunpack.c.l.b16 %v6927
    %v7463 = vunpack.c.l.b16 %v6928
    %v7464 = vunpack.c.l.b16 %v6929
    %v7465 = vunpack.c.l.b16 %v6930
    %v7466 = vunpack.c.l.b16 %v6931
    %v7467 = vunpack.c.l.b16 %v6932
    %v7468 = vunpack.c.l.b16 %v6933
    %v7469 = vunpack.c.l.b16 %v6934
    %v7470 = vunpack.c.l.b16 %v6935
    %v7471 = vunpack.c.l.b16 %v6936
    %v7472 = vunpack.c.l.b16 %v6937
    %v7473 = vunpack.c.l.b16 %v6938
    %v7474 = vunpack.c.l.b16 %v6939
    %v7475 = vunpack.c.l.b16 %v6940
    %v7476 = vunpack.c.l.b16 %v6941
    %v7477 = vunpack.c.l.b16 %v6942
    %v7478 = vunpack.c.l.b16 %v6943
    %v7479 = vunpack.c.l.b16 %v6944
    %v7480 = vunpack.c.l.b16 %v6945
    %v7481 = vunpack.c.l.b16 %v6946
    %v7482 = vunpack.c.l.b16 %v6947
    %v7483 = vunpack.c.l.b16 %v6948
    %v7484 = vunpack.c.l.b16 %v6949
    %v7485 = vunpack.c.l.b16 %v6950
    %v7486 = vunpack.c.l.b16 %v6951
    %v7487 = vunpack.c.l.b16 %v6952
    %v7488 = vunpack.c.l.b16 %v6953
    %v7489 = vunpack.c.l.b16 %v6954
    %v7490 = vunpack.c.l.b16 %v6955
    %v7491 = vunpack.c.l.b16 %v6956
    %v7492 = vunpack.c.l.b16 %v6957
    %v7493 = vunpack.c.l.b16 %v6958
    %v7494 = vunpack.c.l.b16 %v6959
    %v7495 = vunpack.c.l.b16 %v6960
    %v7496 = vunpack.c.l.b16 %v6961
    %v7497 = vunpack.c.l.b16 %v6962
    %v7498 = vunpack.c.l.b16 %v6963
    %v7499 = vunpack.c.l.b16 %v6964
    %v7500 = vunpack.c.l.b16 %v6965
    %v7501 = vunpack.c.l.b16 %v6966
    %v7502 = vunpack.c.l.b16 %v6967
    %v7503 = vunpack.c.l.b16 %v6968
    %v7504 = vunpack.c.l.b16 %v6969
    %v7505 = vunpack.c.l.b16 %v6970
    %v7506 = vunpack.c.l.b16 %v6971
    %v7507 = vunpack.c.l.b16 %v6972
    %v7508 = vunpack.c.l.b16 %v6973
    %v7509 = vunpack.c.l.b16 %v6974
    %v7510 = vunpack.c.l.b16 %v6975
    %v7511 = vunpack.c.l.b16 %v6976
    %v7512 = vunpack.c.l.b16 %v6977
    %v7513 = vunpack.c.l.b16 %v6978
    %v7514 = vunpack.c.l.b16 %v6979
    %v7515 = vunpack.c.l.b16 %v6980
    %v7516 = vunpack.c.l.b16 %v6981
    %v7517 = vunpack.c.l.b16 %v6982
    %v7518 = vunpack.c.l.b16 %v6983
    %v7519 = vunpack.c.l.b16 %v6984
    %v7520 = vunpack.c.l.b16 %v6985
    %v7521 = vunpack.c.l.b16 %v6986
    %v7522 = vunpack.c.l.b16 %v6987
    %v7523 = vunpack.c.l.b16 %v6988
    %v7524 = vunpack.c.l.b16 %v6989
    %v7525 = vunpack.c.l.b16 %v6990
    %v7526 = vunpack.c.l.b16 %v6991
    %v7527 = vunpack.c.l.b16 %v6992
    %v7528 = vunpack.c.l.b16 %v6993
    %v7529 = vunpack.c.l.b16 %v6994
    %v7530 = vunpack.c.l.b16 %v6995
    %v7531 = vunpack.c.l.b16 %v6996
    %v7532 = vunpack.c.l.b16 %v6997
    %v7533 = vunpack.c.l.b16 %v6998
    %v7534 = vunpack.c.l.b16 %v6999
    %v7535 = vunpack.c.l.b16 %v7000
    %v7536 = vunpack.c.l.b16 %v7001
    %v7537 = vunpack.c.l.b16 %v7002
    %v7538 = vunpack.c.l.b16 %v7003
    %v7539 = vunpack.c.l.b16 %v7004
    %v7540 = vunpack.c.l.b16 %v7005
    %v7541 = vunpack.c.l.b16 %v7006
    %v7542 = vunpack.c.l.b16 %v7007
    %v7543 = vunpack.c.l.b16 %v7008
    %v7544 = vunpack.c.l.b16 %v7009
    %v7545 = vunpack.c.l.b16 %v7010
    %v7546 = vunpack.c.l.b16 %v7011
    %v7547 = vunpack.c.l.b16 %v7012
    %v7548 = vunpack.c.l.b16 %v7013
    %v7549 = vunpack.c.l.b16 %v7014
    %v7550 = vunpack.c.l.b16 %v7015
    %v7551 = vunpack.c.l.b16 %v7016
    %v7552 = vunpack.c.l.b16 %v7017
    %v7553 = vunpack.c.l.b16 %v7018
    %v7554 = vunpack.c.l.b16 %v7019
    %v7555 = vunpack.c.l.b16 %v7020
    %v7556 = vunpack.c.l.b16 %v7021
    %v7557 = vunpack.c.l.b16 %v7022
    %v7558 = vunpack.c.l.b16 %v7023
    %v7559 = vunpack.c.l.b16 %v7024
    %v7560 = vunpack.c.l.b16 %v7025
    %v7561 = vunpack.c.l.b16 %v7026
    %v7562 = vunpack.c.l.b16 %v7027
    %v7563 = vunpack.c.l.b16 %v7028
    %v7564 = vunpack.c.l.b16 %v7029
    %v7565 = vunpack.c.l.b16 %v7030
    %v7566 = vunpack.c.l.b16 %v7031
    %v7567 = vunpack.c.l.b16 %v7032
    %v7568 = vunpack.c.l.b16 %v7033
    %v7569 = vunpack.c.l.b16 %v7034
    %v7570 = vunpack.c.l.b16 %v7035
    %v7571 = vunpack.c.l.b16 %v7036
    %v7572 = vunpack.c.l.b16 %v7037
    %v7573 = vunpack.c.l.b16 %v7038
    %v7574 = vunpack.c.l.b16 %v7039
    %v7575 = vunpack.c.l.b16 %v7040
    %v7576 = vunpack.c.l.b16 %v7041
    %v7577 = vunpack.c.l.b16 %v7042
    %v7578 = vunpack.c.l.b16 %v7043
    %v7579 = vunpack.c.l.b16 %v7044
    %v7580 = vunpack.c.l.b16 %v7045
    %v7581 = vunpack.c.l.b16 %v7046
    %v7582 = vunpack.c.l.b16 %v7047
    %v7583 = vunpack.c.l.b16 %v7048
    %v7584 = vunpack.c.l.b16 %v7049
    %v7585 = vunpack.c.l.b16 %v7050
    %v7586 = vunpack.c.l.b16 %v7051
    %v7587 = vunpack.c.l.b16 %v7052
    %v7588 = vunpack.c.l.b16 %v7053
    %v7589 = vunpack.c.l.b16 %v7054
    %v7590 = vunpack.c.l.b16 %v7055
    %v7591 = vunpack.c.l.b16 %v7056
    %v7592 = vunpack.c.l.b16 %v7057
    %v7593 = vunpack.c.l.b16 %v7058
    %v7594 = vunpack.c.l.b16 %v7059
    %v7595 = vunpack.c.l.b16 %v7060
    %v7596 = vunpack.c.l.b16 %v7061
    %v7597 = vunpack.c.l.b16 %v7062
    %v7598 = vunpack.c.l.b16 %v7063
    %v7599 = vunpack.c.l.b16 %v7064
    %v7600 = vunpack.c.l.b16 %v7065
    %v7601 = vunpack.c.l.b16 %v7066
    %v7602 = vunpack.c.l.b16 %v7067
    %v7603 = vunpack.c.l.b16 %v7068
    %v7604 = vunpack.c.l.b16 %v7069
    %v7605 = vunpack.c.l.b16 %v7070
    %v7606 = vunpack.c.l.b16 %v7071
    %v7607 = vunpack.c.l.b16 %v7072
    %v7608 = vunpack.c.l.b16 %v7073
    %v7609 = vunpack.c.l.b16 %v7074
    %v7610 = vunpack.c.l.b16 %v7075
    %v7611 = vunpack.c.l.b16 %v7076
    %v7612 = vunpack.c.l.b16 %v7077
    %v7613 = vunpack.c.l.b16 %v7078
    %v7614 = vunpack.c.l.b16 %v7079
    %v7615 = vunpack.c.l.b16 %v7080
    %v7616 = vunpack.c.l.b16 %v7081
    %v7617 = vunpack.c.l.b16 %v7082
    %v7618 = vunpack.c.l.b16 %v7083
    %v7619 = vunpack.c.l.b16 %v7084
    %v7620 = vunpack.c.l.b16 %v7085
    %v7621 = vunpack.c.l.b16 %v7086
    %v7622 = vunpack.c.l.b16 %v7087
    %v7623 = vunpack.c.l.b16 %v7088
    %v7624 = vunpack.c.l.b16 %v7089
    %v7625 = vunpack.c.l.b16 %v7090
    %v7626 = vunpack.c.l.b16 %v7091
    %v7627 = vunpack.c.l.b16 %v7092
    %v7628 = vunpack.c.l.b16 %v7093
    %v7629 = vunpack.c.l.b16 %v7094
    %v7630 = vunpack.c.l.b16 %v7095
    %v7631 = vunpack.c.l.b16 %v7096
    %v7632 = vunpack.c.l.b16 %v7097
    %v7633 = vunpack.c.l.b16 %v7098
    %v7634 = vunpack.c.l.b16 %v7099
    %v7635 = vunpack.c.l.b16 %v7100
    %v7636 = vunpack.c.l.b16 %v7101
    %v7637 = vunpack.c.l.b16 %v7102
    %v7638 = vunpack.c.l.b16 %v7103
    %v7639 = vunpack.c.l.b16 %v7104
    %v7640 = vunpack.c.l.b16 %v7105
    %v7641 = vunpack.c.l.b16 %v7106
    %v7642 = vunpack.c.l.b16 %v7107
    %v7643 = vunpack.c.l.b16 %v7108
    %v7644 = vunpack.c.l.b16 %v7109
    %v7645 = vunpack.c.l.b16 %v7110
    %v7646 = vunpack.c.l.b16 %v7111
    %v7647 = vunpack.c.l.b16 %v7112
    %v7648 = vunpack.c.l.b16 %v7113
    %v7649 = vunpack.c.l.b16 %v7114
    %v7650 = vunpack.c.l.b16 %v7115
    %v7651 = vunpack.c.l.b16 %v7116
    %v7652 = vunpack.c.l.b16 %v7117
    %v7653 = vunpack.c.l.b16 %v7118
    %v7654 = vunpack.c.l.b16 %v7119
    %v7655 = vunpack.c.l.b16 %v7120
    %v7656 = vunpack.c.l.b16 %v7121
    %v7657 = vunpack.c.l.b16 %v7122
    %v7658 = vunpack.c.l.b16 %v7123
    %v7659 = vunpack.c.l.b16 %v7124
    %v7660 = vunpack.c.l.b16 %v7125
    %v7661 = vunpack.c.l.b16 %v7126
    %v7662 = vunpack.c.l.b16 %v7127
    %v7663 = vunpack.c.l.b16 %v7128
    %v7664 = vunpack.c.l.b16 %v7129
    %v7665 = vunpack.c.l.b16 %v7130
    %v7666 = vunpack.c.l.b16 %v7131
    %v7667 = vunpack.c.l.b16 %v7132
    %v7668 = vunpack.c.l.b16 %v7133
    %v7669 = vunpack.c.l.b16 %v7134
    %v7670 = vunpack.c.l.b16 %v7135
    %v7671 = vunpack.c.l.b16 %v7136
    %v7672 = vunpack.c.l.b16 %v7137
    %v7673 = vunpack.c.l.b16 %v7138
    %v7674 = vunpack.c.l.b16 %v7139
    %v7675 = vunpack.c.l.b16 %v7140
    %v7676 = vunpack.c.l.b16 %v7141
    %v7677 = vunpack.c.l.b16 %v7142
    %v7678 = vunpack.c.l.b16 %v7143
    %v7679 = vunpack.c.l.b16 %v7144
    %v7680 = vunpack.c.l.b16 %v7145
    %v7681 = vunpack.c.l.b16 %v7146
    %v7682 = vunpack.c.l.b16 %v7147
    %v7683 = vunpack.c.l.b16 %v7148
    %v7684 = vunpack.c.l.b16 %v7149
    %v7685 = vunpack.c.l.b16 %v7150
    %v7686 = vunpack.c.l.b16 %v7151
    %v7687 = vunpack.c.l.b16 %v7152
    %v7688 = vunpack.c.l.b16 %v7153
    %v7689 = vunpack.c.l.b16 %v7154
    %v7690 = vunpack.c.l.b16 %v7155
    %v7691 = vunpack.c.l.b16 %v7156
    %v7692 = vunpack.c.l.b16 %v7157
    %v7693 = vunpack.c.l.b16 %v7158
    %v7694 = vunpack.c.l.b16 %v7159
    %v7695 = vpack.c.b16 %v7440, %v7439
    %v7696 = vpack.c.b16 %v7442, %v7441
    %v7697 = vpack.c.b16 %v7444, %v7443
    %v7698 = vpack.c.b16 %v7446, %v7445
    %v7699 = vpack.c.b16 %v7448, %v7447
    %v7700 = vpack.c.b16 %v7450, %v7449
    %v7701 = vpack.c.b16 %v7452, %v7451
    %v7702 = vpack.c.b16 %v7454, %v7453
    %v7703 = vpack.c.b16 %v7456, %v7455
    %v7704 = vpack.c.b16 %v7458, %v7457
    %v7705 = vpack.c.b16 %v7460, %v7459
    %v7706 = vpack.c.b16 %v7462, %v7461
    %v7707 = vpack.c.b16 %v7464, %v7463
    %v7708 = vpack.c.b16 %v7466, %v7465
    %v7709 = vpack.c.b16 %v7468, %v7467
    %v7710 = vpack.c.b16 %v7470, %v7469
    %v7711 = vpack.c.b16 %v7472, %v7471
    %v7712 = vpack.c.b16 %v7474, %v7473
    %v7713 = vpack.c.b16 %v7476, %v7475
    %v7714 = vpack.c.b16 %v7478, %v7477
    %v7715 = vpack.c.b16 %v7480, %v7479
    %v7716 = vpack.c.b16 %v7482, %v7481
    %v7717 = vpack.c.b16 %v7484, %v7483
    %v7718 = vpack.c.b16 %v7486, %v7485
    %v7719 = vpack.c.b16 %v7488, %v7487
    %v7720 = vpack.c.b16 %v7490, %v7489
    %v7721 = vpack.c.b16 %v7492, %v7491
    %v7722 = vpack.c.b16 %v7494, %v7493
    %v7723 = vpack.c.b16 %v7496, %v7495
    %v7724 = vpack.c.b16 %v7498, %v7497
    %v7725 = vpack.c.b16 %v7500, %v7499
    %v7726 = vpack.c.b16 %v7502, %v7501
    %v7727 = vpack.c.b16 %v7504, %v7503
    %v7728 = vpack.c.b16 %v7506, %v7505
    %v7729 = vpack.c.b16 %v7508, %v7507
    %v7730 = vpack.c.b16 %v7510, %v7509
    %v7731 = vpack.c.b16 %v7512, %v7511
    %v7732 = vpack.c.b16 %v7514, %v7513
    %v7733 = vpack.c.b16 %v7516, %v7515
    %v7734 = vpack.c.b16 %v7518, %v7517
    %v7735 = vpack.c.b16 %v7520, %v7519
    %v7736 = vpack.c.b16 %v7522, %v7521
    %v7737 = vpack.c.b16 %v7524, %v7523
    %v7738 = vpack.c.b16 %v7526, %v7525
    %v7739 = vpack.c.b16 %v7528, %v7527
    %v7740 = vpack.c.b16 %v7530, %v7529
    %v7741 = vpack.c.b16 %v7532, %v7531
    %v7742 = vpack.c.b16 %v7534, %v7533
    %v7743 = vpack.c.b16 %v7536, %v7535
    %v7744 = vpack.c.b16 %v7538, %v7537
    %v7745 = vpack.c.b16 %v7540, %v7539
    %v7746 = vpack.c.b16 %v7542, %v7541
    %v7747 = vpack.c.b16 %v7544, %v7543
    %v7748 = vpack.c.b16 %v7546, %v7545
    %v7749 = vpack.c.b16 %v7548, %v7547
    %v7750 = vpack.c.b16 %v7550, %v7549
    %v7751 = vpack.c.b16 %v7552, %v7551
    %v7752 = vpack.c.b16 %v7554, %v7553
    %v7753 = vpack.c.b16 %v7556, %v7555
    %v7754 = vpack.c.b16 %v7558, %v7557
    %v7755 = vpack.c.b16 %v7560, %v7559
    %v7756 = vpack.c.b16 %v7562, %v7561
    %v7757 = vpack.c.b16 %v7564, %v7563
    %v7758 = vpack.c.b16 %v7566, %v7565
    %v7759 = vpack.c.b16 %v7568, %v7567
    %v7760 = vpack.c.b16 %v7570, %v7569
    %v7761 = vpack.c.b16 %v7572, %v7571
    %v7762 = vpack.c.b16 %v7574, %v7573
    %v7763 = vpack.c.b16 %v7576, %v7575
    %v7764 = vpack.c.b16 %v7578, %v7577
    %v7765 = vpack.c.b16 %v7580, %v7579
    %v7766 = vpack.c.b16 %v7582, %v7581
    %v7767 = vpack.c.b16 %v7584, %v7583
    %v7768 = vpack.c.b16 %v7586, %v7585
    %v7769 = vpack.c.b16 %v7588, %v7587
    %v7770 = vpack.c.b16 %v7590, %v7589
    %v7771 = vpack.c.b16 %v7592, %v7591
    %v7772 = vpack.c.b16 %v7594, %v7593
    %v7773 = vpack.c.b16 %v7596, %v7595
    %v7774 = vpack.c.b16 %v7598, %v7597
    %v7775 = vpack.c.b16 %v7600, %v7599
    %v7776 = vpack.c.b16 %v7602, %v7601
    %v7777 = vpack.c.b16 %v7604, %v7603
    %v7778 = vpack.c.b16 %v7606, %v7605
    %v7779 = vpack.c.b16 %v7608, %v7607
    %v7780 = vpack.c.b16 %v7610, %v7609
    %v7781 = vpack.c.b16 %v7612, %v7611
    %v7782 = vpack.c.b16 %v7614, %v7613
    %v7783 = vpack.c.b16 %v7616, %v7615
    %v7784 = vpack.c.b16 %v7618, %v7617
    %v7785 = vpack.c.b16 %v7620, %v7619
    %v7786 = vpack.c.b16 %v7622, %v7621
    %v7787 = vpack.c.b16 %v7624, %v7623
    %v7788 = vpack.c.b16 %v7626, %v7625
    %v7789 = vpack.c.b16 %v7628, %v7627
    %v7790 = vpack.c.b16 %v7630, %v7629
    %v7791 = vpack.c.b16 %v7632, %v7631
    %v7792 = vpack.c.b16 %v7634, %v7633
    %v7793 = vpack.c.b16 %v7636, %v7635
    %v7794 = vpack.c.b16 %v7638, %v7637
    %v7795 = vpack.c.b16 %v7640, %v7639
    %v7796 = vpack.c.b16 %v7642, %v7641
    %v7797 = vpack.c.b16 %v7644, %v7643
    %v7798 = vpack.c.b16 %v7646, %v7645
    %v7799 = vpack.c.b16 %v7648, %v7647
    %v7800 = vpack.c.b16 %v7650, %v7649
    %v7801 = vpack.c.b16 %v7652, %v7651
    %v7802 = vpack.c.b16 %v7654, %v7653
    %v7803 = vpack.c.b16 %v7656, %v7655
    %v7804 = vpack.c.b16 %v7658, %v7657
    %v7805 = vpack.c.b16 %v7660, %v7659
    %v7806 = vpack.c.b16 %v7662, %v7661
    %v7807 = vpack.c.b16 %v7664, %v7663
    %v7808 = vpack.c.b16 %v7666, %v7665
    %v7809 = vpack.c.b16 %v7668, %v7667
    %v7810 = vpack.c.b16 %v7670, %v7669
    %v7811 = vpack.c.b16 %v7672, %v7671
    %v7812 = vpack.c.b16 %v7674, %v7673
    %v7813 = vpack.c.b16 %v7676, %v7675
    %v7814 = vpack.c.b16 %v7678, %v7677
    %v7815 = vpack.c.b16 %v7680, %v7679
    %v7816 = vpack.c.b16 %v7682, %v7681
    %v7817 = vpack.c.b16 %v7684, %v7683
    %v7818 = vpack.c.b16 %v7686, %v7685
    %v7819 = vpack.c.b16 %v7688, %v7687
    %v7820 = vpack.c.b16 %v7690, %v7689
    %v7821 = vpack.c.b16 %v7692, %v7691
    %v7822 = vpack.c.b16 %v7694, %v7693
    %7951 = vmatprep.subr.bf16.mxu0 0
    %7952 = vmatpush1.bf16.msra.mxu0 %v7695
    %7953 = vmatprep.subr.bf16.mxu0 0
    %7954 = vmatpush1.bf16.msra.mxu0 %v7696
    %7955 = vmatprep.subr.bf16.mxu0 0
    %7956 = vmatpush1.bf16.msra.mxu0 %v7697
    %7957 = vmatprep.subr.bf16.mxu0 0
    %7958 = vmatpush1.bf16.msra.mxu0 %v7698
    %7959 = vmatprep.subr.bf16.mxu0 0
    %7960 = vmatpush1.bf16.msra.mxu0 %v7699
    %7961 = vmatprep.subr.bf16.mxu0 0
    %7962 = vmatpush1.bf16.msra.mxu0 %v7700
    %7963 = vmatprep.subr.bf16.mxu0 0
    %7964 = vmatpush1.bf16.msra.mxu0 %v7701
    %7965 = vmatprep.subr.bf16.mxu0 0
    %7966 = vmatpush1.bf16.msra.mxu0 %v7702
    %7967 = vmatprep.subr.bf16.mxu0 0
    %7968 = vmatpush1.bf16.msra.mxu0 %v7703
    %7969 = vmatprep.subr.bf16.mxu0 0
    %7970 = vmatpush1.bf16.msra.mxu0 %v7704
    %7971 = vmatprep.subr.bf16.mxu0 0
    %7972 = vmatpush1.bf16.msra.mxu0 %v7705
    %7973 = vmatprep.subr.bf16.mxu0 0
    %7974 = vmatpush1.bf16.msra.mxu0 %v7706
    %7975 = vmatprep.subr.bf16.mxu0 0
    %7976 = vmatpush1.bf16.msra.mxu0 %v7707
    %7977 = vmatprep.subr.bf16.mxu0 0
    %7978 = vmatpush1.bf16.msra.mxu0 %v7708
    %7979 = vmatprep.subr.bf16.mxu0 0
    %7980 = vmatpush1.bf16.msra.mxu0 %v7709
    %7981 = vmatprep.subr.bf16.mxu0 0
    %7982 = vmatpush1.bf16.msra.mxu0 %v7710
    %7983 = vmatprep.mubr.bf16.mxu0 %v7161
    %7984 = vmatmul.mubr.bf16.gmra.mrb[0].mxu0 %v7160
    %v7985 = vpop.f32.mrb[0].mxu0
    %v7986 = vadd.f32 %v7181, %v7985
    %v7987 = vpop.f32.mrb[0].mxu0
    %v7988 = vpop.f32.mrb[0].mxu0
    %v7989 = vadd.f32 %v7181, %v7988
    %v7990 = vpop.f32.mrb[0].mxu0
    %7991 = vdwg.mxu0
    %7992 = vmatprep.subr.bf16.mxu0 0
    %7993 = vmatpush1.bf16.msra.mxu0 %v7711
    %7994 = vmatprep.subr.bf16.mxu0 0
    %7995 = vmatpush1.bf16.msra.mxu0 %v7712
    %7996 = vmatprep.subr.bf16.mxu0 0
    %7997 = vmatpush1.bf16.msra.mxu0 %v7713
    %7998 = vmatprep.subr.bf16.mxu0 0
    %7999 = vmatpush1.bf16.msra.mxu0 %v7714
    %8000 = vmatprep.subr.bf16.mxu0 0
    %8001 = vmatpush1.bf16.msra.mxu0 %v7715
    %8002 = vmatprep.subr.bf16.mxu0 0
    %8003 = vmatpush1.bf16.msra.mxu0 %v7716
    %8004 = vmatprep.subr.bf16.mxu0 0
    %8005 = vmatpush1.bf16.msra.mxu0 %v7717
    %8006 = vmatprep.subr.bf16.mxu0 0
    %8007 = vmatpush1.bf16.msra.mxu0 %v7718
    %8008 = vmatprep.subr.bf16.mxu0 0
    %8009 = vmatpush1.bf16.msra.mxu0 %v7719
    %8010 = vmatprep.subr.bf16.mxu0 0
    %8011 = vmatpush1.bf16.msra.mxu0 %v7720
    %8012 = vmatprep.subr.bf16.mxu0 0
    %8013 = vmatpush1.bf16.msra.mxu0 %v7721
    %8014 = vmatprep.subr.bf16.mxu0 0
    %8015 = vmatpush1.bf16.msra.mxu0 %v7722
    %8016 = vmatprep.subr.bf16.mxu0 0
    %8017 = vmatpush1.bf16.msra.mxu0 %v7723
    %8018 = vmatprep.subr.bf16.mxu0 0
    %8019 = vmatpush1.bf16.msra.mxu0 %v7724
    %8020 = vmatprep.subr.bf16.mxu0 0
    %8021 = vmatpush1.bf16.msra.mxu0 %v7725
    %8022 = vmatprep.subr.bf16.mxu0 0
    %8023 = vmatpush1.bf16.msra.mxu0 %v7726
    %8024 = vmatprep.mubr.bf16.mxu0 %v7163
    %8025 = vmatmul.mubr.bf16.gmra.mrb[0].mxu0 %v7162
    %v8026 = vpop.f32.mrb[0].mxu0
    %v8027 = vadd.f32 %v7986, %v8026
    %v8028 = vpop.f32.mrb[0].mxu0
    %v8029 = vpop.f32.mrb[0].mxu0
    %v8030 = vadd.f32 %v7989, %v8029
    %v8031 = vpop.f32.mrb[0].mxu0
    %8032 = vdwg.mxu0
    %8033 = vmatprep.subr.bf16.mxu0 0
    %8034 = vmatpush1.bf16.msra.mxu0 %v7727
    %8035 = vmatprep.subr.bf16.mxu0 0
    %8036 = vmatpush1.bf16.msra.mxu0 %v7728
    %8037 = vmatprep.subr.bf16.mxu0 0
    %8038 = vmatpush1.bf16.msra.mxu0 %v7729
    %8039 = vmatprep.subr.bf16.mxu0 0
    %8040 = vmatpush1.bf16.msra.mxu0 %v7730
    %8041 = vmatprep.subr.bf16.mxu0 0
    %8042 = vmatpush1.bf16.msra.mxu0 %v7731
    %8043 = vmatprep.subr.bf16.mxu0 0
    %8044 = vmatpush1.bf16.msra.mxu0 %v7732
    %8045 = vmatprep.subr.bf16.mxu0 0
    %8046 = vmatpush1.bf16.msra.mxu0 %v7733
    %8047 = vmatprep.subr.bf16.mxu0 0
    %8048 = vmatpush1.bf16.msra.mxu0 %v7734
    %8049 = vmatprep.subr.bf16.mxu0 0
    %8050 = vmatpush1.bf16.msra.mxu0 %v7735
    %8051 = vmatprep.subr.bf16.mxu0 0
    %8052 = vmatpush1.bf16.msra.mxu0 %v7736
    %8053 = vmatprep.subr.bf16.mxu0 0
    %8054 = vmatpush1.bf16.msra.mxu0 %v7737
    %8055 = vmatprep.subr.bf16.mxu0 0
    %8056 = vmatpush1.bf16.msra.mxu0 %v7738
    %8057 = vmatprep.subr.bf16.mxu0 0
    %8058 = vmatpush1.bf16.msra.mxu0 %v7739
    %8059 = vmatprep.subr.bf16.mxu0 0
    %8060 = vmatpush1.bf16.msra.mxu0 %v7740
    %8061 = vmatprep.subr.bf16.mxu0 0
    %8062 = vmatpush1.bf16.msra.mxu0 %v7741
    %8063 = vmatprep.subr.bf16.mxu0 0
    %8064 = vmatpush1.bf16.msra.mxu0 %v7742
    %8065 = vmatprep.mubr.bf16.mxu0 %v7165
    %8066 = vmatmul.mubr.bf16.gmra.mrb[0].mxu0 %v7164
    %v8067 = vpop.f32.mrb[0].mxu0
    %v8068 = vadd.f32 %v8027, %v8067
    %v8069 = vpop.f32.mrb[0].mxu0
    %v8070 = vpop.f32.mrb[0].mxu0
    %v8071 = vadd.f32 %v8030, %v8070
    %v8072 = vpop.f32.mrb[0].mxu0
    %8073 = vdwg.mxu0
    %8074 = vmatprep.subr.bf16.mxu0 0
    %8075 = vmatpush1.bf16.msra.mxu0 %v7743
    %8076 = vmatprep.subr.bf16.mxu0 0
    %8077 = vmatpush1.bf16.msra.mxu0 %v7744
    %8078 = vmatprep.subr.bf16.mxu0 0
    %8079 = vmatpush1.bf16.msra.mxu0 %v7745
    %8080 = vmatprep.subr.bf16.mxu0 0
    %8081 = vmatpush1.bf16.msra.mxu0 %v7746
    %8082 = vmatprep.subr.bf16.mxu0 0
    %8083 = vmatpush1.bf16.msra.mxu0 %v7747
    %8084 = vmatprep.subr.bf16.mxu0 0
    %8085 = vmatpush1.bf16.msra.mxu0 %v7748
    %8086 = vmatprep.subr.bf16.mxu0 0
    %8087 = vmatpush1.bf16.msra.mxu0 %v7749
    %8088 = vmatprep.subr.bf16.mxu0 0
    %8089 = vmatpush1.bf16.msra.mxu0 %v7750
    %8090 = vmatprep.subr.bf16.mxu0 0
    %8091 = vmatpush1.bf16.msra.mxu0 %v7751
    %8092 = vmatprep.subr.bf16.mxu0 0
    %8093 = vmatpush1.bf16.msra.mxu0 %v7752
    %8094 = vmatprep.subr.bf16.mxu0 0
    %8095 = vmatpush1.bf16.msra.mxu0 %v7753
    %8096 = vmatprep.subr.bf16.mxu0 0
    %8097 = vmatpush1.bf16.msra.mxu0 %v7754
    %8098 = vmatprep.subr.bf16.mxu0 0
    %8099 = vmatpush1.bf16.msra.mxu0 %v7755
    %8100 = vmatprep.subr.bf16.mxu0 0
    %8101 = vmatpush1.bf16.msra.mxu0 %v7756
    %8102 = vmatprep.subr.bf16.mxu0 0
    %8103 = vmatpush1.bf16.msra.mxu0 %v7757
    %8104 = vmatprep.subr.bf16.mxu0 0
    %8105 = vmatpush1.bf16.msra.mxu0 %v7758
    %8106 = vmatprep.mubr.bf16.mxu0 %v7167
    %8107 = vmatmul.mubr.bf16.gmra.mrb[0].mxu0 %v7166
    %v8108 = vpop.f32.mrb[0].mxu0
    %v8109 = vadd.f32 %v8068, %v8108
    %v8110 = vpop.f32.mrb[0].mxu0
    %v8111 = vpop.f32.mrb[0].mxu0
    %v8112 = vadd.f32 %v8071, %v8111
    %v8113 = vpop.f32.mrb[0].mxu0
    %8114 = vdwg.mxu0
    %8115 = vmatprep.subr.bf16.mxu0 0
    %8116 = vmatpush1.bf16.msra.mxu0 %v7759
    %8117 = vmatprep.subr.bf16.mxu0 0
    %8118 = vmatpush1.bf16.msra.mxu0 %v7760
    %8119 = vmatprep.subr.bf16.mxu0 0
    %8120 = vmatpush1.bf16.msra.mxu0 %v7761
    %8121 = vmatprep.subr.bf16.mxu0 0
    %8122 = vmatpush1.bf16.msra.mxu0 %v7762
    %8123 = vmatprep.subr.bf16.mxu0 0
    %8124 = vmatpush1.bf16.msra.mxu0 %v7763
    %8125 = vmatprep.subr.bf16.mxu0 0
    %8126 = vmatpush1.bf16.msra.mxu0 %v7764
    %8127 = vmatprep.subr.bf16.mxu0 0
    %8128 = vmatpush1.bf16.msra.mxu0 %v7765
    %8129 = vmatprep.subr.bf16.mxu0 0
    %8130 = vmatpush1.bf16.msra.mxu0 %v7766
    %8131 = vmatprep.subr.bf16.mxu0 0
    %8132 = vmatpush1.bf16.msra.mxu0 %v7767
    %8133 = vmatprep.subr.bf16.mxu0 0
    %8134 = vmatpush1.bf16.msra.mxu0 %v7768
    %8135 = vmatprep.subr.bf16.mxu0 0
    %8136 = vmatpush1.bf16.msra.mxu0 %v7769
    %8137 = vmatprep.subr.bf16.mxu0 0
    %8138 = vmatpush1.bf16.msra.mxu0 %v7770
    %8139 = vmatprep.subr.bf16.mxu0 0
    %8140 = vmatpush1.bf16.msra.mxu0 %v7771
    %8141 = vmatprep.subr.bf16.mxu0 0
    %8142 = vmatpush1.bf16.msra.mxu0 %v7772
    %8143 = vmatprep.subr.bf16.mxu0 0
    %8144 = vmatpush1.bf16.msra.mxu0 %v7773
    %8145 = vmatprep.subr.bf16.mxu0 0
    %8146 = vmatpush1.bf16.msra.mxu0 %v7774
    %8147 = vmatprep.mubr.bf16.mxu0 %v7169
    %8148 = vmatmul.mubr.bf16.gmra.mrb[0].mxu0 %v7168
    %v8149 = vpop.f32.mrb[0].mxu0
    %v8150 = vadd.f32 %v8109, %v8149
    %v8151 = vpop.f32.mrb[0].mxu0
    %v8152 = vpop.f32.mrb[0].mxu0
    %v8153 = vadd.f32 %v8112, %v8152
    %v8154 = vpop.f32.mrb[0].mxu0
    %8155 = vdwg.mxu0
    %8156 = vmatprep.subr.bf16.mxu0 0
    %8157 = vmatpush1.bf16.msra.mxu0 %v7775
    %8158 = vmatprep.subr.bf16.mxu0 0
    %8159 = vmatpush1.bf16.msra.mxu0 %v7776
    %8160 = vmatprep.subr.bf16.mxu0 0
    %8161 = vmatpush1.bf16.msra.mxu0 %v7777
    %8162 = vmatprep.subr.bf16.mxu0 0
    %8163 = vmatpush1.bf16.msra.mxu0 %v7778
    %8164 = vmatprep.subr.bf16.mxu0 0
    %8165 = vmatpush1.bf16.msra.mxu0 %v7779
    %8166 = vmatprep.subr.bf16.mxu0 0
    %8167 = vmatpush1.bf16.msra.mxu0 %v7780
    %8168 = vmatprep.subr.bf16.mxu0 0
    %8169 = vmatpush1.bf16.msra.mxu0 %v7781
    %8170 = vmatprep.subr.bf16.mxu0 0
    %8171 = vmatpush1.bf16.msra.mxu0 %v7782
    %8172 = vmatprep.subr.bf16.mxu0 0
    %8173 = vmatpush1.bf16.msra.mxu0 %v7783
    %8174 = vmatprep.subr.bf16.mxu0 0
    %8175 = vmatpush1.bf16.msra.mxu0 %v7784
    %8176 = vmatprep.subr.bf16.mxu0 0
    %8177 = vmatpush1.bf16.msra.mxu0 %v7785
    %8178 = vmatprep.subr.bf16.mxu0 0
    %8179 = vmatpush1.bf16.msra.mxu0 %v7786
    %8180 = vmatprep.subr.bf16.mxu0 0
    %8181 = vmatpush1.bf16.msra.mxu0 %v7787
    %8182 = vmatprep.subr.bf16.mxu0 0
    %8183 = vmatpush1.bf16.msra.mxu0 %v7788
    %8184 = vmatprep.subr.bf16.mxu0 0
    %8185 = vmatpush1.bf16.msra.mxu0 %v7789
    %8186 = vmatprep.subr.bf16.mxu0 0
    %8187 = vmatpush1.bf16.msra.mxu0 %v7790
    %8188 = vmatprep.mubr.bf16.mxu0 %v7171
    %8189 = vmatmul.mubr.bf16.gmra.mrb[0].mxu0 %v7170
    %v8190 = vpop.f32.mrb[0].mxu0
    %v8191 = vadd.f32 %v8150, %v8190
    %v8192 = vpop.f32.mrb[0].mxu0
    %v8193 = vpop.f32.mrb[0].mxu0
    %v8194 = vadd.f32 %v8153, %v8193
    %v8195 = vpop.f32.mrb[0].mxu0
    %8196 = vdwg.mxu0
    %8197 = vmatprep.subr.bf16.mxu0 0
    %8198 = vmatpush1.bf16.msra.mxu0 %v7791
    %8199 = vmatprep.subr.bf16.mxu0 0
    %8200 = vmatpush1.bf16.msra.mxu0 %v7792
    %8201 = vmatprep.subr.bf16.mxu0 0
    %8202 = vmatpush1.bf16.msra.mxu0 %v7793
    %8203 = vmatprep.subr.bf16.mxu0 0
    %8204 = vmatpush1.bf16.msra.mxu0 %v7794
    %8205 = vmatprep.subr.bf16.mxu0 0
    %8206 = vmatpush1.bf16.msra.mxu0 %v7795
    %8207 = vmatprep.subr.bf16.mxu0 0
    %8208 = vmatpush1.bf16.msra.mxu0 %v7796
    %8209 = vmatprep.subr.bf16.mxu0 0
    %8210 = vmatpush1.bf16.msra.mxu0 %v7797
    %8211 = vmatprep.subr.bf16.mxu0 0
    %8212 = vmatpush1.bf16.msra.mxu0 %v7798
    %8213 = vmatprep.subr.bf16.mxu0 0
    %8214 = vmatpush1.bf16.msra.mxu0 %v7799
    %8215 = vmatprep.subr.bf16.mxu0 0
    %8216 = vmatpush1.bf16.msra.mxu0 %v7800
    %8217 = vmatprep.subr.bf16.mxu0 0
    %8218 = vmatpush1.bf16.msra.mxu0 %v7801
    %8219 = vmatprep.subr.bf16.mxu0 0
    %8220 = vmatpush1.bf16.msra.mxu0 %v7802
    %8221 = vmatprep.subr.bf16.mxu0 0
    %8222 = vmatpush1.bf16.msra.mxu0 %v7803
    %8223 = vmatprep.subr.bf16.mxu0 0
    %8224 = vmatpush1.bf16.msra.mxu0 %v7804
    %8225 = vmatprep.subr.bf16.mxu0 0
    %8226 = vmatpush1.bf16.msra.mxu0 %v7805
    %8227 = vmatprep.subr.bf16.mxu0 0
    %8228 = vmatpush1.bf16.msra.mxu0 %v7806
    %8229 = vmatprep.mubr.bf16.mxu0 %v7173
    %8230 = vmatmul.mubr.bf16.gmra.mrb[0].mxu0 %v7172
    %v8231 = vpop.f32.mrb[0].mxu0
    %v8232 = vadd.f32 %v8191, %v8231
    %v8233 = vpop.f32.mrb[0].mxu0
    %v8234 = vpop.f32.mrb[0].mxu0
    %v8235 = vadd.f32 %v8194, %v8234
    %v8236 = vpop.f32.mrb[0].mxu0
    %8237 = vdwg.mxu0
    %8238 = vmatprep.subr.bf16.mxu0 0
    %8239 = vmatpush1.bf16.msra.mxu0 %v7807
    %8240 = vmatprep.subr.bf16.mxu0 0
    %8241 = vmatpush1.bf16.msra.mxu0 %v7808
    %8242 = vmatprep.subr.bf16.mxu0 0
    %8243 = vmatpush1.bf16.msra.mxu0 %v7809
    %8244 = vmatprep.subr.bf16.mxu0 0
    %8245 = vmatpush1.bf16.msra.mxu0 %v7810
    %8246 = vmatprep.subr.bf16.mxu0 0
    %8247 = vmatpush1.bf16.msra.mxu0 %v7811
    %8248 = vmatprep.subr.bf16.mxu0 0
    %8249 = vmatpush1.bf16.msra.mxu0 %v7812
    %8250 = vmatprep.subr.bf16.mxu0 0
    %8251 = vmatpush1.bf16.msra.mxu0 %v7813
    %8252 = vmatprep.subr.bf16.mxu0 0
    %8253 = vmatpush1.bf16.msra.mxu0 %v7814
    %8254 = vmatprep.subr.bf16.mxu0 0
    %8255 = vmatpush1.bf16.msra.mxu0 %v7815
    %8256 = vmatprep.subr.bf16.mxu0 0
    %8257 = vmatpush1.bf16.msra.mxu0 %v7816
    %8258 = vmatprep.subr.bf16.mxu0 0
    %8259 = vmatpush1.bf16.msra.mxu0 %v7817
    %8260 = vmatprep.subr.bf16.mxu0 0
    %8261 = vmatpush1.bf16.msra.mxu0 %v7818
    %8262 = vmatprep.subr.bf16.mxu0 0
    %8263 = vmatpush1.bf16.msra.mxu0 %v7819
    %8264 = vmatprep.subr.bf16.mxu0 0
    %8265 = vmatpush1.bf16.msra.mxu0 %v7820
    %8266 = vmatprep.subr.bf16.mxu0 0
    %8267 = vmatpush1.bf16.msra.mxu0 %v7821
    %8268 = vmatprep.subr.bf16.mxu0 0
    %8269 = vmatpush1.bf16.msra.mxu0 %v7822
    %8270 = vmatprep.mubr.bf16.mxu0 %v7175
    %8271 = vmatmul.mubr.bf16.gmra.mrb[0].mxu0 %v7174
    %v8272 = vpop.f32.mrb[0].mxu0
    %v8273 = vadd.f32 %v8232, %v8272
    %v8274 = vpop.f32.mrb[0].mxu0
    %v8275 = vpop.f32.mrb[0].mxu0
    %v8276 = vadd.f32 %v8235, %v8275
    %v8277 = vpop.f32.mrb[0].mxu0
    %8278 = vdwg.mxu0
    %v8279 = vadd.f32 %v6246, %v8273
    %v8280 = vadd.f32 %v6247, %v8276
    %v8281 = vld [vmem:[#allocation26] sm:$0x1]
    %v8282 = vld [vmem:[#allocation25] sm:$0x1]
    %v8283 = vsel %vm848, %v8279, 0.0
    %8284 = vadd.xlane.f32.xlu0 %v8283
    %v8285 = vpop.xlane.xlu0 %8284
    %v8286 = vsel %vm848, %v8280, 0.0
    %8287 = vadd.xlane.f32.xlu0 %v8286
    %v8288 = vpop.xlane.xlu0 %8287
    %v8289 = vmul.f32 %v8285, %v2534
    %v8290 = vmul.f32 %v8288, %v2534
    %v8291 = vsub.f32 %v8279, %v8289
    %v8292 = vsub.f32 %v8280, %v8290
    %v8293 = vmul.f32 %v8291, %v8291
    %v8294 = vmul.f32 %v8292, %v8292
    %v8295 = vsel %vm848, %v8293, 0.0
    %8296 = vadd.xlane.f32.xlu0 %v8295
    %v8297 = vpop.xlane.xlu0 %8296
    %v8298 = vsel %vm848, %v8294, 0.0
    %8299 = vadd.xlane.f32.xlu0 %v8298
    %v8300 = vpop.xlane.xlu0 %8299
    %v8301 = vmul.f32 %v8297, %v2534
    %v8302 = vmul.f32 %v8300, %v2534
    %v8303 = vadd.f32 %v8301, 1e-05
    %v8304 = vadd.f32 %v8302, 1e-05
    %v8305 = vrsqrt.pop %v8303
    %v8306 = vrsqrt.pop %v8304
    %v8307 = vmul.f32 %v8291, %v8305
    %v8308 = vmul.f32 %v8292, %v8306
    %v8310 = vlaneseq
    %v8311 = vshrl.u32 %v8310, 7
    %v8312 = vsub.s32 0, %v8311
    %v8313 = vrot.slane %v8281, %v8312
    %v8315 = vmul.f32 %v8307, %v8313
    %v8316 = vmul.f32 %v8308, %v8313
    %v8318 = vlaneseq
    %v8319 = vshrl.u32 %v8318, 7
    %v8320 = vsub.s32 0, %v8319
    %v8321 = vrot.slane %v8282, %v8320
    %v8323 = vadd.f32 %v8315, %v8321
    %v8324 = vadd.f32 %v8316, %v8321
    %v8325 = vld [vmem:[#allocation34] sm:$0x1]
    %v8326 = vld [vmem:[#allocation32] sm:$0x1]
    %v8327 = vsel %vm848, %v8323, 0.0
    %8328 = vadd.xlane.f32.xlu0 %v8327
    %v8329 = vpop.xlane.xlu0 %8328
    %v8330 = vsel %vm848, %v8324, 0.0
    %8331 = vadd.xlane.f32.xlu0 %v8330
    %v8332 = vpop.xlane.xlu0 %8331
    %v8333 = vmul.f32 %v8329, %v2534
    %v8334 = vmul.f32 %v8332, %v2534
    %v8335 = vsub.f32 %v8323, %v8333
    %v8336 = vsub.f32 %v8324, %v8334
    %v8337 = vmul.f32 %v8335, %v8335
    %v8338 = vmul.f32 %v8336, %v8336
    %v8339 = vsel %vm848, %v8337, 0.0
    %8340 = vadd.xlane.f32.xlu0 %v8339
    %v8341 = vpop.xlane.xlu0 %8340
    %v8342 = vsel %vm848, %v8338, 0.0
    %8343 = vadd.xlane.f32.xlu0 %v8342
    %v8344 = vpop.xlane.xlu0 %8343
    %v8345 = vmul.f32 %v8341, %v2534
    %v8346 = vmul.f32 %v8344, %v2534
    %v8347 = vadd.f32 %v8345, 1e-05
    %v8348 = vadd.f32 %v8346, 1e-05
    %v8349 = vrsqrt.pop %v8347
    %v8350 = vrsqrt.pop %v8348
    %v8351 = vmul.f32 %v8335, %v8349
    %v8352 = vmul.f32 %v8336, %v8350
    %v8354 = vlaneseq
    %v8355 = vshrl.u32 %v8354, 7
    %v8356 = vsub.s32 0, %v8355
    %v8357 = vrot.slane %v8325, %v8356
    %v8359 = vmul.f32 %v8351, %v8357
    %v8360 = vmul.f32 %v8352, %v8357
    %v8362 = vlaneseq
    %v8363 = vshrl.u32 %v8362, 7
    %v8364 = vsub.s32 0, %v8363
    %v8365 = vrot.slane %v8326, %v8364
    %v8367 = vadd.f32 %v8359, %v8365
    %v8368 = vadd.f32 %v8360, %v8365
    %v8369 = vld [vmem:[#allocation52] sm:$0x1]
    %v8371 = vlaneseq
    %v8372 = vshrl.u32 %v8371, 7
    %v8373 = vsub.s32 0, %v8372
    %v8374 = vrot.slane %v8369, %v8373
    %v8376 = vmul.f32 %v8367, %v8374
    %v8377 = vmul.f32 %v8368, %v8374
    %v8378 = vld [vmem:[#allocation53] sm:$0x1]
    %v8380 = vlaneseq
    %v8381 = vshrl.u32 %v8380, 7
    %v8382 = vsub.s32 0, %v8381
    %v8383 = vrot.slane %v8378, %v8382
    %v8385 = vadd.f32 %v8376, %v8383
    %v8386 = vadd.f32 %v8377, %v8383
    %vm8387 = vcmp.gt.f32.partialorder %v8385, 0.0
    %vm8388 = vcmp.gt.f32.partialorder %v8386, 0.0
    %v8389 = vmin.f32 %v8385, 0.0
    %v8390 = vmin.f32 %v8386, 0.0
    %v8391 = vmul.f32 %v8389, 1.442695
    %v8392 = vpow.pop %v8391
    %v8393 = vmul.f32 %v8390, 1.442695
    %v8394 = vpow.pop %v8393
    %v8395 = vsub.f32 %v8392, 1.0
    %v8396 = vsub.f32 %v8394, 1.0
    %v8397 = vsel %vm8387, %v8385, %v8395
    %v8398 = vsel %vm8388, %v8386, %v8396
    %v8399 = vld [vmem:[%s153] sm:$0xf]
    %v8400 = vld [vmem:[%s153 + $0x4] sm:$0xf]
    %v8401 = vld [vmem:[%s153 + $0x8] sm:$0xf]
    %v8402 = vld [vmem:[%s153 + $0xc] sm:$0xf]
    %v8403 = vpack.c.bf16 %v8398, %v8397
    %v8404 = vld [vmem:[#allocation50] sm:$0x1]
    %v8406 = vlaneseq
    %v8407 = vshrl.u32 %v8406, 7
    %v8408 = vsub.s32 0, %v8407
    %v8409 = vrot.slane %v8404, %v8408
    %v8415 = vunpack.c.l.b16 %v8399
    %v8416 = vunpack.c.l.b16 %v8400
    %v8417 = vunpack.c.l.b16 %v8401
    %v8418 = vunpack.c.l.b16 %v8402
    %v8419 = vpack.c.b16 %v8416, %v8415
    %v8420 = vpack.c.b16 %v8418, %v8417
    %v8424 = vsel %vm848, %v8403, 0
    %8426 = vmatprep.subr.bf16.mxu0 0
    %8427 = vmatpush1.bf16.msra.mxu0 %v8419
    %8428 = vmatprep.subr.bf16.mxu0 0
    %8429 = vmatpush1.bf16.msra.mxu0 %v8420
    %8430 = vmatprep.subr.bf16.mxu0 0
    %8431 = vmatpush1.bf16.msra.mxu0 0
    %8432 = vmatprep.subr.bf16.mxu0 0
    %8433 = vmatpush1.bf16.msra.mxu0 0
    %8434 = vmatprep.subr.bf16.mxu0 0
    %8435 = vmatpush1.bf16.msra.mxu0 0
    %8436 = vmatprep.subr.bf16.mxu0 0
    %8437 = vmatpush1.bf16.msra.mxu0 0
    %8438 = vmatprep.subr.bf16.mxu0 0
    %8439 = vmatpush1.bf16.msra.mxu0 0
    %8440 = vmatprep.subr.bf16.mxu0 0
    %8441 = vmatpush1.bf16.msra.mxu0 0
    %8442 = vmatprep.subr.bf16.mxu0 0
    %8443 = vmatpush1.bf16.msra.mxu0 0
    %8444 = vmatprep.subr.bf16.mxu0 0
    %8445 = vmatpush1.bf16.msra.mxu0 0
    %8446 = vmatprep.subr.bf16.mxu0 0
    %8447 = vmatpush1.bf16.msra.mxu0 0
    %8448 = vmatprep.subr.bf16.mxu0 0
    %8449 = vmatpush1.bf16.msra.mxu0 0
    %8450 = vmatprep.subr.bf16.mxu0 0
    %8451 = vmatpush1.bf16.msra.mxu0 0
    %8452 = vmatprep.subr.bf16.mxu0 0
    %8453 = vmatpush1.bf16.msra.mxu0 0
    %8454 = vmatprep.subr.bf16.mxu0 0
    %8455 = vmatpush1.bf16.msra.mxu0 0
    %8456 = vmatprep.subr.bf16.mxu0 0
    %8457 = vmatpush1.bf16.msra.mxu0 0
    %8458 = vmatprep.mubr.bf16.mxu0 0
    %8459 = vmatmul.mubr.bf16.gmra.mrb[0].mxu0 %v8424
    %v8460 = vpop.f32.mrb[0].mxu0
    %v8461 = vadd.f32 %v8409, %v8460
    %v8462 = vpop.f32.mrb[0].mxu0
    %v8463 = vpop.f32.mrb[0].mxu0
    %v8464 = vadd.f32 %v8409, %v8463
    %v8465 = vpop.f32.mrb[0].mxu0
    %8466 = vdwg.mxu0
    %v8467 = vld [vmem:[%s159] sm:$0xf]
    %v8468 = vld [vmem:[%s159 + $0x4] sm:$0xf]
    %v8469 = vld [vmem:[%s159 + $0x8] sm:$0xf]
    %v8470 = vld [vmem:[%s159 + $0xc] sm:$0xf]
    %v8471 = vpack.c.bf16 %v8464, %v8461
    %v8472 = vld [vmem:[%s161] sm:$0xf]
    %v8473 = vld [vmem:[%s161 + $0x4] sm:$0xf]
    %v8474 = vld [vmem:[%s161 + $0x8] sm:$0xf]
    %v8475 = vld [vmem:[%s161 + $0xc] sm:$0xf]
    %v8480 = vunpack.c.l.b16 %v8472
    %v8481 = vunpack.c.l.b16 %v8473
    %v8482 = vunpack.c.l.b16 %v8474
    %v8483 = vunpack.c.l.b16 %v8475
    %v8484 = vpack.c.b16 %v8481, %v8480
    %v8485 = vpack.c.b16 %v8483, %v8482
    %8488 = vmatprep.subr.bf16.mxu0 0
    %8489 = vmatpush1.bf16.msra.mxu0 %v8484
    %8490 = vmatprep.subr.bf16.mxu0 0
    %8491 = vmatpush1.bf16.msra.mxu0 %v8485
    %8492 = vmatprep.subr.bf16.mxu0 0
    %8493 = vmatpush1.bf16.msra.mxu0 0
    %8494 = vmatprep.subr.bf16.mxu0 0
    %8495 = vmatpush1.bf16.msra.mxu0 0
    %8496 = vmatprep.subr.bf16.mxu0 0
    %8497 = vmatpush1.bf16.msra.mxu0 0
    %8498 = vmatprep.subr.bf16.mxu0 0
    %8499 = vmatpush1.bf16.msra.mxu0 0
    %8500 = vmatprep.subr.bf16.mxu0 0
    %8501 = vmatpush1.bf16.msra.mxu0 0
    %8502 = vmatprep.subr.bf16.mxu0 0
    %8503 = vmatpush1.bf16.msra.mxu0 0
    %8504 = vmatprep.subr.bf16.mxu0 0
    %8505 = vmatpush1.bf16.msra.mxu0 0
    %8506 = vmatprep.subr.bf16.mxu0 0
    %8507 = vmatpush1.bf16.msra.mxu0 0
    %8508 = vmatprep.subr.bf16.mxu0 0
    %8509 = vmatpush1.bf16.msra.mxu0 0
    %8510 = vmatprep.subr.bf16.mxu0 0
    %8511 = vmatpush1.bf16.msra.mxu0 0
    %8512 = vmatprep.subr.bf16.mxu0 0
    %8513 = vmatpush1.bf16.msra.mxu0 0
    %8514 = vmatprep.subr.bf16.mxu0 0
    %8515 = vmatpush1.bf16.msra.mxu0 0
    %8516 = vmatprep.subr.bf16.mxu0 0
    %8517 = vmatpush1.bf16.msra.mxu0 0
    %8518 = vmatprep.subr.bf16.mxu0 0
    %8519 = vmatpush1.bf16.msra.mxu0 0
    %8520 = vmatprep.mubr.bf16.mxu0 0
    %8521 = vmatmul.mubr.bf16.gmra.mrb[0].mxu0 %v4717
    %v8522 = vpop.f32.mrb[0].mxu0
    %v8523 = vadd.f32 0.0, %v8522
    %v8524 = vpop.f32.mrb[0].mxu0
    %v8525 = vpop.f32.mrb[0].mxu0
    %v8526 = vadd.f32 0.0, %v8525
    %v8527 = vpop.f32.mrb[0].mxu0
    %8528 = vdwg.mxu0
    %v8533 = vunpack.c.l.b16 %v8467
    %v8534 = vunpack.c.l.b16 %v8468
    %v8535 = vunpack.c.l.b16 %v8469
    %v8536 = vunpack.c.l.b16 %v8470
    %v8537 = vpack.c.b16 %v8534, %v8533
    %v8538 = vpack.c.b16 %v8536, %v8535
    %v8542 = vsel %vm848, %v8471, 0
    %8544 = vmatprep.subr.bf16.mxu0 0
    %8545 = vmatpush1.bf16.msra.mxu0 %v8537
    %8546 = vmatprep.subr.bf16.mxu0 0
    %8547 = vmatpush1.bf16.msra.mxu0 %v8538
    %8548 = vmatprep.subr.bf16.mxu0 0
    %8549 = vmatpush1.bf16.msra.mxu0 0
    %8550 = vmatprep.subr.bf16.mxu0 0
    %8551 = vmatpush1.bf16.msra.mxu0 0
    %8552 = vmatprep.subr.bf16.mxu0 0
    %8553 = vmatpush1.bf16.msra.mxu0 0
    %8554 = vmatprep.subr.bf16.mxu0 0
    %8555 = vmatpush1.bf16.msra.mxu0 0
    %8556 = vmatprep.subr.bf16.mxu0 0
    %8557 = vmatpush1.bf16.msra.mxu0 0
    %8558 = vmatprep.subr.bf16.mxu0 0
    %8559 = vmatpush1.bf16.msra.mxu0 0
    %8560 = vmatprep.subr.bf16.mxu0 0
    %8561 = vmatpush1.bf16.msra.mxu0 0
    %8562 = vmatprep.subr.bf16.mxu0 0
    %8563 = vmatpush1.bf16.msra.mxu0 0
    %8564 = vmatprep.subr.bf16.mxu0 0
    %8565 = vmatpush1.bf16.msra.mxu0 0
    %8566 = vmatprep.subr.bf16.mxu0 0
    %8567 = vmatpush1.bf16.msra.mxu0 0
    %8568 = vmatprep.subr.bf16.mxu0 0
    %8569 = vmatpush1.bf16.msra.mxu0 0
    %8570 = vmatprep.subr.bf16.mxu0 0
    %8571 = vmatpush1.bf16.msra.mxu0 0
    %8572 = vmatprep.subr.bf16.mxu0 0
    %8573 = vmatpush1.bf16.msra.mxu0 0
    %8574 = vmatprep.subr.bf16.mxu0 0
    %8575 = vmatpush1.bf16.msra.mxu0 0
    %8576 = vmatprep.mubr.bf16.mxu0 0
    %8577 = vmatmul.mubr.bf16.gmra.mrb[0].mxu0 %v8542
    %v8578 = vpop.f32.mrb[0].mxu0
    %v8579 = vadd.f32 %v8523, %v8578
    %v8580 = vpop.f32.mrb[0].mxu0
    %v8581 = vpop.f32.mrb[0].mxu0
    %v8582 = vadd.f32 %v8526, %v8581
    %v8583 = vpop.f32.mrb[0].mxu0
    %8584 = vdwg.mxu0
    %v8585 = vld [vmem:[#allocation55] sm:$0x1]
    %v8587 = vlaneseq
    %v8588 = vshrl.u32 %v8587, 7
    %v8589 = vsub.s32 0, %v8588
    %v8590 = vrot.slane %v8585, %v8589
    %v8592 = vadd.f32 %v8579, %v8590
    %v8593 = vadd.f32 %v8582, %v8590
    %vm8594 = vcmp.gt.f32.partialorder %v8592, 0.0
    %vm8595 = vcmp.gt.f32.partialorder %v8593, 0.0
    %v8596 = vmin.f32 %v8592, 0.0
    %v8597 = vmin.f32 %v8593, 0.0
    %v8598 = vmul.f32 %v8596, 1.442695
    %v8599 = vpow.pop %v8598
    %v8600 = vmul.f32 %v8597, 1.442695
    %v8601 = vpow.pop %v8600
    %v8602 = vsub.f32 %v8599, 1.0
    %v8603 = vsub.f32 %v8601, 1.0
    %v8604 = vsel %vm8594, %v8592, %v8602
    %v8605 = vsel %vm8595, %v8593, %v8603
    %v8606 = vld [vmem:[%s163] sm:$0xf]
    %v8607 = vld [vmem:[%s163 + $0x4] sm:$0xf]
    %v8608 = vld [vmem:[%s163 + $0x8] sm:$0xf]
    %v8609 = vld [vmem:[%s163 + $0xc] sm:$0xf]
    %v8610 = vpack.c.bf16 %v8605, %v8604
    %v8611 = vld [vmem:[#allocation56] sm:$0x1]
    %v8613 = vlaneseq
    %v8614 = vshrl.u32 %v8613, 7
    %v8615 = vsub.s32 0, %v8614
    %v8616 = vrot.slane %v8611, %v8615
    %v8622 = vunpack.c.l.b16 %v8606
    %v8623 = vunpack.c.l.b16 %v8607
    %v8624 = vunpack.c.l.b16 %v8608
    %v8625 = vunpack.c.l.b16 %v8609
    %v8626 = vpack.c.b16 %v8623, %v8622
    %v8627 = vpack.c.b16 %v8625, %v8624
    %v8631 = vsel %vm848, %v8610, 0
    %8633 = vmatprep.subr.bf16.mxu0 0
    %8634 = vmatpush1.bf16.msra.mxu0 %v8626
    %8635 = vmatprep.subr.bf16.mxu0 0
    %8636 = vmatpush1.bf16.msra.mxu0 %v8627
    %8637 = vmatprep.subr.bf16.mxu0 0
    %8638 = vmatpush1.bf16.msra.mxu0 0
    %8639 = vmatprep.subr.bf16.mxu0 0
    %8640 = vmatpush1.bf16.msra.mxu0 0
    %8641 = vmatprep.subr.bf16.mxu0 0
    %8642 = vmatpush1.bf16.msra.mxu0 0
    %8643 = vmatprep.subr.bf16.mxu0 0
    %8644 = vmatpush1.bf16.msra.mxu0 0
    %8645 = vmatprep.subr.bf16.mxu0 0
    %8646 = vmatpush1.bf16.msra.mxu0 0
    %8647 = vmatprep.subr.bf16.mxu0 0
    %8648 = vmatpush1.bf16.msra.mxu0 0
    %8649 = vmatprep.subr.bf16.mxu0 0
    %8650 = vmatpush1.bf16.msra.mxu0 0
    %8651 = vmatprep.subr.bf16.mxu0 0
    %8652 = vmatpush1.bf16.msra.mxu0 0
    %8653 = vmatprep.subr.bf16.mxu0 0
    %8654 = vmatpush1.bf16.msra.mxu0 0
    %8655 = vmatprep.subr.bf16.mxu0 0
    %8656 = vmatpush1.bf16.msra.mxu0 0
    %8657 = vmatprep.subr.bf16.mxu0 0
    %8658 = vmatpush1.bf16.msra.mxu0 0
    %8659 = vmatprep.subr.bf16.mxu0 0
    %8660 = vmatpush1.bf16.msra.mxu0 0
    %8661 = vmatprep.subr.bf16.mxu0 0
    %8662 = vmatpush1.bf16.msra.mxu0 0
    %8663 = vmatprep.subr.bf16.mxu0 0
    %8664 = vmatpush1.bf16.msra.mxu0 0
    %8665 = vmatprep.mubr.bf16.mxu0 0
    %8666 = vmatmul.mubr.bf16.gmra.mrb[0].mxu0 %v8631
    %v8667 = vpop.f32.mrb[0].mxu0
    %v8668 = vadd.f32 %v8616, %v8667
    %v8669 = vpop.f32.mrb[0].mxu0
    %v8670 = vpop.f32.mrb[0].mxu0
    %v8671 = vadd.f32 %v8616, %v8670
    %v8672 = vpop.f32.mrb[0].mxu0
    %8673 = vdwg.mxu0
    %v8674 = vsel %vm848, %v8668, 0.0
    %v8675 = vrot.slane %v8674, 4
    %v8676 = vadd.f32 %v8674, %v8675
    %v8677 = vrot.slane %v8676, 2
    %v8678 = vadd.f32 %v8676, %v8677
    %v8679 = vrot.slane %v8678, 1
    %v8680 = vadd.f32 %v8678, %v8679
    %v8681 = vsel %vm848, %v8671, 0.0
    %v8682 = vrot.slane %v8681, 4
    %v8683 = vadd.f32 %v8681, %v8682
    %v8684 = vrot.slane %v8683, 2
    %v8685 = vadd.f32 %v8683, %v8684
    %v8686 = vrot.slane %v8685, 1
    %v8687 = vadd.f32 %v8685, %v8686
    %v8688 = vrcp.pop 8.0
    %v8689 = vmul.f32 %v8680, %v8688
    %v8690 = vmul.f32 %v8687, %v8688
    %v8691 = vld [vmem:[%s15] sm:$0xf]
    %v8692 = vld [vmem:[%s15 + $0x4] sm:$0xf]
    %v8693 = vld [vmem:[%s15 + $0x8] sm:$0xf]
    %v8694 = vld [vmem:[%s15 + $0xc] sm:$0xf]
    %v8695 = vpack.c.bf16 %v8689, %v8689
    %v8696 = vpack.c.bf16 %v8690, %v8690
    %v8697 = vld [vmem:[%s11] sm:$0x1]
    %v8699 = vlaneseq
    %v8700 = vshrl.u32 %v8699, 7
    %v8701 = vsub.s32 0, %v8700
    %v8702 = vrot.slane %v8697, %v8701
    %v8706 = vunpack.c.l.b16 %v8695
    %v8707 = vunpack.c.l.b16 %v8696
    %vm8708 = vcmask 1041409
    %v8709 = vsel %vm8708, %v8707, %v8706
    %v8710 = vpack.c.b16 %v8709, %v8709
    %v8715 = vunpack.c.l.b16 %v8691
    %v8716 = vunpack.c.l.b16 %v8692
    %v8717 = vunpack.c.l.b16 %v8693
    %v8718 = vunpack.c.l.b16 %v8694
    %v8719 = vpack.c.b16 %v8716, %v8715
    %v8720 = vpack.c.b16 %v8718, %v8717
    %v8724 = vsel %vm848, %v8710, 0
    %8726 = vmatprep.subr.bf16.mxu0 0
    %8727 = vmatpush1.bf16.msra.mxu0 %v8719
    %8728 = vmatprep.subr.bf16.mxu0 0
    %8729 = vmatpush1.bf16.msra.mxu0 %v8720
    %8730 = vmatprep.subr.bf16.mxu0 0
    %8731 = vmatpush1.bf16.msra.mxu0 0
    %8732 = vmatprep.subr.bf16.mxu0 0
    %8733 = vmatpush1.bf16.msra.mxu0 0
    %8734 = vmatprep.subr.bf16.mxu0 0
    %8735 = vmatpush1.bf16.msra.mxu0 0
    %8736 = vmatprep.subr.bf16.mxu0 0
    %8737 = vmatpush1.bf16.msra.mxu0 0
    %8738 = vmatprep.subr.bf16.mxu0 0
    %8739 = vmatpush1.bf16.msra.mxu0 0
    %8740 = vmatprep.subr.bf16.mxu0 0
    %8741 = vmatpush1.bf16.msra.mxu0 0
    %8742 = vmatprep.subr.bf16.mxu0 0
    %8743 = vmatpush1.bf16.msra.mxu0 0
    %8744 = vmatprep.subr.bf16.mxu0 0
    %8745 = vmatpush1.bf16.msra.mxu0 0
    %8746 = vmatprep.subr.bf16.mxu0 0
    %8747 = vmatpush1.bf16.msra.mxu0 0
    %8748 = vmatprep.subr.bf16.mxu0 0
    %8749 = vmatpush1.bf16.msra.mxu0 0
    %8750 = vmatprep.subr.bf16.mxu0 0
    %8751 = vmatpush1.bf16.msra.mxu0 0
    %8752 = vmatprep.subr.bf16.mxu0 0
    %8753 = vmatpush1.bf16.msra.mxu0 0
    %8754 = vmatprep.subr.bf16.mxu0 0
    %8755 = vmatpush1.bf16.msra.mxu0 0
    %8756 = vmatprep.subr.bf16.mxu0 0
    %8757 = vmatpush1.bf16.msra.mxu0 0
    %8758 = vmatprep.mubr.bf16.mxu0 0
    %8759 = vmatmul.mubr.bf16.gmra.mrb[0].mxu0 %v8724
    %v8760 = vpop.f32.mrb[0].mxu0
    %v8761 = vadd.f32 %v8702, %v8760
    %v8762 = vpop.f32.mrb[0].mxu0
    %v8763 = vpop.f32.mrb[0].mxu0
    %v8764 = vpop.f32.mrb[0].mxu0
    %8765 = vdwg.mxu0
    %vm8766 = vcmp.gt.f32.partialorder %v8761, 0.0
    %v8767 = vmin.f32 %v8761, 0.0
    %v8768 = vmul.f32 %v8767, 1.442695
    %v8769 = vpow.pop %v8768
    %v8770 = vsub.f32 %v8769, 1.0
    %v8771 = vsel %vm8766, %v8761, %v8770
    %v8772 = vld [vmem:[%s17] sm:$0xf]
    %v8773 = vld [vmem:[%s17 + $0x4] sm:$0xf]
    %v8774 = vld [vmem:[%s17 + $0x8] sm:$0xf]
    %v8775 = vld [vmem:[%s17 + $0xc] sm:$0xf]
    %v8776 = vpack.c.bf16 %v8771, %v8771
    %v8777 = vld [vmem:[%s13] sm:$0x1]
    %v8779 = vlaneseq
    %v8780 = vshrl.u32 %v8779, 7
    %v8781 = vsub.s32 0, %v8780
    %v8782 = vrot.slane %v8777, %v8781
    %v8788 = vunpack.c.l.b16 %v8772
    %v8789 = vunpack.c.l.b16 %v8773
    %v8790 = vunpack.c.l.b16 %v8774
    %v8791 = vunpack.c.l.b16 %v8775
    %v8792 = vpack.c.b16 %v8789, %v8788
    %v8793 = vpack.c.b16 %v8791, %v8790
    %v8797 = vsel %vm848, %v8776, 0
    %8799 = vmatprep.subr.bf16.mxu0 0
    %8800 = vmatpush1.bf16.msra.mxu0 %v8792
    %8801 = vmatprep.subr.bf16.mxu0 0
    %8802 = vmatpush1.bf16.msra.mxu0 %v8793
    %8803 = vmatprep.subr.bf16.mxu0 0
    %8804 = vmatpush1.bf16.msra.mxu0 0
    %8805 = vmatprep.subr.bf16.mxu0 0
    %8806 = vmatpush1.bf16.msra.mxu0 0
    %8807 = vmatprep.subr.bf16.mxu0 0
    %8808 = vmatpush1.bf16.msra.mxu0 0
    %8809 = vmatprep.subr.bf16.mxu0 0
    %8810 = vmatpush1.bf16.msra.mxu0 0
    %8811 = vmatprep.subr.bf16.mxu0 0
    %8812 = vmatpush1.bf16.msra.mxu0 0
    %8813 = vmatprep.subr.bf16.mxu0 0
    %8814 = vmatpush1.bf16.msra.mxu0 0
    %8815 = vmatprep.subr.bf16.mxu0 0
    %8816 = vmatpush1.bf16.msra.mxu0 0
    %8817 = vmatprep.subr.bf16.mxu0 0
    %8818 = vmatpush1.bf16.msra.mxu0 0
    %8819 = vmatprep.subr.bf16.mxu0 0
    %8820 = vmatpush1.bf16.msra.mxu0 0
    %8821 = vmatprep.subr.bf16.mxu0 0
    %8822 = vmatpush1.bf16.msra.mxu0 0
    %8823 = vmatprep.subr.bf16.mxu0 0
    %8824 = vmatpush1.bf16.msra.mxu0 0
    %8825 = vmatprep.subr.bf16.mxu0 0
    %8826 = vmatpush1.bf16.msra.mxu0 0
    %8827 = vmatprep.subr.bf16.mxu0 0
    %8828 = vmatpush1.bf16.msra.mxu0 0
    %8829 = vmatprep.subr.bf16.mxu0 0
    %8830 = vmatpush1.bf16.msra.mxu0 0
    %8831 = vmatprep.mubr.bf16.mxu0 0
    %8832 = vmatmul.mubr.bf16.gmra.mrb[0].mxu0 %v8797
    %v8833 = vpop.f32.mrb[0].mxu0
    %v8834 = vadd.f32 %v8782, %v8833
    %v8835 = vpop.f32.mrb[0].mxu0
    %v8836 = vpop.f32.mrb[0].mxu0
    %v8837 = vpop.f32.mrb[0].mxu0
    %8838 = vdwg.mxu0
    %vm8839 = vcmask 9216
    %v8840 = vsel %vm8839, %v8834, -inf
    %8841 = vmax.xlane.f32.xlu0 %v8840
    %v8842 = vpop.xlane.xlu0 %8841
    %v8843 = vsub.f32 %v8834, %v8842
    %v8844 = vmul.f32 %v8843, 1.442695
    %v8845 = vpow.pop %v8844
    %v8846 = vsel %vm8839, %v8845, 0.0
    %8847 = vadd.xlane.f32.xlu0 %v8846
    %v8848 = vpop.xlane.xlu0 %8847
    %v8849 = vrcp.pop %v8848
    %v8850 = vmul.f32 %v8845, %v8849
    %8851 = vst.msk [vmem:[%s165] sm:$0x3] %vm8839, %v8850
    // Predicated region
    $region474: #{aimp_forward.1} parent=1 // pred_check
      _
    $region475: #{aimp_forward.1} parent=1 // pred_check_branch
      %8853 = sbr.rel (0) target = $region477
    $region476: #{aimp_forward.1} parent=1 // pred_region
      _
    $region477: #{aimp_forward.1} parent=1 // pred_fallthru
      _
    // Predicated region
    $region478: #{aimp_forward.1} parent=1 // pred_check
      _
    $region479: #{aimp_forward.1} parent=1 // pred_check_branch
      %8855 = sbr.rel (0) target = $region481
    $region480: #{aimp_forward.1} parent=1 // pred_region
      _
    $region481: #{aimp_forward.1} parent=1 // pred_fallthru
      _
    %8856 = vsyncpa [#allocation4], 1
    %8857 = vsyncpa [#allocation6], 1
    %8858 = vsyncpa [#allocation9], 1
    %8859 = vsyncpa [#allocation12], 1
    %8860 = vsyncpa [#allocation15], 1
    %8861 = vsyncpa [#allocation18], 1
    %8862 = vsyncpa [#allocation21], 1
    %8863 = vsyncpa [#allocation24], 1
    %8864 = vsyncpa [#allocation27], 1
    %8865 = vsyncpa [#allocation30], 1
    %8866 = vsyncpa [#allocation33], 1
    %8867 = vsyncpa [#allocation36], 1
    %8868 = vsyncpa [#allocation39], 1
    %8869 = vsyncpa [#allocation42], 1
    %8870 = vsyncpa [#allocation45], 1
    %8871 = vsyncpa [#allocation48], 1
    %8872 = vsyncpa [#allocation51], 1
    %8873 = vsyncpa [#allocation54], 1
    %8874 = vsyncpa [#allocation57], 1

</llo_original>
